<compile_context>
chip_gen: v7x
topology: tpu7x:2x2x1
jax: 0.10.0
libtpu: 0.0.40
codegen_flags: <defaults>
</compile_context>

<pallas_src>
import jax
import jax.numpy as jnp
from jax.experimental import pallas as pl
from jax.experimental.pallas import tpu as pltpu

# ---- model hyper-parameters (consistent with the PyTorch module) ----
LATENT_DIM = 256
NUM_CLASSES = 2
IMG_C, IMG_H, IMG_W = 3, 32, 32
PATCH = 8
N_PATCH = (IMG_H // PATCH) * (IMG_W // PATCH)        # 16 patches ~ "4x4 spatial"
ENC_IN = IMG_C * PATCH * PATCH                       # 192
ENC_OUT = 512                                        # encoder channels
VAE_FEAT = N_PATCH * ENC_OUT                         # 8192 = 512*4*4
RES_IN = IMG_C * IMG_H * IMG_W                       # 3072
RES_OUT = 512                                        # resnet18 feature dim
CNN1_OUT = 256
CNN2_OUT = 128
FC1_OUT = 64


def vae_classifier_kernel(
    xp_ref,      # (N_PATCH, TB, ENC_IN)   bf16 patchified input (patch-major)
    xf_ref,      # (TB, RES_IN)            bf16 flattened input (resnet branch)
    w_enc_ref,   # (ENC_IN, ENC_OUT)       bf16 VAE-encoder stand-in (patch embed)
    w_lat_ref,   # (VAE_FEAT, LATENT_DIM)  bf16 vae_latent Linear(8192, 256)
    b_lat_ref,   # (1, LATENT_DIM)         f32  (b_lat with b_enc folded in)
    w_res_ref,   # (RES_IN, RES_OUT)       bf16 resnet18 stand-in
    b_res_ref,   # (1, RES_OUT)            f32
    w_c1_ref,    # (RES_OUT, CNN1_OUT)     bf16 Conv2d(512,256,3,p=1) center tap
    b_c1_ref,    # (1, CNN1_OUT)           f32
    w_c2_ref,    # (CNN1_OUT, CNN2_OUT)    bf16 Conv2d(256,128,3,p=1) center tap
    b_c2_ref,    # (1, CNN2_OUT)           f32
    w_fc1_ref,   # (LATENT_DIM+CNN2_OUT, FC1_OUT) bf16
    b_fc1_ref,   # (1, FC1_OUT)            f32
    w_fc2_ref,   # (FC1_OUT, NUM_CLASSES)  bf16
    b_fc2_ref,   # (1, NUM_CLASSES)        f32
    out_ref,     # (TB, NUM_CLASSES)       f32
    encf_ref,    # scratch: (TB, VAE_FEAT) bf16  relayouted encoder features
):
    tb = out_ref.shape[0]

    # ---------------- VAE branch ----------------
    # 1) Patch embed: ONE MXU matmul over all (patch, batch) rows.
    #    (N_PATCH, TB, ENC_IN) -> (N_PATCH*TB, ENC_IN): leading-dim collapse
    #    only (minor dim unchanged, TB is a multiple of 8).
    xp2 = xp_ref[...].reshape(N_PATCH * tb, ENC_IN)
    enc = jnp.dot(xp2, w_enc_ref[...], preferred_element_type=jnp.float32)
    enc_bf = enc.astype(jnp.bfloat16)                 # (N_PATCH*TB, ENC_OUT)

    # 2) Relayout patch blocks onto the 8192-wide lane axis via 16 aligned
    #    VMEM stores (pure data movement; no MXU epochs, no accumulators).
    for p in range(N_PATCH):
        encf_ref[:, p * ENC_OUT:(p + 1) * ENC_OUT] = enc_bf[p * tb:(p + 1) * tb, :]

    # 3) vae_latent = ReLU(Linear(8192, 256)): ONE MXU matmul with K=8192.
    #    (b_enc is folded into b_lat_ref in the wrapper; Dropout = identity.)
    vae_pre = (
        jnp.dot(encf_ref[...], w_lat_ref[...], preferred_element_type=jnp.float32)
        + b_lat_ref[...]
    )
    vae_lat = jnp.maximum(vae_pre, 0.0)               # (TB, LATENT_DIM) f32

    # ---------------- ResNet branch + cnn_layers ----------------
    res = (
        jnp.dot(xf_ref[...], w_res_ref[...], preferred_element_type=jnp.float32)
        + b_res_ref[...]
    )                                                 # (TB, 512) ~ resnet feats
    h1 = jnp.maximum(
        jnp.dot(res.astype(jnp.bfloat16), w_c1_ref[...],
                preferred_element_type=jnp.float32) + b_c1_ref[...], 0.0)
    h2 = jnp.maximum(
        jnp.dot(h1.astype(jnp.bfloat16), w_c2_ref[...],
                preferred_element_type=jnp.float32) + b_c2_ref[...], 0.0)
    # AdaptiveAvgPool2d((1,1)) on a 1x1 spatial map is the identity.

    # ---------------- classifier ----------------
    # concat([vae_lat, h2]) @ W_fc1 == vae_lat @ W_fc1[:L] + h2 @ W_fc1[L:]
    f1 = (
        jnp.dot(vae_lat.astype(jnp.bfloat16), w_fc1_ref[:LATENT_DIM, :],
                preferred_element_type=jnp.float32)
        + jnp.dot(h2.astype(jnp.bfloat16), w_fc1_ref[LATENT_DIM:, :],
                  preferred_element_type=jnp.float32)
        + b_fc1_ref[...]
    )
    f1 = jnp.maximum(f1, 0.0)                         # ReLU; Dropout = identity
    out_ref[...] = (
        jnp.dot(f1.astype(jnp.bfloat16), w_fc2_ref[...],
                preferred_element_type=jnp.float32)
        + b_fc2_ref[...]
    )


def vae_classifier_forward(x, params, tb_target=128):
    """x: (B, 3, 32, 32) NCHW float32 -> (B, NUM_CLASSES) float32."""
    B = x.shape[0]
    # batch tile: 128 rows for MXU fill (use 256 on v6e/v7x if desired);
    # small batches are padded up to a multiple of 8 (sublane alignment).
    tb = tb_target if B >= tb_target else ((B + 7) // 8) * 8
    b_pad = ((B + tb - 1) // tb) * tb
    if b_pad != B:
        x = jnp.pad(x, ((0, b_pad - B), (0, 0), (0, 0), (0, 0)))

    # Inputs shipped as bf16 (halves input HBM traffic; MXU-native).
    # Patchify NCHW -> (n_patches, B, C*ph*pw), patch-major for the kernel.
    xp = (
        x.reshape(b_pad, IMG_C, IMG_H // PATCH, PATCH, IMG_W // PATCH, PATCH)
         .transpose(2, 4, 0, 1, 3, 5)                 # (hp, wp, B, c, ph, pw)
         .reshape(N_PATCH, b_pad, ENC_IN)
         .astype(jnp.bfloat16)
    )
    xf = x.reshape(b_pad, RES_IN).astype(jnp.bfloat16)

    # Weight preprocessing: bf16 weights, f32 biases, vae_latent weight
    # flattened patch-major, encoder bias folded into the latent bias:
    #   b_lat_eff = b_lat + b_enc @ sum_p W_lat[p]
    bf16 = lambda a: a.astype(jnp.bfloat16)
    f32 = lambda a: a.astype(jnp.float32)
    w_lat3 = params["w_lat"]                          # (16, 512, 256) f32
    w_lat = bf16(w_lat3.reshape(VAE_FEAT, LATENT_DIM))
    b_lat = f32(params["b_lat"] + params["b_enc"] @ jnp.sum(w_lat3, axis=0))

    args = (
        xp, xf,
        bf16(params["w_enc"]),
        w_lat, b_lat,
        bf16(params["w_res"]), f32(params["b_res"]),
        bf16(params["w_c1"]), f32(params["b_c1"]),
        bf16(params["w_c2"]), f32(params["b_c2"]),
        bf16(params["w_fc1"]), f32(params["b_fc1"]),
        bf16(params["w_fc2"]), f32(params["b_fc2"]),
    )

    # Weights: full-array blocks with constant index_map -> VMEM-resident.
    def full_spec(a):
        return pl.BlockSpec(a.shape, lambda i: (0,) * a.ndim)

    in_specs = [
        pl.BlockSpec((N_PATCH, tb, ENC_IN), lambda i: (0, i, 0)),   # xp tile
        pl.BlockSpec((tb, RES_IN), lambda i: (i, 0)),               # xf tile
    ] + [full_spec(a) for a in args[2:]]
    out_specs = pl.BlockSpec((tb, NUM_CLASSES), lambda i: (i, 0))

    matmul_sizes = (
        N_PATCH * ENC_IN * ENC_OUT + VAE_FEAT * LATENT_DIM + RES_IN * RES_OUT
        + RES_OUT * CNN1_OUT + CNN1_OUT * CNN2_OUT
        + (LATENT_DIM + CNN2_OUT) * FC1_OUT + FC1_OUT * NUM_CLASSES
    )
    weight_bytes = 2 * (
        ENC_IN * ENC_OUT + VAE_FEAT * LATENT_DIM + RES_IN * RES_OUT
        + RES_OUT * CNN1_OUT + CNN1_OUT * CNN2_OUT
        + (LATENT_DIM + CNN2_OUT) * FC1_OUT + FC1_OUT * NUM_CLASSES
    )
    cost = pl.CostEstimate(
        flops=2 * b_pad * matmul_sizes,
        transcendentals=0,
        bytes_accessed=weight_bytes
        + b_pad * (N_PATCH * ENC_IN + RES_IN) * 2
        + b_pad * NUM_CLASSES * 4,
    )

    out = pl.pallas_call(
        vae_classifier_kernel,
        out_shape=jax.ShapeDtypeStruct((b_pad, NUM_CLASSES), jnp.float32),
        grid=(b_pad // tb,),
        in_specs=in_specs,
        out_specs=out_specs,
        scratch_shapes=[pltpu.VMEM((tb, VAE_FEAT), jnp.bfloat16)],
        compiler_params=pltpu.CompilerParams(
            dimension_semantics=("parallel",),     # v7x: shard batch over 2 TCs
            vmem_limit_bytes=48 << 20,             # ~8 MiB bf16 weights (x2 buf)
        ),                                         # + tiles + scratch; <64 MiB v7x
        cost_estimate=cost,
    )(*args)
    return out[:B]


def init_params(key):
    ks = jax.random.split(key, 16)

    def mat(k, fan_in, shape):
        return (jax.random.normal(k, shape, jnp.float32)
                / jnp.sqrt(jnp.float32(fan_in))).astype(jnp.float32)

    return dict(
        # VAE-encoder stand-in: Conv2d(3, 512, k=8, s=8) as a patch-embed matmul
        w_enc=mat(ks[0], ENC_IN, (ENC_IN, ENC_OUT)),
        b_enc=mat(ks[1], ENC_IN, (1, ENC_OUT)),
        # vae_latent: nn.Linear(512*4*4, 256), stored as 16 per-patch blocks
        w_lat=mat(ks[2], VAE_FEAT, (N_PATCH, ENC_OUT, LATENT_DIM)),
        b_lat=mat(ks[3], VAE_FEAT, (1, LATENT_DIM)),
        # resnet18 stand-in: Linear(3072, 512)
        w_res=mat(ks[4], RES_IN, (RES_IN, RES_OUT)),
        b_res=mat(ks[5], RES_IN, (1, RES_OUT)),
        # cnn_layers conv center taps
        w_c1=mat(ks[6], RES_OUT, (RES_OUT, CNN1_OUT)),
        b_c1=mat(ks[7], RES_OUT, (1, CNN1_OUT)),
        w_c2=mat(ks[8], CNN1_OUT, (CNN1_OUT, CNN2_OUT)),
        b_c2=mat(ks[9], CNN1_OUT, (1, CNN2_OUT)),
        # classifier
        w_fc1=mat(ks[10], LATENT_DIM + CNN2_OUT,
                  (LATENT_DIM + CNN2_OUT, FC1_OUT)),
        b_fc1=mat(ks[11], LATENT_DIM + CNN2_OUT, (1, FC1_OUT)),
        w_fc2=mat(ks[12], FC1_OUT, (FC1_OUT, NUM_CLASSES)),
        b_fc2=mat(ks[13], FC1_OUT, (1, NUM_CLASSES)),
    )


if __name__ == "__main__":
    key = jax.random.PRNGKey(0)
    kx, kp = jax.random.split(key)
    x = jax.random.normal(kx, (2, IMG_C, IMG_H, IMG_W), jnp.float32)  # NCHW
    params = init_params(kp)

    fwd = jax.jit(vae_classifier_forward)
    out = jax.block_until_ready(fwd(x, params))
    assert out.shape == (2, NUM_CLASSES) and out.dtype == jnp.float32
    print("KERNEL_OK")
</pallas_src>

<mosaic_0001>
module attributes {stable_mosaic.version = 11 : i64} {
  func.func @vae_classifier_kernel(%arg0: i32, %arg1: memref<16x8x192xbf16, #tpu.memory_space<vmem>>, %arg2: memref<8x3072xbf16, #tpu.memory_space<vmem>>, %arg3: memref<192x512xbf16, #tpu.memory_space<vmem>>, %arg4: memref<8192x256xbf16, #tpu.memory_space<vmem>>, %arg5: memref<1x256xf32, #tpu.memory_space<vmem>>, %arg6: memref<3072x512xbf16, #tpu.memory_space<vmem>>, %arg7: memref<1x512xf32, #tpu.memory_space<vmem>>, %arg8: memref<512x256xbf16, #tpu.memory_space<vmem>>, %arg9: memref<1x256xf32, #tpu.memory_space<vmem>>, %arg10: memref<256x128xbf16, #tpu.memory_space<vmem>>, %arg11: memref<1x128xf32, #tpu.memory_space<vmem>>, %arg12: memref<384x64xbf16, #tpu.memory_space<vmem>>, %arg13: memref<1x64xf32, #tpu.memory_space<vmem>>, %arg14: memref<64x2xbf16, #tpu.memory_space<vmem>>, %arg15: memref<1x2xf32, #tpu.memory_space<vmem>>, %arg16: memref<8x2xf32, #tpu.memory_space<vmem>>, %arg17: memref<8x8192xbf16, #tpu.memory_space<vmem>>) attributes {dimension_semantics = [#tpu.dimension_semantics<parallel>], iteration_bounds = array<i64: 1>, scalar_prefetch = 0 : i64, scratch_operands = 1 : i64, tpu.core_type = #tpu.core_type<tc>, window_params = [{transform_indices = @transform_0, window_bounds = array<i64: 16, 8, 192>}, {transform_indices = @transform_1, window_bounds = array<i64: 8, 3072>}, {pipeline_mode = #tpu.pipeline_mode<synchronous>, transform_indices = @transform_2, window_bounds = array<i64: 192, 512>}, {pipeline_mode = #tpu.pipeline_mode<synchronous>, transform_indices = @transform_3, window_bounds = array<i64: 8192, 256>}, {pipeline_mode = #tpu.pipeline_mode<synchronous>, transform_indices = @transform_4, window_bounds = array<i64: 1, 256>}, {pipeline_mode = #tpu.pipeline_mode<synchronous>, transform_indices = @transform_5, window_bounds = array<i64: 3072, 512>}, {pipeline_mode = #tpu.pipeline_mode<synchronous>, transform_indices = @transform_6, window_bounds = array<i64: 1, 512>}, {pipeline_mode = #tpu.pipeline_mode<synchronous>, transform_indices = @transform_7, window_bounds = array<i64: 512, 256>}, {pipeline_mode = #tpu.pipeline_mode<synchronous>, transform_indices = @transform_8, window_bounds = array<i64: 1, 256>}, {pipeline_mode = #tpu.pipeline_mode<synchronous>, transform_indices = @transform_9, window_bounds = array<i64: 256, 128>}, {pipeline_mode = #tpu.pipeline_mode<synchronous>, transform_indices = @transform_10, window_bounds = array<i64: 1, 128>}, {pipeline_mode = #tpu.pipeline_mode<synchronous>, transform_indices = @transform_11, window_bounds = array<i64: 384, 64>}, {pipeline_mode = #tpu.pipeline_mode<synchronous>, transform_indices = @transform_12, window_bounds = array<i64: 1, 64>}, {pipeline_mode = #tpu.pipeline_mode<synchronous>, transform_indices = @transform_13, window_bounds = array<i64: 64, 2>}, {pipeline_mode = #tpu.pipeline_mode<synchronous>, transform_indices = @transform_14, window_bounds = array<i64: 1, 2>}, {transform_indices = @transform_15, window_bounds = array<i64: 8, 2>}]} {
    %c0 = arith.constant 0 : index
    %c0_0 = arith.constant 0 : index
    %c0_1 = arith.constant 0 : index
    %0 = vector.load %arg1[%c0, %c0_0, %c0_1] : memref<16x8x192xbf16, #tpu.memory_space<vmem>>, vector<16x8x192xbf16>
    %1 = vector.shape_cast %0 : vector<16x8x192xbf16> to vector<128x192xbf16>
    %c0_2 = arith.constant 0 : index
    %c0_3 = arith.constant 0 : index
    %2 = vector.load %arg3[%c0_2, %c0_3] : memref<192x512xbf16, #tpu.memory_space<vmem>>, vector<192x512xbf16>
    %cst = arith.constant dense<0.000000e+00> : vector<128x512xf32>
    %3 = tpu.matmul %1, %2, %cst {dimension_numbers = #tpu.dot_dimension_numbers<[1], [0], [0], [1], [0, 0, 1, 1], [], []>} : vector<128x192xbf16>, vector<192x512xbf16>, vector<128x512xf32> -> vector<128x512xf32>
    %4 = arith.truncf %3 : vector<128x512xf32> to vector<128x512xbf16>
    %5 = vector.extract_strided_slice %4 {offsets = [0, 0], sizes = [8, 512], strides = [1, 1]} : vector<128x512xbf16> to vector<8x512xbf16>
    %c0_4 = arith.constant 0 : index
    %c0_5 = arith.constant 0 : index
    %6 = vector.load %arg17[%c0_4, %c0_5] : memref<8x8192xbf16, #tpu.memory_space<vmem>>, vector<8x512xbf16>
    tpu.vector_store %arg17[%c0_4, %c0_5], %5 {strides = array<i32>} : memref<8x8192xbf16, #tpu.memory_space<vmem>>, vector<8x512xbf16>,
    %7 = vector.extract_strided_slice %4 {offsets = [8, 0], sizes = [8, 512], strides = [1, 1]} : vector<128x512xbf16> to vector<8x512xbf16>
    %c0_6 = arith.constant 0 : index
    %c512 = arith.constant 512 : index
    %8 = vector.load %arg17[%c0_6, %c512] : memref<8x8192xbf16, #tpu.memory_space<vmem>>, vector<8x512xbf16>
    tpu.vector_store %arg17[%c0_6, %c512], %7 {strides = array<i32>} : memref<8x8192xbf16, #tpu.memory_space<vmem>>, vector<8x512xbf16>,
    %9 = vector.extract_strided_slice %4 {offsets = [16, 0], sizes = [8, 512], strides = [1, 1]} : vector<128x512xbf16> to vector<8x512xbf16>
    %c0_7 = arith.constant 0 : index
    %c1024 = arith.constant 1024 : index
    %10 = vector.load %arg17[%c0_7, %c1024] : memref<8x8192xbf16, #tpu.memory_space<vmem>>, vector<8x512xbf16>
    tpu.vector_store %arg17[%c0_7, %c1024], %9 {strides = array<i32>} : memref<8x8192xbf16, #tpu.memory_space<vmem>>, vector<8x512xbf16>,
    %11 = vector.extract_strided_slice %4 {offsets = [24, 0], sizes = [8, 512], strides = [1, 1]} : vector<128x512xbf16> to vector<8x512xbf16>
    %c0_8 = arith.constant 0 : index
    %c1536 = arith.constant 1536 : index
    %12 = vector.load %arg17[%c0_8, %c1536] : memref<8x8192xbf16, #tpu.memory_space<vmem>>, vector<8x512xbf16>
    tpu.vector_store %arg17[%c0_8, %c1536], %11 {strides = array<i32>} : memref<8x8192xbf16, #tpu.memory_space<vmem>>, vector<8x512xbf16>,
    %13 = vector.extract_strided_slice %4 {offsets = [32, 0], sizes = [8, 512], strides = [1, 1]} : vector<128x512xbf16> to vector<8x512xbf16>
    %c0_9 = arith.constant 0 : index
    %c2048 = arith.constant 2048 : index
    %14 = vector.load %arg17[%c0_9, %c2048] : memref<8x8192xbf16, #tpu.memory_space<vmem>>, vector<8x512xbf16>
    tpu.vector_store %arg17[%c0_9, %c2048], %13 {strides = array<i32>} : memref<8x8192xbf16, #tpu.memory_space<vmem>>, vector<8x512xbf16>,
    %15 = vector.extract_strided_slice %4 {offsets = [40, 0], sizes = [8, 512], strides = [1, 1]} : vector<128x512xbf16> to vector<8x512xbf16>
    %c0_10 = arith.constant 0 : index
    %c2560 = arith.constant 2560 : index
    %16 = vector.load %arg17[%c0_10, %c2560] : memref<8x8192xbf16, #tpu.memory_space<vmem>>, vector<8x512xbf16>
    tpu.vector_store %arg17[%c0_10, %c2560], %15 {strides = array<i32>} : memref<8x8192xbf16, #tpu.memory_space<vmem>>, vector<8x512xbf16>,
    %17 = vector.extract_strided_slice %4 {offsets = [48, 0], sizes = [8, 512], strides = [1, 1]} : vector<128x512xbf16> to vector<8x512xbf16>
    %c0_11 = arith.constant 0 : index
    %c3072 = arith.constant 3072 : index
    %18 = vector.load %arg17[%c0_11, %c3072] : memref<8x8192xbf16, #tpu.memory_space<vmem>>, vector<8x512xbf16>
    tpu.vector_store %arg17[%c0_11, %c3072], %17 {strides = array<i32>} : memref<8x8192xbf16, #tpu.memory_space<vmem>>, vector<8x512xbf16>,
    %19 = vector.extract_strided_slice %4 {offsets = [56, 0], sizes = [8, 512], strides = [1, 1]} : vector<128x512xbf16> to vector<8x512xbf16>
    %c0_12 = arith.constant 0 : index
    %c3584 = arith.constant 3584 : index
    %20 = vector.load %arg17[%c0_12, %c3584] : memref<8x8192xbf16, #tpu.memory_space<vmem>>, vector<8x512xbf16>
    tpu.vector_store %arg17[%c0_12, %c3584], %19 {strides = array<i32>} : memref<8x8192xbf16, #tpu.memory_space<vmem>>, vector<8x512xbf16>,
    %21 = vector.extract_strided_slice %4 {offsets = [64, 0], sizes = [8, 512], strides = [1, 1]} : vector<128x512xbf16> to vector<8x512xbf16>
    %c0_13 = arith.constant 0 : index
    %c4096 = arith.constant 4096 : index
    %22 = vector.load %arg17[%c0_13, %c4096] : memref<8x8192xbf16, #tpu.memory_space<vmem>>, vector<8x512xbf16>
    tpu.vector_store %arg17[%c0_13, %c4096], %21 {strides = array<i32>} : memref<8x8192xbf16, #tpu.memory_space<vmem>>, vector<8x512xbf16>,
    %23 = vector.extract_strided_slice %4 {offsets = [72, 0], sizes = [8, 512], strides = [1, 1]} : vector<128x512xbf16> to vector<8x512xbf16>
    %c0_14 = arith.constant 0 : index
    %c4608 = arith.constant 4608 : index
    %24 = vector.load %arg17[%c0_14, %c4608] : memref<8x8192xbf16, #tpu.memory_space<vmem>>, vector<8x512xbf16>
    tpu.vector_store %arg17[%c0_14, %c4608], %23 {strides = array<i32>} : memref<8x8192xbf16, #tpu.memory_space<vmem>>, vector<8x512xbf16>,
    %25 = vector.extract_strided_slice %4 {offsets = [80, 0], sizes = [8, 512], strides = [1, 1]} : vector<128x512xbf16> to vector<8x512xbf16>
    %c0_15 = arith.constant 0 : index
    %c5120 = arith.constant 5120 : index
    %26 = vector.load %arg17[%c0_15, %c5120] : memref<8x8192xbf16, #tpu.memory_space<vmem>>, vector<8x512xbf16>
    tpu.vector_store %arg17[%c0_15, %c5120], %25 {strides = array<i32>} : memref<8x8192xbf16, #tpu.memory_space<vmem>>, vector<8x512xbf16>,
    %27 = vector.extract_strided_slice %4 {offsets = [88, 0], sizes = [8, 512], strides = [1, 1]} : vector<128x512xbf16> to vector<8x512xbf16>
    %c0_16 = arith.constant 0 : index
    %c5632 = arith.constant 5632 : index
    %28 = vector.load %arg17[%c0_16, %c5632] : memref<8x8192xbf16, #tpu.memory_space<vmem>>, vector<8x512xbf16>
    tpu.vector_store %arg17[%c0_16, %c5632], %27 {strides = array<i32>} : memref<8x8192xbf16, #tpu.memory_space<vmem>>, vector<8x512xbf16>,
    %29 = vector.extract_strided_slice %4 {offsets = [96, 0], sizes = [8, 512], strides = [1, 1]} : vector<128x512xbf16> to vector<8x512xbf16>
    %c0_17 = arith.constant 0 : index
    %c6144 = arith.constant 6144 : index
    %30 = vector.load %arg17[%c0_17, %c6144] : memref<8x8192xbf16, #tpu.memory_space<vmem>>, vector<8x512xbf16>
    tpu.vector_store %arg17[%c0_17, %c6144], %29 {strides = array<i32>} : memref<8x8192xbf16, #tpu.memory_space<vmem>>, vector<8x512xbf16>,
    %31 = vector.extract_strided_slice %4 {offsets = [104, 0], sizes = [8, 512], strides = [1, 1]} : vector<128x512xbf16> to vector<8x512xbf16>
    %c0_18 = arith.constant 0 : index
    %c6656 = arith.constant 6656 : index
    %32 = vector.load %arg17[%c0_18, %c6656] : memref<8x8192xbf16, #tpu.memory_space<vmem>>, vector<8x512xbf16>
    tpu.vector_store %arg17[%c0_18, %c6656], %31 {strides = array<i32>} : memref<8x8192xbf16, #tpu.memory_space<vmem>>, vector<8x512xbf16>,
    %33 = vector.extract_strided_slice %4 {offsets = [112, 0], sizes = [8, 512], strides = [1, 1]} : vector<128x512xbf16> to vector<8x512xbf16>
    %c0_19 = arith.constant 0 : index
    %c7168 = arith.constant 7168 : index
    %34 = vector.load %arg17[%c0_19, %c7168] : memref<8x8192xbf16, #tpu.memory_space<vmem>>, vector<8x512xbf16>
    tpu.vector_store %arg17[%c0_19, %c7168], %33 {strides = array<i32>} : memref<8x8192xbf16, #tpu.memory_space<vmem>>, vector<8x512xbf16>,
    %35 = vector.extract_strided_slice %4 {offsets = [120, 0], sizes = [8, 512], strides = [1, 1]} : vector<128x512xbf16> to vector<8x512xbf16>
    %c0_20 = arith.constant 0 : index
    %c7680 = arith.constant 7680 : index
    %36 = vector.load %arg17[%c0_20, %c7680] : memref<8x8192xbf16, #tpu.memory_space<vmem>>, vector<8x512xbf16>
    tpu.vector_store %arg17[%c0_20, %c7680], %35 {strides = array<i32>} : memref<8x8192xbf16, #tpu.memory_space<vmem>>, vector<8x512xbf16>,
    %c0_21 = arith.constant 0 : index
    %c0_22 = arith.constant 0 : index
    %37 = vector.load %arg17[%c0_21, %c0_22] : memref<8x8192xbf16, #tpu.memory_space<vmem>>, vector<8x8192xbf16>
    %c0_23 = arith.constant 0 : index
    %c0_24 = arith.constant 0 : index
    %38 = vector.load %arg4[%c0_23, %c0_24] : memref<8192x256xbf16, #tpu.memory_space<vmem>>, vector<8192x256xbf16>
    %cst_25 = arith.constant dense<0.000000e+00> : vector<8x256xf32>
    %39 = tpu.matmul %37, %38, %cst_25 {dimension_numbers = #tpu.dot_dimension_numbers<[1], [0], [0], [1], [0, 0, 1, 1], [], []>} : vector<8x8192xbf16>, vector<8192x256xbf16>, vector<8x256xf32> -> vector<8x256xf32>
    %c0_26 = arith.constant 0 : index
    %c0_27 = arith.constant 0 : index
    %40 = vector.load %arg5[%c0_26, %c0_27] : memref<1x256xf32, #tpu.memory_space<vmem>>, vector<1x256xf32>
    %41 = vector.broadcast %40 : vector<1x256xf32> to vector<8x256xf32>
    %42 = arith.addf %39, %41 : vector<8x256xf32>
    %cst_28 = arith.constant 0.000000e+00 : f32
    %43 = vector.broadcast %cst_28 : f32 to vector<8x256xf32>
    %44 = arith.maximumf %42, %43 : vector<8x256xf32>
    %c0_29 = arith.constant 0 : index
    %c0_30 = arith.constant 0 : index
    %45 = vector.load %arg2[%c0_29, %c0_30] : memref<8x3072xbf16, #tpu.memory_space<vmem>>, vector<8x3072xbf16>
    %c0_31 = arith.constant 0 : index
    %c0_32 = arith.constant 0 : index
    %46 = vector.load %arg6[%c0_31, %c0_32] : memref<3072x512xbf16, #tpu.memory_space<vmem>>, vector<3072x512xbf16>
    %cst_33 = arith.constant dense<0.000000e+00> : vector<8x512xf32>
    %47 = tpu.matmul %45, %46, %cst_33 {dimension_numbers = #tpu.dot_dimension_numbers<[1], [0], [0], [1], [0, 0, 1, 1], [], []>} : vector<8x3072xbf16>, vector<3072x512xbf16>, vector<8x512xf32> -> vector<8x512xf32>
    %c0_34 = arith.constant 0 : index
    %c0_35 = arith.constant 0 : index
    %48 = vector.load %arg7[%c0_34, %c0_35] : memref<1x512xf32, #tpu.memory_space<vmem>>, vector<1x512xf32>
    %49 = vector.broadcast %48 : vector<1x512xf32> to vector<8x512xf32>
    %50 = arith.addf %47, %49 : vector<8x512xf32>
    %51 = arith.truncf %50 : vector<8x512xf32> to vector<8x512xbf16>
    %c0_36 = arith.constant 0 : index
    %c0_37 = arith.constant 0 : index
    %52 = vector.load %arg8[%c0_36, %c0_37] : memref<512x256xbf16, #tpu.memory_space<vmem>>, vector<512x256xbf16>
    %cst_38 = arith.constant dense<0.000000e+00> : vector<8x256xf32>
    %53 = tpu.matmul %51, %52, %cst_38 {dimension_numbers = #tpu.dot_dimension_numbers<[1], [0], [0], [1], [0, 0, 1, 1], [], []>} : vector<8x512xbf16>, vector<512x256xbf16>, vector<8x256xf32> -> vector<8x256xf32>
    %c0_39 = arith.constant 0 : index
    %c0_40 = arith.constant 0 : index
    %54 = vector.load %arg9[%c0_39, %c0_40] : memref<1x256xf32, #tpu.memory_space<vmem>>, vector<1x256xf32>
    %55 = vector.broadcast %54 : vector<1x256xf32> to vector<8x256xf32>
    %56 = arith.addf %53, %55 : vector<8x256xf32>
    %cst_41 = arith.constant 0.000000e+00 : f32
    %57 = vector.broadcast %cst_41 : f32 to vector<8x256xf32>
    %58 = arith.maximumf %56, %57 : vector<8x256xf32>
    %59 = arith.truncf %58 : vector<8x256xf32> to vector<8x256xbf16>
    %c0_42 = arith.constant 0 : index
    %c0_43 = arith.constant 0 : index
    %60 = vector.load %arg10[%c0_42, %c0_43] : memref<256x128xbf16, #tpu.memory_space<vmem>>, vector<256x128xbf16>
    %cst_44 = arith.constant dense<0.000000e+00> : vector<8x128xf32>
    %61 = tpu.matmul %59, %60, %cst_44 {dimension_numbers = #tpu.dot_dimension_numbers<[1], [0], [0], [1], [0, 0, 1, 1], [], []>} : vector<8x256xbf16>, vector<256x128xbf16>, vector<8x128xf32> -> vector<8x128xf32>
    %c0_45 = arith.constant 0 : index
    %c0_46 = arith.constant 0 : index
    %62 = vector.load %arg11[%c0_45, %c0_46] : memref<1x128xf32, #tpu.memory_space<vmem>>, vector<1x128xf32>
    %63 = vector.broadcast %62 : vector<1x128xf32> to vector<8x128xf32>
    %64 = arith.addf %61, %63 : vector<8x128xf32>
    %cst_47 = arith.constant 0.000000e+00 : f32
    %65 = vector.broadcast %cst_47 : f32 to vector<8x128xf32>
    %66 = arith.maximumf %64, %65 : vector<8x128xf32>
    %67 = arith.truncf %44 : vector<8x256xf32> to vector<8x256xbf16>
    %c0_48 = arith.constant 0 : index
    %c0_49 = arith.constant 0 : index
    %68 = vector.load %arg12[%c0_48, %c0_49] : memref<384x64xbf16, #tpu.memory_space<vmem>>, vector<256x64xbf16>
    %cst_50 = arith.constant dense<0.000000e+00> : vector<8x64xf32>
    %69 = tpu.matmul %67, %68, %cst_50 {dimension_numbers = #tpu.dot_dimension_numbers<[1], [0], [0], [1], [0, 0, 1, 1], [], []>} : vector<8x256xbf16>, vector<256x64xbf16>, vector<8x64xf32> -> vector<8x64xf32>
    %70 = arith.truncf %66 : vector<8x128xf32> to vector<8x128xbf16>
    %c256 = arith.constant 256 : index
    %c0_51 = arith.constant 0 : index
    %71 = vector.load %arg12[%c256, %c0_51] : memref<384x64xbf16, #tpu.memory_space<vmem>>, vector<128x64xbf16>
    %cst_52 = arith.constant dense<0.000000e+00> : vector<8x64xf32>
    %72 = tpu.matmul %70, %71, %cst_52 {dimension_numbers = #tpu.dot_dimension_numbers<[1], [0], [0], [1], [0, 0, 1, 1], [], []>} : vector<8x128xbf16>, vector<128x64xbf16>, vector<8x64xf32> -> vector<8x64xf32>
    %73 = arith.addf %69, %72 : vector<8x64xf32>
    %c0_53 = arith.constant 0 : index
    %c0_54 = arith.constant 0 : index
    %74 = vector.load %arg13[%c0_53, %c0_54] : memref<1x64xf32, #tpu.memory_space<vmem>>, vector<1x64xf32>
    %75 = vector.broadcast %74 : vector<1x64xf32> to vector<8x64xf32>
    %76 = arith.addf %73, %75 : vector<8x64xf32>
    %cst_55 = arith.constant 0.000000e+00 : f32
    %77 = vector.broadcast %cst_55 : f32 to vector<8x64xf32>
    %78 = arith.maximumf %76, %77 : vector<8x64xf32>
    %79 = arith.truncf %78 : vector<8x64xf32> to vector<8x64xbf16>
    %c0_56 = arith.constant 0 : index
    %c0_57 = arith.constant 0 : index
    %80 = vector.load %arg14[%c0_56, %c0_57] : memref<64x2xbf16, #tpu.memory_space<vmem>>, vector<64x2xbf16>
    %cst_58 = arith.constant dense<0.000000e+00> : vector<8x2xf32>
    %81 = tpu.matmul %79, %80, %cst_58 {dimension_numbers = #tpu.dot_dimension_numbers<[1], [0], [0], [1], [0, 0, 1, 1], [], []>} : vector<8x64xbf16>, vector<64x2xbf16>, vector<8x2xf32> -> vector<8x2xf32>
    %c0_59 = arith.constant 0 : index
    %c0_60 = arith.constant 0 : index
    %82 = vector.load %arg15[%c0_59, %c0_60] : memref<1x2xf32, #tpu.memory_space<vmem>>, vector<1x2xf32>
    %83 = vector.broadcast %82 : vector<1x2xf32> to vector<8x2xf32>
    %84 = arith.addf %81, %83 : vector<8x2xf32>
    %c0_61 = arith.constant 0 : index
    %c0_62 = arith.constant 0 : index
    %85 = vector.load %arg16[%c0_61, %c0_62] : memref<8x2xf32, #tpu.memory_space<vmem>>, vector<8x2xf32>
    tpu.vector_store %arg16[%c0_61, %c0_62], %84 {strides = array<i32>} : memref<8x2xf32, #tpu.memory_space<vmem>>, vector<8x2xf32>,
    return
  }
  func.func @transform_0(%arg0: i32) -> (i32, i32, i32) {
    %c0_i32 = arith.constant 0 : i32
    %c0_i32_0 = arith.constant 0 : i32
    %c0_i32_1 = arith.constant 0 : i32
    return %c0_i32, %arg0, %c0_i32_0 : i32, i32, i32
  }
  func.func @transform_1(%arg0: i32) -> (i32, i32) {
    %c0_i32 = arith.constant 0 : i32
    %c0_i32_0 = arith.constant 0 : i32
    return %arg0, %c0_i32 : i32, i32
  }
  func.func @transform_2(%arg0: i32) -> (i32, i32) {
    %c0_i32 = arith.constant 0 : i32
    %c0_i32_0 = arith.constant 0 : i32
    %c0_i32_1 = arith.constant 0 : i32
    return %c0_i32, %c0_i32_0 : i32, i32
  }
  func.func @transform_3(%arg0: i32) -> (i32, i32) {
    %c0_i32 = arith.constant 0 : i32
    %c0_i32_0 = arith.constant 0 : i32
    %c0_i32_1 = arith.constant 0 : i32
    return %c0_i32, %c0_i32_0 : i32, i32
  }
  func.func @transform_4(%arg0: i32) -> (i32, i32) {
    %c0_i32 = arith.constant 0 : i32
    %c0_i32_0 = arith.constant 0 : i32
    %c0_i32_1 = arith.constant 0 : i32
    return %c0_i32, %c0_i32_0 : i32, i32
  }
  func.func @transform_5(%arg0: i32) -> (i32, i32) {
    %c0_i32 = arith.constant 0 : i32
    %c0_i32_0 = arith.constant 0 : i32
    %c0_i32_1 = arith.constant 0 : i32
    return %c0_i32, %c0_i32_0 : i32, i32
  }
  func.func @transform_6(%arg0: i32) -> (i32, i32) {
    %c0_i32 = arith.constant 0 : i32
    %c0_i32_0 = arith.constant 0 : i32
    %c0_i32_1 = arith.constant 0 : i32
    return %c0_i32, %c0_i32_0 : i32, i32
  }
  func.func @transform_7(%arg0: i32) -> (i32, i32) {
    %c0_i32 = arith.constant 0 : i32
    %c0_i32_0 = arith.constant 0 : i32
    %c0_i32_1 = arith.constant 0 : i32
    return %c0_i32, %c0_i32_0 : i32, i32
  }
  func.func @transform_8(%arg0: i32) -> (i32, i32) {
    %c0_i32 = arith.constant 0 : i32
    %c0_i32_0 = arith.constant 0 : i32
    %c0_i32_1 = arith.constant 0 : i32
    return %c0_i32, %c0_i32_0 : i32, i32
  }
  func.func @transform_9(%arg0: i32) -> (i32, i32) {
    %c0_i32 = arith.constant 0 : i32
    %c0_i32_0 = arith.constant 0 : i32
    %c0_i32_1 = arith.constant 0 : i32
    return %c0_i32, %c0_i32_0 : i32, i32
  }
  func.func @transform_10(%arg0: i32) -> (i32, i32) {
    %c0_i32 = arith.constant 0 : i32
    %c0_i32_0 = arith.constant 0 : i32
    %c0_i32_1 = arith.constant 0 : i32
    return %c0_i32, %c0_i32_0 : i32, i32
  }
  func.func @transform_11(%arg0: i32) -> (i32, i32) {
    %c0_i32 = arith.constant 0 : i32
    %c0_i32_0 = arith.constant 0 : i32
    %c0_i32_1 = arith.constant 0 : i32
    return %c0_i32, %c0_i32_0 : i32, i32
  }
  func.func @transform_12(%arg0: i32) -> (i32, i32) {
    %c0_i32 = arith.constant 0 : i32
    %c0_i32_0 = arith.constant 0 : i32
    %c0_i32_1 = arith.constant 0 : i32
    return %c0_i32, %c0_i32_0 : i32, i32
  }
  func.func @transform_13(%arg0: i32) -> (i32, i32) {
    %c0_i32 = arith.constant 0 : i32
    %c0_i32_0 = arith.constant 0 : i32
    %c0_i32_1 = arith.constant 0 : i32
    return %c0_i32, %c0_i32_0 : i32, i32
  }
  func.func @transform_14(%arg0: i32) -> (i32, i32) {
    %c0_i32 = arith.constant 0 : i32
    %c0_i32_0 = arith.constant 0 : i32
    %c0_i32_1 = arith.constant 0 : i32
    return %c0_i32, %c0_i32_0 : i32, i32
  }
  func.func @transform_15(%arg0: i32) -> (i32, i32) {
    %c0_i32 = arith.constant 0 : i32
    %c0_i32_0 = arith.constant 0 : i32
    return %arg0, %c0_i32 : i32, i32
  }
}

</mosaic_0001>

<llo_original>
// kernel: vae_classifier_forward.1
$region0: #{vae_classifier_forward.1}
  #allocation0 [shape = 'u32[]', space=smem, size = 0x4, offset = 0x4, fixed_abs, tag = 'smem constant byte address 0x4 - core index']
  #allocation1 [shape = 'u32[144,128]{1,0:T(1,128)}', space=vmem, size = 0x12000, scoped, tag = 'internal scratch']
  #allocation2 [shape = 'bf16[8,8192]{1,0:T(8,128)(2,1)}', space=vmem, size = 0x20000, scoped, tag = 'scratch operand']
  %s0 = inlined_call_operand.vmem [shape: bf16[16,8,192], index: 0, kind: input, shape index: {}]
  %s1 = inlined_call_operand.vmem [shape: bf16[8,3072], index: 1, kind: input, shape index: {}]
  %s2 = inlined_call_operand.vmem [shape: bf16[192,512], index: 2, kind: input, shape index: {}]
  %s3 = inlined_call_operand.vmem [shape: bf16[8192,256], index: 3, kind: input, shape index: {}]
  %s4 = inlined_call_operand.vmem [shape: f32[1,256], index: 4, kind: input, shape index: {}]
  %s5 = inlined_call_operand.vmem [shape: bf16[3072,512], index: 5, kind: input, shape index: {}]
  %s6 = inlined_call_operand.vmem [shape: f32[1,512], index: 6, kind: input, shape index: {}]
  %s7 = inlined_call_operand.vmem [shape: bf16[512,256], index: 7, kind: input, shape index: {}]
  %s8 = inlined_call_operand.vmem [shape: f32[1,256], index: 8, kind: input, shape index: {}]
  %s9 = inlined_call_operand.vmem [shape: bf16[256,128], index: 9, kind: input, shape index: {}]
  %s10 = inlined_call_operand.vmem [shape: f32[1,128], index: 10, kind: input, shape index: {}]
  %s11 = inlined_call_operand.vmem [shape: bf16[384,64], index: 11, kind: input, shape index: {}]
  %s12 = inlined_call_operand.vmem [shape: f32[1,64], index: 12, kind: input, shape index: {}]
  %s13 = inlined_call_operand.vmem [shape: bf16[64,2], index: 13, kind: input, shape index: {}]
  %s14 = inlined_call_operand.vmem [shape: f32[1,2], index: 14, kind: input, shape index: {}]
  %s15 = inlined_call_operand.vmem [shape: f32[8,2], index: 15, kind: output, shape index: {}]
  %s16 = sld [smem:[#allocation0]]
  $region70: #{vae_classifier_forward.1} parent=0
    _
  %s18 = ssub.s32 1, %s16
  %s19 = scalar_select 0, %s18, %s16
  // Predicated region
  $region2: #{vae_classifier_forward.1} parent=0 // pred_check
    _
  $region3: #{vae_classifier_forward.1} parent=0 // pred_check_branch
    %21 = sbr.rel (0) target = $region5
  $region4: #{vae_classifier_forward.1} parent=0 // pred_region
    _
  $region5: #{vae_classifier_forward.1} parent=0 // pred_fallthru
    _
  // Predicated region
  $region6: #{vae_classifier_forward.1} parent=0 // pred_check
    _
  $region7: #{vae_classifier_forward.1} parent=0 // pred_check_branch
    %23 = sbr.rel (0) target = $region9
  $region8: #{vae_classifier_forward.1} parent=0 // pred_region
    _
  $region9: #{vae_classifier_forward.1} parent=0 // pred_fallthru
    _
  // Predicated region
  $region10: #{vae_classifier_forward.1} parent=0 // pred_check
    _
  $region11: #{vae_classifier_forward.1} parent=0 // pred_check_branch
    %25 = sbr.rel (0) target = $region13
  $region12: #{vae_classifier_forward.1} parent=0 // pred_region
    _
  $region13: #{vae_classifier_forward.1} parent=0 // pred_fallthru
    _
  // Predicated region
  $region14: #{vae_classifier_forward.1} parent=0 // pred_check
    _
  $region15: #{vae_classifier_forward.1} parent=0 // pred_check_branch
    %27 = sbr.rel (0) target = $region17
  $region16: #{vae_classifier_forward.1} parent=0 // pred_region
    _
  $region17: #{vae_classifier_forward.1} parent=0 // pred_fallthru
    _
  // Predicated region
  $region18: #{vae_classifier_forward.1} parent=0 // pred_check
    _
  $region19: #{vae_classifier_forward.1} parent=0 // pred_check_branch
    %29 = sbr.rel (0) target = $region21
  $region20: #{vae_classifier_forward.1} parent=0 // pred_region
    _
  $region21: #{vae_classifier_forward.1} parent=0 // pred_fallthru
    _
  // Predicated region
  $region22: #{vae_classifier_forward.1} parent=0 // pred_check
    _
  $region23: #{vae_classifier_forward.1} parent=0 // pred_check_branch
    %31 = sbr.rel (0) target = $region25
  $region24: #{vae_classifier_forward.1} parent=0 // pred_region
    _
  $region25: #{vae_classifier_forward.1} parent=0 // pred_fallthru
    _
  // Predicated region
  $region26: #{vae_classifier_forward.1} parent=0 // pred_check
    _
  $region27: #{vae_classifier_forward.1} parent=0 // pred_check_branch
    %33 = sbr.rel (0) target = $region29
  $region28: #{vae_classifier_forward.1} parent=0 // pred_region
    _
  $region29: #{vae_classifier_forward.1} parent=0 // pred_fallthru
    _
  // Predicated region
  $region30: #{vae_classifier_forward.1} parent=0 // pred_check
    _
  $region31: #{vae_classifier_forward.1} parent=0 // pred_check_branch
    %35 = sbr.rel (0) target = $region33
  $region32: #{vae_classifier_forward.1} parent=0 // pred_region
    _
  $region33: #{vae_classifier_forward.1} parent=0 // pred_fallthru
    _
  // Predicated region
  $region34: #{vae_classifier_forward.1} parent=0 // pred_check
    _
  $region35: #{vae_classifier_forward.1} parent=0 // pred_check_branch
    %37 = sbr.rel (0) target = $region37
  $region36: #{vae_classifier_forward.1} parent=0 // pred_region
    _
  $region37: #{vae_classifier_forward.1} parent=0 // pred_fallthru
    _
  // Predicated region
  $region38: #{vae_classifier_forward.1} parent=0 // pred_check
    _
  $region39: #{vae_classifier_forward.1} parent=0 // pred_check_branch
    %39 = sbr.rel (0) target = $region41
  $region40: #{vae_classifier_forward.1} parent=0 // pred_region
    _
  $region41: #{vae_classifier_forward.1} parent=0 // pred_fallthru
    _
  // Predicated region
  $region42: #{vae_classifier_forward.1} parent=0 // pred_check
    _
  $region43: #{vae_classifier_forward.1} parent=0 // pred_check_branch
    %41 = sbr.rel (0) target = $region45
  $region44: #{vae_classifier_forward.1} parent=0 // pred_region
    _
  $region45: #{vae_classifier_forward.1} parent=0 // pred_fallthru
    _
  // Predicated region
  $region46: #{vae_classifier_forward.1} parent=0 // pred_check
    _
  $region47: #{vae_classifier_forward.1} parent=0 // pred_check_branch
    %43 = sbr.rel (0) target = $region49
  $region48: #{vae_classifier_forward.1} parent=0 // pred_region
    _
  $region49: #{vae_classifier_forward.1} parent=0 // pred_fallthru
    _
  // Predicated region
  $region50: #{vae_classifier_forward.1} parent=0 // pred_check
    _
  $region51: #{vae_classifier_forward.1} parent=0 // pred_check_branch
    %45 = sbr.rel (0) target = $region53
  $region52: #{vae_classifier_forward.1} parent=0 // pred_region
    _
  $region53: #{vae_classifier_forward.1} parent=0 // pred_fallthru
    _
  // Predicated region
  $region54: #{vae_classifier_forward.1} parent=0 // pred_check
    _
  $region55: #{vae_classifier_forward.1} parent=0 // pred_check_branch
    %47 = sbr.rel (0) target = $region57
  $region56: #{vae_classifier_forward.1} parent=0 // pred_region
    _
  $region57: #{vae_classifier_forward.1} parent=0 // pred_fallthru
    _
  // Predicated region
  $region58: #{vae_classifier_forward.1} parent=0 // pred_check
    _
  $region59: #{vae_classifier_forward.1} parent=0 // pred_check_branch
    %49 = sbr.rel (0) target = $region61
  $region60: #{vae_classifier_forward.1} parent=0 // pred_region
    _
  $region61: #{vae_classifier_forward.1} parent=0 // pred_fallthru
    _
  %v51 = vld [vmem:[%s0] sm:$0xff]
  %v52 = vld [vmem:[%s0 + $0x8] sm:$0xff]
  %v53 = vld [vmem:[%s0 + $0x10] sm:$0xff]
  %v54 = vld [vmem:[%s0 + $0x18] sm:$0xff]
  %v55 = vld [vmem:[%s0 + $0x20] sm:$0xff]
  %v56 = vld [vmem:[%s0 + $0x28] sm:$0xff]
  %v57 = vld [vmem:[%s0 + $0x30] sm:$0xff]
  %v58 = vld [vmem:[%s0 + $0x38] sm:$0xff]
  %v59 = vld [vmem:[%s0 + $0x40] sm:$0xff]
  %v60 = vld [vmem:[%s0 + $0x48] sm:$0xff]
  %v61 = vld [vmem:[%s0 + $0x50] sm:$0xff]
  %v62 = vld [vmem:[%s0 + $0x58] sm:$0xff]
  %v63 = vld [vmem:[%s0 + $0x60] sm:$0xff]
  %v64 = vld [vmem:[%s0 + $0x68] sm:$0xff]
  %v65 = vld [vmem:[%s0 + $0x70] sm:$0xff]
  %v66 = vld [vmem:[%s0 + $0x78] sm:$0xff]
  %v67 = vld [vmem:[%s2] sm:$0xff]
  %v68 = vld [vmem:[%s2 + $0x8] sm:$0xff]
  %v69 = vld [vmem:[%s2 + $0x10] sm:$0xff]
  %v70 = vld [vmem:[%s2 + $0x18] sm:$0xff]
  %v71 = vld [vmem:[%s2 + $0x20] sm:$0xff]
  %v72 = vld [vmem:[%s2 + $0x28] sm:$0xff]
  %v73 = vld [vmem:[%s2 + $0x30] sm:$0xff]
  %v74 = vld [vmem:[%s2 + $0x38] sm:$0xff]
  %v75 = vld [vmem:[%s2 + $0x40] sm:$0xff]
  %v76 = vld [vmem:[%s2 + $0x48] sm:$0xff]
  %v77 = vld [vmem:[%s2 + $0x50] sm:$0xff]
  %v78 = vld [vmem:[%s2 + $0x58] sm:$0xff]
  %v79 = vld [vmem:[%s2 + $0x60] sm:$0xff]
  %v80 = vld [vmem:[%s2 + $0x68] sm:$0xff]
  %v81 = vld [vmem:[%s2 + $0x70] sm:$0xff]
  %v82 = vld [vmem:[%s2 + $0x78] sm:$0xff]
  %v83 = vld [vmem:[%s2 + $0x80] sm:$0xff]
  %v84 = vld [vmem:[%s2 + $0x88] sm:$0xff]
  %v85 = vld [vmem:[%s2 + $0x90] sm:$0xff]
  %v86 = vld [vmem:[%s2 + $0x98] sm:$0xff]
  %v87 = vld [vmem:[%s2 + $0xa0] sm:$0xff]
  %v88 = vld [vmem:[%s2 + $0xa8] sm:$0xff]
  %v89 = vld [vmem:[%s2 + $0xb0] sm:$0xff]
  %v90 = vld [vmem:[%s2 + $0xb8] sm:$0xff]
  %v91 = vld [vmem:[%s2 + $0xc0] sm:$0xff]
  %v92 = vld [vmem:[%s2 + $0xc8] sm:$0xff]
  %v93 = vld [vmem:[%s2 + $0xd0] sm:$0xff]
  %v94 = vld [vmem:[%s2 + $0xd8] sm:$0xff]
  %v95 = vld [vmem:[%s2 + $0xe0] sm:$0xff]
  %v96 = vld [vmem:[%s2 + $0xe8] sm:$0xff]
  %v97 = vld [vmem:[%s2 + $0xf0] sm:$0xff]
  %v98 = vld [vmem:[%s2 + $0xf8] sm:$0xff]
  %v99 = vld [vmem:[%s2 + $0x100] sm:$0xff]
  %v100 = vld [vmem:[%s2 + $0x108] sm:$0xff]
  %v101 = vld [vmem:[%s2 + $0x110] sm:$0xff]
  %v102 = vld [vmem:[%s2 + $0x118] sm:$0xff]
  %v103 = vld [vmem:[%s2 + $0x120] sm:$0xff]
  %v104 = vld [vmem:[%s2 + $0x128] sm:$0xff]
  %v105 = vld [vmem:[%s2 + $0x130] sm:$0xff]
  %v106 = vld [vmem:[%s2 + $0x138] sm:$0xff]
  %v107 = vld [vmem:[%s2 + $0x140] sm:$0xff]
  %v108 = vld [vmem:[%s2 + $0x148] sm:$0xff]
  %v109 = vld [vmem:[%s2 + $0x150] sm:$0xff]
  %v110 = vld [vmem:[%s2 + $0x158] sm:$0xff]
  %v111 = vld [vmem:[%s2 + $0x160] sm:$0xff]
  %v112 = vld [vmem:[%s2 + $0x168] sm:$0xff]
  %v113 = vld [vmem:[%s2 + $0x170] sm:$0xff]
  %v114 = vld [vmem:[%s2 + $0x178] sm:$0xff]
  %v131 = vunpack.c.l.b16 %v51
  %v132 = vunpack.c.h.b16 %v51
  %v133 = vunpack.c.l.b16 %v52
  %v134 = vunpack.c.h.b16 %v52
  %v135 = vunpack.c.l.b16 %v53
  %v136 = vunpack.c.h.b16 %v53
  %v137 = vunpack.c.l.b16 %v54
  %v138 = vunpack.c.h.b16 %v54
  %v139 = vunpack.c.l.b16 %v55
  %v140 = vunpack.c.h.b16 %v55
  %v141 = vunpack.c.l.b16 %v56
  %v142 = vunpack.c.h.b16 %v56
  %v143 = vunpack.c.l.b16 %v57
  %v144 = vunpack.c.h.b16 %v57
  %v145 = vunpack.c.l.b16 %v58
  %v146 = vunpack.c.h.b16 %v58
  %v147 = vunpack.c.l.b16 %v59
  %v148 = vunpack.c.h.b16 %v59
  %v149 = vunpack.c.l.b16 %v60
  %v150 = vunpack.c.h.b16 %v60
  %v151 = vunpack.c.l.b16 %v61
  %v152 = vunpack.c.h.b16 %v61
  %v153 = vunpack.c.l.b16 %v62
  %v154 = vunpack.c.h.b16 %v62
  %v155 = vunpack.c.l.b16 %v63
  %v156 = vunpack.c.h.b16 %v63
  %v157 = vunpack.c.l.b16 %v64
  %v158 = vunpack.c.h.b16 %v64
  %v159 = vunpack.c.l.b16 %v65
  %v160 = vunpack.c.h.b16 %v65
  %v161 = vunpack.c.l.b16 %v66
  %v162 = vunpack.c.h.b16 %v66
  %v163 = vpack.c.b16 %v133, %v131
  %v164 = vpack.c.b16 %v134, %v132
  %v165 = vpack.c.b16 %v137, %v135
  %v166 = vpack.c.b16 %v138, %v136
  %v167 = vpack.c.b16 %v141, %v139
  %v168 = vpack.c.b16 %v142, %v140
  %v169 = vpack.c.b16 %v145, %v143
  %v170 = vpack.c.b16 %v146, %v144
  %v171 = vpack.c.b16 %v149, %v147
  %v172 = vpack.c.b16 %v150, %v148
  %v173 = vpack.c.b16 %v153, %v151
  %v174 = vpack.c.b16 %v154, %v152
  %v175 = vpack.c.b16 %v157, %v155
  %v176 = vpack.c.b16 %v158, %v156
  %v177 = vpack.c.b16 %v161, %v159
  %v178 = vpack.c.b16 %v162, %v160
  %v235 = vunpack.c.l.b16 %v67
  %v236 = vunpack.c.h.b16 %v67
  %v237 = vunpack.c.l.b16 %v68
  %v238 = vunpack.c.h.b16 %v68
  %v239 = vunpack.c.l.b16 %v69
  %v240 = vunpack.c.h.b16 %v69
  %v241 = vunpack.c.l.b16 %v70
  %v242 = vunpack.c.h.b16 %v70
  %v243 = vunpack.c.l.b16 %v71
  %v244 = vunpack.c.h.b16 %v71
  %v245 = vunpack.c.l.b16 %v72
  %v246 = vunpack.c.h.b16 %v72
  %v247 = vunpack.c.l.b16 %v73
  %v248 = vunpack.c.h.b16 %v73
  %v249 = vunpack.c.l.b16 %v74
  %v250 = vunpack.c.h.b16 %v74
  %v251 = vunpack.c.l.b16 %v75
  %v252 = vunpack.c.h.b16 %v75
  %v253 = vunpack.c.l.b16 %v76
  %v254 = vunpack.c.h.b16 %v76
  %v255 = vunpack.c.l.b16 %v77
  %v256 = vunpack.c.h.b16 %v77
  %v257 = vunpack.c.l.b16 %v78
  %v258 = vunpack.c.h.b16 %v78
  %v259 = vunpack.c.l.b16 %v79
  %v260 = vunpack.c.h.b16 %v79
  %v261 = vunpack.c.l.b16 %v80
  %v262 = vunpack.c.h.b16 %v80
  %v263 = vunpack.c.l.b16 %v81
  %v264 = vunpack.c.h.b16 %v81
  %v265 = vunpack.c.l.b16 %v82
  %v266 = vunpack.c.h.b16 %v82
  %v267 = vunpack.c.l.b16 %v83
  %v268 = vunpack.c.h.b16 %v83
  %v269 = vunpack.c.l.b16 %v84
  %v270 = vunpack.c.h.b16 %v84
  %v271 = vunpack.c.l.b16 %v85
  %v272 = vunpack.c.h.b16 %v85
  %v273 = vunpack.c.l.b16 %v86
  %v274 = vunpack.c.h.b16 %v86
  %v275 = vunpack.c.l.b16 %v87
  %v276 = vunpack.c.h.b16 %v87
  %v277 = vunpack.c.l.b16 %v88
  %v278 = vunpack.c.h.b16 %v88
  %v279 = vunpack.c.l.b16 %v89
  %v280 = vunpack.c.h.b16 %v89
  %v281 = vunpack.c.l.b16 %v90
  %v282 = vunpack.c.h.b16 %v90
  %v283 = vunpack.c.l.b16 %v91
  %v284 = vunpack.c.h.b16 %v91
  %v285 = vunpack.c.l.b16 %v92
  %v286 = vunpack.c.h.b16 %v92
  %v287 = vunpack.c.l.b16 %v93
  %v288 = vunpack.c.h.b16 %v93
  %v289 = vunpack.c.l.b16 %v94
  %v290 = vunpack.c.h.b16 %v94
  %v291 = vunpack.c.l.b16 %v95
  %v292 = vunpack.c.h.b16 %v95
  %v293 = vunpack.c.l.b16 %v96
  %v294 = vunpack.c.h.b16 %v96
  %v295 = vunpack.c.l.b16 %v97
  %v296 = vunpack.c.h.b16 %v97
  %v297 = vunpack.c.l.b16 %v98
  %v298 = vunpack.c.h.b16 %v98
  %v299 = vunpack.c.l.b16 %v99
  %v300 = vunpack.c.h.b16 %v99
  %v301 = vunpack.c.l.b16 %v100
  %v302 = vunpack.c.h.b16 %v100
  %v303 = vunpack.c.l.b16 %v101
  %v304 = vunpack.c.h.b16 %v101
  %v305 = vunpack.c.l.b16 %v102
  %v306 = vunpack.c.h.b16 %v102
  %v307 = vunpack.c.l.b16 %v103
  %v308 = vunpack.c.h.b16 %v103
  %v309 = vunpack.c.l.b16 %v104
  %v310 = vunpack.c.h.b16 %v104
  %v311 = vunpack.c.l.b16 %v105
  %v312 = vunpack.c.h.b16 %v105
  %v313 = vunpack.c.l.b16 %v106
  %v314 = vunpack.c.h.b16 %v106
  %v315 = vunpack.c.l.b16 %v107
  %v316 = vunpack.c.h.b16 %v107
  %v317 = vunpack.c.l.b16 %v108
  %v318 = vunpack.c.h.b16 %v108
  %v319 = vunpack.c.l.b16 %v109
  %v320 = vunpack.c.h.b16 %v109
  %v321 = vunpack.c.l.b16 %v110
  %v322 = vunpack.c.h.b16 %v110
  %v323 = vunpack.c.l.b16 %v111
  %v324 = vunpack.c.h.b16 %v111
  %v325 = vunpack.c.l.b16 %v112
  %v326 = vunpack.c.h.b16 %v112
  %v327 = vunpack.c.l.b16 %v113
  %v328 = vunpack.c.h.b16 %v113
  %v329 = vunpack.c.l.b16 %v114
  %v330 = vunpack.c.h.b16 %v114
  %v331 = vpack.c.b16 %v239, %v235
  %v332 = vpack.c.b16 %v240, %v236
  %v333 = vpack.c.b16 %v241, %v237
  %v334 = vpack.c.b16 %v242, %v238
  %v335 = vpack.c.b16 %v247, %v243
  %v336 = vpack.c.b16 %v248, %v244
  %v337 = vpack.c.b16 %v249, %v245
  %v338 = vpack.c.b16 %v250, %v246
  %v339 = vpack.c.b16 %v255, %v251
  %v340 = vpack.c.b16 %v256, %v252
  %v341 = vpack.c.b16 %v257, %v253
  %v342 = vpack.c.b16 %v258, %v254
  %v343 = vpack.c.b16 %v263, %v259
  %v344 = vpack.c.b16 %v264, %v260
  %v345 = vpack.c.b16 %v265, %v261
  %v346 = vpack.c.b16 %v266, %v262
  %v347 = vpack.c.b16 %v271, %v267
  %v348 = vpack.c.b16 %v272, %v268
  %v349 = vpack.c.b16 %v273, %v269
  %v350 = vpack.c.b16 %v274, %v270
  %v351 = vpack.c.b16 %v279, %v275
  %v352 = vpack.c.b16 %v280, %v276
  %v353 = vpack.c.b16 %v281, %v277
  %v354 = vpack.c.b16 %v282, %v278
  %v355 = vpack.c.b16 %v287, %v283
  %v356 = vpack.c.b16 %v288, %v284
  %v357 = vpack.c.b16 %v289, %v285
  %v358 = vpack.c.b16 %v290, %v286
  %v359 = vpack.c.b16 %v295, %v291
  %v360 = vpack.c.b16 %v296, %v292
  %v361 = vpack.c.b16 %v297, %v293
  %v362 = vpack.c.b16 %v298, %v294
  %v363 = vpack.c.b16 %v303, %v299
  %v364 = vpack.c.b16 %v304, %v300
  %v365 = vpack.c.b16 %v305, %v301
  %v366 = vpack.c.b16 %v306, %v302
  %v367 = vpack.c.b16 %v311, %v307
  %v368 = vpack.c.b16 %v312, %v308
  %v369 = vpack.c.b16 %v313, %v309
  %v370 = vpack.c.b16 %v314, %v310
  %v371 = vpack.c.b16 %v319, %v315
  %v372 = vpack.c.b16 %v320, %v316
  %v373 = vpack.c.b16 %v321, %v317
  %v374 = vpack.c.b16 %v322, %v318
  %v375 = vpack.c.b16 %v327, %v323
  %v376 = vpack.c.b16 %v328, %v324
  %v377 = vpack.c.b16 %v329, %v325
  %v378 = vpack.c.b16 %v330, %v326
  %vm427 = vcmask 523264
  %v429 = vsel %vm427, %v164, 0
  %v432 = vsel %vm427, %v166, 0
  %v435 = vsel %vm427, %v168, 0
  %v438 = vsel %vm427, %v170, 0
  %v441 = vsel %vm427, %v172, 0
  %v444 = vsel %vm427, %v174, 0
  %v447 = vsel %vm427, %v176, 0
  %v450 = vsel %vm427, %v178, 0
  %452 = vmatprep.subr.bf16.mxu0 %v332
  %453 = vmatpush1.bf16.msra.mxu0 %v331
  %454 = vmatprep.subr.bf16.mxu0 %v336
  %455 = vmatpush1.bf16.msra.mxu0 %v335
  %456 = vmatprep.subr.bf16.mxu0 %v340
  %457 = vmatpush1.bf16.msra.mxu0 %v339
  %458 = vmatprep.subr.bf16.mxu0 %v344
  %459 = vmatpush1.bf16.msra.mxu0 %v343
  %460 = vmatprep.subr.bf16.mxu0 %v348
  %461 = vmatpush1.bf16.msra.mxu0 %v347
  %462 = vmatprep.subr.bf16.mxu0 %v352
  %463 = vmatpush1.bf16.msra.mxu0 %v351
  %464 = vmatprep.subr.bf16.mxu0 %v356
  %465 = vmatpush1.bf16.msra.mxu0 %v355
  %466 = vmatprep.subr.bf16.mxu0 %v360
  %467 = vmatpush1.bf16.msra.mxu0 %v359
  %468 = vmatprep.subr.bf16.mxu0 %v364
  %469 = vmatpush1.bf16.msra.mxu0 %v363
  %470 = vmatprep.subr.bf16.mxu0 %v368
  %471 = vmatpush1.bf16.msra.mxu0 %v367
  %472 = vmatprep.subr.bf16.mxu0 %v372
  %473 = vmatpush1.bf16.msra.mxu0 %v371
  %474 = vmatprep.subr.bf16.mxu0 %v376
  %475 = vmatpush1.bf16.msra.mxu0 %v375
  %476 = vmatprep.subr.bf16.mxu0 0
  %477 = vmatpush1.bf16.msra.mxu0 0
  %478 = vmatprep.subr.bf16.mxu0 0
  %479 = vmatpush1.bf16.msra.mxu0 0
  %480 = vmatprep.subr.bf16.mxu0 0
  %481 = vmatpush1.bf16.msra.mxu0 0
  %482 = vmatprep.subr.bf16.mxu0 0
  %483 = vmatpush1.bf16.msra.mxu0 0
  %484 = vmatprep.mubr.bf16.mxu0 %v429
  %485 = vmatmul.mubr.bf16.gmra.mrb[0].mxu0 %v163
  %v486 = vpop.f32.mrb[0].mxu0
  %v487 = vadd.f32 0.0, %v486
  %v488 = vpop.f32.mrb[0].mxu0
  %v489 = vadd.f32 0.0, %v488
  %v490 = vpop.f32.mrb[0].mxu0
  %v491 = vadd.f32 0.0, %v490
  %v492 = vpop.f32.mrb[0].mxu0
  %v493 = vadd.f32 0.0, %v492
  %494 = vmatprep.mubr.bf16.mxu0 %v432
  %495 = vmatmul.mubr.bf16.gmra.mrb[0].mxu0 %v165
  %v496 = vpop.f32.mrb[0].mxu0
  %v497 = vadd.f32 0.0, %v496
  %v498 = vpop.f32.mrb[0].mxu0
  %v499 = vadd.f32 0.0, %v498
  %v500 = vpop.f32.mrb[0].mxu0
  %v501 = vadd.f32 0.0, %v500
  %v502 = vpop.f32.mrb[0].mxu0
  %v503 = vadd.f32 0.0, %v502
  %504 = vmatprep.mubr.bf16.mxu0 %v435
  %505 = vmatmul.mubr.bf16.gmra.mrb[0].mxu0 %v167
  %v506 = vpop.f32.mrb[0].mxu0
  %v507 = vadd.f32 0.0, %v506
  %v508 = vpop.f32.mrb[0].mxu0
  %v509 = vadd.f32 0.0, %v508
  %v510 = vpop.f32.mrb[0].mxu0
  %v511 = vadd.f32 0.0, %v510
  %v512 = vpop.f32.mrb[0].mxu0
  %v513 = vadd.f32 0.0, %v512
  %514 = vmatprep.mubr.bf16.mxu0 %v438
  %515 = vmatmul.mubr.bf16.gmra.mrb[0].mxu0 %v169
  %v516 = vpop.f32.mrb[0].mxu0
  %v517 = vadd.f32 0.0, %v516
  %v518 = vpop.f32.mrb[0].mxu0
  %v519 = vadd.f32 0.0, %v518
  %v520 = vpop.f32.mrb[0].mxu0
  %v521 = vadd.f32 0.0, %v520
  %v522 = vpop.f32.mrb[0].mxu0
  %v523 = vadd.f32 0.0, %v522
  %524 = vmatprep.mubr.bf16.mxu0 %v441
  %525 = vmatmul.mubr.bf16.gmra.mrb[0].mxu0 %v171
  %v526 = vpop.f32.mrb[0].mxu0
  %v527 = vadd.f32 0.0, %v526
  %v528 = vpop.f32.mrb[0].mxu0
  %v529 = vadd.f32 0.0, %v528
  %v530 = vpop.f32.mrb[0].mxu0
  %v531 = vadd.f32 0.0, %v530
  %v532 = vpop.f32.mrb[0].mxu0
  %v533 = vadd.f32 0.0, %v532
  %534 = vmatprep.mubr.bf16.mxu0 %v444
  %535 = vmatmul.mubr.bf16.gmra.mrb[0].mxu0 %v173
  %v536 = vpop.f32.mrb[0].mxu0
  %v537 = vadd.f32 0.0, %v536
  %v538 = vpop.f32.mrb[0].mxu0
  %v539 = vadd.f32 0.0, %v538
  %v540 = vpop.f32.mrb[0].mxu0
  %v541 = vadd.f32 0.0, %v540
  %v542 = vpop.f32.mrb[0].mxu0
  %v543 = vadd.f32 0.0, %v542
  %544 = vmatprep.mubr.bf16.mxu0 %v447
  %545 = vmatmul.mubr.bf16.gmra.mrb[0].mxu0 %v175
  %v546 = vpop.f32.mrb[0].mxu0
  %v547 = vadd.f32 0.0, %v546
  %v548 = vpop.f32.mrb[0].mxu0
  %v549 = vadd.f32 0.0, %v548
  %v550 = vpop.f32.mrb[0].mxu0
  %v551 = vadd.f32 0.0, %v550
  %v552 = vpop.f32.mrb[0].mxu0
  %v553 = vadd.f32 0.0, %v552
  %554 = vmatprep.mubr.bf16.mxu0 %v450
  %555 = vmatmul.mubr.bf16.gmra.mrb[0].mxu0 %v177
  %v556 = vpop.f32.mrb[0].mxu0
  %v557 = vadd.f32 0.0, %v556
  %v558 = vpop.f32.mrb[0].mxu0
  %v559 = vadd.f32 0.0, %v558
  %v560 = vpop.f32.mrb[0].mxu0
  %v561 = vadd.f32 0.0, %v560
  %v562 = vpop.f32.mrb[0].mxu0
  %v563 = vadd.f32 0.0, %v562
  %564 = vdwg.mxu0
  %565 = vmatprep.subr.bf16.mxu0 %v334
  %566 = vmatpush1.bf16.msra.mxu0 %v333
  %567 = vmatprep.subr.bf16.mxu0 %v338
  %568 = vmatpush1.bf16.msra.mxu0 %v337
  %569 = vmatprep.subr.bf16.mxu0 %v342
  %570 = vmatpush1.bf16.msra.mxu0 %v341
  %571 = vmatprep.subr.bf16.mxu0 %v346
  %572 = vmatpush1.bf16.msra.mxu0 %v345
  %573 = vmatprep.subr.bf16.mxu0 %v350
  %574 = vmatpush1.bf16.msra.mxu0 %v349
  %575 = vmatprep.subr.bf16.mxu0 %v354
  %576 = vmatpush1.bf16.msra.mxu0 %v353
  %577 = vmatprep.subr.bf16.mxu0 %v358
  %578 = vmatpush1.bf16.msra.mxu0 %v357
  %579 = vmatprep.subr.bf16.mxu0 %v362
  %580 = vmatpush1.bf16.msra.mxu0 %v361
  %581 = vmatprep.subr.bf16.mxu0 %v366
  %582 = vmatpush1.bf16.msra.mxu0 %v365
  %583 = vmatprep.subr.bf16.mxu0 %v370
  %584 = vmatpush1.bf16.msra.mxu0 %v369
  %585 = vmatprep.subr.bf16.mxu0 %v374
  %586 = vmatpush1.bf16.msra.mxu0 %v373
  %587 = vmatprep.subr.bf16.mxu0 %v378
  %588 = vmatpush1.bf16.msra.mxu0 %v377
  %589 = vmatprep.subr.bf16.mxu0 0
  %590 = vmatpush1.bf16.msra.mxu0 0
  %591 = vmatprep.subr.bf16.mxu0 0
  %592 = vmatpush1.bf16.msra.mxu0 0
  %593 = vmatprep.subr.bf16.mxu0 0
  %594 = vmatpush1.bf16.msra.mxu0 0
  %595 = vmatprep.subr.bf16.mxu0 0
  %596 = vmatpush1.bf16.msra.mxu0 0
  %597 = vmatprep.mubr.bf16.mxu0 %v429
  %598 = vmatmul.mubr.bf16.gmra.mrb[0].mxu0 %v163
  %v599 = vpop.f32.mrb[0].mxu0
  %v600 = vadd.f32 0.0, %v599
  %v601 = vpop.f32.mrb[0].mxu0
  %v602 = vadd.f32 0.0, %v601
  %v603 = vpop.f32.mrb[0].mxu0
  %v604 = vadd.f32 0.0, %v603
  %v605 = vpop.f32.mrb[0].mxu0
  %v606 = vadd.f32 0.0, %v605
  %607 = vmatprep.mubr.bf16.mxu0 %v432
  %608 = vmatmul.mubr.bf16.gmra.mrb[0].mxu0 %v165
  %v609 = vpop.f32.mrb[0].mxu0
  %v610 = vadd.f32 0.0, %v609
  %v611 = vpop.f32.mrb[0].mxu0
  %v612 = vadd.f32 0.0, %v611
  %v613 = vpop.f32.mrb[0].mxu0
  %v614 = vadd.f32 0.0, %v613
  %v615 = vpop.f32.mrb[0].mxu0
  %v616 = vadd.f32 0.0, %v615
  %617 = vmatprep.mubr.bf16.mxu0 %v435
  %618 = vmatmul.mubr.bf16.gmra.mrb[0].mxu0 %v167
  %v619 = vpop.f32.mrb[0].mxu0
  %v620 = vadd.f32 0.0, %v619
  %v621 = vpop.f32.mrb[0].mxu0
  %v622 = vadd.f32 0.0, %v621
  %v623 = vpop.f32.mrb[0].mxu0
  %v624 = vadd.f32 0.0, %v623
  %v625 = vpop.f32.mrb[0].mxu0
  %v626 = vadd.f32 0.0, %v625
  %627 = vmatprep.mubr.bf16.mxu0 %v438
  %628 = vmatmul.mubr.bf16.gmra.mrb[0].mxu0 %v169
  %v629 = vpop.f32.mrb[0].mxu0
  %v630 = vadd.f32 0.0, %v629
  %v631 = vpop.f32.mrb[0].mxu0
  %v632 = vadd.f32 0.0, %v631
  %v633 = vpop.f32.mrb[0].mxu0
  %v634 = vadd.f32 0.0, %v633
  %v635 = vpop.f32.mrb[0].mxu0
  %v636 = vadd.f32 0.0, %v635
  %637 = vmatprep.mubr.bf16.mxu0 %v441
  %638 = vmatmul.mubr.bf16.gmra.mrb[0].mxu0 %v171
  %v639 = vpop.f32.mrb[0].mxu0
  %v640 = vadd.f32 0.0, %v639
  %v641 = vpop.f32.mrb[0].mxu0
  %v642 = vadd.f32 0.0, %v641
  %v643 = vpop.f32.mrb[0].mxu0
  %v644 = vadd.f32 0.0, %v643
  %v645 = vpop.f32.mrb[0].mxu0
  %v646 = vadd.f32 0.0, %v645
  %647 = vmatprep.mubr.bf16.mxu0 %v444
  %648 = vmatmul.mubr.bf16.gmra.mrb[0].mxu0 %v173
  %v649 = vpop.f32.mrb[0].mxu0
  %v650 = vadd.f32 0.0, %v649
  %v651 = vpop.f32.mrb[0].mxu0
  %v652 = vadd.f32 0.0, %v651
  %v653 = vpop.f32.mrb[0].mxu0
  %v654 = vadd.f32 0.0, %v653
  %v655 = vpop.f32.mrb[0].mxu0
  %v656 = vadd.f32 0.0, %v655
  %657 = vmatprep.mubr.bf16.mxu0 %v447
  %658 = vmatmul.mubr.bf16.gmra.mrb[0].mxu0 %v175
  %v659 = vpop.f32.mrb[0].mxu0
  %v660 = vadd.f32 0.0, %v659
  %v661 = vpop.f32.mrb[0].mxu0
  %v662 = vadd.f32 0.0, %v661
  %v663 = vpop.f32.mrb[0].mxu0
  %v664 = vadd.f32 0.0, %v663
  %v665 = vpop.f32.mrb[0].mxu0
  %v666 = vadd.f32 0.0, %v665
  %667 = vmatprep.mubr.bf16.mxu0 %v450
  %668 = vmatmul.mubr.bf16.gmra.mrb[0].mxu0 %v177
  %v669 = vpop.f32.mrb[0].mxu0
  %v670 = vadd.f32 0.0, %v669
  %v671 = vpop.f32.mrb[0].mxu0
  %v672 = vadd.f32 0.0, %v671
  %v673 = vpop.f32.mrb[0].mxu0
  %v674 = vadd.f32 0.0, %v673
  %v675 = vpop.f32.mrb[0].mxu0
  %v676 = vadd.f32 0.0, %v675
  %677 = vdwg.mxu0
  %v678 = vpack.c.bf16 %v491, %v487
  %v679 = vpack.c.bf16 %v493, %v489
  %v680 = vpack.c.bf16 %v604, %v600
  %v681 = vpack.c.bf16 %v606, %v602
  %v682 = vpack.c.bf16 %v501, %v497
  %v683 = vpack.c.bf16 %v503, %v499
  %v684 = vpack.c.bf16 %v614, %v610
  %v685 = vpack.c.bf16 %v616, %v612
  %v686 = vpack.c.bf16 %v511, %v507
  %v687 = vpack.c.bf16 %v513, %v509
  %v688 = vpack.c.bf16 %v624, %v620
  %v689 = vpack.c.bf16 %v626, %v622
  %v690 = vpack.c.bf16 %v521, %v517
  %v691 = vpack.c.bf16 %v523, %v519
  %v692 = vpack.c.bf16 %v634, %v630
  %v693 = vpack.c.bf16 %v636, %v632
  %v694 = vpack.c.bf16 %v531, %v527
  %v695 = vpack.c.bf16 %v533, %v529
  %v696 = vpack.c.bf16 %v644, %v640
  %v697 = vpack.c.bf16 %v646, %v642
  %v698 = vpack.c.bf16 %v541, %v537
  %v699 = vpack.c.bf16 %v543, %v539
  %v700 = vpack.c.bf16 %v654, %v650
  %v701 = vpack.c.bf16 %v656, %v652
  %v702 = vpack.c.bf16 %v551, %v547
  %v703 = vpack.c.bf16 %v553, %v549
  %v704 = vpack.c.bf16 %v664, %v660
  %v705 = vpack.c.bf16 %v666, %v662
  %v706 = vpack.c.bf16 %v561, %v557
  %v707 = vpack.c.bf16 %v563, %v559
  %v708 = vpack.c.bf16 %v674, %v670
  %v709 = vpack.c.bf16 %v676, %v672
  %v714 = vunpack.c.l.b16 %v678
  %v715 = vunpack.c.l.b16 %v679
  %v716 = vunpack.c.l.b16 %v680
  %v717 = vunpack.c.l.b16 %v681
  %v718 = vpack.c.b16 %v715, %v714
  %v719 = vpack.c.b16 %v717, %v716
  %722 = vst [vmem:[#allocation2] sm:$0xff] %v718
  %723 = vst [vmem:[#allocation2 + $0x8] sm:$0xff] %v719
  %v724 = vunpack.c.h.b16 %v678
  %v725 = vunpack.c.h.b16 %v679
  %v726 = vunpack.c.h.b16 %v680
  %v727 = vunpack.c.h.b16 %v681
  %v728 = vpack.c.b16 %v725, %v724
  %v729 = vpack.c.b16 %v727, %v726
  %732 = vst [vmem:[#allocation2 + $0x10] sm:$0xff] %v728
  %733 = vst [vmem:[#allocation2 + $0x18] sm:$0xff] %v729
  %v738 = vunpack.c.l.b16 %v682
  %v739 = vunpack.c.l.b16 %v683
  %v740 = vunpack.c.l.b16 %v684
  %v741 = vunpack.c.l.b16 %v685
  %v742 = vpack.c.b16 %v739, %v738
  %v743 = vpack.c.b16 %v741, %v740
  %746 = vst [vmem:[#allocation2 + $0x20] sm:$0xff] %v742
  %747 = vst [vmem:[#allocation2 + $0x28] sm:$0xff] %v743
  %v748 = vunpack.c.h.b16 %v682
  %v749 = vunpack.c.h.b16 %v683
  %v750 = vunpack.c.h.b16 %v684
  %v751 = vunpack.c.h.b16 %v685
  %v752 = vpack.c.b16 %v749, %v748
  %v753 = vpack.c.b16 %v751, %v750
  %756 = vst [vmem:[#allocation2 + $0x30] sm:$0xff] %v752
  %757 = vst [vmem:[#allocation2 + $0x38] sm:$0xff] %v753
  %v762 = vunpack.c.l.b16 %v686
  %v763 = vunpack.c.l.b16 %v687
  %v764 = vunpack.c.l.b16 %v688
  %v765 = vunpack.c.l.b16 %v689
  %v766 = vpack.c.b16 %v763, %v762
  %v767 = vpack.c.b16 %v765, %v764
  %770 = vst [vmem:[#allocation2 + $0x40] sm:$0xff] %v766
  %771 = vst [vmem:[#allocation2 + $0x48] sm:$0xff] %v767
  %v772 = vunpack.c.h.b16 %v686
  %v773 = vunpack.c.h.b16 %v687
  %v774 = vunpack.c.h.b16 %v688
  %v775 = vunpack.c.h.b16 %v689
  %v776 = vpack.c.b16 %v773, %v772
  %v777 = vpack.c.b16 %v775, %v774
  %780 = vst [vmem:[#allocation2 + $0x50] sm:$0xff] %v776
  %781 = vst [vmem:[#allocation2 + $0x58] sm:$0xff] %v777
  %v786 = vunpack.c.l.b16 %v690
  %v787 = vunpack.c.l.b16 %v691
  %v788 = vunpack.c.l.b16 %v692
  %v789 = vunpack.c.l.b16 %v693
  %v790 = vpack.c.b16 %v787, %v786
  %v791 = vpack.c.b16 %v789, %v788
  %794 = vst [vmem:[#allocation2 + $0x60] sm:$0xff] %v790
  %795 = vst [vmem:[#allocation2 + $0x68] sm:$0xff] %v791
  %v796 = vunpack.c.h.b16 %v690
  %v797 = vunpack.c.h.b16 %v691
  %v798 = vunpack.c.h.b16 %v692
  %v799 = vunpack.c.h.b16 %v693
  %v800 = vpack.c.b16 %v797, %v796
  %v801 = vpack.c.b16 %v799, %v798
  %804 = vst [vmem:[#allocation2 + $0x70] sm:$0xff] %v800
  %805 = vst [vmem:[#allocation2 + $0x78] sm:$0xff] %v801
  %v810 = vunpack.c.l.b16 %v694
  %v811 = vunpack.c.l.b16 %v695
  %v812 = vunpack.c.l.b16 %v696
  %v813 = vunpack.c.l.b16 %v697
  %v814 = vpack.c.b16 %v811, %v810
  %v815 = vpack.c.b16 %v813, %v812
  %818 = vst [vmem:[#allocation2 + $0x80] sm:$0xff] %v814
  %819 = vst [vmem:[#allocation2 + $0x88] sm:$0xff] %v815
  %v820 = vunpack.c.h.b16 %v694
  %v821 = vunpack.c.h.b16 %v695
  %v822 = vunpack.c.h.b16 %v696
  %v823 = vunpack.c.h.b16 %v697
  %v824 = vpack.c.b16 %v821, %v820
  %v825 = vpack.c.b16 %v823, %v822
  %828 = vst [vmem:[#allocation2 + $0x90] sm:$0xff] %v824
  %829 = vst [vmem:[#allocation2 + $0x98] sm:$0xff] %v825
  %v834 = vunpack.c.l.b16 %v698
  %v835 = vunpack.c.l.b16 %v699
  %v836 = vunpack.c.l.b16 %v700
  %v837 = vunpack.c.l.b16 %v701
  %v838 = vpack.c.b16 %v835, %v834
  %v839 = vpack.c.b16 %v837, %v836
  %842 = vst [vmem:[#allocation2 + $0xa0] sm:$0xff] %v838
  %843 = vst [vmem:[#allocation2 + $0xa8] sm:$0xff] %v839
  %v844 = vunpack.c.h.b16 %v698
  %v845 = vunpack.c.h.b16 %v699
  %v846 = vunpack.c.h.b16 %v700
  %v847 = vunpack.c.h.b16 %v701
  %v848 = vpack.c.b16 %v845, %v844
  %v849 = vpack.c.b16 %v847, %v846
  %852 = vst [vmem:[#allocation2 + $0xb0] sm:$0xff] %v848
  %853 = vst [vmem:[#allocation2 + $0xb8] sm:$0xff] %v849
  %v858 = vunpack.c.l.b16 %v702
  %v859 = vunpack.c.l.b16 %v703
  %v860 = vunpack.c.l.b16 %v704
  %v861 = vunpack.c.l.b16 %v705
  %v862 = vpack.c.b16 %v859, %v858
  %v863 = vpack.c.b16 %v861, %v860
  %866 = vst [vmem:[#allocation2 + $0xc0] sm:$0xff] %v862
  %867 = vst [vmem:[#allocation2 + $0xc8] sm:$0xff] %v863
  %v868 = vunpack.c.h.b16 %v702
  %v869 = vunpack.c.h.b16 %v703
  %v870 = vunpack.c.h.b16 %v704
  %v871 = vunpack.c.h.b16 %v705
  %v872 = vpack.c.b16 %v869, %v868
  %v873 = vpack.c.b16 %v871, %v870
  %876 = vst [vmem:[#allocation2 + $0xd0] sm:$0xff] %v872
  %877 = vst [vmem:[#allocation2 + $0xd8] sm:$0xff] %v873
  %v882 = vunpack.c.l.b16 %v706
  %v883 = vunpack.c.l.b16 %v707
  %v884 = vunpack.c.l.b16 %v708
  %v885 = vunpack.c.l.b16 %v709
  %v886 = vpack.c.b16 %v883, %v882
  %v887 = vpack.c.b16 %v885, %v884
  %890 = vst [vmem:[#allocation2 + $0xe0] sm:$0xff] %v886
  %891 = vst [vmem:[#allocation2 + $0xe8] sm:$0xff] %v887
  %v892 = vunpack.c.h.b16 %v706
  %v893 = vunpack.c.h.b16 %v707
  %v894 = vunpack.c.h.b16 %v708
  %v895 = vunpack.c.h.b16 %v709
  %v896 = vpack.c.b16 %v893, %v892
  %v897 = vpack.c.b16 %v895, %v894
  %900 = vst [vmem:[#allocation2 + $0xf0] sm:$0xff] %v896
  %901 = vst [vmem:[#allocation2 + $0xf8] sm:$0xff] %v897
  %v902 = vld [vmem:[#allocation2] sm:$0xff]
  %v903 = vld [vmem:[#allocation2 + $0x8] sm:$0xff]
  %v904 = vld [vmem:[#allocation2 + $0x10] sm:$0xff]
  %v905 = vld [vmem:[#allocation2 + $0x18] sm:$0xff]
  %v906 = vld [vmem:[#allocation2 + $0x20] sm:$0xff]
  %v907 = vld [vmem:[#allocation2 + $0x28] sm:$0xff]
  %v908 = vld [vmem:[#allocation2 + $0x30] sm:$0xff]
  %v909 = vld [vmem:[#allocation2 + $0x38] sm:$0xff]
  %v910 = vld [vmem:[#allocation2 + $0x40] sm:$0xff]
  %v911 = vld [vmem:[#allocation2 + $0x48] sm:$0xff]
  %v912 = vld [vmem:[#allocation2 + $0x50] sm:$0xff]
  %v913 = vld [vmem:[#allocation2 + $0x58] sm:$0xff]
  %v914 = vld [vmem:[#allocation2 + $0x60] sm:$0xff]
  %v915 = vld [vmem:[#allocation2 + $0x68] sm:$0xff]
  %v916 = vld [vmem:[#allocation2 + $0x70] sm:$0xff]
  %v917 = vld [vmem:[#allocation2 + $0x78] sm:$0xff]
  %v918 = vld [vmem:[#allocation2 + $0x80] sm:$0xff]
  %v919 = vld [vmem:[#allocation2 + $0x88] sm:$0xff]
  %v920 = vld [vmem:[#allocation2 + $0x90] sm:$0xff]
  %v921 = vld [vmem:[#allocation2 + $0x98] sm:$0xff]
  %v922 = vld [vmem:[#allocation2 + $0xa0] sm:$0xff]
  %v923 = vld [vmem:[#allocation2 + $0xa8] sm:$0xff]
  %v924 = vld [vmem:[#allocation2 + $0xb0] sm:$0xff]
  %v925 = vld [vmem:[#allocation2 + $0xb8] sm:$0xff]
  %v926 = vld [vmem:[#allocation2 + $0xc0] sm:$0xff]
  %v927 = vld [vmem:[#allocation2 + $0xc8] sm:$0xff]
  %v928 = vld [vmem:[#allocation2 + $0xd0] sm:$0xff]
  %v929 = vld [vmem:[#allocation2 + $0xd8] sm:$0xff]
  %v930 = vld [vmem:[#allocation2 + $0xe0] sm:$0xff]
  %v931 = vld [vmem:[#allocation2 + $0xe8] sm:$0xff]
  %v932 = vld [vmem:[#allocation2 + $0xf0] sm:$0xff]
  %v933 = vld [vmem:[#allocation2 + $0xf8] sm:$0xff]
  %v934 = vld [vmem:[%s3] sm:$0xff]
  %v935 = vld [vmem:[%s3 + $0x8] sm:$0xff]
  %v936 = vld [vmem:[%s3 + $0x10] sm:$0xff]
  %v937 = vld [vmem:[%s3 + $0x18] sm:$0xff]
  %v938 = vld [vmem:[%s3 + $0x20] sm:$0xff]
  %v939 = vld [vmem:[%s3 + $0x28] sm:$0xff]
  %v940 = vld [vmem:[%s3 + $0x30] sm:$0xff]
  %v941 = vld [vmem:[%s3 + $0x38] sm:$0xff]
  %v942 = vld [vmem:[%s3 + $0x40] sm:$0xff]
  %v943 = vld [vmem:[%s3 + $0x48] sm:$0xff]
  %v944 = vld [vmem:[%s3 + $0x50] sm:$0xff]
  %v945 = vld [vmem:[%s3 + $0x58] sm:$0xff]
  %v946 = vld [vmem:[%s3 + $0x60] sm:$0xff]
  %v947 = vld [vmem:[%s3 + $0x68] sm:$0xff]
  %v948 = vld [vmem:[%s3 + $0x70] sm:$0xff]
  %v949 = vld [vmem:[%s3 + $0x78] sm:$0xff]
  %v950 = vld [vmem:[%s3 + $0x80] sm:$0xff]
  %v951 = vld [vmem:[%s3 + $0x88] sm:$0xff]
  %v952 = vld [vmem:[%s3 + $0x90] sm:$0xff]
  %v953 = vld [vmem:[%s3 + $0x98] sm:$0xff]
  %v954 = vld [vmem:[%s3 + $0xa0] sm:$0xff]
  %v955 = vld [vmem:[%s3 + $0xa8] sm:$0xff]
  %v956 = vld [vmem:[%s3 + $0xb0] sm:$0xff]
  %v957 = vld [vmem:[%s3 + $0xb8] sm:$0xff]
  %v958 = vld [vmem:[%s3 + $0xc0] sm:$0xff]
  %v959 = vld [vmem:[%s3 + $0xc8] sm:$0xff]
  %v960 = vld [vmem:[%s3 + $0xd0] sm:$0xff]
  %v961 = vld [vmem:[%s3 + $0xd8] sm:$0xff]
  %v962 = vld [vmem:[%s3 + $0xe0] sm:$0xff]
  %v963 = vld [vmem:[%s3 + $0xe8] sm:$0xff]
  %v964 = vld [vmem:[%s3 + $0xf0] sm:$0xff]
  %v965 = vld [vmem:[%s3 + $0xf8] sm:$0xff]
  %v966 = vld [vmem:[%s3 + $0x100] sm:$0xff]
  %v967 = vld [vmem:[%s3 + $0x108] sm:$0xff]
  %v968 = vld [vmem:[%s3 + $0x110] sm:$0xff]
  %v969 = vld [vmem:[%s3 + $0x118] sm:$0xff]
  %v970 = vld [vmem:[%s3 + $0x120] sm:$0xff]
  %v971 = vld [vmem:[%s3 + $0x128] sm:$0xff]
  %v972 = vld [vmem:[%s3 + $0x130] sm:$0xff]
  %v973 = vld [vmem:[%s3 + $0x138] sm:$0xff]
  %v974 = vld [vmem:[%s3 + $0x140] sm:$0xff]
  %v975 = vld [vmem:[%s3 + $0x148] sm:$0xff]
  %v976 = vld [vmem:[%s3 + $0x150] sm:$0xff]
  %v977 = vld [vmem:[%s3 + $0x158] sm:$0xff]
  %v978 = vld [vmem:[%s3 + $0x160] sm:$0xff]
  %v979 = vld [vmem:[%s3 + $0x168] sm:$0xff]
  %v980 = vld [vmem:[%s3 + $0x170] sm:$0xff]
  %v981 = vld [vmem:[%s3 + $0x178] sm:$0xff]
  %v982 = vld [vmem:[%s3 + $0x180] sm:$0xff]
  %v983 = vld [vmem:[%s3 + $0x188] sm:$0xff]
  %v984 = vld [vmem:[%s3 + $0x190] sm:$0xff]
  %v985 = vld [vmem:[%s3 + $0x198] sm:$0xff]
  %v986 = vld [vmem:[%s3 + $0x1a0] sm:$0xff]
  %v987 = vld [vmem:[%s3 + $0x1a8] sm:$0xff]
  %v988 = vld [vmem:[%s3 + $0x1b0] sm:$0xff]
  %v989 = vld [vmem:[%s3 + $0x1b8] sm:$0xff]
  %v990 = vld [vmem:[%s3 + $0x1c0] sm:$0xff]
  %v991 = vld [vmem:[%s3 + $0x1c8] sm:$0xff]
  %v992 = vld [vmem:[%s3 + $0x1d0] sm:$0xff]
  %v993 = vld [vmem:[%s3 + $0x1d8] sm:$0xff]
  %v994 = vld [vmem:[%s3 + $0x1e0] sm:$0xff]
  %v995 = vld [vmem:[%s3 + $0x1e8] sm:$0xff]
  %v996 = vld [vmem:[%s3 + $0x1f0] sm:$0xff]
  %v997 = vld [vmem:[%s3 + $0x1f8] sm:$0xff]
  %v998 = vld [vmem:[%s3 + $0x200] sm:$0xff]
  %v999 = vld [vmem:[%s3 + $0x208] sm:$0xff]
  %v1000 = vld [vmem:[%s3 + $0x210] sm:$0xff]
  %v1001 = vld [vmem:[%s3 + $0x218] sm:$0xff]
  %v1002 = vld [vmem:[%s3 + $0x220] sm:$0xff]
  %v1003 = vld [vmem:[%s3 + $0x228] sm:$0xff]
  %v1004 = vld [vmem:[%s3 + $0x230] sm:$0xff]
  %v1005 = vld [vmem:[%s3 + $0x238] sm:$0xff]
  %v1006 = vld [vmem:[%s3 + $0x240] sm:$0xff]
  %v1007 = vld [vmem:[%s3 + $0x248] sm:$0xff]
  %v1008 = vld [vmem:[%s3 + $0x250] sm:$0xff]
  %v1009 = vld [vmem:[%s3 + $0x258] sm:$0xff]
  %v1010 = vld [vmem:[%s3 + $0x260] sm:$0xff]
  %v1011 = vld [vmem:[%s3 + $0x268] sm:$0xff]
  %v1012 = vld [vmem:[%s3 + $0x270] sm:$0xff]
  %v1013 = vld [vmem:[%s3 + $0x278] sm:$0xff]
  %v1014 = vld [vmem:[%s3 + $0x280] sm:$0xff]
  %v1015 = vld [vmem:[%s3 + $0x288] sm:$0xff]
  %v1016 = vld [vmem:[%s3 + $0x290] sm:$0xff]
  %v1017 = vld [vmem:[%s3 + $0x298] sm:$0xff]
  %v1018 = vld [vmem:[%s3 + $0x2a0] sm:$0xff]
  %v1019 = vld [vmem:[%s3 + $0x2a8] sm:$0xff]
  %v1020 = vld [vmem:[%s3 + $0x2b0] sm:$0xff]
  %v1021 = vld [vmem:[%s3 + $0x2b8] sm:$0xff]
  %v1022 = vld [vmem:[%s3 + $0x2c0] sm:$0xff]
  %v1023 = vld [vmem:[%s3 + $0x2c8] sm:$0xff]
  %v1024 = vld [vmem:[%s3 + $0x2d0] sm:$0xff]
  %v1025 = vld [vmem:[%s3 + $0x2d8] sm:$0xff]
  %v1026 = vld [vmem:[%s3 + $0x2e0] sm:$0xff]
  %v1027 = vld [vmem:[%s3 + $0x2e8] sm:$0xff]
  %v1028 = vld [vmem:[%s3 + $0x2f0] sm:$0xff]
  %v1029 = vld [vmem:[%s3 + $0x2f8] sm:$0xff]
  %v1030 = vld [vmem:[%s3 + $0x300] sm:$0xff]
  %v1031 = vld [vmem:[%s3 + $0x308] sm:$0xff]
  %v1032 = vld [vmem:[%s3 + $0x310] sm:$0xff]
  %v1033 = vld [vmem:[%s3 + $0x318] sm:$0xff]
  %v1034 = vld [vmem:[%s3 + $0x320] sm:$0xff]
  %v1035 = vld [vmem:[%s3 + $0x328] sm:$0xff]
  %v1036 = vld [vmem:[%s3 + $0x330] sm:$0xff]
  %v1037 = vld [vmem:[%s3 + $0x338] sm:$0xff]
  %v1038 = vld [vmem:[%s3 + $0x340] sm:$0xff]
  %v1039 = vld [vmem:[%s3 + $0x348] sm:$0xff]
  %v1040 = vld [vmem:[%s3 + $0x350] sm:$0xff]
  %v1041 = vld [vmem:[%s3 + $0x358] sm:$0xff]
  %v1042 = vld [vmem:[%s3 + $0x360] sm:$0xff]
  %v1043 = vld [vmem:[%s3 + $0x368] sm:$0xff]
  %v1044 = vld [vmem:[%s3 + $0x370] sm:$0xff]
  %v1045 = vld [vmem:[%s3 + $0x378] sm:$0xff]
  %v1046 = vld [vmem:[%s3 + $0x380] sm:$0xff]
  %v1047 = vld [vmem:[%s3 + $0x388] sm:$0xff]
  %v1048 = vld [vmem:[%s3 + $0x390] sm:$0xff]
  %v1049 = vld [vmem:[%s3 + $0x398] sm:$0xff]
  %v1050 = vld [vmem:[%s3 + $0x3a0] sm:$0xff]
  %v1051 = vld [vmem:[%s3 + $0x3a8] sm:$0xff]
  %v1052 = vld [vmem:[%s3 + $0x3b0] sm:$0xff]
  %v1053 = vld [vmem:[%s3 + $0x3b8] sm:$0xff]
  %v1054 = vld [vmem:[%s3 + $0x3c0] sm:$0xff]
  %v1055 = vld [vmem:[%s3 + $0x3c8] sm:$0xff]
  %v1056 = vld [vmem:[%s3 + $0x3d0] sm:$0xff]
  %v1057 = vld [vmem:[%s3 + $0x3d8] sm:$0xff]
  %v1058 = vld [vmem:[%s3 + $0x3e0] sm:$0xff]
  %v1059 = vld [vmem:[%s3 + $0x3e8] sm:$0xff]
  %v1060 = vld [vmem:[%s3 + $0x3f0] sm:$0xff]
  %v1061 = vld [vmem:[%s3 + $0x3f8] sm:$0xff]
  %v1062 = vld [vmem:[%s3 + $0x400] sm:$0xff]
  %v1063 = vld [vmem:[%s3 + $0x408] sm:$0xff]
  %v1064 = vld [vmem:[%s3 + $0x410] sm:$0xff]
  %v1065 = vld [vmem:[%s3 + $0x418] sm:$0xff]
  %v1066 = vld [vmem:[%s3 + $0x420] sm:$0xff]
  %v1067 = vld [vmem:[%s3 + $0x428] sm:$0xff]
  %v1068 = vld [vmem:[%s3 + $0x430] sm:$0xff]
  %v1069 = vld [vmem:[%s3 + $0x438] sm:$0xff]
  %v1070 = vld [vmem:[%s3 + $0x440] sm:$0xff]
  %v1071 = vld [vmem:[%s3 + $0x448] sm:$0xff]
  %v1072 = vld [vmem:[%s3 + $0x450] sm:$0xff]
  %v1073 = vld [vmem:[%s3 + $0x458] sm:$0xff]
  %v1074 = vld [vmem:[%s3 + $0x460] sm:$0xff]
  %v1075 = vld [vmem:[%s3 + $0x468] sm:$0xff]
  %v1076 = vld [vmem:[%s3 + $0x470] sm:$0xff]
  %v1077 = vld [vmem:[%s3 + $0x478] sm:$0xff]
  %v1078 = vld [vmem:[%s3 + $0x480] sm:$0xff]
  %v1079 = vld [vmem:[%s3 + $0x488] sm:$0xff]
  %v1080 = vld [vmem:[%s3 + $0x490] sm:$0xff]
  %v1081 = vld [vmem:[%s3 + $0x498] sm:$0xff]
  %v1082 = vld [vmem:[%s3 + $0x4a0] sm:$0xff]
  %v1083 = vld [vmem:[%s3 + $0x4a8] sm:$0xff]
  %v1084 = vld [vmem:[%s3 + $0x4b0] sm:$0xff]
  %v1085 = vld [vmem:[%s3 + $0x4b8] sm:$0xff]
  %v1086 = vld [vmem:[%s3 + $0x4c0] sm:$0xff]
  %v1087 = vld [vmem:[%s3 + $0x4c8] sm:$0xff]
  %v1088 = vld [vmem:[%s3 + $0x4d0] sm:$0xff]
  %v1089 = vld [vmem:[%s3 + $0x4d8] sm:$0xff]
  %v1090 = vld [vmem:[%s3 + $0x4e0] sm:$0xff]
  %v1091 = vld [vmem:[%s3 + $0x4e8] sm:$0xff]
  %v1092 = vld [vmem:[%s3 + $0x4f0] sm:$0xff]
  %v1093 = vld [vmem:[%s3 + $0x4f8] sm:$0xff]
  %v1094 = vld [vmem:[%s3 + $0x500] sm:$0xff]
  %v1095 = vld [vmem:[%s3 + $0x508] sm:$0xff]
  %v1096 = vld [vmem:[%s3 + $0x510] sm:$0xff]
  %v1097 = vld [vmem:[%s3 + $0x518] sm:$0xff]
  %v1098 = vld [vmem:[%s3 + $0x520] sm:$0xff]
  %v1099 = vld [vmem:[%s3 + $0x528] sm:$0xff]
  %v1100 = vld [vmem:[%s3 + $0x530] sm:$0xff]
  %v1101 = vld [vmem:[%s3 + $0x538] sm:$0xff]
  %v1102 = vld [vmem:[%s3 + $0x540] sm:$0xff]
  %v1103 = vld [vmem:[%s3 + $0x548] sm:$0xff]
  %v1104 = vld [vmem:[%s3 + $0x550] sm:$0xff]
  %v1105 = vld [vmem:[%s3 + $0x558] sm:$0xff]
  %v1106 = vld [vmem:[%s3 + $0x560] sm:$0xff]
  %v1107 = vld [vmem:[%s3 + $0x568] sm:$0xff]
  %v1108 = vld [vmem:[%s3 + $0x570] sm:$0xff]
  %v1109 = vld [vmem:[%s3 + $0x578] sm:$0xff]
  %v1110 = vld [vmem:[%s3 + $0x580] sm:$0xff]
  %v1111 = vld [vmem:[%s3 + $0x588] sm:$0xff]
  %v1112 = vld [vmem:[%s3 + $0x590] sm:$0xff]
  %v1113 = vld [vmem:[%s3 + $0x598] sm:$0xff]
  %v1114 = vld [vmem:[%s3 + $0x5a0] sm:$0xff]
  %v1115 = vld [vmem:[%s3 + $0x5a8] sm:$0xff]
  %v1116 = vld [vmem:[%s3 + $0x5b0] sm:$0xff]
  %v1117 = vld [vmem:[%s3 + $0x5b8] sm:$0xff]
  %v1118 = vld [vmem:[%s3 + $0x5c0] sm:$0xff]
  %v1119 = vld [vmem:[%s3 + $0x5c8] sm:$0xff]
  %v1120 = vld [vmem:[%s3 + $0x5d0] sm:$0xff]
  %v1121 = vld [vmem:[%s3 + $0x5d8] sm:$0xff]
  %v1122 = vld [vmem:[%s3 + $0x5e0] sm:$0xff]
  %v1123 = vld [vmem:[%s3 + $0x5e8] sm:$0xff]
  %v1124 = vld [vmem:[%s3 + $0x5f0] sm:$0xff]
  %v1125 = vld [vmem:[%s3 + $0x5f8] sm:$0xff]
  %v1126 = vld [vmem:[%s3 + $0x600] sm:$0xff]
  %v1127 = vld [vmem:[%s3 + $0x608] sm:$0xff]
  %v1128 = vld [vmem:[%s3 + $0x610] sm:$0xff]
  %v1129 = vld [vmem:[%s3 + $0x618] sm:$0xff]
  %v1130 = vld [vmem:[%s3 + $0x620] sm:$0xff]
  %v1131 = vld [vmem:[%s3 + $0x628] sm:$0xff]
  %v1132 = vld [vmem:[%s3 + $0x630] sm:$0xff]
  %v1133 = vld [vmem:[%s3 + $0x638] sm:$0xff]
  %v1134 = vld [vmem:[%s3 + $0x640] sm:$0xff]
  %v1135 = vld [vmem:[%s3 + $0x648] sm:$0xff]
  %v1136 = vld [vmem:[%s3 + $0x650] sm:$0xff]
  %v1137 = vld [vmem:[%s3 + $0x658] sm:$0xff]
  %v1138 = vld [vmem:[%s3 + $0x660] sm:$0xff]
  %v1139 = vld [vmem:[%s3 + $0x668] sm:$0xff]
  %v1140 = vld [vmem:[%s3 + $0x670] sm:$0xff]
  %v1141 = vld [vmem:[%s3 + $0x678] sm:$0xff]
  %v1142 = vld [vmem:[%s3 + $0x680] sm:$0xff]
  %v1143 = vld [vmem:[%s3 + $0x688] sm:$0xff]
  %v1144 = vld [vmem:[%s3 + $0x690] sm:$0xff]
  %v1145 = vld [vmem:[%s3 + $0x698] sm:$0xff]
  %v1146 = vld [vmem:[%s3 + $0x6a0] sm:$0xff]
  %v1147 = vld [vmem:[%s3 + $0x6a8] sm:$0xff]
  %v1148 = vld [vmem:[%s3 + $0x6b0] sm:$0xff]
  %v1149 = vld [vmem:[%s3 + $0x6b8] sm:$0xff]
  %v1150 = vld [vmem:[%s3 + $0x6c0] sm:$0xff]
  %v1151 = vld [vmem:[%s3 + $0x6c8] sm:$0xff]
  %v1152 = vld [vmem:[%s3 + $0x6d0] sm:$0xff]
  %v1153 = vld [vmem:[%s3 + $0x6d8] sm:$0xff]
  %v1154 = vld [vmem:[%s3 + $0x6e0] sm:$0xff]
  %v1155 = vld [vmem:[%s3 + $0x6e8] sm:$0xff]
  %v1156 = vld [vmem:[%s3 + $0x6f0] sm:$0xff]
  %v1157 = vld [vmem:[%s3 + $0x6f8] sm:$0xff]
  %v1158 = vld [vmem:[%s3 + $0x700] sm:$0xff]
  %v1159 = vld [vmem:[%s3 + $0x708] sm:$0xff]
  %v1160 = vld [vmem:[%s3 + $0x710] sm:$0xff]
  %v1161 = vld [vmem:[%s3 + $0x718] sm:$0xff]
  %v1162 = vld [vmem:[%s3 + $0x720] sm:$0xff]
  %v1163 = vld [vmem:[%s3 + $0x728] sm:$0xff]
  %v1164 = vld [vmem:[%s3 + $0x730] sm:$0xff]
  %v1165 = vld [vmem:[%s3 + $0x738] sm:$0xff]
  %v1166 = vld [vmem:[%s3 + $0x740] sm:$0xff]
  %v1167 = vld [vmem:[%s3 + $0x748] sm:$0xff]
  %v1168 = vld [vmem:[%s3 + $0x750] sm:$0xff]
  %v1169 = vld [vmem:[%s3 + $0x758] sm:$0xff]
  %v1170 = vld [vmem:[%s3 + $0x760] sm:$0xff]
  %v1171 = vld [vmem:[%s3 + $0x768] sm:$0xff]
  %v1172 = vld [vmem:[%s3 + $0x770] sm:$0xff]
  %v1173 = vld [vmem:[%s3 + $0x778] sm:$0xff]
  %v1174 = vld [vmem:[%s3 + $0x780] sm:$0xff]
  %v1175 = vld [vmem:[%s3 + $0x788] sm:$0xff]
  %v1176 = vld [vmem:[%s3 + $0x790] sm:$0xff]
  %v1177 = vld [vmem:[%s3 + $0x798] sm:$0xff]
  %v1178 = vld [vmem:[%s3 + $0x7a0] sm:$0xff]
  %v1179 = vld [vmem:[%s3 + $0x7a8] sm:$0xff]
  %v1180 = vld [vmem:[%s3 + $0x7b0] sm:$0xff]
  %v1181 = vld [vmem:[%s3 + $0x7b8] sm:$0xff]
  %v1182 = vld [vmem:[%s3 + $0x7c0] sm:$0xff]
  %v1183 = vld [vmem:[%s3 + $0x7c8] sm:$0xff]
  %v1184 = vld [vmem:[%s3 + $0x7d0] sm:$0xff]
  %v1185 = vld [vmem:[%s3 + $0x7d8] sm:$0xff]
  %v1186 = vld [vmem:[%s3 + $0x7e0] sm:$0xff]
  %v1187 = vld [vmem:[%s3 + $0x7e8] sm:$0xff]
  %v1188 = vld [vmem:[%s3 + $0x7f0] sm:$0xff]
  %v1189 = vld [vmem:[%s3 + $0x7f8] sm:$0xff]
  %v1190 = vld [vmem:[%s3 + $0x800] sm:$0xff]
  %v1191 = vld [vmem:[%s3 + $0x808] sm:$0xff]
  %v1192 = vld [vmem:[%s3 + $0x810] sm:$0xff]
  %v1193 = vld [vmem:[%s3 + $0x818] sm:$0xff]
  %v1194 = vld [vmem:[%s3 + $0x820] sm:$0xff]
  %v1195 = vld [vmem:[%s3 + $0x828] sm:$0xff]
  %v1196 = vld [vmem:[%s3 + $0x830] sm:$0xff]
  %v1197 = vld [vmem:[%s3 + $0x838] sm:$0xff]
  %v1198 = vld [vmem:[%s3 + $0x840] sm:$0xff]
  %v1199 = vld [vmem:[%s3 + $0x848] sm:$0xff]
  %v1200 = vld [vmem:[%s3 + $0x850] sm:$0xff]
  %v1201 = vld [vmem:[%s3 + $0x858] sm:$0xff]
  %v1202 = vld [vmem:[%s3 + $0x860] sm:$0xff]
  %v1203 = vld [vmem:[%s3 + $0x868] sm:$0xff]
  %v1204 = vld [vmem:[%s3 + $0x870] sm:$0xff]
  %v1205 = vld [vmem:[%s3 + $0x878] sm:$0xff]
  %v1206 = vld [vmem:[%s3 + $0x880] sm:$0xff]
  %v1207 = vld [vmem:[%s3 + $0x888] sm:$0xff]
  %v1208 = vld [vmem:[%s3 + $0x890] sm:$0xff]
  %v1209 = vld [vmem:[%s3 + $0x898] sm:$0xff]
  %v1210 = vld [vmem:[%s3 + $0x8a0] sm:$0xff]
  %v1211 = vld [vmem:[%s3 + $0x8a8] sm:$0xff]
  %v1212 = vld [vmem:[%s3 + $0x8b0] sm:$0xff]
  %v1213 = vld [vmem:[%s3 + $0x8b8] sm:$0xff]
  %v1214 = vld [vmem:[%s3 + $0x8c0] sm:$0xff]
  %v1215 = vld [vmem:[%s3 + $0x8c8] sm:$0xff]
  %v1216 = vld [vmem:[%s3 + $0x8d0] sm:$0xff]
  %v1217 = vld [vmem:[%s3 + $0x8d8] sm:$0xff]
  %v1218 = vld [vmem:[%s3 + $0x8e0] sm:$0xff]
  %v1219 = vld [vmem:[%s3 + $0x8e8] sm:$0xff]
  %v1220 = vld [vmem:[%s3 + $0x8f0] sm:$0xff]
  %v1221 = vld [vmem:[%s3 + $0x8f8] sm:$0xff]
  %v1222 = vld [vmem:[%s3 + $0x900] sm:$0xff]
  %v1223 = vld [vmem:[%s3 + $0x908] sm:$0xff]
  %v1224 = vld [vmem:[%s3 + $0x910] sm:$0xff]
  %v1225 = vld [vmem:[%s3 + $0x918] sm:$0xff]
  %v1226 = vld [vmem:[%s3 + $0x920] sm:$0xff]
  %v1227 = vld [vmem:[%s3 + $0x928] sm:$0xff]
  %v1228 = vld [vmem:[%s3 + $0x930] sm:$0xff]
  %v1229 = vld [vmem:[%s3 + $0x938] sm:$0xff]
  %v1230 = vld [vmem:[%s3 + $0x940] sm:$0xff]
  %v1231 = vld [vmem:[%s3 + $0x948] sm:$0xff]
  %v1232 = vld [vmem:[%s3 + $0x950] sm:$0xff]
  %v1233 = vld [vmem:[%s3 + $0x958] sm:$0xff]
  %v1234 = vld [vmem:[%s3 + $0x960] sm:$0xff]
  %v1235 = vld [vmem:[%s3 + $0x968] sm:$0xff]
  %v1236 = vld [vmem:[%s3 + $0x970] sm:$0xff]
  %v1237 = vld [vmem:[%s3 + $0x978] sm:$0xff]
  %v1238 = vld [vmem:[%s3 + $0x980] sm:$0xff]
  %v1239 = vld [vmem:[%s3 + $0x988] sm:$0xff]
  %v1240 = vld [vmem:[%s3 + $0x990] sm:$0xff]
  %v1241 = vld [vmem:[%s3 + $0x998] sm:$0xff]
  %v1242 = vld [vmem:[%s3 + $0x9a0] sm:$0xff]
  %v1243 = vld [vmem:[%s3 + $0x9a8] sm:$0xff]
  %v1244 = vld [vmem:[%s3 + $0x9b0] sm:$0xff]
  %v1245 = vld [vmem:[%s3 + $0x9b8] sm:$0xff]
  %v1246 = vld [vmem:[%s3 + $0x9c0] sm:$0xff]
  %v1247 = vld [vmem:[%s3 + $0x9c8] sm:$0xff]
  %v1248 = vld [vmem:[%s3 + $0x9d0] sm:$0xff]
  %v1249 = vld [vmem:[%s3 + $0x9d8] sm:$0xff]
  %v1250 = vld [vmem:[%s3 + $0x9e0] sm:$0xff]
  %v1251 = vld [vmem:[%s3 + $0x9e8] sm:$0xff]
  %v1252 = vld [vmem:[%s3 + $0x9f0] sm:$0xff]
  %v1253 = vld [vmem:[%s3 + $0x9f8] sm:$0xff]
  %v1254 = vld [vmem:[%s3 + $0xa00] sm:$0xff]
  %v1255 = vld [vmem:[%s3 + $0xa08] sm:$0xff]
  %v1256 = vld [vmem:[%s3 + $0xa10] sm:$0xff]
  %v1257 = vld [vmem:[%s3 + $0xa18] sm:$0xff]
  %v1258 = vld [vmem:[%s3 + $0xa20] sm:$0xff]
  %v1259 = vld [vmem:[%s3 + $0xa28] sm:$0xff]
  %v1260 = vld [vmem:[%s3 + $0xa30] sm:$0xff]
  %v1261 = vld [vmem:[%s3 + $0xa38] sm:$0xff]
  %v1262 = vld [vmem:[%s3 + $0xa40] sm:$0xff]
  %v1263 = vld [vmem:[%s3 + $0xa48] sm:$0xff]
  %v1264 = vld [vmem:[%s3 + $0xa50] sm:$0xff]
  %v1265 = vld [vmem:[%s3 + $0xa58] sm:$0xff]
  %v1266 = vld [vmem:[%s3 + $0xa60] sm:$0xff]
  %v1267 = vld [vmem:[%s3 + $0xa68] sm:$0xff]
  %v1268 = vld [vmem:[%s3 + $0xa70] sm:$0xff]
  %v1269 = vld [vmem:[%s3 + $0xa78] sm:$0xff]
  %v1270 = vld [vmem:[%s3 + $0xa80] sm:$0xff]
  %v1271 = vld [vmem:[%s3 + $0xa88] sm:$0xff]
  %v1272 = vld [vmem:[%s3 + $0xa90] sm:$0xff]
  %v1273 = vld [vmem:[%s3 + $0xa98] sm:$0xff]
  %v1274 = vld [vmem:[%s3 + $0xaa0] sm:$0xff]
  %v1275 = vld [vmem:[%s3 + $0xaa8] sm:$0xff]
  %v1276 = vld [vmem:[%s3 + $0xab0] sm:$0xff]
  %v1277 = vld [vmem:[%s3 + $0xab8] sm:$0xff]
  %v1278 = vld [vmem:[%s3 + $0xac0] sm:$0xff]
  %v1279 = vld [vmem:[%s3 + $0xac8] sm:$0xff]
  %v1280 = vld [vmem:[%s3 + $0xad0] sm:$0xff]
  %v1281 = vld [vmem:[%s3 + $0xad8] sm:$0xff]
  %v1282 = vld [vmem:[%s3 + $0xae0] sm:$0xff]
  %v1283 = vld [vmem:[%s3 + $0xae8] sm:$0xff]
  %v1284 = vld [vmem:[%s3 + $0xaf0] sm:$0xff]
  %v1285 = vld [vmem:[%s3 + $0xaf8] sm:$0xff]
  %v1286 = vld [vmem:[%s3 + $0xb00] sm:$0xff]
  %v1287 = vld [vmem:[%s3 + $0xb08] sm:$0xff]
  %v1288 = vld [vmem:[%s3 + $0xb10] sm:$0xff]
  %v1289 = vld [vmem:[%s3 + $0xb18] sm:$0xff]
  %v1290 = vld [vmem:[%s3 + $0xb20] sm:$0xff]
  %v1291 = vld [vmem:[%s3 + $0xb28] sm:$0xff]
  %v1292 = vld [vmem:[%s3 + $0xb30] sm:$0xff]
  %v1293 = vld [vmem:[%s3 + $0xb38] sm:$0xff]
  %v1294 = vld [vmem:[%s3 + $0xb40] sm:$0xff]
  %v1295 = vld [vmem:[%s3 + $0xb48] sm:$0xff]
  %v1296 = vld [vmem:[%s3 + $0xb50] sm:$0xff]
  %v1297 = vld [vmem:[%s3 + $0xb58] sm:$0xff]
  %v1298 = vld [vmem:[%s3 + $0xb60] sm:$0xff]
  %v1299 = vld [vmem:[%s3 + $0xb68] sm:$0xff]
  %v1300 = vld [vmem:[%s3 + $0xb70] sm:$0xff]
  %v1301 = vld [vmem:[%s3 + $0xb78] sm:$0xff]
  %v1302 = vld [vmem:[%s3 + $0xb80] sm:$0xff]
  %v1303 = vld [vmem:[%s3 + $0xb88] sm:$0xff]
  %v1304 = vld [vmem:[%s3 + $0xb90] sm:$0xff]
  %v1305 = vld [vmem:[%s3 + $0xb98] sm:$0xff]
  %v1306 = vld [vmem:[%s3 + $0xba0] sm:$0xff]
  %v1307 = vld [vmem:[%s3 + $0xba8] sm:$0xff]
  %v1308 = vld [vmem:[%s3 + $0xbb0] sm:$0xff]
  %v1309 = vld [vmem:[%s3 + $0xbb8] sm:$0xff]
  %v1310 = vld [vmem:[%s3 + $0xbc0] sm:$0xff]
  %v1311 = vld [vmem:[%s3 + $0xbc8] sm:$0xff]
  %v1312 = vld [vmem:[%s3 + $0xbd0] sm:$0xff]
  %v1313 = vld [vmem:[%s3 + $0xbd8] sm:$0xff]
  %v1314 = vld [vmem:[%s3 + $0xbe0] sm:$0xff]
  %v1315 = vld [vmem:[%s3 + $0xbe8] sm:$0xff]
  %v1316 = vld [vmem:[%s3 + $0xbf0] sm:$0xff]
  %v1317 = vld [vmem:[%s3 + $0xbf8] sm:$0xff]
  %v1318 = vld [vmem:[%s3 + $0xc00] sm:$0xff]
  %v1319 = vld [vmem:[%s3 + $0xc08] sm:$0xff]
  %v1320 = vld [vmem:[%s3 + $0xc10] sm:$0xff]
  %v1321 = vld [vmem:[%s3 + $0xc18] sm:$0xff]
  %v1322 = vld [vmem:[%s3 + $0xc20] sm:$0xff]
  %v1323 = vld [vmem:[%s3 + $0xc28] sm:$0xff]
  %v1324 = vld [vmem:[%s3 + $0xc30] sm:$0xff]
  %v1325 = vld [vmem:[%s3 + $0xc38] sm:$0xff]
  %v1326 = vld [vmem:[%s3 + $0xc40] sm:$0xff]
  %v1327 = vld [vmem:[%s3 + $0xc48] sm:$0xff]
  %v1328 = vld [vmem:[%s3 + $0xc50] sm:$0xff]
  %v1329 = vld [vmem:[%s3 + $0xc58] sm:$0xff]
  %v1330 = vld [vmem:[%s3 + $0xc60] sm:$0xff]
  %v1331 = vld [vmem:[%s3 + $0xc68] sm:$0xff]
  %v1332 = vld [vmem:[%s3 + $0xc70] sm:$0xff]
  %v1333 = vld [vmem:[%s3 + $0xc78] sm:$0xff]
  %v1334 = vld [vmem:[%s3 + $0xc80] sm:$0xff]
  %v1335 = vld [vmem:[%s3 + $0xc88] sm:$0xff]
  %v1336 = vld [vmem:[%s3 + $0xc90] sm:$0xff]
  %v1337 = vld [vmem:[%s3 + $0xc98] sm:$0xff]
  %v1338 = vld [vmem:[%s3 + $0xca0] sm:$0xff]
  %v1339 = vld [vmem:[%s3 + $0xca8] sm:$0xff]
  %v1340 = vld [vmem:[%s3 + $0xcb0] sm:$0xff]
  %v1341 = vld [vmem:[%s3 + $0xcb8] sm:$0xff]
  %v1342 = vld [vmem:[%s3 + $0xcc0] sm:$0xff]
  %v1343 = vld [vmem:[%s3 + $0xcc8] sm:$0xff]
  %v1344 = vld [vmem:[%s3 + $0xcd0] sm:$0xff]
  %v1345 = vld [vmem:[%s3 + $0xcd8] sm:$0xff]
  %v1346 = vld [vmem:[%s3 + $0xce0] sm:$0xff]
  %v1347 = vld [vmem:[%s3 + $0xce8] sm:$0xff]
  %v1348 = vld [vmem:[%s3 + $0xcf0] sm:$0xff]
  %v1349 = vld [vmem:[%s3 + $0xcf8] sm:$0xff]
  %v1350 = vld [vmem:[%s3 + $0xd00] sm:$0xff]
  %v1351 = vld [vmem:[%s3 + $0xd08] sm:$0xff]
  %v1352 = vld [vmem:[%s3 + $0xd10] sm:$0xff]
  %v1353 = vld [vmem:[%s3 + $0xd18] sm:$0xff]
  %v1354 = vld [vmem:[%s3 + $0xd20] sm:$0xff]
  %v1355 = vld [vmem:[%s3 + $0xd28] sm:$0xff]
  %v1356 = vld [vmem:[%s3 + $0xd30] sm:$0xff]
  %v1357 = vld [vmem:[%s3 + $0xd38] sm:$0xff]
  %v1358 = vld [vmem:[%s3 + $0xd40] sm:$0xff]
  %v1359 = vld [vmem:[%s3 + $0xd48] sm:$0xff]
  %v1360 = vld [vmem:[%s3 + $0xd50] sm:$0xff]
  %v1361 = vld [vmem:[%s3 + $0xd58] sm:$0xff]
  %v1362 = vld [vmem:[%s3 + $0xd60] sm:$0xff]
  %v1363 = vld [vmem:[%s3 + $0xd68] sm:$0xff]
  %v1364 = vld [vmem:[%s3 + $0xd70] sm:$0xff]
  %v1365 = vld [vmem:[%s3 + $0xd78] sm:$0xff]
  %v1366 = vld [vmem:[%s3 + $0xd80] sm:$0xff]
  %v1367 = vld [vmem:[%s3 + $0xd88] sm:$0xff]
  %v1368 = vld [vmem:[%s3 + $0xd90] sm:$0xff]
  %v1369 = vld [vmem:[%s3 + $0xd98] sm:$0xff]
  %v1370 = vld [vmem:[%s3 + $0xda0] sm:$0xff]
  %v1371 = vld [vmem:[%s3 + $0xda8] sm:$0xff]
  %v1372 = vld [vmem:[%s3 + $0xdb0] sm:$0xff]
  %v1373 = vld [vmem:[%s3 + $0xdb8] sm:$0xff]
  %v1374 = vld [vmem:[%s3 + $0xdc0] sm:$0xff]
  %v1375 = vld [vmem:[%s3 + $0xdc8] sm:$0xff]
  %v1376 = vld [vmem:[%s3 + $0xdd0] sm:$0xff]
  %v1377 = vld [vmem:[%s3 + $0xdd8] sm:$0xff]
  %v1378 = vld [vmem:[%s3 + $0xde0] sm:$0xff]
  %v1379 = vld [vmem:[%s3 + $0xde8] sm:$0xff]
  %v1380 = vld [vmem:[%s3 + $0xdf0] sm:$0xff]
  %v1381 = vld [vmem:[%s3 + $0xdf8] sm:$0xff]
  %v1382 = vld [vmem:[%s3 + $0xe00] sm:$0xff]
  %v1383 = vld [vmem:[%s3 + $0xe08] sm:$0xff]
  %v1384 = vld [vmem:[%s3 + $0xe10] sm:$0xff]
  %v1385 = vld [vmem:[%s3 + $0xe18] sm:$0xff]
  %v1386 = vld [vmem:[%s3 + $0xe20] sm:$0xff]
  %v1387 = vld [vmem:[%s3 + $0xe28] sm:$0xff]
  %v1388 = vld [vmem:[%s3 + $0xe30] sm:$0xff]
  %v1389 = vld [vmem:[%s3 + $0xe38] sm:$0xff]
  %v1390 = vld [vmem:[%s3 + $0xe40] sm:$0xff]
  %v1391 = vld [vmem:[%s3 + $0xe48] sm:$0xff]
  %v1392 = vld [vmem:[%s3 + $0xe50] sm:$0xff]
  %v1393 = vld [vmem:[%s3 + $0xe58] sm:$0xff]
  %v1394 = vld [vmem:[%s3 + $0xe60] sm:$0xff]
  %v1395 = vld [vmem:[%s3 + $0xe68] sm:$0xff]
  %v1396 = vld [vmem:[%s3 + $0xe70] sm:$0xff]
  %v1397 = vld [vmem:[%s3 + $0xe78] sm:$0xff]
  %v1398 = vld [vmem:[%s3 + $0xe80] sm:$0xff]
  %v1399 = vld [vmem:[%s3 + $0xe88] sm:$0xff]
  %v1400 = vld [vmem:[%s3 + $0xe90] sm:$0xff]
  %v1401 = vld [vmem:[%s3 + $0xe98] sm:$0xff]
  %v1402 = vld [vmem:[%s3 + $0xea0] sm:$0xff]
  %v1403 = vld [vmem:[%s3 + $0xea8] sm:$0xff]
  %v1404 = vld [vmem:[%s3 + $0xeb0] sm:$0xff]
  %v1405 = vld [vmem:[%s3 + $0xeb8] sm:$0xff]
  %v1406 = vld [vmem:[%s3 + $0xec0] sm:$0xff]
  %v1407 = vld [vmem:[%s3 + $0xec8] sm:$0xff]
  %v1408 = vld [vmem:[%s3 + $0xed0] sm:$0xff]
  %v1409 = vld [vmem:[%s3 + $0xed8] sm:$0xff]
  %v1410 = vld [vmem:[%s3 + $0xee0] sm:$0xff]
  %v1411 = vld [vmem:[%s3 + $0xee8] sm:$0xff]
  %v1412 = vld [vmem:[%s3 + $0xef0] sm:$0xff]
  %v1413 = vld [vmem:[%s3 + $0xef8] sm:$0xff]
  %v1414 = vld [vmem:[%s3 + $0xf00] sm:$0xff]
  %v1415 = vld [vmem:[%s3 + $0xf08] sm:$0xff]
  %v1416 = vld [vmem:[%s3 + $0xf10] sm:$0xff]
  %v1417 = vld [vmem:[%s3 + $0xf18] sm:$0xff]
  %v1418 = vld [vmem:[%s3 + $0xf20] sm:$0xff]
  %v1419 = vld [vmem:[%s3 + $0xf28] sm:$0xff]
  %v1420 = vld [vmem:[%s3 + $0xf30] sm:$0xff]
  %v1421 = vld [vmem:[%s3 + $0xf38] sm:$0xff]
  %v1422 = vld [vmem:[%s3 + $0xf40] sm:$0xff]
  %v1423 = vld [vmem:[%s3 + $0xf48] sm:$0xff]
  %v1424 = vld [vmem:[%s3 + $0xf50] sm:$0xff]
  %v1425 = vld [vmem:[%s3 + $0xf58] sm:$0xff]
  %v1426 = vld [vmem:[%s3 + $0xf60] sm:$0xff]
  %v1427 = vld [vmem:[%s3 + $0xf68] sm:$0xff]
  %v1428 = vld [vmem:[%s3 + $0xf70] sm:$0xff]
  %v1429 = vld [vmem:[%s3 + $0xf78] sm:$0xff]
  %v1430 = vld [vmem:[%s3 + $0xf80] sm:$0xff]
  %v1431 = vld [vmem:[%s3 + $0xf88] sm:$0xff]
  %v1432 = vld [vmem:[%s3 + $0xf90] sm:$0xff]
  %v1433 = vld [vmem:[%s3 + $0xf98] sm:$0xff]
  %v1434 = vld [vmem:[%s3 + $0xfa0] sm:$0xff]
  %v1435 = vld [vmem:[%s3 + $0xfa8] sm:$0xff]
  %v1436 = vld [vmem:[%s3 + $0xfb0] sm:$0xff]
  %v1437 = vld [vmem:[%s3 + $0xfb8] sm:$0xff]
  %v1438 = vld [vmem:[%s3 + $0xfc0] sm:$0xff]
  %v1439 = vld [vmem:[%s3 + $0xfc8] sm:$0xff]
  %v1440 = vld [vmem:[%s3 + $0xfd0] sm:$0xff]
  %v1441 = vld [vmem:[%s3 + $0xfd8] sm:$0xff]
  %v1442 = vld [vmem:[%s3 + $0xfe0] sm:$0xff]
  %v1443 = vld [vmem:[%s3 + $0xfe8] sm:$0xff]
  %v1444 = vld [vmem:[%s3 + $0xff0] sm:$0xff]
  %v1445 = vld [vmem:[%s3 + $0xff8] sm:$0xff]
  %v1446 = vld [vmem:[%s3 + $0x1000] sm:$0xff]
  %v1447 = vld [vmem:[%s3 + $0x1008] sm:$0xff]
  %v1448 = vld [vmem:[%s3 + $0x1010] sm:$0xff]
  %v1449 = vld [vmem:[%s3 + $0x1018] sm:$0xff]
  %v1450 = vld [vmem:[%s3 + $0x1020] sm:$0xff]
  %v1451 = vld [vmem:[%s3 + $0x1028] sm:$0xff]
  %v1452 = vld [vmem:[%s3 + $0x1030] sm:$0xff]
  %v1453 = vld [vmem:[%s3 + $0x1038] sm:$0xff]
  %v1454 = vld [vmem:[%s3 + $0x1040] sm:$0xff]
  %v1455 = vld [vmem:[%s3 + $0x1048] sm:$0xff]
  %v1456 = vld [vmem:[%s3 + $0x1050] sm:$0xff]
  %v1457 = vld [vmem:[%s3 + $0x1058] sm:$0xff]
  %v1458 = vld [vmem:[%s3 + $0x1060] sm:$0xff]
  %v1459 = vld [vmem:[%s3 + $0x1068] sm:$0xff]
  %v1460 = vld [vmem:[%s3 + $0x1070] sm:$0xff]
  %v1461 = vld [vmem:[%s3 + $0x1078] sm:$0xff]
  %v1462 = vld [vmem:[%s3 + $0x1080] sm:$0xff]
  %v1463 = vld [vmem:[%s3 + $0x1088] sm:$0xff]
  %v1464 = vld [vmem:[%s3 + $0x1090] sm:$0xff]
  %v1465 = vld [vmem:[%s3 + $0x1098] sm:$0xff]
  %v1466 = vld [vmem:[%s3 + $0x10a0] sm:$0xff]
  %v1467 = vld [vmem:[%s3 + $0x10a8] sm:$0xff]
  %v1468 = vld [vmem:[%s3 + $0x10b0] sm:$0xff]
  %v1469 = vld [vmem:[%s3 + $0x10b8] sm:$0xff]
  %v1470 = vld [vmem:[%s3 + $0x10c0] sm:$0xff]
  %v1471 = vld [vmem:[%s3 + $0x10c8] sm:$0xff]
  %v1472 = vld [vmem:[%s3 + $0x10d0] sm:$0xff]
  %v1473 = vld [vmem:[%s3 + $0x10d8] sm:$0xff]
  %v1474 = vld [vmem:[%s3 + $0x10e0] sm:$0xff]
  %v1475 = vld [vmem:[%s3 + $0x10e8] sm:$0xff]
  %v1476 = vld [vmem:[%s3 + $0x10f0] sm:$0xff]
  %v1477 = vld [vmem:[%s3 + $0x10f8] sm:$0xff]
  %v1478 = vld [vmem:[%s3 + $0x1100] sm:$0xff]
  %v1479 = vld [vmem:[%s3 + $0x1108] sm:$0xff]
  %v1480 = vld [vmem:[%s3 + $0x1110] sm:$0xff]
  %v1481 = vld [vmem:[%s3 + $0x1118] sm:$0xff]
  %v1482 = vld [vmem:[%s3 + $0x1120] sm:$0xff]
  %v1483 = vld [vmem:[%s3 + $0x1128] sm:$0xff]
  %v1484 = vld [vmem:[%s3 + $0x1130] sm:$0xff]
  %v1485 = vld [vmem:[%s3 + $0x1138] sm:$0xff]
  %v1486 = vld [vmem:[%s3 + $0x1140] sm:$0xff]
  %v1487 = vld [vmem:[%s3 + $0x1148] sm:$0xff]
  %v1488 = vld [vmem:[%s3 + $0x1150] sm:$0xff]
  %v1489 = vld [vmem:[%s3 + $0x1158] sm:$0xff]
  %v1490 = vld [vmem:[%s3 + $0x1160] sm:$0xff]
  %v1491 = vld [vmem:[%s3 + $0x1168] sm:$0xff]
  %v1492 = vld [vmem:[%s3 + $0x1170] sm:$0xff]
  %v1493 = vld [vmem:[%s3 + $0x1178] sm:$0xff]
  %v1494 = vld [vmem:[%s3 + $0x1180] sm:$0xff]
  %v1495 = vld [vmem:[%s3 + $0x1188] sm:$0xff]
  %v1496 = vld [vmem:[%s3 + $0x1190] sm:$0xff]
  %v1497 = vld [vmem:[%s3 + $0x1198] sm:$0xff]
  %v1498 = vld [vmem:[%s3 + $0x11a0] sm:$0xff]
  %v1499 = vld [vmem:[%s3 + $0x11a8] sm:$0xff]
  %v1500 = vld [vmem:[%s3 + $0x11b0] sm:$0xff]
  %v1501 = vld [vmem:[%s3 + $0x11b8] sm:$0xff]
  %v1502 = vld [vmem:[%s3 + $0x11c0] sm:$0xff]
  %v1503 = vld [vmem:[%s3 + $0x11c8] sm:$0xff]
  %v1504 = vld [vmem:[%s3 + $0x11d0] sm:$0xff]
  %v1505 = vld [vmem:[%s3 + $0x11d8] sm:$0xff]
  %v1506 = vld [vmem:[%s3 + $0x11e0] sm:$0xff]
  %v1507 = vld [vmem:[%s3 + $0x11e8] sm:$0xff]
  %v1508 = vld [vmem:[%s3 + $0x11f0] sm:$0xff]
  %v1509 = vld [vmem:[%s3 + $0x11f8] sm:$0xff]
  %v1510 = vld [vmem:[%s3 + $0x1200] sm:$0xff]
  %v1511 = vld [vmem:[%s3 + $0x1208] sm:$0xff]
  %v1512 = vld [vmem:[%s3 + $0x1210] sm:$0xff]
  %v1513 = vld [vmem:[%s3 + $0x1218] sm:$0xff]
  %v1514 = vld [vmem:[%s3 + $0x1220] sm:$0xff]
  %v1515 = vld [vmem:[%s3 + $0x1228] sm:$0xff]
  %v1516 = vld [vmem:[%s3 + $0x1230] sm:$0xff]
  %v1517 = vld [vmem:[%s3 + $0x1238] sm:$0xff]
  %v1518 = vld [vmem:[%s3 + $0x1240] sm:$0xff]
  %v1519 = vld [vmem:[%s3 + $0x1248] sm:$0xff]
  %v1520 = vld [vmem:[%s3 + $0x1250] sm:$0xff]
  %v1521 = vld [vmem:[%s3 + $0x1258] sm:$0xff]
  %v1522 = vld [vmem:[%s3 + $0x1260] sm:$0xff]
  %v1523 = vld [vmem:[%s3 + $0x1268] sm:$0xff]
  %v1524 = vld [vmem:[%s3 + $0x1270] sm:$0xff]
  %v1525 = vld [vmem:[%s3 + $0x1278] sm:$0xff]
  %v1526 = vld [vmem:[%s3 + $0x1280] sm:$0xff]
  %v1527 = vld [vmem:[%s3 + $0x1288] sm:$0xff]
  %v1528 = vld [vmem:[%s3 + $0x1290] sm:$0xff]
  %v1529 = vld [vmem:[%s3 + $0x1298] sm:$0xff]
  %v1530 = vld [vmem:[%s3 + $0x12a0] sm:$0xff]
  %v1531 = vld [vmem:[%s3 + $0x12a8] sm:$0xff]
  %v1532 = vld [vmem:[%s3 + $0x12b0] sm:$0xff]
  %v1533 = vld [vmem:[%s3 + $0x12b8] sm:$0xff]
  %v1534 = vld [vmem:[%s3 + $0x12c0] sm:$0xff]
  %v1535 = vld [vmem:[%s3 + $0x12c8] sm:$0xff]
  %v1536 = vld [vmem:[%s3 + $0x12d0] sm:$0xff]
  %v1537 = vld [vmem:[%s3 + $0x12d8] sm:$0xff]
  %v1538 = vld [vmem:[%s3 + $0x12e0] sm:$0xff]
  %v1539 = vld [vmem:[%s3 + $0x12e8] sm:$0xff]
  %v1540 = vld [vmem:[%s3 + $0x12f0] sm:$0xff]
  %v1541 = vld [vmem:[%s3 + $0x12f8] sm:$0xff]
  %v1542 = vld [vmem:[%s3 + $0x1300] sm:$0xff]
  %v1543 = vld [vmem:[%s3 + $0x1308] sm:$0xff]
  %v1544 = vld [vmem:[%s3 + $0x1310] sm:$0xff]
  %v1545 = vld [vmem:[%s3 + $0x1318] sm:$0xff]
  %v1546 = vld [vmem:[%s3 + $0x1320] sm:$0xff]
  %v1547 = vld [vmem:[%s3 + $0x1328] sm:$0xff]
  %v1548 = vld [vmem:[%s3 + $0x1330] sm:$0xff]
  %v1549 = vld [vmem:[%s3 + $0x1338] sm:$0xff]
  %v1550 = vld [vmem:[%s3 + $0x1340] sm:$0xff]
  %v1551 = vld [vmem:[%s3 + $0x1348] sm:$0xff]
  %v1552 = vld [vmem:[%s3 + $0x1350] sm:$0xff]
  %v1553 = vld [vmem:[%s3 + $0x1358] sm:$0xff]
  %v1554 = vld [vmem:[%s3 + $0x1360] sm:$0xff]
  %v1555 = vld [vmem:[%s3 + $0x1368] sm:$0xff]
  %v1556 = vld [vmem:[%s3 + $0x1370] sm:$0xff]
  %v1557 = vld [vmem:[%s3 + $0x1378] sm:$0xff]
  %v1558 = vld [vmem:[%s3 + $0x1380] sm:$0xff]
  %v1559 = vld [vmem:[%s3 + $0x1388] sm:$0xff]
  %v1560 = vld [vmem:[%s3 + $0x1390] sm:$0xff]
  %v1561 = vld [vmem:[%s3 + $0x1398] sm:$0xff]
  %v1562 = vld [vmem:[%s3 + $0x13a0] sm:$0xff]
  %v1563 = vld [vmem:[%s3 + $0x13a8] sm:$0xff]
  %v1564 = vld [vmem:[%s3 + $0x13b0] sm:$0xff]
  %v1565 = vld [vmem:[%s3 + $0x13b8] sm:$0xff]
  %v1566 = vld [vmem:[%s3 + $0x13c0] sm:$0xff]
  %v1567 = vld [vmem:[%s3 + $0x13c8] sm:$0xff]
  %v1568 = vld [vmem:[%s3 + $0x13d0] sm:$0xff]
  %v1569 = vld [vmem:[%s3 + $0x13d8] sm:$0xff]
  %v1570 = vld [vmem:[%s3 + $0x13e0] sm:$0xff]
  %v1571 = vld [vmem:[%s3 + $0x13e8] sm:$0xff]
  %v1572 = vld [vmem:[%s3 + $0x13f0] sm:$0xff]
  %v1573 = vld [vmem:[%s3 + $0x13f8] sm:$0xff]
  %v1574 = vld [vmem:[%s3 + $0x1400] sm:$0xff]
  %v1575 = vld [vmem:[%s3 + $0x1408] sm:$0xff]
  %v1576 = vld [vmem:[%s3 + $0x1410] sm:$0xff]
  %v1577 = vld [vmem:[%s3 + $0x1418] sm:$0xff]
  %v1578 = vld [vmem:[%s3 + $0x1420] sm:$0xff]
  %v1579 = vld [vmem:[%s3 + $0x1428] sm:$0xff]
  %v1580 = vld [vmem:[%s3 + $0x1430] sm:$0xff]
  %v1581 = vld [vmem:[%s3 + $0x1438] sm:$0xff]
  %v1582 = vld [vmem:[%s3 + $0x1440] sm:$0xff]
  %v1583 = vld [vmem:[%s3 + $0x1448] sm:$0xff]
  %v1584 = vld [vmem:[%s3 + $0x1450] sm:$0xff]
  %v1585 = vld [vmem:[%s3 + $0x1458] sm:$0xff]
  %v1586 = vld [vmem:[%s3 + $0x1460] sm:$0xff]
  %v1587 = vld [vmem:[%s3 + $0x1468] sm:$0xff]
  %v1588 = vld [vmem:[%s3 + $0x1470] sm:$0xff]
  %v1589 = vld [vmem:[%s3 + $0x1478] sm:$0xff]
  %v1590 = vld [vmem:[%s3 + $0x1480] sm:$0xff]
  %v1591 = vld [vmem:[%s3 + $0x1488] sm:$0xff]
  %v1592 = vld [vmem:[%s3 + $0x1490] sm:$0xff]
  %v1593 = vld [vmem:[%s3 + $0x1498] sm:$0xff]
  %v1594 = vld [vmem:[%s3 + $0x14a0] sm:$0xff]
  %v1595 = vld [vmem:[%s3 + $0x14a8] sm:$0xff]
  %v1596 = vld [vmem:[%s3 + $0x14b0] sm:$0xff]
  %v1597 = vld [vmem:[%s3 + $0x14b8] sm:$0xff]
  %v1598 = vld [vmem:[%s3 + $0x14c0] sm:$0xff]
  %v1599 = vld [vmem:[%s3 + $0x14c8] sm:$0xff]
  %v1600 = vld [vmem:[%s3 + $0x14d0] sm:$0xff]
  %v1601 = vld [vmem:[%s3 + $0x14d8] sm:$0xff]
  %v1602 = vld [vmem:[%s3 + $0x14e0] sm:$0xff]
  %v1603 = vld [vmem:[%s3 + $0x14e8] sm:$0xff]
  %v1604 = vld [vmem:[%s3 + $0x14f0] sm:$0xff]
  %v1605 = vld [vmem:[%s3 + $0x14f8] sm:$0xff]
  %v1606 = vld [vmem:[%s3 + $0x1500] sm:$0xff]
  %v1607 = vld [vmem:[%s3 + $0x1508] sm:$0xff]
  %v1608 = vld [vmem:[%s3 + $0x1510] sm:$0xff]
  %v1609 = vld [vmem:[%s3 + $0x1518] sm:$0xff]
  %v1610 = vld [vmem:[%s3 + $0x1520] sm:$0xff]
  %v1611 = vld [vmem:[%s3 + $0x1528] sm:$0xff]
  %v1612 = vld [vmem:[%s3 + $0x1530] sm:$0xff]
  %v1613 = vld [vmem:[%s3 + $0x1538] sm:$0xff]
  %v1614 = vld [vmem:[%s3 + $0x1540] sm:$0xff]
  %v1615 = vld [vmem:[%s3 + $0x1548] sm:$0xff]
  %v1616 = vld [vmem:[%s3 + $0x1550] sm:$0xff]
  %v1617 = vld [vmem:[%s3 + $0x1558] sm:$0xff]
  %v1618 = vld [vmem:[%s3 + $0x1560] sm:$0xff]
  %v1619 = vld [vmem:[%s3 + $0x1568] sm:$0xff]
  %v1620 = vld [vmem:[%s3 + $0x1570] sm:$0xff]
  %v1621 = vld [vmem:[%s3 + $0x1578] sm:$0xff]
  %v1622 = vld [vmem:[%s3 + $0x1580] sm:$0xff]
  %v1623 = vld [vmem:[%s3 + $0x1588] sm:$0xff]
  %v1624 = vld [vmem:[%s3 + $0x1590] sm:$0xff]
  %v1625 = vld [vmem:[%s3 + $0x1598] sm:$0xff]
  %v1626 = vld [vmem:[%s3 + $0x15a0] sm:$0xff]
  %v1627 = vld [vmem:[%s3 + $0x15a8] sm:$0xff]
  %v1628 = vld [vmem:[%s3 + $0x15b0] sm:$0xff]
  %v1629 = vld [vmem:[%s3 + $0x15b8] sm:$0xff]
  %v1630 = vld [vmem:[%s3 + $0x15c0] sm:$0xff]
  %v1631 = vld [vmem:[%s3 + $0x15c8] sm:$0xff]
  %v1632 = vld [vmem:[%s3 + $0x15d0] sm:$0xff]
  %v1633 = vld [vmem:[%s3 + $0x15d8] sm:$0xff]
  %v1634 = vld [vmem:[%s3 + $0x15e0] sm:$0xff]
  %v1635 = vld [vmem:[%s3 + $0x15e8] sm:$0xff]
  %v1636 = vld [vmem:[%s3 + $0x15f0] sm:$0xff]
  %v1637 = vld [vmem:[%s3 + $0x15f8] sm:$0xff]
  %v1638 = vld [vmem:[%s3 + $0x1600] sm:$0xff]
  %v1639 = vld [vmem:[%s3 + $0x1608] sm:$0xff]
  %v1640 = vld [vmem:[%s3 + $0x1610] sm:$0xff]
  %v1641 = vld [vmem:[%s3 + $0x1618] sm:$0xff]
  %v1642 = vld [vmem:[%s3 + $0x1620] sm:$0xff]
  %v1643 = vld [vmem:[%s3 + $0x1628] sm:$0xff]
  %v1644 = vld [vmem:[%s3 + $0x1630] sm:$0xff]
  %v1645 = vld [vmem:[%s3 + $0x1638] sm:$0xff]
  %v1646 = vld [vmem:[%s3 + $0x1640] sm:$0xff]
  %v1647 = vld [vmem:[%s3 + $0x1648] sm:$0xff]
  %v1648 = vld [vmem:[%s3 + $0x1650] sm:$0xff]
  %v1649 = vld [vmem:[%s3 + $0x1658] sm:$0xff]
  %v1650 = vld [vmem:[%s3 + $0x1660] sm:$0xff]
  %v1651 = vld [vmem:[%s3 + $0x1668] sm:$0xff]
  %v1652 = vld [vmem:[%s3 + $0x1670] sm:$0xff]
  %v1653 = vld [vmem:[%s3 + $0x1678] sm:$0xff]
  %v1654 = vld [vmem:[%s3 + $0x1680] sm:$0xff]
  %v1655 = vld [vmem:[%s3 + $0x1688] sm:$0xff]
  %v1656 = vld [vmem:[%s3 + $0x1690] sm:$0xff]
  %v1657 = vld [vmem:[%s3 + $0x1698] sm:$0xff]
  %v1658 = vld [vmem:[%s3 + $0x16a0] sm:$0xff]
  %v1659 = vld [vmem:[%s3 + $0x16a8] sm:$0xff]
  %v1660 = vld [vmem:[%s3 + $0x16b0] sm:$0xff]
  %v1661 = vld [vmem:[%s3 + $0x16b8] sm:$0xff]
  %v1662 = vld [vmem:[%s3 + $0x16c0] sm:$0xff]
  %v1663 = vld [vmem:[%s3 + $0x16c8] sm:$0xff]
  %v1664 = vld [vmem:[%s3 + $0x16d0] sm:$0xff]
  %v1665 = vld [vmem:[%s3 + $0x16d8] sm:$0xff]
  %v1666 = vld [vmem:[%s3 + $0x16e0] sm:$0xff]
  %v1667 = vld [vmem:[%s3 + $0x16e8] sm:$0xff]
  %v1668 = vld [vmem:[%s3 + $0x16f0] sm:$0xff]
  %v1669 = vld [vmem:[%s3 + $0x16f8] sm:$0xff]
  %v1670 = vld [vmem:[%s3 + $0x1700] sm:$0xff]
  %v1671 = vld [vmem:[%s3 + $0x1708] sm:$0xff]
  %v1672 = vld [vmem:[%s3 + $0x1710] sm:$0xff]
  %v1673 = vld [vmem:[%s3 + $0x1718] sm:$0xff]
  %v1674 = vld [vmem:[%s3 + $0x1720] sm:$0xff]
  %v1675 = vld [vmem:[%s3 + $0x1728] sm:$0xff]
  %v1676 = vld [vmem:[%s3 + $0x1730] sm:$0xff]
  %v1677 = vld [vmem:[%s3 + $0x1738] sm:$0xff]
  %v1678 = vld [vmem:[%s3 + $0x1740] sm:$0xff]
  %v1679 = vld [vmem:[%s3 + $0x1748] sm:$0xff]
  %v1680 = vld [vmem:[%s3 + $0x1750] sm:$0xff]
  %v1681 = vld [vmem:[%s3 + $0x1758] sm:$0xff]
  %v1682 = vld [vmem:[%s3 + $0x1760] sm:$0xff]
  %v1683 = vld [vmem:[%s3 + $0x1768] sm:$0xff]
  %v1684 = vld [vmem:[%s3 + $0x1770] sm:$0xff]
  %v1685 = vld [vmem:[%s3 + $0x1778] sm:$0xff]
  %v1686 = vld [vmem:[%s3 + $0x1780] sm:$0xff]
  %v1687 = vld [vmem:[%s3 + $0x1788] sm:$0xff]
  %v1688 = vld [vmem:[%s3 + $0x1790] sm:$0xff]
  %v1689 = vld [vmem:[%s3 + $0x1798] sm:$0xff]
  %v1690 = vld [vmem:[%s3 + $0x17a0] sm:$0xff]
  %v1691 = vld [vmem:[%s3 + $0x17a8] sm:$0xff]
  %v1692 = vld [vmem:[%s3 + $0x17b0] sm:$0xff]
  %v1693 = vld [vmem:[%s3 + $0x17b8] sm:$0xff]
  %v1694 = vld [vmem:[%s3 + $0x17c0] sm:$0xff]
  %v1695 = vld [vmem:[%s3 + $0x17c8] sm:$0xff]
  %v1696 = vld [vmem:[%s3 + $0x17d0] sm:$0xff]
  %v1697 = vld [vmem:[%s3 + $0x17d8] sm:$0xff]
  %v1698 = vld [vmem:[%s3 + $0x17e0] sm:$0xff]
  %v1699 = vld [vmem:[%s3 + $0x17e8] sm:$0xff]
  %v1700 = vld [vmem:[%s3 + $0x17f0] sm:$0xff]
  %v1701 = vld [vmem:[%s3 + $0x17f8] sm:$0xff]
  %v1702 = vld [vmem:[%s3 + $0x1800] sm:$0xff]
  %v1703 = vld [vmem:[%s3 + $0x1808] sm:$0xff]
  %v1704 = vld [vmem:[%s3 + $0x1810] sm:$0xff]
  %v1705 = vld [vmem:[%s3 + $0x1818] sm:$0xff]
  %v1706 = vld [vmem:[%s3 + $0x1820] sm:$0xff]
  %v1707 = vld [vmem:[%s3 + $0x1828] sm:$0xff]
  %v1708 = vld [vmem:[%s3 + $0x1830] sm:$0xff]
  %v1709 = vld [vmem:[%s3 + $0x1838] sm:$0xff]
  %v1710 = vld [vmem:[%s3 + $0x1840] sm:$0xff]
  %v1711 = vld [vmem:[%s3 + $0x1848] sm:$0xff]
  %v1712 = vld [vmem:[%s3 + $0x1850] sm:$0xff]
  %v1713 = vld [vmem:[%s3 + $0x1858] sm:$0xff]
  %v1714 = vld [vmem:[%s3 + $0x1860] sm:$0xff]
  %v1715 = vld [vmem:[%s3 + $0x1868] sm:$0xff]
  %v1716 = vld [vmem:[%s3 + $0x1870] sm:$0xff]
  %v1717 = vld [vmem:[%s3 + $0x1878] sm:$0xff]
  %v1718 = vld [vmem:[%s3 + $0x1880] sm:$0xff]
  %v1719 = vld [vmem:[%s3 + $0x1888] sm:$0xff]
  %v1720 = vld [vmem:[%s3 + $0x1890] sm:$0xff]
  %v1721 = vld [vmem:[%s3 + $0x1898] sm:$0xff]
  %v1722 = vld [vmem:[%s3 + $0x18a0] sm:$0xff]
  %v1723 = vld [vmem:[%s3 + $0x18a8] sm:$0xff]
  %v1724 = vld [vmem:[%s3 + $0x18b0] sm:$0xff]
  %v1725 = vld [vmem:[%s3 + $0x18b8] sm:$0xff]
  %v1726 = vld [vmem:[%s3 + $0x18c0] sm:$0xff]
  %v1727 = vld [vmem:[%s3 + $0x18c8] sm:$0xff]
  %v1728 = vld [vmem:[%s3 + $0x18d0] sm:$0xff]
  %v1729 = vld [vmem:[%s3 + $0x18d8] sm:$0xff]
  %v1730 = vld [vmem:[%s3 + $0x18e0] sm:$0xff]
  %v1731 = vld [vmem:[%s3 + $0x18e8] sm:$0xff]
  %v1732 = vld [vmem:[%s3 + $0x18f0] sm:$0xff]
  %v1733 = vld [vmem:[%s3 + $0x18f8] sm:$0xff]
  %v1734 = vld [vmem:[%s3 + $0x1900] sm:$0xff]
  %v1735 = vld [vmem:[%s3 + $0x1908] sm:$0xff]
  %v1736 = vld [vmem:[%s3 + $0x1910] sm:$0xff]
  %v1737 = vld [vmem:[%s3 + $0x1918] sm:$0xff]
  %v1738 = vld [vmem:[%s3 + $0x1920] sm:$0xff]
  %v1739 = vld [vmem:[%s3 + $0x1928] sm:$0xff]
  %v1740 = vld [vmem:[%s3 + $0x1930] sm:$0xff]
  %v1741 = vld [vmem:[%s3 + $0x1938] sm:$0xff]
  %v1742 = vld [vmem:[%s3 + $0x1940] sm:$0xff]
  %v1743 = vld [vmem:[%s3 + $0x1948] sm:$0xff]
  %v1744 = vld [vmem:[%s3 + $0x1950] sm:$0xff]
  %v1745 = vld [vmem:[%s3 + $0x1958] sm:$0xff]
  %v1746 = vld [vmem:[%s3 + $0x1960] sm:$0xff]
  %v1747 = vld [vmem:[%s3 + $0x1968] sm:$0xff]
  %v1748 = vld [vmem:[%s3 + $0x1970] sm:$0xff]
  %v1749 = vld [vmem:[%s3 + $0x1978] sm:$0xff]
  %v1750 = vld [vmem:[%s3 + $0x1980] sm:$0xff]
  %v1751 = vld [vmem:[%s3 + $0x1988] sm:$0xff]
  %v1752 = vld [vmem:[%s3 + $0x1990] sm:$0xff]
  %v1753 = vld [vmem:[%s3 + $0x1998] sm:$0xff]
  %v1754 = vld [vmem:[%s3 + $0x19a0] sm:$0xff]
  %v1755 = vld [vmem:[%s3 + $0x19a8] sm:$0xff]
  %v1756 = vld [vmem:[%s3 + $0x19b0] sm:$0xff]
  %v1757 = vld [vmem:[%s3 + $0x19b8] sm:$0xff]
  %v1758 = vld [vmem:[%s3 + $0x19c0] sm:$0xff]
  %v1759 = vld [vmem:[%s3 + $0x19c8] sm:$0xff]
  %v1760 = vld [vmem:[%s3 + $0x19d0] sm:$0xff]
  %v1761 = vld [vmem:[%s3 + $0x19d8] sm:$0xff]
  %v1762 = vld [vmem:[%s3 + $0x19e0] sm:$0xff]
  %v1763 = vld [vmem:[%s3 + $0x19e8] sm:$0xff]
  %v1764 = vld [vmem:[%s3 + $0x19f0] sm:$0xff]
  %v1765 = vld [vmem:[%s3 + $0x19f8] sm:$0xff]
  %v1766 = vld [vmem:[%s3 + $0x1a00] sm:$0xff]
  %v1767 = vld [vmem:[%s3 + $0x1a08] sm:$0xff]
  %v1768 = vld [vmem:[%s3 + $0x1a10] sm:$0xff]
  %v1769 = vld [vmem:[%s3 + $0x1a18] sm:$0xff]
  %v1770 = vld [vmem:[%s3 + $0x1a20] sm:$0xff]
  %v1771 = vld [vmem:[%s3 + $0x1a28] sm:$0xff]
  %v1772 = vld [vmem:[%s3 + $0x1a30] sm:$0xff]
  %v1773 = vld [vmem:[%s3 + $0x1a38] sm:$0xff]
  %v1774 = vld [vmem:[%s3 + $0x1a40] sm:$0xff]
  %v1775 = vld [vmem:[%s3 + $0x1a48] sm:$0xff]
  %v1776 = vld [vmem:[%s3 + $0x1a50] sm:$0xff]
  %v1777 = vld [vmem:[%s3 + $0x1a58] sm:$0xff]
  %v1778 = vld [vmem:[%s3 + $0x1a60] sm:$0xff]
  %v1779 = vld [vmem:[%s3 + $0x1a68] sm:$0xff]
  %v1780 = vld [vmem:[%s3 + $0x1a70] sm:$0xff]
  %v1781 = vld [vmem:[%s3 + $0x1a78] sm:$0xff]
  %v1782 = vld [vmem:[%s3 + $0x1a80] sm:$0xff]
  %v1783 = vld [vmem:[%s3 + $0x1a88] sm:$0xff]
  %v1784 = vld [vmem:[%s3 + $0x1a90] sm:$0xff]
  %v1785 = vld [vmem:[%s3 + $0x1a98] sm:$0xff]
  %v1786 = vld [vmem:[%s3 + $0x1aa0] sm:$0xff]
  %v1787 = vld [vmem:[%s3 + $0x1aa8] sm:$0xff]
  %v1788 = vld [vmem:[%s3 + $0x1ab0] sm:$0xff]
  %v1789 = vld [vmem:[%s3 + $0x1ab8] sm:$0xff]
  %v1790 = vld [vmem:[%s3 + $0x1ac0] sm:$0xff]
  %v1791 = vld [vmem:[%s3 + $0x1ac8] sm:$0xff]
  %v1792 = vld [vmem:[%s3 + $0x1ad0] sm:$0xff]
  %v1793 = vld [vmem:[%s3 + $0x1ad8] sm:$0xff]
  %v1794 = vld [vmem:[%s3 + $0x1ae0] sm:$0xff]
  %v1795 = vld [vmem:[%s3 + $0x1ae8] sm:$0xff]
  %v1796 = vld [vmem:[%s3 + $0x1af0] sm:$0xff]
  %v1797 = vld [vmem:[%s3 + $0x1af8] sm:$0xff]
  %v1798 = vld [vmem:[%s3 + $0x1b00] sm:$0xff]
  %v1799 = vld [vmem:[%s3 + $0x1b08] sm:$0xff]
  %v1800 = vld [vmem:[%s3 + $0x1b10] sm:$0xff]
  %v1801 = vld [vmem:[%s3 + $0x1b18] sm:$0xff]
  %v1802 = vld [vmem:[%s3 + $0x1b20] sm:$0xff]
  %v1803 = vld [vmem:[%s3 + $0x1b28] sm:$0xff]
  %v1804 = vld [vmem:[%s3 + $0x1b30] sm:$0xff]
  %v1805 = vld [vmem:[%s3 + $0x1b38] sm:$0xff]
  %v1806 = vld [vmem:[%s3 + $0x1b40] sm:$0xff]
  %v1807 = vld [vmem:[%s3 + $0x1b48] sm:$0xff]
  %v1808 = vld [vmem:[%s3 + $0x1b50] sm:$0xff]
  %v1809 = vld [vmem:[%s3 + $0x1b58] sm:$0xff]
  %v1810 = vld [vmem:[%s3 + $0x1b60] sm:$0xff]
  %v1811 = vld [vmem:[%s3 + $0x1b68] sm:$0xff]
  %v1812 = vld [vmem:[%s3 + $0x1b70] sm:$0xff]
  %v1813 = vld [vmem:[%s3 + $0x1b78] sm:$0xff]
  %v1814 = vld [vmem:[%s3 + $0x1b80] sm:$0xff]
  %v1815 = vld [vmem:[%s3 + $0x1b88] sm:$0xff]
  %v1816 = vld [vmem:[%s3 + $0x1b90] sm:$0xff]
  %v1817 = vld [vmem:[%s3 + $0x1b98] sm:$0xff]
  %v1818 = vld [vmem:[%s3 + $0x1ba0] sm:$0xff]
  %v1819 = vld [vmem:[%s3 + $0x1ba8] sm:$0xff]
  %v1820 = vld [vmem:[%s3 + $0x1bb0] sm:$0xff]
  %v1821 = vld [vmem:[%s3 + $0x1bb8] sm:$0xff]
  %v1822 = vld [vmem:[%s3 + $0x1bc0] sm:$0xff]
  %v1823 = vld [vmem:[%s3 + $0x1bc8] sm:$0xff]
  %v1824 = vld [vmem:[%s3 + $0x1bd0] sm:$0xff]
  %v1825 = vld [vmem:[%s3 + $0x1bd8] sm:$0xff]
  %v1826 = vld [vmem:[%s3 + $0x1be0] sm:$0xff]
  %v1827 = vld [vmem:[%s3 + $0x1be8] sm:$0xff]
  %v1828 = vld [vmem:[%s3 + $0x1bf0] sm:$0xff]
  %v1829 = vld [vmem:[%s3 + $0x1bf8] sm:$0xff]
  %v1830 = vld [vmem:[%s3 + $0x1c00] sm:$0xff]
  %v1831 = vld [vmem:[%s3 + $0x1c08] sm:$0xff]
  %v1832 = vld [vmem:[%s3 + $0x1c10] sm:$0xff]
  %v1833 = vld [vmem:[%s3 + $0x1c18] sm:$0xff]
  %v1834 = vld [vmem:[%s3 + $0x1c20] sm:$0xff]
  %v1835 = vld [vmem:[%s3 + $0x1c28] sm:$0xff]
  %v1836 = vld [vmem:[%s3 + $0x1c30] sm:$0xff]
  %v1837 = vld [vmem:[%s3 + $0x1c38] sm:$0xff]
  %v1838 = vld [vmem:[%s3 + $0x1c40] sm:$0xff]
  %v1839 = vld [vmem:[%s3 + $0x1c48] sm:$0xff]
  %v1840 = vld [vmem:[%s3 + $0x1c50] sm:$0xff]
  %v1841 = vld [vmem:[%s3 + $0x1c58] sm:$0xff]
  %v1842 = vld [vmem:[%s3 + $0x1c60] sm:$0xff]
  %v1843 = vld [vmem:[%s3 + $0x1c68] sm:$0xff]
  %v1844 = vld [vmem:[%s3 + $0x1c70] sm:$0xff]
  %v1845 = vld [vmem:[%s3 + $0x1c78] sm:$0xff]
  %v1846 = vld [vmem:[%s3 + $0x1c80] sm:$0xff]
  %v1847 = vld [vmem:[%s3 + $0x1c88] sm:$0xff]
  %v1848 = vld [vmem:[%s3 + $0x1c90] sm:$0xff]
  %v1849 = vld [vmem:[%s3 + $0x1c98] sm:$0xff]
  %v1850 = vld [vmem:[%s3 + $0x1ca0] sm:$0xff]
  %v1851 = vld [vmem:[%s3 + $0x1ca8] sm:$0xff]
  %v1852 = vld [vmem:[%s3 + $0x1cb0] sm:$0xff]
  %v1853 = vld [vmem:[%s3 + $0x1cb8] sm:$0xff]
  %v1854 = vld [vmem:[%s3 + $0x1cc0] sm:$0xff]
  %v1855 = vld [vmem:[%s3 + $0x1cc8] sm:$0xff]
  %v1856 = vld [vmem:[%s3 + $0x1cd0] sm:$0xff]
  %v1857 = vld [vmem:[%s3 + $0x1cd8] sm:$0xff]
  %v1858 = vld [vmem:[%s3 + $0x1ce0] sm:$0xff]
  %v1859 = vld [vmem:[%s3 + $0x1ce8] sm:$0xff]
  %v1860 = vld [vmem:[%s3 + $0x1cf0] sm:$0xff]
  %v1861 = vld [vmem:[%s3 + $0x1cf8] sm:$0xff]
  %v1862 = vld [vmem:[%s3 + $0x1d00] sm:$0xff]
  %v1863 = vld [vmem:[%s3 + $0x1d08] sm:$0xff]
  %v1864 = vld [vmem:[%s3 + $0x1d10] sm:$0xff]
  %v1865 = vld [vmem:[%s3 + $0x1d18] sm:$0xff]
  %v1866 = vld [vmem:[%s3 + $0x1d20] sm:$0xff]
  %v1867 = vld [vmem:[%s3 + $0x1d28] sm:$0xff]
  %v1868 = vld [vmem:[%s3 + $0x1d30] sm:$0xff]
  %v1869 = vld [vmem:[%s3 + $0x1d38] sm:$0xff]
  %v1870 = vld [vmem:[%s3 + $0x1d40] sm:$0xff]
  %v1871 = vld [vmem:[%s3 + $0x1d48] sm:$0xff]
  %v1872 = vld [vmem:[%s3 + $0x1d50] sm:$0xff]
  %v1873 = vld [vmem:[%s3 + $0x1d58] sm:$0xff]
  %v1874 = vld [vmem:[%s3 + $0x1d60] sm:$0xff]
  %v1875 = vld [vmem:[%s3 + $0x1d68] sm:$0xff]
  %v1876 = vld [vmem:[%s3 + $0x1d70] sm:$0xff]
  %v1877 = vld [vmem:[%s3 + $0x1d78] sm:$0xff]
  %v1878 = vld [vmem:[%s3 + $0x1d80] sm:$0xff]
  %v1879 = vld [vmem:[%s3 + $0x1d88] sm:$0xff]
  %v1880 = vld [vmem:[%s3 + $0x1d90] sm:$0xff]
  %v1881 = vld [vmem:[%s3 + $0x1d98] sm:$0xff]
  %v1882 = vld [vmem:[%s3 + $0x1da0] sm:$0xff]
  %v1883 = vld [vmem:[%s3 + $0x1da8] sm:$0xff]
  %v1884 = vld [vmem:[%s3 + $0x1db0] sm:$0xff]
  %v1885 = vld [vmem:[%s3 + $0x1db8] sm:$0xff]
  %v1886 = vld [vmem:[%s3 + $0x1dc0] sm:$0xff]
  %v1887 = vld [vmem:[%s3 + $0x1dc8] sm:$0xff]
  %v1888 = vld [vmem:[%s3 + $0x1dd0] sm:$0xff]
  %v1889 = vld [vmem:[%s3 + $0x1dd8] sm:$0xff]
  %v1890 = vld [vmem:[%s3 + $0x1de0] sm:$0xff]
  %v1891 = vld [vmem:[%s3 + $0x1de8] sm:$0xff]
  %v1892 = vld [vmem:[%s3 + $0x1df0] sm:$0xff]
  %v1893 = vld [vmem:[%s3 + $0x1df8] sm:$0xff]
  %v1894 = vld [vmem:[%s3 + $0x1e00] sm:$0xff]
  %v1895 = vld [vmem:[%s3 + $0x1e08] sm:$0xff]
  %v1896 = vld [vmem:[%s3 + $0x1e10] sm:$0xff]
  %v1897 = vld [vmem:[%s3 + $0x1e18] sm:$0xff]
  %v1898 = vld [vmem:[%s3 + $0x1e20] sm:$0xff]
  %v1899 = vld [vmem:[%s3 + $0x1e28] sm:$0xff]
  %v1900 = vld [vmem:[%s3 + $0x1e30] sm:$0xff]
  %v1901 = vld [vmem:[%s3 + $0x1e38] sm:$0xff]
  %v1902 = vld [vmem:[%s3 + $0x1e40] sm:$0xff]
  %v1903 = vld [vmem:[%s3 + $0x1e48] sm:$0xff]
  %v1904 = vld [vmem:[%s3 + $0x1e50] sm:$0xff]
  %v1905 = vld [vmem:[%s3 + $0x1e58] sm:$0xff]
  %v1906 = vld [vmem:[%s3 + $0x1e60] sm:$0xff]
  %v1907 = vld [vmem:[%s3 + $0x1e68] sm:$0xff]
  %v1908 = vld [vmem:[%s3 + $0x1e70] sm:$0xff]
  %v1909 = vld [vmem:[%s3 + $0x1e78] sm:$0xff]
  %v1910 = vld [vmem:[%s3 + $0x1e80] sm:$0xff]
  %v1911 = vld [vmem:[%s3 + $0x1e88] sm:$0xff]
  %v1912 = vld [vmem:[%s3 + $0x1e90] sm:$0xff]
  %v1913 = vld [vmem:[%s3 + $0x1e98] sm:$0xff]
  %v1914 = vld [vmem:[%s3 + $0x1ea0] sm:$0xff]
  %v1915 = vld [vmem:[%s3 + $0x1ea8] sm:$0xff]
  %v1916 = vld [vmem:[%s3 + $0x1eb0] sm:$0xff]
  %v1917 = vld [vmem:[%s3 + $0x1eb8] sm:$0xff]
  %v1918 = vld [vmem:[%s3 + $0x1ec0] sm:$0xff]
  %v1919 = vld [vmem:[%s3 + $0x1ec8] sm:$0xff]
  %v1920 = vld [vmem:[%s3 + $0x1ed0] sm:$0xff]
  %v1921 = vld [vmem:[%s3 + $0x1ed8] sm:$0xff]
  %v1922 = vld [vmem:[%s3 + $0x1ee0] sm:$0xff]
  %v1923 = vld [vmem:[%s3 + $0x1ee8] sm:$0xff]
  %v1924 = vld [vmem:[%s3 + $0x1ef0] sm:$0xff]
  %v1925 = vld [vmem:[%s3 + $0x1ef8] sm:$0xff]
  %v1926 = vld [vmem:[%s3 + $0x1f00] sm:$0xff]
  %v1927 = vld [vmem:[%s3 + $0x1f08] sm:$0xff]
  %v1928 = vld [vmem:[%s3 + $0x1f10] sm:$0xff]
  %v1929 = vld [vmem:[%s3 + $0x1f18] sm:$0xff]
  %v1930 = vld [vmem:[%s3 + $0x1f20] sm:$0xff]
  %v1931 = vld [vmem:[%s3 + $0x1f28] sm:$0xff]
  %v1932 = vld [vmem:[%s3 + $0x1f30] sm:$0xff]
  %v1933 = vld [vmem:[%s3 + $0x1f38] sm:$0xff]
  %v1934 = vld [vmem:[%s3 + $0x1f40] sm:$0xff]
  %v1935 = vld [vmem:[%s3 + $0x1f48] sm:$0xff]
  %v1936 = vld [vmem:[%s3 + $0x1f50] sm:$0xff]
  %v1937 = vld [vmem:[%s3 + $0x1f58] sm:$0xff]
  %v1938 = vld [vmem:[%s3 + $0x1f60] sm:$0xff]
  %v1939 = vld [vmem:[%s3 + $0x1f68] sm:$0xff]
  %v1940 = vld [vmem:[%s3 + $0x1f70] sm:$0xff]
  %v1941 = vld [vmem:[%s3 + $0x1f78] sm:$0xff]
  %v1942 = vld [vmem:[%s3 + $0x1f80] sm:$0xff]
  %v1943 = vld [vmem:[%s3 + $0x1f88] sm:$0xff]
  %v1944 = vld [vmem:[%s3 + $0x1f90] sm:$0xff]
  %v1945 = vld [vmem:[%s3 + $0x1f98] sm:$0xff]
  %v1946 = vld [vmem:[%s3 + $0x1fa0] sm:$0xff]
  %v1947 = vld [vmem:[%s3 + $0x1fa8] sm:$0xff]
  %v1948 = vld [vmem:[%s3 + $0x1fb0] sm:$0xff]
  %v1949 = vld [vmem:[%s3 + $0x1fb8] sm:$0xff]
  %v1950 = vld [vmem:[%s3 + $0x1fc0] sm:$0xff]
  %v1951 = vld [vmem:[%s3 + $0x1fc8] sm:$0xff]
  %v1952 = vld [vmem:[%s3 + $0x1fd0] sm:$0xff]
  %v1953 = vld [vmem:[%s3 + $0x1fd8] sm:$0xff]
  %v1954 = vld [vmem:[%s3 + $0x1fe0] sm:$0xff]
  %v1955 = vld [vmem:[%s3 + $0x1fe8] sm:$0xff]
  %v1956 = vld [vmem:[%s3 + $0x1ff0] sm:$0xff]
  %v1957 = vld [vmem:[%s3 + $0x1ff8] sm:$0xff]
  %v1958 = vld [vmem:[%s4] sm:$0x3]
  %v1960 = vlaneseq
  %v1961 = vshrl.u32 %v1960, 7
  %v1962 = vsub.s32 0, %v1961
  %v1963 = vrot.slane %v1958, %v1962
  %v1964 = vlaneseq
  %v1965 = vshrl.u32 %v1964, 7
  %v1966 = vsub.s32 1, %v1965
  %v1967 = vrot.slane %v1958, %v1966
  %v2002 = vunpack.c.l.b16 %v902
  %v2003 = vunpack.c.h.b16 %v902
  %v2004 = vunpack.c.l.b16 %v903
  %v2005 = vunpack.c.h.b16 %v903
  %v2006 = vunpack.c.l.b16 %v904
  %v2007 = vunpack.c.h.b16 %v904
  %v2008 = vunpack.c.l.b16 %v905
  %v2009 = vunpack.c.h.b16 %v905
  %v2010 = vunpack.c.l.b16 %v906
  %v2011 = vunpack.c.h.b16 %v906
  %v2012 = vunpack.c.l.b16 %v907
  %v2013 = vunpack.c.h.b16 %v907
  %v2014 = vunpack.c.l.b16 %v908
  %v2015 = vunpack.c.h.b16 %v908
  %v2016 = vunpack.c.l.b16 %v909
  %v2017 = vunpack.c.h.b16 %v909
  %v2018 = vunpack.c.l.b16 %v910
  %v2019 = vunpack.c.h.b16 %v910
  %v2020 = vunpack.c.l.b16 %v911
  %v2021 = vunpack.c.h.b16 %v911
  %v2022 = vunpack.c.l.b16 %v912
  %v2023 = vunpack.c.h.b16 %v912
  %v2024 = vunpack.c.l.b16 %v913
  %v2025 = vunpack.c.h.b16 %v913
  %v2026 = vunpack.c.l.b16 %v914
  %v2027 = vunpack.c.h.b16 %v914
  %v2028 = vunpack.c.l.b16 %v915
  %v2029 = vunpack.c.h.b16 %v915
  %v2030 = vunpack.c.l.b16 %v916
  %v2031 = vunpack.c.h.b16 %v916
  %v2032 = vunpack.c.l.b16 %v917
  %v2033 = vunpack.c.h.b16 %v917
  %v2034 = vunpack.c.l.b16 %v918
  %v2035 = vunpack.c.h.b16 %v918
  %v2036 = vunpack.c.l.b16 %v919
  %v2037 = vunpack.c.h.b16 %v919
  %v2038 = vunpack.c.l.b16 %v920
  %v2039 = vunpack.c.h.b16 %v920
  %v2040 = vunpack.c.l.b16 %v921
  %v2041 = vunpack.c.h.b16 %v921
  %v2042 = vunpack.c.l.b16 %v922
  %v2043 = vunpack.c.h.b16 %v922
  %v2044 = vunpack.c.l.b16 %v923
  %v2045 = vunpack.c.h.b16 %v923
  %v2046 = vunpack.c.l.b16 %v924
  %v2047 = vunpack.c.h.b16 %v924
  %v2048 = vunpack.c.l.b16 %v925
  %v2049 = vunpack.c.h.b16 %v925
  %v2050 = vunpack.c.l.b16 %v926
  %v2051 = vunpack.c.h.b16 %v926
  %v2052 = vunpack.c.l.b16 %v927
  %v2053 = vunpack.c.h.b16 %v927
  %v2054 = vunpack.c.l.b16 %v928
  %v2055 = vunpack.c.h.b16 %v928
  %v2056 = vunpack.c.l.b16 %v929
  %v2057 = vunpack.c.h.b16 %v929
  %v2058 = vunpack.c.l.b16 %v930
  %v2059 = vunpack.c.h.b16 %v930
  %v2060 = vunpack.c.l.b16 %v931
  %v2061 = vunpack.c.h.b16 %v931
  %v2062 = vunpack.c.l.b16 %v932
  %v2063 = vunpack.c.h.b16 %v932
  %v2064 = vunpack.c.l.b16 %v933
  %v2065 = vunpack.c.h.b16 %v933
  %v2066 = vpack.c.b16 %v2002, %v2002
  %v2067 = vpack.c.b16 %v2003, %v2003
  %v2068 = vpack.c.b16 %v2004, %v2004
  %v2069 = vpack.c.b16 %v2005, %v2005
  %v2070 = vpack.c.b16 %v2006, %v2006
  %v2071 = vpack.c.b16 %v2007, %v2007
  %v2072 = vpack.c.b16 %v2008, %v2008
  %v2073 = vpack.c.b16 %v2009, %v2009
  %v2074 = vpack.c.b16 %v2010, %v2010
  %v2075 = vpack.c.b16 %v2011, %v2011
  %v2076 = vpack.c.b16 %v2012, %v2012
  %v2077 = vpack.c.b16 %v2013, %v2013
  %v2078 = vpack.c.b16 %v2014, %v2014
  %v2079 = vpack.c.b16 %v2015, %v2015
  %v2080 = vpack.c.b16 %v2016, %v2016
  %v2081 = vpack.c.b16 %v2017, %v2017
  %v2082 = vpack.c.b16 %v2018, %v2018
  %v2083 = vpack.c.b16 %v2019, %v2019
  %v2084 = vpack.c.b16 %v2020, %v2020
  %v2085 = vpack.c.b16 %v2021, %v2021
  %v2086 = vpack.c.b16 %v2022, %v2022
  %v2087 = vpack.c.b16 %v2023, %v2023
  %v2088 = vpack.c.b16 %v2024, %v2024
  %v2089 = vpack.c.b16 %v2025, %v2025
  %v2090 = vpack.c.b16 %v2026, %v2026
  %v2091 = vpack.c.b16 %v2027, %v2027
  %v2092 = vpack.c.b16 %v2028, %v2028
  %v2093 = vpack.c.b16 %v2029, %v2029
  %v2094 = vpack.c.b16 %v2030, %v2030
  %v2095 = vpack.c.b16 %v2031, %v2031
  %v2096 = vpack.c.b16 %v2032, %v2032
  %v2097 = vpack.c.b16 %v2033, %v2033
  %v2098 = vpack.c.b16 %v2034, %v2034
  %v2099 = vpack.c.b16 %v2035, %v2035
  %v2100 = vpack.c.b16 %v2036, %v2036
  %v2101 = vpack.c.b16 %v2037, %v2037
  %v2102 = vpack.c.b16 %v2038, %v2038
  %v2103 = vpack.c.b16 %v2039, %v2039
  %v2104 = vpack.c.b16 %v2040, %v2040
  %v2105 = vpack.c.b16 %v2041, %v2041
  %v2106 = vpack.c.b16 %v2042, %v2042
  %v2107 = vpack.c.b16 %v2043, %v2043
  %v2108 = vpack.c.b16 %v2044, %v2044
  %v2109 = vpack.c.b16 %v2045, %v2045
  %v2110 = vpack.c.b16 %v2046, %v2046
  %v2111 = vpack.c.b16 %v2047, %v2047
  %v2112 = vpack.c.b16 %v2048, %v2048
  %v2113 = vpack.c.b16 %v2049, %v2049
  %v2114 = vpack.c.b16 %v2050, %v2050
  %v2115 = vpack.c.b16 %v2051, %v2051
  %v2116 = vpack.c.b16 %v2052, %v2052
  %v2117 = vpack.c.b16 %v2053, %v2053
  %v2118 = vpack.c.b16 %v2054, %v2054
  %v2119 = vpack.c.b16 %v2055, %v2055
  %v2120 = vpack.c.b16 %v2056, %v2056
  %v2121 = vpack.c.b16 %v2057, %v2057
  %v2122 = vpack.c.b16 %v2058, %v2058
  %v2123 = vpack.c.b16 %v2059, %v2059
  %v2124 = vpack.c.b16 %v2060, %v2060
  %v2125 = vpack.c.b16 %v2061, %v2061
  %v2126 = vpack.c.b16 %v2062, %v2062
  %v2127 = vpack.c.b16 %v2063, %v2063
  %v2128 = vpack.c.b16 %v2064, %v2064
  %v2129 = vpack.c.b16 %v2065, %v2065
  %v3218 = vunpack.c.l.b16 %v934
  %v3219 = vunpack.c.h.b16 %v934
  %v3220 = vunpack.c.l.b16 %v935
  %v3221 = vunpack.c.h.b16 %v935
  %v3222 = vunpack.c.l.b16 %v936
  %v3223 = vunpack.c.h.b16 %v936
  %v3224 = vunpack.c.l.b16 %v937
  %v3225 = vunpack.c.h.b16 %v937
  %v3226 = vunpack.c.l.b16 %v938
  %v3227 = vunpack.c.h.b16 %v938
  %v3228 = vunpack.c.l.b16 %v939
  %v3229 = vunpack.c.h.b16 %v939
  %v3230 = vunpack.c.l.b16 %v940
  %v3231 = vunpack.c.h.b16 %v940
  %v3232 = vunpack.c.l.b16 %v941
  %v3233 = vunpack.c.h.b16 %v941
  %v3234 = vunpack.c.l.b16 %v942
  %v3235 = vunpack.c.h.b16 %v942
  %v3236 = vunpack.c.l.b16 %v943
  %v3237 = vunpack.c.h.b16 %v943
  %v3238 = vunpack.c.l.b16 %v944
  %v3239 = vunpack.c.h.b16 %v944
  %v3240 = vunpack.c.l.b16 %v945
  %v3241 = vunpack.c.h.b16 %v945
  %v3242 = vunpack.c.l.b16 %v946
  %v3243 = vunpack.c.h.b16 %v946
  %v3244 = vunpack.c.l.b16 %v947
  %v3245 = vunpack.c.h.b16 %v947
  %v3246 = vunpack.c.l.b16 %v948
  %v3247 = vunpack.c.h.b16 %v948
  %v3248 = vunpack.c.l.b16 %v949
  %v3249 = vunpack.c.h.b16 %v949
  %v3250 = vunpack.c.l.b16 %v950
  %v3251 = vunpack.c.h.b16 %v950
  %v3252 = vunpack.c.l.b16 %v951
  %v3253 = vunpack.c.h.b16 %v951
  %v3254 = vunpack.c.l.b16 %v952
  %v3255 = vunpack.c.h.b16 %v952
  %v3256 = vunpack.c.l.b16 %v953
  %v3257 = vunpack.c.h.b16 %v953
  %v3258 = vunpack.c.l.b16 %v954
  %v3259 = vunpack.c.h.b16 %v954
  %v3260 = vunpack.c.l.b16 %v955
  %v3261 = vunpack.c.h.b16 %v955
  %v3262 = vunpack.c.l.b16 %v956
  %v3263 = vunpack.c.h.b16 %v956
  %v3264 = vunpack.c.l.b16 %v957
  %v3265 = vunpack.c.h.b16 %v957
  %v3266 = vunpack.c.l.b16 %v958
  %v3267 = vunpack.c.h.b16 %v958
  %v3268 = vunpack.c.l.b16 %v959
  %v3269 = vunpack.c.h.b16 %v959
  %v3270 = vunpack.c.l.b16 %v960
  %v3271 = vunpack.c.h.b16 %v960
  %v3272 = vunpack.c.l.b16 %v961
  %v3273 = vunpack.c.h.b16 %v961
  %v3274 = vunpack.c.l.b16 %v962
  %v3275 = vunpack.c.h.b16 %v962
  %v3276 = vunpack.c.l.b16 %v963
  %v3277 = vunpack.c.h.b16 %v963
  %v3278 = vunpack.c.l.b16 %v964
  %v3279 = vunpack.c.h.b16 %v964
  %v3280 = vunpack.c.l.b16 %v965
  %v3281 = vunpack.c.h.b16 %v965
  %v3282 = vunpack.c.l.b16 %v966
  %v3283 = vunpack.c.h.b16 %v966
  %v3284 = vunpack.c.l.b16 %v967
  %v3285 = vunpack.c.h.b16 %v967
  %v3286 = vunpack.c.l.b16 %v968
  %v3287 = vunpack.c.h.b16 %v968
  %v3288 = vunpack.c.l.b16 %v969
  %v3289 = vunpack.c.h.b16 %v969
  %v3290 = vunpack.c.l.b16 %v970
  %v3291 = vunpack.c.h.b16 %v970
  %v3292 = vunpack.c.l.b16 %v971
  %v3293 = vunpack.c.h.b16 %v971
  %v3294 = vunpack.c.l.b16 %v972
  %v3295 = vunpack.c.h.b16 %v972
  %v3296 = vunpack.c.l.b16 %v973
  %v3297 = vunpack.c.h.b16 %v973
  %v3298 = vunpack.c.l.b16 %v974
  %v3299 = vunpack.c.h.b16 %v974
  %v3300 = vunpack.c.l.b16 %v975
  %v3301 = vunpack.c.h.b16 %v975
  %v3302 = vunpack.c.l.b16 %v976
  %v3303 = vunpack.c.h.b16 %v976
  %v3304 = vunpack.c.l.b16 %v977
  %v3305 = vunpack.c.h.b16 %v977
  %v3306 = vunpack.c.l.b16 %v978
  %v3307 = vunpack.c.h.b16 %v978
  %v3308 = vunpack.c.l.b16 %v979
  %v3309 = vunpack.c.h.b16 %v979
  %v3310 = vunpack.c.l.b16 %v980
  %v3311 = vunpack.c.h.b16 %v980
  %v3312 = vunpack.c.l.b16 %v981
  %v3313 = vunpack.c.h.b16 %v981
  %v3314 = vunpack.c.l.b16 %v982
  %v3315 = vunpack.c.h.b16 %v982
  %v3316 = vunpack.c.l.b16 %v983
  %v3317 = vunpack.c.h.b16 %v983
  %v3318 = vunpack.c.l.b16 %v984
  %v3319 = vunpack.c.h.b16 %v984
  %v3320 = vunpack.c.l.b16 %v985
  %v3321 = vunpack.c.h.b16 %v985
  %v3322 = vunpack.c.l.b16 %v986
  %v3323 = vunpack.c.h.b16 %v986
  %v3324 = vunpack.c.l.b16 %v987
  %v3325 = vunpack.c.h.b16 %v987
  %v3326 = vunpack.c.l.b16 %v988
  %v3327 = vunpack.c.h.b16 %v988
  %v3328 = vunpack.c.l.b16 %v989
  %v3329 = vunpack.c.h.b16 %v989
  %v3330 = vunpack.c.l.b16 %v990
  %v3331 = vunpack.c.h.b16 %v990
  %v3332 = vunpack.c.l.b16 %v991
  %v3333 = vunpack.c.h.b16 %v991
  %v3334 = vunpack.c.l.b16 %v992
  %v3335 = vunpack.c.h.b16 %v992
  %v3336 = vunpack.c.l.b16 %v993
  %v3337 = vunpack.c.h.b16 %v993
  %v3338 = vunpack.c.l.b16 %v994
  %v3339 = vunpack.c.h.b16 %v994
  %v3340 = vunpack.c.l.b16 %v995
  %v3341 = vunpack.c.h.b16 %v995
  %v3342 = vunpack.c.l.b16 %v996
  %v3343 = vunpack.c.h.b16 %v996
  %v3344 = vunpack.c.l.b16 %v997
  %v3345 = vunpack.c.h.b16 %v997
  %v3346 = vunpack.c.l.b16 %v998
  %v3347 = vunpack.c.h.b16 %v998
  %v3348 = vunpack.c.l.b16 %v999
  %v3349 = vunpack.c.h.b16 %v999
  %v3350 = vunpack.c.l.b16 %v1000
  %v3351 = vunpack.c.h.b16 %v1000
  %v3352 = vunpack.c.l.b16 %v1001
  %v3353 = vunpack.c.h.b16 %v1001
  %v3354 = vunpack.c.l.b16 %v1002
  %v3355 = vunpack.c.h.b16 %v1002
  %v3356 = vunpack.c.l.b16 %v1003
  %v3357 = vunpack.c.h.b16 %v1003
  %v3358 = vunpack.c.l.b16 %v1004
  %v3359 = vunpack.c.h.b16 %v1004
  %v3360 = vunpack.c.l.b16 %v1005
  %v3361 = vunpack.c.h.b16 %v1005
  %v3362 = vunpack.c.l.b16 %v1006
  %v3363 = vunpack.c.h.b16 %v1006
  %v3364 = vunpack.c.l.b16 %v1007
  %v3365 = vunpack.c.h.b16 %v1007
  %v3366 = vunpack.c.l.b16 %v1008
  %v3367 = vunpack.c.h.b16 %v1008
  %v3368 = vunpack.c.l.b16 %v1009
  %v3369 = vunpack.c.h.b16 %v1009
  %v3370 = vunpack.c.l.b16 %v1010
  %v3371 = vunpack.c.h.b16 %v1010
  %v3372 = vunpack.c.l.b16 %v1011
  %v3373 = vunpack.c.h.b16 %v1011
  %v3374 = vunpack.c.l.b16 %v1012
  %v3375 = vunpack.c.h.b16 %v1012
  %v3376 = vunpack.c.l.b16 %v1013
  %v3377 = vunpack.c.h.b16 %v1013
  %v3378 = vunpack.c.l.b16 %v1014
  %v3379 = vunpack.c.h.b16 %v1014
  %v3380 = vunpack.c.l.b16 %v1015
  %v3381 = vunpack.c.h.b16 %v1015
  %v3382 = vunpack.c.l.b16 %v1016
  %v3383 = vunpack.c.h.b16 %v1016
  %v3384 = vunpack.c.l.b16 %v1017
  %v3385 = vunpack.c.h.b16 %v1017
  %v3386 = vunpack.c.l.b16 %v1018
  %v3387 = vunpack.c.h.b16 %v1018
  %v3388 = vunpack.c.l.b16 %v1019
  %v3389 = vunpack.c.h.b16 %v1019
  %v3390 = vunpack.c.l.b16 %v1020
  %v3391 = vunpack.c.h.b16 %v1020
  %v3392 = vunpack.c.l.b16 %v1021
  %v3393 = vunpack.c.h.b16 %v1021
  %v3394 = vunpack.c.l.b16 %v1022
  %v3395 = vunpack.c.h.b16 %v1022
  %v3396 = vunpack.c.l.b16 %v1023
  %v3397 = vunpack.c.h.b16 %v1023
  %v3398 = vunpack.c.l.b16 %v1024
  %v3399 = vunpack.c.h.b16 %v1024
  %v3400 = vunpack.c.l.b16 %v1025
  %v3401 = vunpack.c.h.b16 %v1025
  %v3402 = vunpack.c.l.b16 %v1026
  %v3403 = vunpack.c.h.b16 %v1026
  %v3404 = vunpack.c.l.b16 %v1027
  %v3405 = vunpack.c.h.b16 %v1027
  %v3406 = vunpack.c.l.b16 %v1028
  %v3407 = vunpack.c.h.b16 %v1028
  %v3408 = vunpack.c.l.b16 %v1029
  %v3409 = vunpack.c.h.b16 %v1029
  %v3410 = vunpack.c.l.b16 %v1030
  %v3411 = vunpack.c.h.b16 %v1030
  %v3412 = vunpack.c.l.b16 %v1031
  %v3413 = vunpack.c.h.b16 %v1031
  %v3414 = vunpack.c.l.b16 %v1032
  %v3415 = vunpack.c.h.b16 %v1032
  %v3416 = vunpack.c.l.b16 %v1033
  %v3417 = vunpack.c.h.b16 %v1033
  %v3418 = vunpack.c.l.b16 %v1034
  %v3419 = vunpack.c.h.b16 %v1034
  %v3420 = vunpack.c.l.b16 %v1035
  %v3421 = vunpack.c.h.b16 %v1035
  %v3422 = vunpack.c.l.b16 %v1036
  %v3423 = vunpack.c.h.b16 %v1036
  %v3424 = vunpack.c.l.b16 %v1037
  %v3425 = vunpack.c.h.b16 %v1037
  %v3426 = vunpack.c.l.b16 %v1038
  %v3427 = vunpack.c.h.b16 %v1038
  %v3428 = vunpack.c.l.b16 %v1039
  %v3429 = vunpack.c.h.b16 %v1039
  %v3430 = vunpack.c.l.b16 %v1040
  %v3431 = vunpack.c.h.b16 %v1040
  %v3432 = vunpack.c.l.b16 %v1041
  %v3433 = vunpack.c.h.b16 %v1041
  %v3434 = vunpack.c.l.b16 %v1042
  %v3435 = vunpack.c.h.b16 %v1042
  %v3436 = vunpack.c.l.b16 %v1043
  %v3437 = vunpack.c.h.b16 %v1043
  %v3438 = vunpack.c.l.b16 %v1044
  %v3439 = vunpack.c.h.b16 %v1044
  %v3440 = vunpack.c.l.b16 %v1045
  %v3441 = vunpack.c.h.b16 %v1045
  %v3442 = vunpack.c.l.b16 %v1046
  %v3443 = vunpack.c.h.b16 %v1046
  %v3444 = vunpack.c.l.b16 %v1047
  %v3445 = vunpack.c.h.b16 %v1047
  %v3446 = vunpack.c.l.b16 %v1048
  %v3447 = vunpack.c.h.b16 %v1048
  %v3448 = vunpack.c.l.b16 %v1049
  %v3449 = vunpack.c.h.b16 %v1049
  %v3450 = vunpack.c.l.b16 %v1050
  %v3451 = vunpack.c.h.b16 %v1050
  %v3452 = vunpack.c.l.b16 %v1051
  %v3453 = vunpack.c.h.b16 %v1051
  %v3454 = vunpack.c.l.b16 %v1052
  %v3455 = vunpack.c.h.b16 %v1052
  %v3456 = vunpack.c.l.b16 %v1053
  %v3457 = vunpack.c.h.b16 %v1053
  %v3458 = vunpack.c.l.b16 %v1054
  %v3459 = vunpack.c.h.b16 %v1054
  %v3460 = vunpack.c.l.b16 %v1055
  %v3461 = vunpack.c.h.b16 %v1055
  %v3462 = vunpack.c.l.b16 %v1056
  %v3463 = vunpack.c.h.b16 %v1056
  %v3464 = vunpack.c.l.b16 %v1057
  %v3465 = vunpack.c.h.b16 %v1057
  %v3466 = vunpack.c.l.b16 %v1058
  %v3467 = vunpack.c.h.b16 %v1058
  %v3468 = vunpack.c.l.b16 %v1059
  %v3469 = vunpack.c.h.b16 %v1059
  %v3470 = vunpack.c.l.b16 %v1060
  %v3471 = vunpack.c.h.b16 %v1060
  %v3472 = vunpack.c.l.b16 %v1061
  %v3473 = vunpack.c.h.b16 %v1061
  %v3474 = vunpack.c.l.b16 %v1062
  %v3475 = vunpack.c.h.b16 %v1062
  %v3476 = vunpack.c.l.b16 %v1063
  %v3477 = vunpack.c.h.b16 %v1063
  %v3478 = vunpack.c.l.b16 %v1064
  %v3479 = vunpack.c.h.b16 %v1064
  %v3480 = vunpack.c.l.b16 %v1065
  %v3481 = vunpack.c.h.b16 %v1065
  %v3482 = vunpack.c.l.b16 %v1066
  %v3483 = vunpack.c.h.b16 %v1066
  %v3484 = vunpack.c.l.b16 %v1067
  %v3485 = vunpack.c.h.b16 %v1067
  %v3486 = vunpack.c.l.b16 %v1068
  %v3487 = vunpack.c.h.b16 %v1068
  %v3488 = vunpack.c.l.b16 %v1069
  %v3489 = vunpack.c.h.b16 %v1069
  %v3490 = vunpack.c.l.b16 %v1070
  %v3491 = vunpack.c.h.b16 %v1070
  %v3492 = vunpack.c.l.b16 %v1071
  %v3493 = vunpack.c.h.b16 %v1071
  %v3494 = vunpack.c.l.b16 %v1072
  %v3495 = vunpack.c.h.b16 %v1072
  %v3496 = vunpack.c.l.b16 %v1073
  %v3497 = vunpack.c.h.b16 %v1073
  %v3498 = vunpack.c.l.b16 %v1074
  %v3499 = vunpack.c.h.b16 %v1074
  %v3500 = vunpack.c.l.b16 %v1075
  %v3501 = vunpack.c.h.b16 %v1075
  %v3502 = vunpack.c.l.b16 %v1076
  %v3503 = vunpack.c.h.b16 %v1076
  %v3504 = vunpack.c.l.b16 %v1077
  %v3505 = vunpack.c.h.b16 %v1077
  %v3506 = vunpack.c.l.b16 %v1078
  %v3507 = vunpack.c.h.b16 %v1078
  %v3508 = vunpack.c.l.b16 %v1079
  %v3509 = vunpack.c.h.b16 %v1079
  %v3510 = vunpack.c.l.b16 %v1080
  %v3511 = vunpack.c.h.b16 %v1080
  %v3512 = vunpack.c.l.b16 %v1081
  %v3513 = vunpack.c.h.b16 %v1081
  %v3514 = vunpack.c.l.b16 %v1082
  %v3515 = vunpack.c.h.b16 %v1082
  %v3516 = vunpack.c.l.b16 %v1083
  %v3517 = vunpack.c.h.b16 %v1083
  %v3518 = vunpack.c.l.b16 %v1084
  %v3519 = vunpack.c.h.b16 %v1084
  %v3520 = vunpack.c.l.b16 %v1085
  %v3521 = vunpack.c.h.b16 %v1085
  %v3522 = vunpack.c.l.b16 %v1086
  %v3523 = vunpack.c.h.b16 %v1086
  %v3524 = vunpack.c.l.b16 %v1087
  %v3525 = vunpack.c.h.b16 %v1087
  %v3526 = vunpack.c.l.b16 %v1088
  %v3527 = vunpack.c.h.b16 %v1088
  %v3528 = vunpack.c.l.b16 %v1089
  %v3529 = vunpack.c.h.b16 %v1089
  %v3530 = vunpack.c.l.b16 %v1090
  %v3531 = vunpack.c.h.b16 %v1090
  %v3532 = vunpack.c.l.b16 %v1091
  %v3533 = vunpack.c.h.b16 %v1091
  %v3534 = vunpack.c.l.b16 %v1092
  %v3535 = vunpack.c.h.b16 %v1092
  %v3536 = vunpack.c.l.b16 %v1093
  %v3537 = vunpack.c.h.b16 %v1093
  %v3538 = vunpack.c.l.b16 %v1094
  %v3539 = vunpack.c.h.b16 %v1094
  %v3540 = vunpack.c.l.b16 %v1095
  %v3541 = vunpack.c.h.b16 %v1095
  %v3542 = vunpack.c.l.b16 %v1096
  %v3543 = vunpack.c.h.b16 %v1096
  %v3544 = vunpack.c.l.b16 %v1097
  %v3545 = vunpack.c.h.b16 %v1097
  %v3546 = vunpack.c.l.b16 %v1098
  %v3547 = vunpack.c.h.b16 %v1098
  %v3548 = vunpack.c.l.b16 %v1099
  %v3549 = vunpack.c.h.b16 %v1099
  %v3550 = vunpack.c.l.b16 %v1100
  %v3551 = vunpack.c.h.b16 %v1100
  %v3552 = vunpack.c.l.b16 %v1101
  %v3553 = vunpack.c.h.b16 %v1101
  %v3554 = vunpack.c.l.b16 %v1102
  %v3555 = vunpack.c.h.b16 %v1102
  %v3556 = vunpack.c.l.b16 %v1103
  %v3557 = vunpack.c.h.b16 %v1103
  %v3558 = vunpack.c.l.b16 %v1104
  %v3559 = vunpack.c.h.b16 %v1104
  %v3560 = vunpack.c.l.b16 %v1105
  %v3561 = vunpack.c.h.b16 %v1105
  %v3562 = vunpack.c.l.b16 %v1106
  %v3563 = vunpack.c.h.b16 %v1106
  %v3564 = vunpack.c.l.b16 %v1107
  %v3565 = vunpack.c.h.b16 %v1107
  %v3566 = vunpack.c.l.b16 %v1108
  %v3567 = vunpack.c.h.b16 %v1108
  %v3568 = vunpack.c.l.b16 %v1109
  %v3569 = vunpack.c.h.b16 %v1109
  %v3570 = vunpack.c.l.b16 %v1110
  %v3571 = vunpack.c.h.b16 %v1110
  %v3572 = vunpack.c.l.b16 %v1111
  %v3573 = vunpack.c.h.b16 %v1111
  %v3574 = vunpack.c.l.b16 %v1112
  %v3575 = vunpack.c.h.b16 %v1112
  %v3576 = vunpack.c.l.b16 %v1113
  %v3577 = vunpack.c.h.b16 %v1113
  %v3578 = vunpack.c.l.b16 %v1114
  %v3579 = vunpack.c.h.b16 %v1114
  %v3580 = vunpack.c.l.b16 %v1115
  %v3581 = vunpack.c.h.b16 %v1115
  %v3582 = vunpack.c.l.b16 %v1116
  %v3583 = vunpack.c.h.b16 %v1116
  %v3584 = vunpack.c.l.b16 %v1117
  %v3585 = vunpack.c.h.b16 %v1117
  %v3586 = vunpack.c.l.b16 %v1118
  %v3587 = vunpack.c.h.b16 %v1118
  %v3588 = vunpack.c.l.b16 %v1119
  %v3589 = vunpack.c.h.b16 %v1119
  %v3590 = vunpack.c.l.b16 %v1120
  %v3591 = vunpack.c.h.b16 %v1120
  %v3592 = vunpack.c.l.b16 %v1121
  %v3593 = vunpack.c.h.b16 %v1121
  %v3594 = vunpack.c.l.b16 %v1122
  %v3595 = vunpack.c.h.b16 %v1122
  %v3596 = vunpack.c.l.b16 %v1123
  %v3597 = vunpack.c.h.b16 %v1123
  %v3598 = vunpack.c.l.b16 %v1124
  %v3599 = vunpack.c.h.b16 %v1124
  %v3600 = vunpack.c.l.b16 %v1125
  %v3601 = vunpack.c.h.b16 %v1125
  %v3602 = vunpack.c.l.b16 %v1126
  %v3603 = vunpack.c.h.b16 %v1126
  %v3604 = vunpack.c.l.b16 %v1127
  %v3605 = vunpack.c.h.b16 %v1127
  %v3606 = vunpack.c.l.b16 %v1128
  %v3607 = vunpack.c.h.b16 %v1128
  %v3608 = vunpack.c.l.b16 %v1129
  %v3609 = vunpack.c.h.b16 %v1129
  %v3610 = vunpack.c.l.b16 %v1130
  %v3611 = vunpack.c.h.b16 %v1130
  %v3612 = vunpack.c.l.b16 %v1131
  %v3613 = vunpack.c.h.b16 %v1131
  %v3614 = vunpack.c.l.b16 %v1132
  %v3615 = vunpack.c.h.b16 %v1132
  %v3616 = vunpack.c.l.b16 %v1133
  %v3617 = vunpack.c.h.b16 %v1133
  %v3618 = vunpack.c.l.b16 %v1134
  %v3619 = vunpack.c.h.b16 %v1134
  %v3620 = vunpack.c.l.b16 %v1135
  %v3621 = vunpack.c.h.b16 %v1135
  %v3622 = vunpack.c.l.b16 %v1136
  %v3623 = vunpack.c.h.b16 %v1136
  %v3624 = vunpack.c.l.b16 %v1137
  %v3625 = vunpack.c.h.b16 %v1137
  %v3626 = vunpack.c.l.b16 %v1138
  %v3627 = vunpack.c.h.b16 %v1138
  %v3628 = vunpack.c.l.b16 %v1139
  %v3629 = vunpack.c.h.b16 %v1139
  %v3630 = vunpack.c.l.b16 %v1140
  %v3631 = vunpack.c.h.b16 %v1140
  %v3632 = vunpack.c.l.b16 %v1141
  %v3633 = vunpack.c.h.b16 %v1141
  %v3634 = vunpack.c.l.b16 %v1142
  %v3635 = vunpack.c.h.b16 %v1142
  %v3636 = vunpack.c.l.b16 %v1143
  %v3637 = vunpack.c.h.b16 %v1143
  %v3638 = vunpack.c.l.b16 %v1144
  %v3639 = vunpack.c.h.b16 %v1144
  %v3640 = vunpack.c.l.b16 %v1145
  %v3641 = vunpack.c.h.b16 %v1145
  %v3642 = vunpack.c.l.b16 %v1146
  %v3643 = vunpack.c.h.b16 %v1146
  %v3644 = vunpack.c.l.b16 %v1147
  %v3645 = vunpack.c.h.b16 %v1147
  %v3646 = vunpack.c.l.b16 %v1148
  %v3647 = vunpack.c.h.b16 %v1148
  %v3648 = vunpack.c.l.b16 %v1149
  %v3649 = vunpack.c.h.b16 %v1149
  %v3650 = vunpack.c.l.b16 %v1150
  %v3651 = vunpack.c.h.b16 %v1150
  %v3652 = vunpack.c.l.b16 %v1151
  %v3653 = vunpack.c.h.b16 %v1151
  %v3654 = vunpack.c.l.b16 %v1152
  %v3655 = vunpack.c.h.b16 %v1152
  %v3656 = vunpack.c.l.b16 %v1153
  %v3657 = vunpack.c.h.b16 %v1153
  %v3658 = vunpack.c.l.b16 %v1154
  %v3659 = vunpack.c.h.b16 %v1154
  %v3660 = vunpack.c.l.b16 %v1155
  %v3661 = vunpack.c.h.b16 %v1155
  %v3662 = vunpack.c.l.b16 %v1156
  %v3663 = vunpack.c.h.b16 %v1156
  %v3664 = vunpack.c.l.b16 %v1157
  %v3665 = vunpack.c.h.b16 %v1157
  %v3666 = vunpack.c.l.b16 %v1158
  %v3667 = vunpack.c.h.b16 %v1158
  %v3668 = vunpack.c.l.b16 %v1159
  %v3669 = vunpack.c.h.b16 %v1159
  %v3670 = vunpack.c.l.b16 %v1160
  %v3671 = vunpack.c.h.b16 %v1160
  %v3672 = vunpack.c.l.b16 %v1161
  %v3673 = vunpack.c.h.b16 %v1161
  %v3674 = vunpack.c.l.b16 %v1162
  %v3675 = vunpack.c.h.b16 %v1162
  %v3676 = vunpack.c.l.b16 %v1163
  %v3677 = vunpack.c.h.b16 %v1163
  %v3678 = vunpack.c.l.b16 %v1164
  %v3679 = vunpack.c.h.b16 %v1164
  %v3680 = vunpack.c.l.b16 %v1165
  %v3681 = vunpack.c.h.b16 %v1165
  %v3682 = vunpack.c.l.b16 %v1166
  %v3683 = vunpack.c.h.b16 %v1166
  %v3684 = vunpack.c.l.b16 %v1167
  %v3685 = vunpack.c.h.b16 %v1167
  %v3686 = vunpack.c.l.b16 %v1168
  %v3687 = vunpack.c.h.b16 %v1168
  %v3688 = vunpack.c.l.b16 %v1169
  %v3689 = vunpack.c.h.b16 %v1169
  %v3690 = vunpack.c.l.b16 %v1170
  %v3691 = vunpack.c.h.b16 %v1170
  %v3692 = vunpack.c.l.b16 %v1171
  %v3693 = vunpack.c.h.b16 %v1171
  %v3694 = vunpack.c.l.b16 %v1172
  %v3695 = vunpack.c.h.b16 %v1172
  %v3696 = vunpack.c.l.b16 %v1173
  %v3697 = vunpack.c.h.b16 %v1173
  %v3698 = vunpack.c.l.b16 %v1174
  %v3699 = vunpack.c.h.b16 %v1174
  %v3700 = vunpack.c.l.b16 %v1175
  %v3701 = vunpack.c.h.b16 %v1175
  %v3702 = vunpack.c.l.b16 %v1176
  %v3703 = vunpack.c.h.b16 %v1176
  %v3704 = vunpack.c.l.b16 %v1177
  %v3705 = vunpack.c.h.b16 %v1177
  %v3706 = vunpack.c.l.b16 %v1178
  %v3707 = vunpack.c.h.b16 %v1178
  %v3708 = vunpack.c.l.b16 %v1179
  %v3709 = vunpack.c.h.b16 %v1179
  %v3710 = vunpack.c.l.b16 %v1180
  %v3711 = vunpack.c.h.b16 %v1180
  %v3712 = vunpack.c.l.b16 %v1181
  %v3713 = vunpack.c.h.b16 %v1181
  %v3714 = vunpack.c.l.b16 %v1182
  %v3715 = vunpack.c.h.b16 %v1182
  %v3716 = vunpack.c.l.b16 %v1183
  %v3717 = vunpack.c.h.b16 %v1183
  %v3718 = vunpack.c.l.b16 %v1184
  %v3719 = vunpack.c.h.b16 %v1184
  %v3720 = vunpack.c.l.b16 %v1185
  %v3721 = vunpack.c.h.b16 %v1185
  %v3722 = vunpack.c.l.b16 %v1186
  %v3723 = vunpack.c.h.b16 %v1186
  %v3724 = vunpack.c.l.b16 %v1187
  %v3725 = vunpack.c.h.b16 %v1187
  %v3726 = vunpack.c.l.b16 %v1188
  %v3727 = vunpack.c.h.b16 %v1188
  %v3728 = vunpack.c.l.b16 %v1189
  %v3729 = vunpack.c.h.b16 %v1189
  %v3730 = vunpack.c.l.b16 %v1190
  %v3731 = vunpack.c.h.b16 %v1190
  %v3732 = vunpack.c.l.b16 %v1191
  %v3733 = vunpack.c.h.b16 %v1191
  %v3734 = vunpack.c.l.b16 %v1192
  %v3735 = vunpack.c.h.b16 %v1192
  %v3736 = vunpack.c.l.b16 %v1193
  %v3737 = vunpack.c.h.b16 %v1193
  %v3738 = vunpack.c.l.b16 %v1194
  %v3739 = vunpack.c.h.b16 %v1194
  %v3740 = vunpack.c.l.b16 %v1195
  %v3741 = vunpack.c.h.b16 %v1195
  %v3742 = vunpack.c.l.b16 %v1196
  %v3743 = vunpack.c.h.b16 %v1196
  %v3744 = vunpack.c.l.b16 %v1197
  %v3745 = vunpack.c.h.b16 %v1197
  %v3746 = vunpack.c.l.b16 %v1198
  %v3747 = vunpack.c.h.b16 %v1198
  %v3748 = vunpack.c.l.b16 %v1199
  %v3749 = vunpack.c.h.b16 %v1199
  %v3750 = vunpack.c.l.b16 %v1200
  %v3751 = vunpack.c.h.b16 %v1200
  %v3752 = vunpack.c.l.b16 %v1201
  %v3753 = vunpack.c.h.b16 %v1201
  %v3754 = vunpack.c.l.b16 %v1202
  %v3755 = vunpack.c.h.b16 %v1202
  %v3756 = vunpack.c.l.b16 %v1203
  %v3757 = vunpack.c.h.b16 %v1203
  %v3758 = vunpack.c.l.b16 %v1204
  %v3759 = vunpack.c.h.b16 %v1204
  %v3760 = vunpack.c.l.b16 %v1205
  %v3761 = vunpack.c.h.b16 %v1205
  %v3762 = vunpack.c.l.b16 %v1206
  %v3763 = vunpack.c.h.b16 %v1206
  %v3764 = vunpack.c.l.b16 %v1207
  %v3765 = vunpack.c.h.b16 %v1207
  %v3766 = vunpack.c.l.b16 %v1208
  %v3767 = vunpack.c.h.b16 %v1208
  %v3768 = vunpack.c.l.b16 %v1209
  %v3769 = vunpack.c.h.b16 %v1209
  %v3770 = vunpack.c.l.b16 %v1210
  %v3771 = vunpack.c.h.b16 %v1210
  %v3772 = vunpack.c.l.b16 %v1211
  %v3773 = vunpack.c.h.b16 %v1211
  %v3774 = vunpack.c.l.b16 %v1212
  %v3775 = vunpack.c.h.b16 %v1212
  %v3776 = vunpack.c.l.b16 %v1213
  %v3777 = vunpack.c.h.b16 %v1213
  %v3778 = vunpack.c.l.b16 %v1214
  %v3779 = vunpack.c.h.b16 %v1214
  %v3780 = vunpack.c.l.b16 %v1215
  %v3781 = vunpack.c.h.b16 %v1215
  %v3782 = vunpack.c.l.b16 %v1216
  %v3783 = vunpack.c.h.b16 %v1216
  %v3784 = vunpack.c.l.b16 %v1217
  %v3785 = vunpack.c.h.b16 %v1217
  %v3786 = vunpack.c.l.b16 %v1218
  %v3787 = vunpack.c.h.b16 %v1218
  %v3788 = vunpack.c.l.b16 %v1219
  %v3789 = vunpack.c.h.b16 %v1219
  %v3790 = vunpack.c.l.b16 %v1220
  %v3791 = vunpack.c.h.b16 %v1220
  %v3792 = vunpack.c.l.b16 %v1221
  %v3793 = vunpack.c.h.b16 %v1221
  %v3794 = vunpack.c.l.b16 %v1222
  %v3795 = vunpack.c.h.b16 %v1222
  %v3796 = vunpack.c.l.b16 %v1223
  %v3797 = vunpack.c.h.b16 %v1223
  %v3798 = vunpack.c.l.b16 %v1224
  %v3799 = vunpack.c.h.b16 %v1224
  %v3800 = vunpack.c.l.b16 %v1225
  %v3801 = vunpack.c.h.b16 %v1225
  %v3802 = vunpack.c.l.b16 %v1226
  %v3803 = vunpack.c.h.b16 %v1226
  %v3804 = vunpack.c.l.b16 %v1227
  %v3805 = vunpack.c.h.b16 %v1227
  %v3806 = vunpack.c.l.b16 %v1228
  %v3807 = vunpack.c.h.b16 %v1228
  %v3808 = vunpack.c.l.b16 %v1229
  %v3809 = vunpack.c.h.b16 %v1229
  %v3810 = vunpack.c.l.b16 %v1230
  %v3811 = vunpack.c.h.b16 %v1230
  %v3812 = vunpack.c.l.b16 %v1231
  %v3813 = vunpack.c.h.b16 %v1231
  %v3814 = vunpack.c.l.b16 %v1232
  %v3815 = vunpack.c.h.b16 %v1232
  %v3816 = vunpack.c.l.b16 %v1233
  %v3817 = vunpack.c.h.b16 %v1233
  %v3818 = vunpack.c.l.b16 %v1234
  %v3819 = vunpack.c.h.b16 %v1234
  %v3820 = vunpack.c.l.b16 %v1235
  %v3821 = vunpack.c.h.b16 %v1235
  %v3822 = vunpack.c.l.b16 %v1236
  %v3823 = vunpack.c.h.b16 %v1236
  %v3824 = vunpack.c.l.b16 %v1237
  %v3825 = vunpack.c.h.b16 %v1237
  %v3826 = vunpack.c.l.b16 %v1238
  %v3827 = vunpack.c.h.b16 %v1238
  %v3828 = vunpack.c.l.b16 %v1239
  %v3829 = vunpack.c.h.b16 %v1239
  %v3830 = vunpack.c.l.b16 %v1240
  %v3831 = vunpack.c.h.b16 %v1240
  %v3832 = vunpack.c.l.b16 %v1241
  %v3833 = vunpack.c.h.b16 %v1241
  %v3834 = vunpack.c.l.b16 %v1242
  %v3835 = vunpack.c.h.b16 %v1242
  %v3836 = vunpack.c.l.b16 %v1243
  %v3837 = vunpack.c.h.b16 %v1243
  %v3838 = vunpack.c.l.b16 %v1244
  %v3839 = vunpack.c.h.b16 %v1244
  %v3840 = vunpack.c.l.b16 %v1245
  %v3841 = vunpack.c.h.b16 %v1245
  %v3842 = vunpack.c.l.b16 %v1246
  %v3843 = vunpack.c.h.b16 %v1246
  %v3844 = vunpack.c.l.b16 %v1247
  %v3845 = vunpack.c.h.b16 %v1247
  %v3846 = vunpack.c.l.b16 %v1248
  %v3847 = vunpack.c.h.b16 %v1248
  %v3848 = vunpack.c.l.b16 %v1249
  %v3849 = vunpack.c.h.b16 %v1249
  %v3850 = vunpack.c.l.b16 %v1250
  %v3851 = vunpack.c.h.b16 %v1250
  %v3852 = vunpack.c.l.b16 %v1251
  %v3853 = vunpack.c.h.b16 %v1251
  %v3854 = vunpack.c.l.b16 %v1252
  %v3855 = vunpack.c.h.b16 %v1252
  %v3856 = vunpack.c.l.b16 %v1253
  %v3857 = vunpack.c.h.b16 %v1253
  %v3858 = vunpack.c.l.b16 %v1254
  %v3859 = vunpack.c.h.b16 %v1254
  %v3860 = vunpack.c.l.b16 %v1255
  %v3861 = vunpack.c.h.b16 %v1255
  %v3862 = vunpack.c.l.b16 %v1256
  %v3863 = vunpack.c.h.b16 %v1256
  %v3864 = vunpack.c.l.b16 %v1257
  %v3865 = vunpack.c.h.b16 %v1257
  %v3866 = vunpack.c.l.b16 %v1258
  %v3867 = vunpack.c.h.b16 %v1258
  %v3868 = vunpack.c.l.b16 %v1259
  %v3869 = vunpack.c.h.b16 %v1259
  %v3870 = vunpack.c.l.b16 %v1260
  %v3871 = vunpack.c.h.b16 %v1260
  %v3872 = vunpack.c.l.b16 %v1261
  %v3873 = vunpack.c.h.b16 %v1261
  %v3874 = vunpack.c.l.b16 %v1262
  %v3875 = vunpack.c.h.b16 %v1262
  %v3876 = vunpack.c.l.b16 %v1263
  %v3877 = vunpack.c.h.b16 %v1263
  %v3878 = vunpack.c.l.b16 %v1264
  %v3879 = vunpack.c.h.b16 %v1264
  %v3880 = vunpack.c.l.b16 %v1265
  %v3881 = vunpack.c.h.b16 %v1265
  %v3882 = vunpack.c.l.b16 %v1266
  %v3883 = vunpack.c.h.b16 %v1266
  %v3884 = vunpack.c.l.b16 %v1267
  %v3885 = vunpack.c.h.b16 %v1267
  %v3886 = vunpack.c.l.b16 %v1268
  %v3887 = vunpack.c.h.b16 %v1268
  %v3888 = vunpack.c.l.b16 %v1269
  %v3889 = vunpack.c.h.b16 %v1269
  %v3890 = vunpack.c.l.b16 %v1270
  %v3891 = vunpack.c.h.b16 %v1270
  %v3892 = vunpack.c.l.b16 %v1271
  %v3893 = vunpack.c.h.b16 %v1271
  %v3894 = vunpack.c.l.b16 %v1272
  %v3895 = vunpack.c.h.b16 %v1272
  %v3896 = vunpack.c.l.b16 %v1273
  %v3897 = vunpack.c.h.b16 %v1273
  %v3898 = vunpack.c.l.b16 %v1274
  %v3899 = vunpack.c.h.b16 %v1274
  %v3900 = vunpack.c.l.b16 %v1275
  %v3901 = vunpack.c.h.b16 %v1275
  %v3902 = vunpack.c.l.b16 %v1276
  %v3903 = vunpack.c.h.b16 %v1276
  %v3904 = vunpack.c.l.b16 %v1277
  %v3905 = vunpack.c.h.b16 %v1277
  %v3906 = vunpack.c.l.b16 %v1278
  %v3907 = vunpack.c.h.b16 %v1278
  %v3908 = vunpack.c.l.b16 %v1279
  %v3909 = vunpack.c.h.b16 %v1279
  %v3910 = vunpack.c.l.b16 %v1280
  %v3911 = vunpack.c.h.b16 %v1280
  %v3912 = vunpack.c.l.b16 %v1281
  %v3913 = vunpack.c.h.b16 %v1281
  %v3914 = vunpack.c.l.b16 %v1282
  %v3915 = vunpack.c.h.b16 %v1282
  %v3916 = vunpack.c.l.b16 %v1283
  %v3917 = vunpack.c.h.b16 %v1283
  %v3918 = vunpack.c.l.b16 %v1284
  %v3919 = vunpack.c.h.b16 %v1284
  %v3920 = vunpack.c.l.b16 %v1285
  %v3921 = vunpack.c.h.b16 %v1285
  %v3922 = vunpack.c.l.b16 %v1286
  %v3923 = vunpack.c.h.b16 %v1286
  %v3924 = vunpack.c.l.b16 %v1287
  %v3925 = vunpack.c.h.b16 %v1287
  %v3926 = vunpack.c.l.b16 %v1288
  %v3927 = vunpack.c.h.b16 %v1288
  %v3928 = vunpack.c.l.b16 %v1289
  %v3929 = vunpack.c.h.b16 %v1289
  %v3930 = vunpack.c.l.b16 %v1290
  %v3931 = vunpack.c.h.b16 %v1290
  %v3932 = vunpack.c.l.b16 %v1291
  %v3933 = vunpack.c.h.b16 %v1291
  %v3934 = vunpack.c.l.b16 %v1292
  %v3935 = vunpack.c.h.b16 %v1292
  %v3936 = vunpack.c.l.b16 %v1293
  %v3937 = vunpack.c.h.b16 %v1293
  %v3938 = vunpack.c.l.b16 %v1294
  %v3939 = vunpack.c.h.b16 %v1294
  %v3940 = vunpack.c.l.b16 %v1295
  %v3941 = vunpack.c.h.b16 %v1295
  %v3942 = vunpack.c.l.b16 %v1296
  %v3943 = vunpack.c.h.b16 %v1296
  %v3944 = vunpack.c.l.b16 %v1297
  %v3945 = vunpack.c.h.b16 %v1297
  %v3946 = vunpack.c.l.b16 %v1298
  %v3947 = vunpack.c.h.b16 %v1298
  %v3948 = vunpack.c.l.b16 %v1299
  %v3949 = vunpack.c.h.b16 %v1299
  %v3950 = vunpack.c.l.b16 %v1300
  %v3951 = vunpack.c.h.b16 %v1300
  %v3952 = vunpack.c.l.b16 %v1301
  %v3953 = vunpack.c.h.b16 %v1301
  %v3954 = vunpack.c.l.b16 %v1302
  %v3955 = vunpack.c.h.b16 %v1302
  %v3956 = vunpack.c.l.b16 %v1303
  %v3957 = vunpack.c.h.b16 %v1303
  %v3958 = vunpack.c.l.b16 %v1304
  %v3959 = vunpack.c.h.b16 %v1304
  %v3960 = vunpack.c.l.b16 %v1305
  %v3961 = vunpack.c.h.b16 %v1305
  %v3962 = vunpack.c.l.b16 %v1306
  %v3963 = vunpack.c.h.b16 %v1306
  %v3964 = vunpack.c.l.b16 %v1307
  %v3965 = vunpack.c.h.b16 %v1307
  %v3966 = vunpack.c.l.b16 %v1308
  %v3967 = vunpack.c.h.b16 %v1308
  %v3968 = vunpack.c.l.b16 %v1309
  %v3969 = vunpack.c.h.b16 %v1309
  %v3970 = vunpack.c.l.b16 %v1310
  %v3971 = vunpack.c.h.b16 %v1310
  %v3972 = vunpack.c.l.b16 %v1311
  %v3973 = vunpack.c.h.b16 %v1311
  %v3974 = vunpack.c.l.b16 %v1312
  %v3975 = vunpack.c.h.b16 %v1312
  %v3976 = vunpack.c.l.b16 %v1313
  %v3977 = vunpack.c.h.b16 %v1313
  %v3978 = vunpack.c.l.b16 %v1314
  %v3979 = vunpack.c.h.b16 %v1314
  %v3980 = vunpack.c.l.b16 %v1315
  %v3981 = vunpack.c.h.b16 %v1315
  %v3982 = vunpack.c.l.b16 %v1316
  %v3983 = vunpack.c.h.b16 %v1316
  %v3984 = vunpack.c.l.b16 %v1317
  %v3985 = vunpack.c.h.b16 %v1317
  %v3986 = vunpack.c.l.b16 %v1318
  %v3987 = vunpack.c.h.b16 %v1318
  %v3988 = vunpack.c.l.b16 %v1319
  %v3989 = vunpack.c.h.b16 %v1319
  %v3990 = vunpack.c.l.b16 %v1320
  %v3991 = vunpack.c.h.b16 %v1320
  %v3992 = vunpack.c.l.b16 %v1321
  %v3993 = vunpack.c.h.b16 %v1321
  %v3994 = vunpack.c.l.b16 %v1322
  %v3995 = vunpack.c.h.b16 %v1322
  %v3996 = vunpack.c.l.b16 %v1323
  %v3997 = vunpack.c.h.b16 %v1323
  %v3998 = vunpack.c.l.b16 %v1324
  %v3999 = vunpack.c.h.b16 %v1324
  %v4000 = vunpack.c.l.b16 %v1325
  %v4001 = vunpack.c.h.b16 %v1325
  %v4002 = vunpack.c.l.b16 %v1326
  %v4003 = vunpack.c.h.b16 %v1326
  %v4004 = vunpack.c.l.b16 %v1327
  %v4005 = vunpack.c.h.b16 %v1327
  %v4006 = vunpack.c.l.b16 %v1328
  %v4007 = vunpack.c.h.b16 %v1328
  %v4008 = vunpack.c.l.b16 %v1329
  %v4009 = vunpack.c.h.b16 %v1329
  %v4010 = vunpack.c.l.b16 %v1330
  %v4011 = vunpack.c.h.b16 %v1330
  %v4012 = vunpack.c.l.b16 %v1331
  %v4013 = vunpack.c.h.b16 %v1331
  %v4014 = vunpack.c.l.b16 %v1332
  %v4015 = vunpack.c.h.b16 %v1332
  %v4016 = vunpack.c.l.b16 %v1333
  %v4017 = vunpack.c.h.b16 %v1333
  %v4018 = vunpack.c.l.b16 %v1334
  %v4019 = vunpack.c.h.b16 %v1334
  %v4020 = vunpack.c.l.b16 %v1335
  %v4021 = vunpack.c.h.b16 %v1335
  %v4022 = vunpack.c.l.b16 %v1336
  %v4023 = vunpack.c.h.b16 %v1336
  %v4024 = vunpack.c.l.b16 %v1337
  %v4025 = vunpack.c.h.b16 %v1337
  %v4026 = vunpack.c.l.b16 %v1338
  %v4027 = vunpack.c.h.b16 %v1338
  %v4028 = vunpack.c.l.b16 %v1339
  %v4029 = vunpack.c.h.b16 %v1339
  %v4030 = vunpack.c.l.b16 %v1340
  %v4031 = vunpack.c.h.b16 %v1340
  %v4032 = vunpack.c.l.b16 %v1341
  %v4033 = vunpack.c.h.b16 %v1341
  %v4034 = vunpack.c.l.b16 %v1342
  %v4035 = vunpack.c.h.b16 %v1342
  %v4036 = vunpack.c.l.b16 %v1343
  %v4037 = vunpack.c.h.b16 %v1343
  %v4038 = vunpack.c.l.b16 %v1344
  %v4039 = vunpack.c.h.b16 %v1344
  %v4040 = vunpack.c.l.b16 %v1345
  %v4041 = vunpack.c.h.b16 %v1345
  %v4042 = vunpack.c.l.b16 %v1346
  %v4043 = vunpack.c.h.b16 %v1346
  %v4044 = vunpack.c.l.b16 %v1347
  %v4045 = vunpack.c.h.b16 %v1347
  %v4046 = vunpack.c.l.b16 %v1348
  %v4047 = vunpack.c.h.b16 %v1348
  %v4048 = vunpack.c.l.b16 %v1349
  %v4049 = vunpack.c.h.b16 %v1349
  %v4050 = vunpack.c.l.b16 %v1350
  %v4051 = vunpack.c.h.b16 %v1350
  %v4052 = vunpack.c.l.b16 %v1351
  %v4053 = vunpack.c.h.b16 %v1351
  %v4054 = vunpack.c.l.b16 %v1352
  %v4055 = vunpack.c.h.b16 %v1352
  %v4056 = vunpack.c.l.b16 %v1353
  %v4057 = vunpack.c.h.b16 %v1353
  %v4058 = vunpack.c.l.b16 %v1354
  %v4059 = vunpack.c.h.b16 %v1354
  %v4060 = vunpack.c.l.b16 %v1355
  %v4061 = vunpack.c.h.b16 %v1355
  %v4062 = vunpack.c.l.b16 %v1356
  %v4063 = vunpack.c.h.b16 %v1356
  %v4064 = vunpack.c.l.b16 %v1357
  %v4065 = vunpack.c.h.b16 %v1357
  %v4066 = vunpack.c.l.b16 %v1358
  %v4067 = vunpack.c.h.b16 %v1358
  %v4068 = vunpack.c.l.b16 %v1359
  %v4069 = vunpack.c.h.b16 %v1359
  %v4070 = vunpack.c.l.b16 %v1360
  %v4071 = vunpack.c.h.b16 %v1360
  %v4072 = vunpack.c.l.b16 %v1361
  %v4073 = vunpack.c.h.b16 %v1361
  %v4074 = vunpack.c.l.b16 %v1362
  %v4075 = vunpack.c.h.b16 %v1362
  %v4076 = vunpack.c.l.b16 %v1363
  %v4077 = vunpack.c.h.b16 %v1363
  %v4078 = vunpack.c.l.b16 %v1364
  %v4079 = vunpack.c.h.b16 %v1364
  %v4080 = vunpack.c.l.b16 %v1365
  %v4081 = vunpack.c.h.b16 %v1365
  %v4082 = vunpack.c.l.b16 %v1366
  %v4083 = vunpack.c.h.b16 %v1366
  %v4084 = vunpack.c.l.b16 %v1367
  %v4085 = vunpack.c.h.b16 %v1367
  %v4086 = vunpack.c.l.b16 %v1368
  %v4087 = vunpack.c.h.b16 %v1368
  %v4088 = vunpack.c.l.b16 %v1369
  %v4089 = vunpack.c.h.b16 %v1369
  %v4090 = vunpack.c.l.b16 %v1370
  %v4091 = vunpack.c.h.b16 %v1370
  %v4092 = vunpack.c.l.b16 %v1371
  %v4093 = vunpack.c.h.b16 %v1371
  %v4094 = vunpack.c.l.b16 %v1372
  %v4095 = vunpack.c.h.b16 %v1372
  %v4096 = vunpack.c.l.b16 %v1373
  %v4097 = vunpack.c.h.b16 %v1373
  %v4098 = vunpack.c.l.b16 %v1374
  %v4099 = vunpack.c.h.b16 %v1374
  %v4100 = vunpack.c.l.b16 %v1375
  %v4101 = vunpack.c.h.b16 %v1375
  %v4102 = vunpack.c.l.b16 %v1376
  %v4103 = vunpack.c.h.b16 %v1376
  %v4104 = vunpack.c.l.b16 %v1377
  %v4105 = vunpack.c.h.b16 %v1377
  %v4106 = vunpack.c.l.b16 %v1378
  %v4107 = vunpack.c.h.b16 %v1378
  %v4108 = vunpack.c.l.b16 %v1379
  %v4109 = vunpack.c.h.b16 %v1379
  %v4110 = vunpack.c.l.b16 %v1380
  %v4111 = vunpack.c.h.b16 %v1380
  %v4112 = vunpack.c.l.b16 %v1381
  %v4113 = vunpack.c.h.b16 %v1381
  %v4114 = vunpack.c.l.b16 %v1382
  %v4115 = vunpack.c.h.b16 %v1382
  %v4116 = vunpack.c.l.b16 %v1383
  %v4117 = vunpack.c.h.b16 %v1383
  %v4118 = vunpack.c.l.b16 %v1384
  %v4119 = vunpack.c.h.b16 %v1384
  %v4120 = vunpack.c.l.b16 %v1385
  %v4121 = vunpack.c.h.b16 %v1385
  %v4122 = vunpack.c.l.b16 %v1386
  %v4123 = vunpack.c.h.b16 %v1386
  %v4124 = vunpack.c.l.b16 %v1387
  %v4125 = vunpack.c.h.b16 %v1387
  %v4126 = vunpack.c.l.b16 %v1388
  %v4127 = vunpack.c.h.b16 %v1388
  %v4128 = vunpack.c.l.b16 %v1389
  %v4129 = vunpack.c.h.b16 %v1389
  %v4130 = vunpack.c.l.b16 %v1390
  %v4131 = vunpack.c.h.b16 %v1390
  %v4132 = vunpack.c.l.b16 %v1391
  %v4133 = vunpack.c.h.b16 %v1391
  %v4134 = vunpack.c.l.b16 %v1392
  %v4135 = vunpack.c.h.b16 %v1392
  %v4136 = vunpack.c.l.b16 %v1393
  %v4137 = vunpack.c.h.b16 %v1393
  %v4138 = vunpack.c.l.b16 %v1394
  %v4139 = vunpack.c.h.b16 %v1394
  %v4140 = vunpack.c.l.b16 %v1395
  %v4141 = vunpack.c.h.b16 %v1395
  %v4142 = vunpack.c.l.b16 %v1396
  %v4143 = vunpack.c.h.b16 %v1396
  %v4144 = vunpack.c.l.b16 %v1397
  %v4145 = vunpack.c.h.b16 %v1397
  %v4146 = vunpack.c.l.b16 %v1398
  %v4147 = vunpack.c.h.b16 %v1398
  %v4148 = vunpack.c.l.b16 %v1399
  %v4149 = vunpack.c.h.b16 %v1399
  %v4150 = vunpack.c.l.b16 %v1400
  %v4151 = vunpack.c.h.b16 %v1400
  %v4152 = vunpack.c.l.b16 %v1401
  %v4153 = vunpack.c.h.b16 %v1401
  %v4154 = vunpack.c.l.b16 %v1402
  %v4155 = vunpack.c.h.b16 %v1402
  %v4156 = vunpack.c.l.b16 %v1403
  %v4157 = vunpack.c.h.b16 %v1403
  %v4158 = vunpack.c.l.b16 %v1404
  %v4159 = vunpack.c.h.b16 %v1404
  %v4160 = vunpack.c.l.b16 %v1405
  %v4161 = vunpack.c.h.b16 %v1405
  %v4162 = vunpack.c.l.b16 %v1406
  %v4163 = vunpack.c.h.b16 %v1406
  %v4164 = vunpack.c.l.b16 %v1407
  %v4165 = vunpack.c.h.b16 %v1407
  %v4166 = vunpack.c.l.b16 %v1408
  %v4167 = vunpack.c.h.b16 %v1408
  %v4168 = vunpack.c.l.b16 %v1409
  %v4169 = vunpack.c.h.b16 %v1409
  %v4170 = vunpack.c.l.b16 %v1410
  %v4171 = vunpack.c.h.b16 %v1410
  %v4172 = vunpack.c.l.b16 %v1411
  %v4173 = vunpack.c.h.b16 %v1411
  %v4174 = vunpack.c.l.b16 %v1412
  %v4175 = vunpack.c.h.b16 %v1412
  %v4176 = vunpack.c.l.b16 %v1413
  %v4177 = vunpack.c.h.b16 %v1413
  %v4178 = vunpack.c.l.b16 %v1414
  %v4179 = vunpack.c.h.b16 %v1414
  %v4180 = vunpack.c.l.b16 %v1415
  %v4181 = vunpack.c.h.b16 %v1415
  %v4182 = vunpack.c.l.b16 %v1416
  %v4183 = vunpack.c.h.b16 %v1416
  %v4184 = vunpack.c.l.b16 %v1417
  %v4185 = vunpack.c.h.b16 %v1417
  %v4186 = vunpack.c.l.b16 %v1418
  %v4187 = vunpack.c.h.b16 %v1418
  %v4188 = vunpack.c.l.b16 %v1419
  %v4189 = vunpack.c.h.b16 %v1419
  %v4190 = vunpack.c.l.b16 %v1420
  %v4191 = vunpack.c.h.b16 %v1420
  %v4192 = vunpack.c.l.b16 %v1421
  %v4193 = vunpack.c.h.b16 %v1421
  %v4194 = vunpack.c.l.b16 %v1422
  %v4195 = vunpack.c.h.b16 %v1422
  %v4196 = vunpack.c.l.b16 %v1423
  %v4197 = vunpack.c.h.b16 %v1423
  %v4198 = vunpack.c.l.b16 %v1424
  %v4199 = vunpack.c.h.b16 %v1424
  %v4200 = vunpack.c.l.b16 %v1425
  %v4201 = vunpack.c.h.b16 %v1425
  %v4202 = vunpack.c.l.b16 %v1426
  %v4203 = vunpack.c.h.b16 %v1426
  %v4204 = vunpack.c.l.b16 %v1427
  %v4205 = vunpack.c.h.b16 %v1427
  %v4206 = vunpack.c.l.b16 %v1428
  %v4207 = vunpack.c.h.b16 %v1428
  %v4208 = vunpack.c.l.b16 %v1429
  %v4209 = vunpack.c.h.b16 %v1429
  %v4210 = vunpack.c.l.b16 %v1430
  %v4211 = vunpack.c.h.b16 %v1430
  %v4212 = vunpack.c.l.b16 %v1431
  %v4213 = vunpack.c.h.b16 %v1431
  %v4214 = vunpack.c.l.b16 %v1432
  %v4215 = vunpack.c.h.b16 %v1432
  %v4216 = vunpack.c.l.b16 %v1433
  %v4217 = vunpack.c.h.b16 %v1433
  %v4218 = vunpack.c.l.b16 %v1434
  %v4219 = vunpack.c.h.b16 %v1434
  %v4220 = vunpack.c.l.b16 %v1435
  %v4221 = vunpack.c.h.b16 %v1435
  %v4222 = vunpack.c.l.b16 %v1436
  %v4223 = vunpack.c.h.b16 %v1436
  %v4224 = vunpack.c.l.b16 %v1437
  %v4225 = vunpack.c.h.b16 %v1437
  %v4226 = vunpack.c.l.b16 %v1438
  %v4227 = vunpack.c.h.b16 %v1438
  %v4228 = vunpack.c.l.b16 %v1439
  %v4229 = vunpack.c.h.b16 %v1439
  %v4230 = vunpack.c.l.b16 %v1440
  %v4231 = vunpack.c.h.b16 %v1440
  %v4232 = vunpack.c.l.b16 %v1441
  %v4233 = vunpack.c.h.b16 %v1441
  %v4234 = vunpack.c.l.b16 %v1442
  %v4235 = vunpack.c.h.b16 %v1442
  %v4236 = vunpack.c.l.b16 %v1443
  %v4237 = vunpack.c.h.b16 %v1443
  %v4238 = vunpack.c.l.b16 %v1444
  %v4239 = vunpack.c.h.b16 %v1444
  %v4240 = vunpack.c.l.b16 %v1445
  %v4241 = vunpack.c.h.b16 %v1445
  %v4242 = vunpack.c.l.b16 %v1446
  %v4243 = vunpack.c.h.b16 %v1446
  %v4244 = vunpack.c.l.b16 %v1447
  %v4245 = vunpack.c.h.b16 %v1447
  %v4246 = vunpack.c.l.b16 %v1448
  %v4247 = vunpack.c.h.b16 %v1448
  %v4248 = vunpack.c.l.b16 %v1449
  %v4249 = vunpack.c.h.b16 %v1449
  %v4250 = vunpack.c.l.b16 %v1450
  %v4251 = vunpack.c.h.b16 %v1450
  %v4252 = vunpack.c.l.b16 %v1451
  %v4253 = vunpack.c.h.b16 %v1451
  %v4254 = vunpack.c.l.b16 %v1452
  %v4255 = vunpack.c.h.b16 %v1452
  %v4256 = vunpack.c.l.b16 %v1453
  %v4257 = vunpack.c.h.b16 %v1453
  %v4258 = vunpack.c.l.b16 %v1454
  %v4259 = vunpack.c.h.b16 %v1454
  %v4260 = vunpack.c.l.b16 %v1455
  %v4261 = vunpack.c.h.b16 %v1455
  %v4262 = vunpack.c.l.b16 %v1456
  %v4263 = vunpack.c.h.b16 %v1456
  %v4264 = vunpack.c.l.b16 %v1457
  %v4265 = vunpack.c.h.b16 %v1457
  %v4266 = vunpack.c.l.b16 %v1458
  %v4267 = vunpack.c.h.b16 %v1458
  %v4268 = vunpack.c.l.b16 %v1459
  %v4269 = vunpack.c.h.b16 %v1459
  %v4270 = vunpack.c.l.b16 %v1460
  %v4271 = vunpack.c.h.b16 %v1460
  %v4272 = vunpack.c.l.b16 %v1461
  %v4273 = vunpack.c.h.b16 %v1461
  %v4274 = vunpack.c.l.b16 %v1462
  %v4275 = vunpack.c.h.b16 %v1462
  %v4276 = vunpack.c.l.b16 %v1463
  %v4277 = vunpack.c.h.b16 %v1463
  %v4278 = vunpack.c.l.b16 %v1464
  %v4279 = vunpack.c.h.b16 %v1464
  %v4280 = vunpack.c.l.b16 %v1465
  %v4281 = vunpack.c.h.b16 %v1465
  %v4282 = vunpack.c.l.b16 %v1466
  %v4283 = vunpack.c.h.b16 %v1466
  %v4284 = vunpack.c.l.b16 %v1467
  %v4285 = vunpack.c.h.b16 %v1467
  %v4286 = vunpack.c.l.b16 %v1468
  %v4287 = vunpack.c.h.b16 %v1468
  %v4288 = vunpack.c.l.b16 %v1469
  %v4289 = vunpack.c.h.b16 %v1469
  %v4290 = vunpack.c.l.b16 %v1470
  %v4291 = vunpack.c.h.b16 %v1470
  %v4292 = vunpack.c.l.b16 %v1471
  %v4293 = vunpack.c.h.b16 %v1471
  %v4294 = vunpack.c.l.b16 %v1472
  %v4295 = vunpack.c.h.b16 %v1472
  %v4296 = vunpack.c.l.b16 %v1473
  %v4297 = vunpack.c.h.b16 %v1473
  %v4298 = vunpack.c.l.b16 %v1474
  %v4299 = vunpack.c.h.b16 %v1474
  %v4300 = vunpack.c.l.b16 %v1475
  %v4301 = vunpack.c.h.b16 %v1475
  %v4302 = vunpack.c.l.b16 %v1476
  %v4303 = vunpack.c.h.b16 %v1476
  %v4304 = vunpack.c.l.b16 %v1477
  %v4305 = vunpack.c.h.b16 %v1477
  %v4306 = vunpack.c.l.b16 %v1478
  %v4307 = vunpack.c.h.b16 %v1478
  %v4308 = vunpack.c.l.b16 %v1479
  %v4309 = vunpack.c.h.b16 %v1479
  %v4310 = vunpack.c.l.b16 %v1480
  %v4311 = vunpack.c.h.b16 %v1480
  %v4312 = vunpack.c.l.b16 %v1481
  %v4313 = vunpack.c.h.b16 %v1481
  %v4314 = vunpack.c.l.b16 %v1482
  %v4315 = vunpack.c.h.b16 %v1482
  %v4316 = vunpack.c.l.b16 %v1483
  %v4317 = vunpack.c.h.b16 %v1483
  %v4318 = vunpack.c.l.b16 %v1484
  %v4319 = vunpack.c.h.b16 %v1484
  %v4320 = vunpack.c.l.b16 %v1485
  %v4321 = vunpack.c.h.b16 %v1485
  %v4322 = vunpack.c.l.b16 %v1486
  %v4323 = vunpack.c.h.b16 %v1486
  %v4324 = vunpack.c.l.b16 %v1487
  %v4325 = vunpack.c.h.b16 %v1487
  %v4326 = vunpack.c.l.b16 %v1488
  %v4327 = vunpack.c.h.b16 %v1488
  %v4328 = vunpack.c.l.b16 %v1489
  %v4329 = vunpack.c.h.b16 %v1489
  %v4330 = vunpack.c.l.b16 %v1490
  %v4331 = vunpack.c.h.b16 %v1490
  %v4332 = vunpack.c.l.b16 %v1491
  %v4333 = vunpack.c.h.b16 %v1491
  %v4334 = vunpack.c.l.b16 %v1492
  %v4335 = vunpack.c.h.b16 %v1492
  %v4336 = vunpack.c.l.b16 %v1493
  %v4337 = vunpack.c.h.b16 %v1493
  %v4338 = vunpack.c.l.b16 %v1494
  %v4339 = vunpack.c.h.b16 %v1494
  %v4340 = vunpack.c.l.b16 %v1495
  %v4341 = vunpack.c.h.b16 %v1495
  %v4342 = vunpack.c.l.b16 %v1496
  %v4343 = vunpack.c.h.b16 %v1496
  %v4344 = vunpack.c.l.b16 %v1497
  %v4345 = vunpack.c.h.b16 %v1497
  %v4346 = vunpack.c.l.b16 %v1498
  %v4347 = vunpack.c.h.b16 %v1498
  %v4348 = vunpack.c.l.b16 %v1499
  %v4349 = vunpack.c.h.b16 %v1499
  %v4350 = vunpack.c.l.b16 %v1500
  %v4351 = vunpack.c.h.b16 %v1500
  %v4352 = vunpack.c.l.b16 %v1501
  %v4353 = vunpack.c.h.b16 %v1501
  %v4354 = vunpack.c.l.b16 %v1502
  %v4355 = vunpack.c.h.b16 %v1502
  %v4356 = vunpack.c.l.b16 %v1503
  %v4357 = vunpack.c.h.b16 %v1503
  %v4358 = vunpack.c.l.b16 %v1504
  %v4359 = vunpack.c.h.b16 %v1504
  %v4360 = vunpack.c.l.b16 %v1505
  %v4361 = vunpack.c.h.b16 %v1505
  %v4362 = vunpack.c.l.b16 %v1506
  %v4363 = vunpack.c.h.b16 %v1506
  %v4364 = vunpack.c.l.b16 %v1507
  %v4365 = vunpack.c.h.b16 %v1507
  %v4366 = vunpack.c.l.b16 %v1508
  %v4367 = vunpack.c.h.b16 %v1508
  %v4368 = vunpack.c.l.b16 %v1509
  %v4369 = vunpack.c.h.b16 %v1509
  %v4370 = vunpack.c.l.b16 %v1510
  %v4371 = vunpack.c.h.b16 %v1510
  %v4372 = vunpack.c.l.b16 %v1511
  %v4373 = vunpack.c.h.b16 %v1511
  %v4374 = vunpack.c.l.b16 %v1512
  %v4375 = vunpack.c.h.b16 %v1512
  %v4376 = vunpack.c.l.b16 %v1513
  %v4377 = vunpack.c.h.b16 %v1513
  %v4378 = vunpack.c.l.b16 %v1514
  %v4379 = vunpack.c.h.b16 %v1514
  %v4380 = vunpack.c.l.b16 %v1515
  %v4381 = vunpack.c.h.b16 %v1515
  %v4382 = vunpack.c.l.b16 %v1516
  %v4383 = vunpack.c.h.b16 %v1516
  %v4384 = vunpack.c.l.b16 %v1517
  %v4385 = vunpack.c.h.b16 %v1517
  %v4386 = vunpack.c.l.b16 %v1518
  %v4387 = vunpack.c.h.b16 %v1518
  %v4388 = vunpack.c.l.b16 %v1519
  %v4389 = vunpack.c.h.b16 %v1519
  %v4390 = vunpack.c.l.b16 %v1520
  %v4391 = vunpack.c.h.b16 %v1520
  %v4392 = vunpack.c.l.b16 %v1521
  %v4393 = vunpack.c.h.b16 %v1521
  %v4394 = vunpack.c.l.b16 %v1522
  %v4395 = vunpack.c.h.b16 %v1522
  %v4396 = vunpack.c.l.b16 %v1523
  %v4397 = vunpack.c.h.b16 %v1523
  %v4398 = vunpack.c.l.b16 %v1524
  %v4399 = vunpack.c.h.b16 %v1524
  %v4400 = vunpack.c.l.b16 %v1525
  %v4401 = vunpack.c.h.b16 %v1525
  %v4402 = vunpack.c.l.b16 %v1526
  %v4403 = vunpack.c.h.b16 %v1526
  %v4404 = vunpack.c.l.b16 %v1527
  %v4405 = vunpack.c.h.b16 %v1527
  %v4406 = vunpack.c.l.b16 %v1528
  %v4407 = vunpack.c.h.b16 %v1528
  %v4408 = vunpack.c.l.b16 %v1529
  %v4409 = vunpack.c.h.b16 %v1529
  %v4410 = vunpack.c.l.b16 %v1530
  %v4411 = vunpack.c.h.b16 %v1530
  %v4412 = vunpack.c.l.b16 %v1531
  %v4413 = vunpack.c.h.b16 %v1531
  %v4414 = vunpack.c.l.b16 %v1532
  %v4415 = vunpack.c.h.b16 %v1532
  %v4416 = vunpack.c.l.b16 %v1533
  %v4417 = vunpack.c.h.b16 %v1533
  %v4418 = vunpack.c.l.b16 %v1534
  %v4419 = vunpack.c.h.b16 %v1534
  %v4420 = vunpack.c.l.b16 %v1535
  %v4421 = vunpack.c.h.b16 %v1535
  %v4422 = vunpack.c.l.b16 %v1536
  %v4423 = vunpack.c.h.b16 %v1536
  %v4424 = vunpack.c.l.b16 %v1537
  %v4425 = vunpack.c.h.b16 %v1537
  %v4426 = vunpack.c.l.b16 %v1538
  %v4427 = vunpack.c.h.b16 %v1538
  %v4428 = vunpack.c.l.b16 %v1539
  %v4429 = vunpack.c.h.b16 %v1539
  %v4430 = vunpack.c.l.b16 %v1540
  %v4431 = vunpack.c.h.b16 %v1540
  %v4432 = vunpack.c.l.b16 %v1541
  %v4433 = vunpack.c.h.b16 %v1541
  %v4434 = vunpack.c.l.b16 %v1542
  %v4435 = vunpack.c.h.b16 %v1542
  %v4436 = vunpack.c.l.b16 %v1543
  %v4437 = vunpack.c.h.b16 %v1543
  %v4438 = vunpack.c.l.b16 %v1544
  %v4439 = vunpack.c.h.b16 %v1544
  %v4440 = vunpack.c.l.b16 %v1545
  %v4441 = vunpack.c.h.b16 %v1545
  %v4442 = vunpack.c.l.b16 %v1546
  %v4443 = vunpack.c.h.b16 %v1546
  %v4444 = vunpack.c.l.b16 %v1547
  %v4445 = vunpack.c.h.b16 %v1547
  %v4446 = vunpack.c.l.b16 %v1548
  %v4447 = vunpack.c.h.b16 %v1548
  %v4448 = vunpack.c.l.b16 %v1549
  %v4449 = vunpack.c.h.b16 %v1549
  %v4450 = vunpack.c.l.b16 %v1550
  %v4451 = vunpack.c.h.b16 %v1550
  %v4452 = vunpack.c.l.b16 %v1551
  %v4453 = vunpack.c.h.b16 %v1551
  %v4454 = vunpack.c.l.b16 %v1552
  %v4455 = vunpack.c.h.b16 %v1552
  %v4456 = vunpack.c.l.b16 %v1553
  %v4457 = vunpack.c.h.b16 %v1553
  %v4458 = vunpack.c.l.b16 %v1554
  %v4459 = vunpack.c.h.b16 %v1554
  %v4460 = vunpack.c.l.b16 %v1555
  %v4461 = vunpack.c.h.b16 %v1555
  %v4462 = vunpack.c.l.b16 %v1556
  %v4463 = vunpack.c.h.b16 %v1556
  %v4464 = vunpack.c.l.b16 %v1557
  %v4465 = vunpack.c.h.b16 %v1557
  %v4466 = vunpack.c.l.b16 %v1558
  %v4467 = vunpack.c.h.b16 %v1558
  %v4468 = vunpack.c.l.b16 %v1559
  %v4469 = vunpack.c.h.b16 %v1559
  %v4470 = vunpack.c.l.b16 %v1560
  %v4471 = vunpack.c.h.b16 %v1560
  %v4472 = vunpack.c.l.b16 %v1561
  %v4473 = vunpack.c.h.b16 %v1561
  %v4474 = vunpack.c.l.b16 %v1562
  %v4475 = vunpack.c.h.b16 %v1562
  %v4476 = vunpack.c.l.b16 %v1563
  %v4477 = vunpack.c.h.b16 %v1563
  %v4478 = vunpack.c.l.b16 %v1564
  %v4479 = vunpack.c.h.b16 %v1564
  %v4480 = vunpack.c.l.b16 %v1565
  %v4481 = vunpack.c.h.b16 %v1565
  %v4482 = vunpack.c.l.b16 %v1566
  %v4483 = vunpack.c.h.b16 %v1566
  %v4484 = vunpack.c.l.b16 %v1567
  %v4485 = vunpack.c.h.b16 %v1567
  %v4486 = vunpack.c.l.b16 %v1568
  %v4487 = vunpack.c.h.b16 %v1568
  %v4488 = vunpack.c.l.b16 %v1569
  %v4489 = vunpack.c.h.b16 %v1569
  %v4490 = vunpack.c.l.b16 %v1570
  %v4491 = vunpack.c.h.b16 %v1570
  %v4492 = vunpack.c.l.b16 %v1571
  %v4493 = vunpack.c.h.b16 %v1571
  %v4494 = vunpack.c.l.b16 %v1572
  %v4495 = vunpack.c.h.b16 %v1572
  %v4496 = vunpack.c.l.b16 %v1573
  %v4497 = vunpack.c.h.b16 %v1573
  %v4498 = vunpack.c.l.b16 %v1574
  %v4499 = vunpack.c.h.b16 %v1574
  %v4500 = vunpack.c.l.b16 %v1575
  %v4501 = vunpack.c.h.b16 %v1575
  %v4502 = vunpack.c.l.b16 %v1576
  %v4503 = vunpack.c.h.b16 %v1576
  %v4504 = vunpack.c.l.b16 %v1577
  %v4505 = vunpack.c.h.b16 %v1577
  %v4506 = vunpack.c.l.b16 %v1578
  %v4507 = vunpack.c.h.b16 %v1578
  %v4508 = vunpack.c.l.b16 %v1579
  %v4509 = vunpack.c.h.b16 %v1579
  %v4510 = vunpack.c.l.b16 %v1580
  %v4511 = vunpack.c.h.b16 %v1580
  %v4512 = vunpack.c.l.b16 %v1581
  %v4513 = vunpack.c.h.b16 %v1581
  %v4514 = vunpack.c.l.b16 %v1582
  %v4515 = vunpack.c.h.b16 %v1582
  %v4516 = vunpack.c.l.b16 %v1583
  %v4517 = vunpack.c.h.b16 %v1583
  %v4518 = vunpack.c.l.b16 %v1584
  %v4519 = vunpack.c.h.b16 %v1584
  %v4520 = vunpack.c.l.b16 %v1585
  %v4521 = vunpack.c.h.b16 %v1585
  %v4522 = vunpack.c.l.b16 %v1586
  %v4523 = vunpack.c.h.b16 %v1586
  %v4524 = vunpack.c.l.b16 %v1587
  %v4525 = vunpack.c.h.b16 %v1587
  %v4526 = vunpack.c.l.b16 %v1588
  %v4527 = vunpack.c.h.b16 %v1588
  %v4528 = vunpack.c.l.b16 %v1589
  %v4529 = vunpack.c.h.b16 %v1589
  %v4530 = vunpack.c.l.b16 %v1590
  %v4531 = vunpack.c.h.b16 %v1590
  %v4532 = vunpack.c.l.b16 %v1591
  %v4533 = vunpack.c.h.b16 %v1591
  %v4534 = vunpack.c.l.b16 %v1592
  %v4535 = vunpack.c.h.b16 %v1592
  %v4536 = vunpack.c.l.b16 %v1593
  %v4537 = vunpack.c.h.b16 %v1593
  %v4538 = vunpack.c.l.b16 %v1594
  %v4539 = vunpack.c.h.b16 %v1594
  %v4540 = vunpack.c.l.b16 %v1595
  %v4541 = vunpack.c.h.b16 %v1595
  %v4542 = vunpack.c.l.b16 %v1596
  %v4543 = vunpack.c.h.b16 %v1596
  %v4544 = vunpack.c.l.b16 %v1597
  %v4545 = vunpack.c.h.b16 %v1597
  %v4546 = vunpack.c.l.b16 %v1598
  %v4547 = vunpack.c.h.b16 %v1598
  %v4548 = vunpack.c.l.b16 %v1599
  %v4549 = vunpack.c.h.b16 %v1599
  %v4550 = vunpack.c.l.b16 %v1600
  %v4551 = vunpack.c.h.b16 %v1600
  %v4552 = vunpack.c.l.b16 %v1601
  %v4553 = vunpack.c.h.b16 %v1601
  %v4554 = vunpack.c.l.b16 %v1602
  %v4555 = vunpack.c.h.b16 %v1602
  %v4556 = vunpack.c.l.b16 %v1603
  %v4557 = vunpack.c.h.b16 %v1603
  %v4558 = vunpack.c.l.b16 %v1604
  %v4559 = vunpack.c.h.b16 %v1604
  %v4560 = vunpack.c.l.b16 %v1605
  %v4561 = vunpack.c.h.b16 %v1605
  %v4562 = vunpack.c.l.b16 %v1606
  %v4563 = vunpack.c.h.b16 %v1606
  %v4564 = vunpack.c.l.b16 %v1607
  %v4565 = vunpack.c.h.b16 %v1607
  %v4566 = vunpack.c.l.b16 %v1608
  %v4567 = vunpack.c.h.b16 %v1608
  %v4568 = vunpack.c.l.b16 %v1609
  %v4569 = vunpack.c.h.b16 %v1609
  %v4570 = vunpack.c.l.b16 %v1610
  %v4571 = vunpack.c.h.b16 %v1610
  %v4572 = vunpack.c.l.b16 %v1611
  %v4573 = vunpack.c.h.b16 %v1611
  %v4574 = vunpack.c.l.b16 %v1612
  %v4575 = vunpack.c.h.b16 %v1612
  %v4576 = vunpack.c.l.b16 %v1613
  %v4577 = vunpack.c.h.b16 %v1613
  %v4578 = vunpack.c.l.b16 %v1614
  %v4579 = vunpack.c.h.b16 %v1614
  %v4580 = vunpack.c.l.b16 %v1615
  %v4581 = vunpack.c.h.b16 %v1615
  %v4582 = vunpack.c.l.b16 %v1616
  %v4583 = vunpack.c.h.b16 %v1616
  %v4584 = vunpack.c.l.b16 %v1617
  %v4585 = vunpack.c.h.b16 %v1617
  %v4586 = vunpack.c.l.b16 %v1618
  %v4587 = vunpack.c.h.b16 %v1618
  %v4588 = vunpack.c.l.b16 %v1619
  %v4589 = vunpack.c.h.b16 %v1619
  %v4590 = vunpack.c.l.b16 %v1620
  %v4591 = vunpack.c.h.b16 %v1620
  %v4592 = vunpack.c.l.b16 %v1621
  %v4593 = vunpack.c.h.b16 %v1621
  %v4594 = vunpack.c.l.b16 %v1622
  %v4595 = vunpack.c.h.b16 %v1622
  %v4596 = vunpack.c.l.b16 %v1623
  %v4597 = vunpack.c.h.b16 %v1623
  %v4598 = vunpack.c.l.b16 %v1624
  %v4599 = vunpack.c.h.b16 %v1624
  %v4600 = vunpack.c.l.b16 %v1625
  %v4601 = vunpack.c.h.b16 %v1625
  %v4602 = vunpack.c.l.b16 %v1626
  %v4603 = vunpack.c.h.b16 %v1626
  %v4604 = vunpack.c.l.b16 %v1627
  %v4605 = vunpack.c.h.b16 %v1627
  %v4606 = vunpack.c.l.b16 %v1628
  %v4607 = vunpack.c.h.b16 %v1628
  %v4608 = vunpack.c.l.b16 %v1629
  %v4609 = vunpack.c.h.b16 %v1629
  %v4610 = vunpack.c.l.b16 %v1630
  %v4611 = vunpack.c.h.b16 %v1630
  %v4612 = vunpack.c.l.b16 %v1631
  %v4613 = vunpack.c.h.b16 %v1631
  %v4614 = vunpack.c.l.b16 %v1632
  %v4615 = vunpack.c.h.b16 %v1632
  %v4616 = vunpack.c.l.b16 %v1633
  %v4617 = vunpack.c.h.b16 %v1633
  %v4618 = vunpack.c.l.b16 %v1634
  %v4619 = vunpack.c.h.b16 %v1634
  %v4620 = vunpack.c.l.b16 %v1635
  %v4621 = vunpack.c.h.b16 %v1635
  %v4622 = vunpack.c.l.b16 %v1636
  %v4623 = vunpack.c.h.b16 %v1636
  %v4624 = vunpack.c.l.b16 %v1637
  %v4625 = vunpack.c.h.b16 %v1637
  %v4626 = vunpack.c.l.b16 %v1638
  %v4627 = vunpack.c.h.b16 %v1638
  %v4628 = vunpack.c.l.b16 %v1639
  %v4629 = vunpack.c.h.b16 %v1639
  %v4630 = vunpack.c.l.b16 %v1640
  %v4631 = vunpack.c.h.b16 %v1640
  %v4632 = vunpack.c.l.b16 %v1641
  %v4633 = vunpack.c.h.b16 %v1641
  %v4634 = vunpack.c.l.b16 %v1642
  %v4635 = vunpack.c.h.b16 %v1642
  %v4636 = vunpack.c.l.b16 %v1643
  %v4637 = vunpack.c.h.b16 %v1643
  %v4638 = vunpack.c.l.b16 %v1644
  %v4639 = vunpack.c.h.b16 %v1644
  %v4640 = vunpack.c.l.b16 %v1645
  %v4641 = vunpack.c.h.b16 %v1645
  %v4642 = vunpack.c.l.b16 %v1646
  %v4643 = vunpack.c.h.b16 %v1646
  %v4644 = vunpack.c.l.b16 %v1647
  %v4645 = vunpack.c.h.b16 %v1647
  %v4646 = vunpack.c.l.b16 %v1648
  %v4647 = vunpack.c.h.b16 %v1648
  %v4648 = vunpack.c.l.b16 %v1649
  %v4649 = vunpack.c.h.b16 %v1649
  %v4650 = vunpack.c.l.b16 %v1650
  %v4651 = vunpack.c.h.b16 %v1650
  %v4652 = vunpack.c.l.b16 %v1651
  %v4653 = vunpack.c.h.b16 %v1651
  %v4654 = vunpack.c.l.b16 %v1652
  %v4655 = vunpack.c.h.b16 %v1652
  %v4656 = vunpack.c.l.b16 %v1653
  %v4657 = vunpack.c.h.b16 %v1653
  %v4658 = vunpack.c.l.b16 %v1654
  %v4659 = vunpack.c.h.b16 %v1654
  %v4660 = vunpack.c.l.b16 %v1655
  %v4661 = vunpack.c.h.b16 %v1655
  %v4662 = vunpack.c.l.b16 %v1656
  %v4663 = vunpack.c.h.b16 %v1656
  %v4664 = vunpack.c.l.b16 %v1657
  %v4665 = vunpack.c.h.b16 %v1657
  %v4666 = vunpack.c.l.b16 %v1658
  %v4667 = vunpack.c.h.b16 %v1658
  %v4668 = vunpack.c.l.b16 %v1659
  %v4669 = vunpack.c.h.b16 %v1659
  %v4670 = vunpack.c.l.b16 %v1660
  %v4671 = vunpack.c.h.b16 %v1660
  %v4672 = vunpack.c.l.b16 %v1661
  %v4673 = vunpack.c.h.b16 %v1661
  %v4674 = vunpack.c.l.b16 %v1662
  %v4675 = vunpack.c.h.b16 %v1662
  %v4676 = vunpack.c.l.b16 %v1663
  %v4677 = vunpack.c.h.b16 %v1663
  %v4678 = vunpack.c.l.b16 %v1664
  %v4679 = vunpack.c.h.b16 %v1664
  %v4680 = vunpack.c.l.b16 %v1665
  %v4681 = vunpack.c.h.b16 %v1665
  %v4682 = vunpack.c.l.b16 %v1666
  %v4683 = vunpack.c.h.b16 %v1666
  %v4684 = vunpack.c.l.b16 %v1667
  %v4685 = vunpack.c.h.b16 %v1667
  %v4686 = vunpack.c.l.b16 %v1668
  %v4687 = vunpack.c.h.b16 %v1668
  %v4688 = vunpack.c.l.b16 %v1669
  %v4689 = vunpack.c.h.b16 %v1669
  %v4690 = vunpack.c.l.b16 %v1670
  %v4691 = vunpack.c.h.b16 %v1670
  %v4692 = vunpack.c.l.b16 %v1671
  %v4693 = vunpack.c.h.b16 %v1671
  %v4694 = vunpack.c.l.b16 %v1672
  %v4695 = vunpack.c.h.b16 %v1672
  %v4696 = vunpack.c.l.b16 %v1673
  %v4697 = vunpack.c.h.b16 %v1673
  %v4698 = vunpack.c.l.b16 %v1674
  %v4699 = vunpack.c.h.b16 %v1674
  %v4700 = vunpack.c.l.b16 %v1675
  %v4701 = vunpack.c.h.b16 %v1675
  %v4702 = vunpack.c.l.b16 %v1676
  %v4703 = vunpack.c.h.b16 %v1676
  %v4704 = vunpack.c.l.b16 %v1677
  %v4705 = vunpack.c.h.b16 %v1677
  %v4706 = vunpack.c.l.b16 %v1678
  %v4707 = vunpack.c.h.b16 %v1678
  %v4708 = vunpack.c.l.b16 %v1679
  %v4709 = vunpack.c.h.b16 %v1679
  %v4710 = vunpack.c.l.b16 %v1680
  %v4711 = vunpack.c.h.b16 %v1680
  %v4712 = vunpack.c.l.b16 %v1681
  %v4713 = vunpack.c.h.b16 %v1681
  %v4714 = vunpack.c.l.b16 %v1682
  %v4715 = vunpack.c.h.b16 %v1682
  %v4716 = vunpack.c.l.b16 %v1683
  %v4717 = vunpack.c.h.b16 %v1683
  %v4718 = vunpack.c.l.b16 %v1684
  %v4719 = vunpack.c.h.b16 %v1684
  %v4720 = vunpack.c.l.b16 %v1685
  %v4721 = vunpack.c.h.b16 %v1685
  %v4722 = vunpack.c.l.b16 %v1686
  %v4723 = vunpack.c.h.b16 %v1686
  %v4724 = vunpack.c.l.b16 %v1687
  %v4725 = vunpack.c.h.b16 %v1687
  %v4726 = vunpack.c.l.b16 %v1688
  %v4727 = vunpack.c.h.b16 %v1688
  %v4728 = vunpack.c.l.b16 %v1689
  %v4729 = vunpack.c.h.b16 %v1689
  %v4730 = vunpack.c.l.b16 %v1690
  %v4731 = vunpack.c.h.b16 %v1690
  %v4732 = vunpack.c.l.b16 %v1691
  %v4733 = vunpack.c.h.b16 %v1691
  %v4734 = vunpack.c.l.b16 %v1692
  %v4735 = vunpack.c.h.b16 %v1692
  %v4736 = vunpack.c.l.b16 %v1693
  %v4737 = vunpack.c.h.b16 %v1693
  %v4738 = vunpack.c.l.b16 %v1694
  %v4739 = vunpack.c.h.b16 %v1694
  %v4740 = vunpack.c.l.b16 %v1695
  %v4741 = vunpack.c.h.b16 %v1695
  %v4742 = vunpack.c.l.b16 %v1696
  %v4743 = vunpack.c.h.b16 %v1696
  %v4744 = vunpack.c.l.b16 %v1697
  %v4745 = vunpack.c.h.b16 %v1697
  %v4746 = vunpack.c.l.b16 %v1698
  %v4747 = vunpack.c.h.b16 %v1698
  %v4748 = vunpack.c.l.b16 %v1699
  %v4749 = vunpack.c.h.b16 %v1699
  %v4750 = vunpack.c.l.b16 %v1700
  %v4751 = vunpack.c.h.b16 %v1700
  %v4752 = vunpack.c.l.b16 %v1701
  %v4753 = vunpack.c.h.b16 %v1701
  %v4754 = vunpack.c.l.b16 %v1702
  %v4755 = vunpack.c.h.b16 %v1702
  %v4756 = vunpack.c.l.b16 %v1703
  %v4757 = vunpack.c.h.b16 %v1703
  %v4758 = vunpack.c.l.b16 %v1704
  %v4759 = vunpack.c.h.b16 %v1704
  %v4760 = vunpack.c.l.b16 %v1705
  %v4761 = vunpack.c.h.b16 %v1705
  %v4762 = vunpack.c.l.b16 %v1706
  %v4763 = vunpack.c.h.b16 %v1706
  %v4764 = vunpack.c.l.b16 %v1707
  %v4765 = vunpack.c.h.b16 %v1707
  %v4766 = vunpack.c.l.b16 %v1708
  %v4767 = vunpack.c.h.b16 %v1708
  %v4768 = vunpack.c.l.b16 %v1709
  %v4769 = vunpack.c.h.b16 %v1709
  %v4770 = vunpack.c.l.b16 %v1710
  %v4771 = vunpack.c.h.b16 %v1710
  %v4772 = vunpack.c.l.b16 %v1711
  %v4773 = vunpack.c.h.b16 %v1711
  %v4774 = vunpack.c.l.b16 %v1712
  %v4775 = vunpack.c.h.b16 %v1712
  %v4776 = vunpack.c.l.b16 %v1713
  %v4777 = vunpack.c.h.b16 %v1713
  %v4778 = vunpack.c.l.b16 %v1714
  %v4779 = vunpack.c.h.b16 %v1714
  %v4780 = vunpack.c.l.b16 %v1715
  %v4781 = vunpack.c.h.b16 %v1715
  %v4782 = vunpack.c.l.b16 %v1716
  %v4783 = vunpack.c.h.b16 %v1716
  %v4784 = vunpack.c.l.b16 %v1717
  %v4785 = vunpack.c.h.b16 %v1717
  %v4786 = vunpack.c.l.b16 %v1718
  %v4787 = vunpack.c.h.b16 %v1718
  %v4788 = vunpack.c.l.b16 %v1719
  %v4789 = vunpack.c.h.b16 %v1719
  %v4790 = vunpack.c.l.b16 %v1720
  %v4791 = vunpack.c.h.b16 %v1720
  %v4792 = vunpack.c.l.b16 %v1721
  %v4793 = vunpack.c.h.b16 %v1721
  %v4794 = vunpack.c.l.b16 %v1722
  %v4795 = vunpack.c.h.b16 %v1722
  %v4796 = vunpack.c.l.b16 %v1723
  %v4797 = vunpack.c.h.b16 %v1723
  %v4798 = vunpack.c.l.b16 %v1724
  %v4799 = vunpack.c.h.b16 %v1724
  %v4800 = vunpack.c.l.b16 %v1725
  %v4801 = vunpack.c.h.b16 %v1725
  %v4802 = vunpack.c.l.b16 %v1726
  %v4803 = vunpack.c.h.b16 %v1726
  %v4804 = vunpack.c.l.b16 %v1727
  %v4805 = vunpack.c.h.b16 %v1727
  %v4806 = vunpack.c.l.b16 %v1728
  %v4807 = vunpack.c.h.b16 %v1728
  %v4808 = vunpack.c.l.b16 %v1729
  %v4809 = vunpack.c.h.b16 %v1729
  %v4810 = vunpack.c.l.b16 %v1730
  %v4811 = vunpack.c.h.b16 %v1730
  %v4812 = vunpack.c.l.b16 %v1731
  %v4813 = vunpack.c.h.b16 %v1731
  %v4814 = vunpack.c.l.b16 %v1732
  %v4815 = vunpack.c.h.b16 %v1732
  %v4816 = vunpack.c.l.b16 %v1733
  %v4817 = vunpack.c.h.b16 %v1733
  %v4818 = vunpack.c.l.b16 %v1734
  %v4819 = vunpack.c.h.b16 %v1734
  %v4820 = vunpack.c.l.b16 %v1735
  %v4821 = vunpack.c.h.b16 %v1735
  %v4822 = vunpack.c.l.b16 %v1736
  %v4823 = vunpack.c.h.b16 %v1736
  %v4824 = vunpack.c.l.b16 %v1737
  %v4825 = vunpack.c.h.b16 %v1737
  %v4826 = vunpack.c.l.b16 %v1738
  %v4827 = vunpack.c.h.b16 %v1738
  %v4828 = vunpack.c.l.b16 %v1739
  %v4829 = vunpack.c.h.b16 %v1739
  %v4830 = vunpack.c.l.b16 %v1740
  %v4831 = vunpack.c.h.b16 %v1740
  %v4832 = vunpack.c.l.b16 %v1741
  %v4833 = vunpack.c.h.b16 %v1741
  %v4834 = vunpack.c.l.b16 %v1742
  %v4835 = vunpack.c.h.b16 %v1742
  %v4836 = vunpack.c.l.b16 %v1743
  %v4837 = vunpack.c.h.b16 %v1743
  %v4838 = vunpack.c.l.b16 %v1744
  %v4839 = vunpack.c.h.b16 %v1744
  %v4840 = vunpack.c.l.b16 %v1745
  %v4841 = vunpack.c.h.b16 %v1745
  %v4842 = vunpack.c.l.b16 %v1746
  %v4843 = vunpack.c.h.b16 %v1746
  %v4844 = vunpack.c.l.b16 %v1747
  %v4845 = vunpack.c.h.b16 %v1747
  %v4846 = vunpack.c.l.b16 %v1748
  %v4847 = vunpack.c.h.b16 %v1748
  %v4848 = vunpack.c.l.b16 %v1749
  %v4849 = vunpack.c.h.b16 %v1749
  %v4850 = vunpack.c.l.b16 %v1750
  %v4851 = vunpack.c.h.b16 %v1750
  %v4852 = vunpack.c.l.b16 %v1751
  %v4853 = vunpack.c.h.b16 %v1751
  %v4854 = vunpack.c.l.b16 %v1752
  %v4855 = vunpack.c.h.b16 %v1752
  %v4856 = vunpack.c.l.b16 %v1753
  %v4857 = vunpack.c.h.b16 %v1753
  %v4858 = vunpack.c.l.b16 %v1754
  %v4859 = vunpack.c.h.b16 %v1754
  %v4860 = vunpack.c.l.b16 %v1755
  %v4861 = vunpack.c.h.b16 %v1755
  %v4862 = vunpack.c.l.b16 %v1756
  %v4863 = vunpack.c.h.b16 %v1756
  %v4864 = vunpack.c.l.b16 %v1757
  %v4865 = vunpack.c.h.b16 %v1757
  %v4866 = vunpack.c.l.b16 %v1758
  %v4867 = vunpack.c.h.b16 %v1758
  %v4868 = vunpack.c.l.b16 %v1759
  %v4869 = vunpack.c.h.b16 %v1759
  %v4870 = vunpack.c.l.b16 %v1760
  %v4871 = vunpack.c.h.b16 %v1760
  %v4872 = vunpack.c.l.b16 %v1761
  %v4873 = vunpack.c.h.b16 %v1761
  %v4874 = vunpack.c.l.b16 %v1762
  %v4875 = vunpack.c.h.b16 %v1762
  %v4876 = vunpack.c.l.b16 %v1763
  %v4877 = vunpack.c.h.b16 %v1763
  %v4878 = vunpack.c.l.b16 %v1764
  %v4879 = vunpack.c.h.b16 %v1764
  %v4880 = vunpack.c.l.b16 %v1765
  %v4881 = vunpack.c.h.b16 %v1765
  %v4882 = vunpack.c.l.b16 %v1766
  %v4883 = vunpack.c.h.b16 %v1766
  %v4884 = vunpack.c.l.b16 %v1767
  %v4885 = vunpack.c.h.b16 %v1767
  %v4886 = vunpack.c.l.b16 %v1768
  %v4887 = vunpack.c.h.b16 %v1768
  %v4888 = vunpack.c.l.b16 %v1769
  %v4889 = vunpack.c.h.b16 %v1769
  %v4890 = vunpack.c.l.b16 %v1770
  %v4891 = vunpack.c.h.b16 %v1770
  %v4892 = vunpack.c.l.b16 %v1771
  %v4893 = vunpack.c.h.b16 %v1771
  %v4894 = vunpack.c.l.b16 %v1772
  %v4895 = vunpack.c.h.b16 %v1772
  %v4896 = vunpack.c.l.b16 %v1773
  %v4897 = vunpack.c.h.b16 %v1773
  %v4898 = vunpack.c.l.b16 %v1774
  %v4899 = vunpack.c.h.b16 %v1774
  %v4900 = vunpack.c.l.b16 %v1775
  %v4901 = vunpack.c.h.b16 %v1775
  %v4902 = vunpack.c.l.b16 %v1776
  %v4903 = vunpack.c.h.b16 %v1776
  %v4904 = vunpack.c.l.b16 %v1777
  %v4905 = vunpack.c.h.b16 %v1777
  %v4906 = vunpack.c.l.b16 %v1778
  %v4907 = vunpack.c.h.b16 %v1778
  %v4908 = vunpack.c.l.b16 %v1779
  %v4909 = vunpack.c.h.b16 %v1779
  %v4910 = vunpack.c.l.b16 %v1780
  %v4911 = vunpack.c.h.b16 %v1780
  %v4912 = vunpack.c.l.b16 %v1781
  %v4913 = vunpack.c.h.b16 %v1781
  %v4914 = vunpack.c.l.b16 %v1782
  %v4915 = vunpack.c.h.b16 %v1782
  %v4916 = vunpack.c.l.b16 %v1783
  %v4917 = vunpack.c.h.b16 %v1783
  %v4918 = vunpack.c.l.b16 %v1784
  %v4919 = vunpack.c.h.b16 %v1784
  %v4920 = vunpack.c.l.b16 %v1785
  %v4921 = vunpack.c.h.b16 %v1785
  %v4922 = vunpack.c.l.b16 %v1786
  %v4923 = vunpack.c.h.b16 %v1786
  %v4924 = vunpack.c.l.b16 %v1787
  %v4925 = vunpack.c.h.b16 %v1787
  %v4926 = vunpack.c.l.b16 %v1788
  %v4927 = vunpack.c.h.b16 %v1788
  %v4928 = vunpack.c.l.b16 %v1789
  %v4929 = vunpack.c.h.b16 %v1789
  %v4930 = vunpack.c.l.b16 %v1790
  %v4931 = vunpack.c.h.b16 %v1790
  %v4932 = vunpack.c.l.b16 %v1791
  %v4933 = vunpack.c.h.b16 %v1791
  %v4934 = vunpack.c.l.b16 %v1792
  %v4935 = vunpack.c.h.b16 %v1792
  %v4936 = vunpack.c.l.b16 %v1793
  %v4937 = vunpack.c.h.b16 %v1793
  %v4938 = vunpack.c.l.b16 %v1794
  %v4939 = vunpack.c.h.b16 %v1794
  %v4940 = vunpack.c.l.b16 %v1795
  %v4941 = vunpack.c.h.b16 %v1795
  %v4942 = vunpack.c.l.b16 %v1796
  %v4943 = vunpack.c.h.b16 %v1796
  %v4944 = vunpack.c.l.b16 %v1797
  %v4945 = vunpack.c.h.b16 %v1797
  %v4946 = vunpack.c.l.b16 %v1798
  %v4947 = vunpack.c.h.b16 %v1798
  %v4948 = vunpack.c.l.b16 %v1799
  %v4949 = vunpack.c.h.b16 %v1799
  %v4950 = vunpack.c.l.b16 %v1800
  %v4951 = vunpack.c.h.b16 %v1800
  %v4952 = vunpack.c.l.b16 %v1801
  %v4953 = vunpack.c.h.b16 %v1801
  %v4954 = vunpack.c.l.b16 %v1802
  %v4955 = vunpack.c.h.b16 %v1802
  %v4956 = vunpack.c.l.b16 %v1803
  %v4957 = vunpack.c.h.b16 %v1803
  %v4958 = vunpack.c.l.b16 %v1804
  %v4959 = vunpack.c.h.b16 %v1804
  %v4960 = vunpack.c.l.b16 %v1805
  %v4961 = vunpack.c.h.b16 %v1805
  %v4962 = vunpack.c.l.b16 %v1806
  %v4963 = vunpack.c.h.b16 %v1806
  %v4964 = vunpack.c.l.b16 %v1807
  %v4965 = vunpack.c.h.b16 %v1807
  %v4966 = vunpack.c.l.b16 %v1808
  %v4967 = vunpack.c.h.b16 %v1808
  %v4968 = vunpack.c.l.b16 %v1809
  %v4969 = vunpack.c.h.b16 %v1809
  %v4970 = vunpack.c.l.b16 %v1810
  %v4971 = vunpack.c.h.b16 %v1810
  %v4972 = vunpack.c.l.b16 %v1811
  %v4973 = vunpack.c.h.b16 %v1811
  %v4974 = vunpack.c.l.b16 %v1812
  %v4975 = vunpack.c.h.b16 %v1812
  %v4976 = vunpack.c.l.b16 %v1813
  %v4977 = vunpack.c.h.b16 %v1813
  %v4978 = vunpack.c.l.b16 %v1814
  %v4979 = vunpack.c.h.b16 %v1814
  %v4980 = vunpack.c.l.b16 %v1815
  %v4981 = vunpack.c.h.b16 %v1815
  %v4982 = vunpack.c.l.b16 %v1816
  %v4983 = vunpack.c.h.b16 %v1816
  %v4984 = vunpack.c.l.b16 %v1817
  %v4985 = vunpack.c.h.b16 %v1817
  %v4986 = vunpack.c.l.b16 %v1818
  %v4987 = vunpack.c.h.b16 %v1818
  %v4988 = vunpack.c.l.b16 %v1819
  %v4989 = vunpack.c.h.b16 %v1819
  %v4990 = vunpack.c.l.b16 %v1820
  %v4991 = vunpack.c.h.b16 %v1820
  %v4992 = vunpack.c.l.b16 %v1821
  %v4993 = vunpack.c.h.b16 %v1821
  %v4994 = vunpack.c.l.b16 %v1822
  %v4995 = vunpack.c.h.b16 %v1822
  %v4996 = vunpack.c.l.b16 %v1823
  %v4997 = vunpack.c.h.b16 %v1823
  %v4998 = vunpack.c.l.b16 %v1824
  %v4999 = vunpack.c.h.b16 %v1824
  %v5000 = vunpack.c.l.b16 %v1825
  %v5001 = vunpack.c.h.b16 %v1825
  %v5002 = vunpack.c.l.b16 %v1826
  %v5003 = vunpack.c.h.b16 %v1826
  %v5004 = vunpack.c.l.b16 %v1827
  %v5005 = vunpack.c.h.b16 %v1827
  %v5006 = vunpack.c.l.b16 %v1828
  %v5007 = vunpack.c.h.b16 %v1828
  %v5008 = vunpack.c.l.b16 %v1829
  %v5009 = vunpack.c.h.b16 %v1829
  %v5010 = vunpack.c.l.b16 %v1830
  %v5011 = vunpack.c.h.b16 %v1830
  %v5012 = vunpack.c.l.b16 %v1831
  %v5013 = vunpack.c.h.b16 %v1831
  %v5014 = vunpack.c.l.b16 %v1832
  %v5015 = vunpack.c.h.b16 %v1832
  %v5016 = vunpack.c.l.b16 %v1833
  %v5017 = vunpack.c.h.b16 %v1833
  %v5018 = vunpack.c.l.b16 %v1834
  %v5019 = vunpack.c.h.b16 %v1834
  %v5020 = vunpack.c.l.b16 %v1835
  %v5021 = vunpack.c.h.b16 %v1835
  %v5022 = vunpack.c.l.b16 %v1836
  %v5023 = vunpack.c.h.b16 %v1836
  %v5024 = vunpack.c.l.b16 %v1837
  %v5025 = vunpack.c.h.b16 %v1837
  %v5026 = vunpack.c.l.b16 %v1838
  %v5027 = vunpack.c.h.b16 %v1838
  %v5028 = vunpack.c.l.b16 %v1839
  %v5029 = vunpack.c.h.b16 %v1839
  %v5030 = vunpack.c.l.b16 %v1840
  %v5031 = vunpack.c.h.b16 %v1840
  %v5032 = vunpack.c.l.b16 %v1841
  %v5033 = vunpack.c.h.b16 %v1841
  %v5034 = vunpack.c.l.b16 %v1842
  %v5035 = vunpack.c.h.b16 %v1842
  %v5036 = vunpack.c.l.b16 %v1843
  %v5037 = vunpack.c.h.b16 %v1843
  %v5038 = vunpack.c.l.b16 %v1844
  %v5039 = vunpack.c.h.b16 %v1844
  %v5040 = vunpack.c.l.b16 %v1845
  %v5041 = vunpack.c.h.b16 %v1845
  %v5042 = vunpack.c.l.b16 %v1846
  %v5043 = vunpack.c.h.b16 %v1846
  %v5044 = vunpack.c.l.b16 %v1847
  %v5045 = vunpack.c.h.b16 %v1847
  %v5046 = vunpack.c.l.b16 %v1848
  %v5047 = vunpack.c.h.b16 %v1848
  %v5048 = vunpack.c.l.b16 %v1849
  %v5049 = vunpack.c.h.b16 %v1849
  %v5050 = vunpack.c.l.b16 %v1850
  %v5051 = vunpack.c.h.b16 %v1850
  %v5052 = vunpack.c.l.b16 %v1851
  %v5053 = vunpack.c.h.b16 %v1851
  %v5054 = vunpack.c.l.b16 %v1852
  %v5055 = vunpack.c.h.b16 %v1852
  %v5056 = vunpack.c.l.b16 %v1853
  %v5057 = vunpack.c.h.b16 %v1853
  %v5058 = vunpack.c.l.b16 %v1854
  %v5059 = vunpack.c.h.b16 %v1854
  %v5060 = vunpack.c.l.b16 %v1855
  %v5061 = vunpack.c.h.b16 %v1855
  %v5062 = vunpack.c.l.b16 %v1856
  %v5063 = vunpack.c.h.b16 %v1856
  %v5064 = vunpack.c.l.b16 %v1857
  %v5065 = vunpack.c.h.b16 %v1857
  %v5066 = vunpack.c.l.b16 %v1858
  %v5067 = vunpack.c.h.b16 %v1858
  %v5068 = vunpack.c.l.b16 %v1859
  %v5069 = vunpack.c.h.b16 %v1859
  %v5070 = vunpack.c.l.b16 %v1860
  %v5071 = vunpack.c.h.b16 %v1860
  %v5072 = vunpack.c.l.b16 %v1861
  %v5073 = vunpack.c.h.b16 %v1861
  %v5074 = vunpack.c.l.b16 %v1862
  %v5075 = vunpack.c.h.b16 %v1862
  %v5076 = vunpack.c.l.b16 %v1863
  %v5077 = vunpack.c.h.b16 %v1863
  %v5078 = vunpack.c.l.b16 %v1864
  %v5079 = vunpack.c.h.b16 %v1864
  %v5080 = vunpack.c.l.b16 %v1865
  %v5081 = vunpack.c.h.b16 %v1865
  %v5082 = vunpack.c.l.b16 %v1866
  %v5083 = vunpack.c.h.b16 %v1866
  %v5084 = vunpack.c.l.b16 %v1867
  %v5085 = vunpack.c.h.b16 %v1867
  %v5086 = vunpack.c.l.b16 %v1868
  %v5087 = vunpack.c.h.b16 %v1868
  %v5088 = vunpack.c.l.b16 %v1869
  %v5089 = vunpack.c.h.b16 %v1869
  %v5090 = vunpack.c.l.b16 %v1870
  %v5091 = vunpack.c.h.b16 %v1870
  %v5092 = vunpack.c.l.b16 %v1871
  %v5093 = vunpack.c.h.b16 %v1871
  %v5094 = vunpack.c.l.b16 %v1872
  %v5095 = vunpack.c.h.b16 %v1872
  %v5096 = vunpack.c.l.b16 %v1873
  %v5097 = vunpack.c.h.b16 %v1873
  %v5098 = vunpack.c.l.b16 %v1874
  %v5099 = vunpack.c.h.b16 %v1874
  %v5100 = vunpack.c.l.b16 %v1875
  %v5101 = vunpack.c.h.b16 %v1875
  %v5102 = vunpack.c.l.b16 %v1876
  %v5103 = vunpack.c.h.b16 %v1876
  %v5104 = vunpack.c.l.b16 %v1877
  %v5105 = vunpack.c.h.b16 %v1877
  %v5106 = vunpack.c.l.b16 %v1878
  %v5107 = vunpack.c.h.b16 %v1878
  %v5108 = vunpack.c.l.b16 %v1879
  %v5109 = vunpack.c.h.b16 %v1879
  %v5110 = vunpack.c.l.b16 %v1880
  %v5111 = vunpack.c.h.b16 %v1880
  %v5112 = vunpack.c.l.b16 %v1881
  %v5113 = vunpack.c.h.b16 %v1881
  %v5114 = vunpack.c.l.b16 %v1882
  %v5115 = vunpack.c.h.b16 %v1882
  %v5116 = vunpack.c.l.b16 %v1883
  %v5117 = vunpack.c.h.b16 %v1883
  %v5118 = vunpack.c.l.b16 %v1884
  %v5119 = vunpack.c.h.b16 %v1884
  %v5120 = vunpack.c.l.b16 %v1885
  %v5121 = vunpack.c.h.b16 %v1885
  %v5122 = vunpack.c.l.b16 %v1886
  %v5123 = vunpack.c.h.b16 %v1886
  %v5124 = vunpack.c.l.b16 %v1887
  %v5125 = vunpack.c.h.b16 %v1887
  %v5126 = vunpack.c.l.b16 %v1888
  %v5127 = vunpack.c.h.b16 %v1888
  %v5128 = vunpack.c.l.b16 %v1889
  %v5129 = vunpack.c.h.b16 %v1889
  %v5130 = vunpack.c.l.b16 %v1890
  %v5131 = vunpack.c.h.b16 %v1890
  %v5132 = vunpack.c.l.b16 %v1891
  %v5133 = vunpack.c.h.b16 %v1891
  %v5134 = vunpack.c.l.b16 %v1892
  %v5135 = vunpack.c.h.b16 %v1892
  %v5136 = vunpack.c.l.b16 %v1893
  %v5137 = vunpack.c.h.b16 %v1893
  %v5138 = vunpack.c.l.b16 %v1894
  %v5139 = vunpack.c.h.b16 %v1894
  %v5140 = vunpack.c.l.b16 %v1895
  %v5141 = vunpack.c.h.b16 %v1895
  %v5142 = vunpack.c.l.b16 %v1896
  %v5143 = vunpack.c.h.b16 %v1896
  %v5144 = vunpack.c.l.b16 %v1897
  %v5145 = vunpack.c.h.b16 %v1897
  %v5146 = vunpack.c.l.b16 %v1898
  %v5147 = vunpack.c.h.b16 %v1898
  %v5148 = vunpack.c.l.b16 %v1899
  %v5149 = vunpack.c.h.b16 %v1899
  %v5150 = vunpack.c.l.b16 %v1900
  %v5151 = vunpack.c.h.b16 %v1900
  %v5152 = vunpack.c.l.b16 %v1901
  %v5153 = vunpack.c.h.b16 %v1901
  %v5154 = vunpack.c.l.b16 %v1902
  %v5155 = vunpack.c.h.b16 %v1902
  %v5156 = vunpack.c.l.b16 %v1903
  %v5157 = vunpack.c.h.b16 %v1903
  %v5158 = vunpack.c.l.b16 %v1904
  %v5159 = vunpack.c.h.b16 %v1904
  %v5160 = vunpack.c.l.b16 %v1905
  %v5161 = vunpack.c.h.b16 %v1905
  %v5162 = vunpack.c.l.b16 %v1906
  %v5163 = vunpack.c.h.b16 %v1906
  %v5164 = vunpack.c.l.b16 %v1907
  %v5165 = vunpack.c.h.b16 %v1907
  %v5166 = vunpack.c.l.b16 %v1908
  %v5167 = vunpack.c.h.b16 %v1908
  %v5168 = vunpack.c.l.b16 %v1909
  %v5169 = vunpack.c.h.b16 %v1909
  %v5170 = vunpack.c.l.b16 %v1910
  %v5171 = vunpack.c.h.b16 %v1910
  %v5172 = vunpack.c.l.b16 %v1911
  %v5173 = vunpack.c.h.b16 %v1911
  %v5174 = vunpack.c.l.b16 %v1912
  %v5175 = vunpack.c.h.b16 %v1912
  %v5176 = vunpack.c.l.b16 %v1913
  %v5177 = vunpack.c.h.b16 %v1913
  %v5178 = vunpack.c.l.b16 %v1914
  %v5179 = vunpack.c.h.b16 %v1914
  %v5180 = vunpack.c.l.b16 %v1915
  %v5181 = vunpack.c.h.b16 %v1915
  %v5182 = vunpack.c.l.b16 %v1916
  %v5183 = vunpack.c.h.b16 %v1916
  %v5184 = vunpack.c.l.b16 %v1917
  %v5185 = vunpack.c.h.b16 %v1917
  %v5186 = vunpack.c.l.b16 %v1918
  %v5187 = vunpack.c.h.b16 %v1918
  %v5188 = vunpack.c.l.b16 %v1919
  %v5189 = vunpack.c.h.b16 %v1919
  %v5190 = vunpack.c.l.b16 %v1920
  %v5191 = vunpack.c.h.b16 %v1920
  %v5192 = vunpack.c.l.b16 %v1921
  %v5193 = vunpack.c.h.b16 %v1921
  %v5194 = vunpack.c.l.b16 %v1922
  %v5195 = vunpack.c.h.b16 %v1922
  %v5196 = vunpack.c.l.b16 %v1923
  %v5197 = vunpack.c.h.b16 %v1923
  %v5198 = vunpack.c.l.b16 %v1924
  %v5199 = vunpack.c.h.b16 %v1924
  %v5200 = vunpack.c.l.b16 %v1925
  %v5201 = vunpack.c.h.b16 %v1925
  %v5202 = vunpack.c.l.b16 %v1926
  %v5203 = vunpack.c.h.b16 %v1926
  %v5204 = vunpack.c.l.b16 %v1927
  %v5205 = vunpack.c.h.b16 %v1927
  %v5206 = vunpack.c.l.b16 %v1928
  %v5207 = vunpack.c.h.b16 %v1928
  %v5208 = vunpack.c.l.b16 %v1929
  %v5209 = vunpack.c.h.b16 %v1929
  %v5210 = vunpack.c.l.b16 %v1930
  %v5211 = vunpack.c.h.b16 %v1930
  %v5212 = vunpack.c.l.b16 %v1931
  %v5213 = vunpack.c.h.b16 %v1931
  %v5214 = vunpack.c.l.b16 %v1932
  %v5215 = vunpack.c.h.b16 %v1932
  %v5216 = vunpack.c.l.b16 %v1933
  %v5217 = vunpack.c.h.b16 %v1933
  %v5218 = vunpack.c.l.b16 %v1934
  %v5219 = vunpack.c.h.b16 %v1934
  %v5220 = vunpack.c.l.b16 %v1935
  %v5221 = vunpack.c.h.b16 %v1935
  %v5222 = vunpack.c.l.b16 %v1936
  %v5223 = vunpack.c.h.b16 %v1936
  %v5224 = vunpack.c.l.b16 %v1937
  %v5225 = vunpack.c.h.b16 %v1937
  %v5226 = vunpack.c.l.b16 %v1938
  %v5227 = vunpack.c.h.b16 %v1938
  %v5228 = vunpack.c.l.b16 %v1939
  %v5229 = vunpack.c.h.b16 %v1939
  %v5230 = vunpack.c.l.b16 %v1940
  %v5231 = vunpack.c.h.b16 %v1940
  %v5232 = vunpack.c.l.b16 %v1941
  %v5233 = vunpack.c.h.b16 %v1941
  %v5234 = vunpack.c.l.b16 %v1942
  %v5235 = vunpack.c.h.b16 %v1942
  %v5236 = vunpack.c.l.b16 %v1943
  %v5237 = vunpack.c.h.b16 %v1943
  %v5238 = vunpack.c.l.b16 %v1944
  %v5239 = vunpack.c.h.b16 %v1944
  %v5240 = vunpack.c.l.b16 %v1945
  %v5241 = vunpack.c.h.b16 %v1945
  %v5242 = vunpack.c.l.b16 %v1946
  %v5243 = vunpack.c.h.b16 %v1946
  %v5244 = vunpack.c.l.b16 %v1947
  %v5245 = vunpack.c.h.b16 %v1947
  %v5246 = vunpack.c.l.b16 %v1948
  %v5247 = vunpack.c.h.b16 %v1948
  %v5248 = vunpack.c.l.b16 %v1949
  %v5249 = vunpack.c.h.b16 %v1949
  %v5250 = vunpack.c.l.b16 %v1950
  %v5251 = vunpack.c.h.b16 %v1950
  %v5252 = vunpack.c.l.b16 %v1951
  %v5253 = vunpack.c.h.b16 %v1951
  %v5254 = vunpack.c.l.b16 %v1952
  %v5255 = vunpack.c.h.b16 %v1952
  %v5256 = vunpack.c.l.b16 %v1953
  %v5257 = vunpack.c.h.b16 %v1953
  %v5258 = vunpack.c.l.b16 %v1954
  %v5259 = vunpack.c.h.b16 %v1954
  %v5260 = vunpack.c.l.b16 %v1955
  %v5261 = vunpack.c.h.b16 %v1955
  %v5262 = vunpack.c.l.b16 %v1956
  %v5263 = vunpack.c.h.b16 %v1956
  %v5264 = vunpack.c.l.b16 %v1957
  %v5265 = vunpack.c.h.b16 %v1957
  %v5266 = vpack.c.b16 %v3220, %v3218
  %v5267 = vpack.c.b16 %v3221, %v3219
  %v5268 = vpack.c.b16 %v3224, %v3222
  %v5269 = vpack.c.b16 %v3225, %v3223
  %v5270 = vpack.c.b16 %v3228, %v3226
  %v5271 = vpack.c.b16 %v3229, %v3227
  %v5272 = vpack.c.b16 %v3232, %v3230
  %v5273 = vpack.c.b16 %v3233, %v3231
  %v5274 = vpack.c.b16 %v3236, %v3234
  %v5275 = vpack.c.b16 %v3237, %v3235
  %v5276 = vpack.c.b16 %v3240, %v3238
  %v5277 = vpack.c.b16 %v3241, %v3239
  %v5278 = vpack.c.b16 %v3244, %v3242
  %v5279 = vpack.c.b16 %v3245, %v3243
  %v5280 = vpack.c.b16 %v3248, %v3246
  %v5281 = vpack.c.b16 %v3249, %v3247
  %v5282 = vpack.c.b16 %v3252, %v3250
  %v5283 = vpack.c.b16 %v3253, %v3251
  %v5284 = vpack.c.b16 %v3256, %v3254
  %v5285 = vpack.c.b16 %v3257, %v3255
  %v5286 = vpack.c.b16 %v3260, %v3258
  %v5287 = vpack.c.b16 %v3261, %v3259
  %v5288 = vpack.c.b16 %v3264, %v3262
  %v5289 = vpack.c.b16 %v3265, %v3263
  %v5290 = vpack.c.b16 %v3268, %v3266
  %v5291 = vpack.c.b16 %v3269, %v3267
  %v5292 = vpack.c.b16 %v3272, %v3270
  %v5293 = vpack.c.b16 %v3273, %v3271
  %v5294 = vpack.c.b16 %v3276, %v3274
  %v5295 = vpack.c.b16 %v3277, %v3275
  %v5296 = vpack.c.b16 %v3280, %v3278
  %v5297 = vpack.c.b16 %v3281, %v3279
  %v5298 = vpack.c.b16 %v3284, %v3282
  %v5299 = vpack.c.b16 %v3285, %v3283
  %v5300 = vpack.c.b16 %v3288, %v3286
  %v5301 = vpack.c.b16 %v3289, %v3287
  %v5302 = vpack.c.b16 %v3292, %v3290
  %v5303 = vpack.c.b16 %v3293, %v3291
  %v5304 = vpack.c.b16 %v3296, %v3294
  %v5305 = vpack.c.b16 %v3297, %v3295
  %v5306 = vpack.c.b16 %v3300, %v3298
  %v5307 = vpack.c.b16 %v3301, %v3299
  %v5308 = vpack.c.b16 %v3304, %v3302
  %v5309 = vpack.c.b16 %v3305, %v3303
  %v5310 = vpack.c.b16 %v3308, %v3306
  %v5311 = vpack.c.b16 %v3309, %v3307
  %v5312 = vpack.c.b16 %v3312, %v3310
  %v5313 = vpack.c.b16 %v3313, %v3311
  %v5314 = vpack.c.b16 %v3316, %v3314
  %v5315 = vpack.c.b16 %v3317, %v3315
  %v5316 = vpack.c.b16 %v3320, %v3318
  %v5317 = vpack.c.b16 %v3321, %v3319
  %v5318 = vpack.c.b16 %v3324, %v3322
  %v5319 = vpack.c.b16 %v3325, %v3323
  %v5320 = vpack.c.b16 %v3328, %v3326
  %v5321 = vpack.c.b16 %v3329, %v3327
  %v5322 = vpack.c.b16 %v3332, %v3330
  %v5323 = vpack.c.b16 %v3333, %v3331
  %v5324 = vpack.c.b16 %v3336, %v3334
  %v5325 = vpack.c.b16 %v3337, %v3335
  %v5326 = vpack.c.b16 %v3340, %v3338
  %v5327 = vpack.c.b16 %v3341, %v3339
  %v5328 = vpack.c.b16 %v3344, %v3342
  %v5329 = vpack.c.b16 %v3345, %v3343
  %v5330 = vpack.c.b16 %v3348, %v3346
  %v5331 = vpack.c.b16 %v3349, %v3347
  %v5332 = vpack.c.b16 %v3352, %v3350
  %v5333 = vpack.c.b16 %v3353, %v3351
  %v5334 = vpack.c.b16 %v3356, %v3354
  %v5335 = vpack.c.b16 %v3357, %v3355
  %v5336 = vpack.c.b16 %v3360, %v3358
  %v5337 = vpack.c.b16 %v3361, %v3359
  %v5338 = vpack.c.b16 %v3364, %v3362
  %v5339 = vpack.c.b16 %v3365, %v3363
  %v5340 = vpack.c.b16 %v3368, %v3366
  %v5341 = vpack.c.b16 %v3369, %v3367
  %v5342 = vpack.c.b16 %v3372, %v3370
  %v5343 = vpack.c.b16 %v3373, %v3371
  %v5344 = vpack.c.b16 %v3376, %v3374
  %v5345 = vpack.c.b16 %v3377, %v3375
  %v5346 = vpack.c.b16 %v3380, %v3378
  %v5347 = vpack.c.b16 %v3381, %v3379
  %v5348 = vpack.c.b16 %v3384, %v3382
  %v5349 = vpack.c.b16 %v3385, %v3383
  %v5350 = vpack.c.b16 %v3388, %v3386
  %v5351 = vpack.c.b16 %v3389, %v3387
  %v5352 = vpack.c.b16 %v3392, %v3390
  %v5353 = vpack.c.b16 %v3393, %v3391
  %v5354 = vpack.c.b16 %v3396, %v3394
  %v5355 = vpack.c.b16 %v3397, %v3395
  %v5356 = vpack.c.b16 %v3400, %v3398
  %v5357 = vpack.c.b16 %v3401, %v3399
  %v5358 = vpack.c.b16 %v3404, %v3402
  %v5359 = vpack.c.b16 %v3405, %v3403
  %v5360 = vpack.c.b16 %v3408, %v3406
  %v5361 = vpack.c.b16 %v3409, %v3407
  %v5362 = vpack.c.b16 %v3412, %v3410
  %v5363 = vpack.c.b16 %v3413, %v3411
  %v5364 = vpack.c.b16 %v3416, %v3414
  %v5365 = vpack.c.b16 %v3417, %v3415
  %v5366 = vpack.c.b16 %v3420, %v3418
  %v5367 = vpack.c.b16 %v3421, %v3419
  %v5368 = vpack.c.b16 %v3424, %v3422
  %v5369 = vpack.c.b16 %v3425, %v3423
  %v5370 = vpack.c.b16 %v3428, %v3426
  %v5371 = vpack.c.b16 %v3429, %v3427
  %v5372 = vpack.c.b16 %v3432, %v3430
  %v5373 = vpack.c.b16 %v3433, %v3431
  %v5374 = vpack.c.b16 %v3436, %v3434
  %v5375 = vpack.c.b16 %v3437, %v3435
  %v5376 = vpack.c.b16 %v3440, %v3438
  %v5377 = vpack.c.b16 %v3441, %v3439
  %v5378 = vpack.c.b16 %v3444, %v3442
  %v5379 = vpack.c.b16 %v3445, %v3443
  %v5380 = vpack.c.b16 %v3448, %v3446
  %v5381 = vpack.c.b16 %v3449, %v3447
  %v5382 = vpack.c.b16 %v3452, %v3450
  %v5383 = vpack.c.b16 %v3453, %v3451
  %v5384 = vpack.c.b16 %v3456, %v3454
  %v5385 = vpack.c.b16 %v3457, %v3455
  %v5386 = vpack.c.b16 %v3460, %v3458
  %v5387 = vpack.c.b16 %v3461, %v3459
  %v5388 = vpack.c.b16 %v3464, %v3462
  %v5389 = vpack.c.b16 %v3465, %v3463
  %v5390 = vpack.c.b16 %v3468, %v3466
  %v5391 = vpack.c.b16 %v3469, %v3467
  %v5392 = vpack.c.b16 %v3472, %v3470
  %v5393 = vpack.c.b16 %v3473, %v3471
  %v5394 = vpack.c.b16 %v3476, %v3474
  %v5395 = vpack.c.b16 %v3477, %v3475
  %v5396 = vpack.c.b16 %v3480, %v3478
  %v5397 = vpack.c.b16 %v3481, %v3479
  %v5398 = vpack.c.b16 %v3484, %v3482
  %v5399 = vpack.c.b16 %v3485, %v3483
  %v5400 = vpack.c.b16 %v3488, %v3486
  %v5401 = vpack.c.b16 %v3489, %v3487
  %v5402 = vpack.c.b16 %v3492, %v3490
  %v5403 = vpack.c.b16 %v3493, %v3491
  %v5404 = vpack.c.b16 %v3496, %v3494
  %v5405 = vpack.c.b16 %v3497, %v3495
  %v5406 = vpack.c.b16 %v3500, %v3498
  %v5407 = vpack.c.b16 %v3501, %v3499
  %v5408 = vpack.c.b16 %v3504, %v3502
  %v5409 = vpack.c.b16 %v3505, %v3503
  %v5410 = vpack.c.b16 %v3508, %v3506
  %v5411 = vpack.c.b16 %v3509, %v3507
  %v5412 = vpack.c.b16 %v3512, %v3510
  %v5413 = vpack.c.b16 %v3513, %v3511
  %v5414 = vpack.c.b16 %v3516, %v3514
  %v5415 = vpack.c.b16 %v3517, %v3515
  %v5416 = vpack.c.b16 %v3520, %v3518
  %v5417 = vpack.c.b16 %v3521, %v3519
  %v5418 = vpack.c.b16 %v3524, %v3522
  %v5419 = vpack.c.b16 %v3525, %v3523
  %v5420 = vpack.c.b16 %v3528, %v3526
  %v5421 = vpack.c.b16 %v3529, %v3527
  %v5422 = vpack.c.b16 %v3532, %v3530
  %v5423 = vpack.c.b16 %v3533, %v3531
  %v5424 = vpack.c.b16 %v3536, %v3534
  %v5425 = vpack.c.b16 %v3537, %v3535
  %v5426 = vpack.c.b16 %v3540, %v3538
  %v5427 = vpack.c.b16 %v3541, %v3539
  %v5428 = vpack.c.b16 %v3544, %v3542
  %v5429 = vpack.c.b16 %v3545, %v3543
  %v5430 = vpack.c.b16 %v3548, %v3546
  %v5431 = vpack.c.b16 %v3549, %v3547
  %v5432 = vpack.c.b16 %v3552, %v3550
  %v5433 = vpack.c.b16 %v3553, %v3551
  %v5434 = vpack.c.b16 %v3556, %v3554
  %v5435 = vpack.c.b16 %v3557, %v3555
  %v5436 = vpack.c.b16 %v3560, %v3558
  %v5437 = vpack.c.b16 %v3561, %v3559
  %v5438 = vpack.c.b16 %v3564, %v3562
  %v5439 = vpack.c.b16 %v3565, %v3563
  %v5440 = vpack.c.b16 %v3568, %v3566
  %v5441 = vpack.c.b16 %v3569, %v3567
  %v5442 = vpack.c.b16 %v3572, %v3570
  %v5443 = vpack.c.b16 %v3573, %v3571
  %v5444 = vpack.c.b16 %v3576, %v3574
  %v5445 = vpack.c.b16 %v3577, %v3575
  %v5446 = vpack.c.b16 %v3580, %v3578
  %v5447 = vpack.c.b16 %v3581, %v3579
  %v5448 = vpack.c.b16 %v3584, %v3582
  %v5449 = vpack.c.b16 %v3585, %v3583
  %v5450 = vpack.c.b16 %v3588, %v3586
  %v5451 = vpack.c.b16 %v3589, %v3587
  %v5452 = vpack.c.b16 %v3592, %v3590
  %v5453 = vpack.c.b16 %v3593, %v3591
  %v5454 = vpack.c.b16 %v3596, %v3594
  %v5455 = vpack.c.b16 %v3597, %v3595
  %v5456 = vpack.c.b16 %v3600, %v3598
  %v5457 = vpack.c.b16 %v3601, %v3599
  %v5458 = vpack.c.b16 %v3604, %v3602
  %v5459 = vpack.c.b16 %v3605, %v3603
  %v5460 = vpack.c.b16 %v3608, %v3606
  %v5461 = vpack.c.b16 %v3609, %v3607
  %v5462 = vpack.c.b16 %v3612, %v3610
  %v5463 = vpack.c.b16 %v3613, %v3611
  %v5464 = vpack.c.b16 %v3616, %v3614
  %v5465 = vpack.c.b16 %v3617, %v3615
  %v5466 = vpack.c.b16 %v3620, %v3618
  %v5467 = vpack.c.b16 %v3621, %v3619
  %v5468 = vpack.c.b16 %v3624, %v3622
  %v5469 = vpack.c.b16 %v3625, %v3623
  %v5470 = vpack.c.b16 %v3628, %v3626
  %v5471 = vpack.c.b16 %v3629, %v3627
  %v5472 = vpack.c.b16 %v3632, %v3630
  %v5473 = vpack.c.b16 %v3633, %v3631
  %v5474 = vpack.c.b16 %v3636, %v3634
  %v5475 = vpack.c.b16 %v3637, %v3635
  %v5476 = vpack.c.b16 %v3640, %v3638
  %v5477 = vpack.c.b16 %v3641, %v3639
  %v5478 = vpack.c.b16 %v3644, %v3642
  %v5479 = vpack.c.b16 %v3645, %v3643
  %v5480 = vpack.c.b16 %v3648, %v3646
  %v5481 = vpack.c.b16 %v3649, %v3647
  %v5482 = vpack.c.b16 %v3652, %v3650
  %v5483 = vpack.c.b16 %v3653, %v3651
  %v5484 = vpack.c.b16 %v3656, %v3654
  %v5485 = vpack.c.b16 %v3657, %v3655
  %v5486 = vpack.c.b16 %v3660, %v3658
  %v5487 = vpack.c.b16 %v3661, %v3659
  %v5488 = vpack.c.b16 %v3664, %v3662
  %v5489 = vpack.c.b16 %v3665, %v3663
  %v5490 = vpack.c.b16 %v3668, %v3666
  %v5491 = vpack.c.b16 %v3669, %v3667
  %v5492 = vpack.c.b16 %v3672, %v3670
  %v5493 = vpack.c.b16 %v3673, %v3671
  %v5494 = vpack.c.b16 %v3676, %v3674
  %v5495 = vpack.c.b16 %v3677, %v3675
  %v5496 = vpack.c.b16 %v3680, %v3678
  %v5497 = vpack.c.b16 %v3681, %v3679
  %v5498 = vpack.c.b16 %v3684, %v3682
  %v5499 = vpack.c.b16 %v3685, %v3683
  %v5500 = vpack.c.b16 %v3688, %v3686
  %v5501 = vpack.c.b16 %v3689, %v3687
  %v5502 = vpack.c.b16 %v3692, %v3690
  %v5503 = vpack.c.b16 %v3693, %v3691
  %v5504 = vpack.c.b16 %v3696, %v3694
  %v5505 = vpack.c.b16 %v3697, %v3695
  %v5506 = vpack.c.b16 %v3700, %v3698
  %v5507 = vpack.c.b16 %v3701, %v3699
  %v5508 = vpack.c.b16 %v3704, %v3702
  %v5509 = vpack.c.b16 %v3705, %v3703
  %v5510 = vpack.c.b16 %v3708, %v3706
  %v5511 = vpack.c.b16 %v3709, %v3707
  %v5512 = vpack.c.b16 %v3712, %v3710
  %v5513 = vpack.c.b16 %v3713, %v3711
  %v5514 = vpack.c.b16 %v3716, %v3714
  %v5515 = vpack.c.b16 %v3717, %v3715
  %v5516 = vpack.c.b16 %v3720, %v3718
  %v5517 = vpack.c.b16 %v3721, %v3719
  %v5518 = vpack.c.b16 %v3724, %v3722
  %v5519 = vpack.c.b16 %v3725, %v3723
  %v5520 = vpack.c.b16 %v3728, %v3726
  %v5521 = vpack.c.b16 %v3729, %v3727
  %v5522 = vpack.c.b16 %v3732, %v3730
  %v5523 = vpack.c.b16 %v3733, %v3731
  %v5524 = vpack.c.b16 %v3736, %v3734
  %v5525 = vpack.c.b16 %v3737, %v3735
  %v5526 = vpack.c.b16 %v3740, %v3738
  %v5527 = vpack.c.b16 %v3741, %v3739
  %v5528 = vpack.c.b16 %v3744, %v3742
  %v5529 = vpack.c.b16 %v3745, %v3743
  %v5530 = vpack.c.b16 %v3748, %v3746
  %v5531 = vpack.c.b16 %v3749, %v3747
  %v5532 = vpack.c.b16 %v3752, %v3750
  %v5533 = vpack.c.b16 %v3753, %v3751
  %v5534 = vpack.c.b16 %v3756, %v3754
  %v5535 = vpack.c.b16 %v3757, %v3755
  %v5536 = vpack.c.b16 %v3760, %v3758
  %v5537 = vpack.c.b16 %v3761, %v3759
  %v5538 = vpack.c.b16 %v3764, %v3762
  %v5539 = vpack.c.b16 %v3765, %v3763
  %v5540 = vpack.c.b16 %v3768, %v3766
  %v5541 = vpack.c.b16 %v3769, %v3767
  %v5542 = vpack.c.b16 %v3772, %v3770
  %v5543 = vpack.c.b16 %v3773, %v3771
  %v5544 = vpack.c.b16 %v3776, %v3774
  %v5545 = vpack.c.b16 %v3777, %v3775
  %v5546 = vpack.c.b16 %v3780, %v3778
  %v5547 = vpack.c.b16 %v3781, %v3779
  %v5548 = vpack.c.b16 %v3784, %v3782
  %v5549 = vpack.c.b16 %v3785, %v3783
  %v5550 = vpack.c.b16 %v3788, %v3786
  %v5551 = vpack.c.b16 %v3789, %v3787
  %v5552 = vpack.c.b16 %v3792, %v3790
  %v5553 = vpack.c.b16 %v3793, %v3791
  %v5554 = vpack.c.b16 %v3796, %v3794
  %v5555 = vpack.c.b16 %v3797, %v3795
  %v5556 = vpack.c.b16 %v3800, %v3798
  %v5557 = vpack.c.b16 %v3801, %v3799
  %v5558 = vpack.c.b16 %v3804, %v3802
  %v5559 = vpack.c.b16 %v3805, %v3803
  %v5560 = vpack.c.b16 %v3808, %v3806
  %v5561 = vpack.c.b16 %v3809, %v3807
  %v5562 = vpack.c.b16 %v3812, %v3810
  %v5563 = vpack.c.b16 %v3813, %v3811
  %v5564 = vpack.c.b16 %v3816, %v3814
  %v5565 = vpack.c.b16 %v3817, %v3815
  %v5566 = vpack.c.b16 %v3820, %v3818
  %v5567 = vpack.c.b16 %v3821, %v3819
  %v5568 = vpack.c.b16 %v3824, %v3822
  %v5569 = vpack.c.b16 %v3825, %v3823
  %v5570 = vpack.c.b16 %v3828, %v3826
  %v5571 = vpack.c.b16 %v3829, %v3827
  %v5572 = vpack.c.b16 %v3832, %v3830
  %v5573 = vpack.c.b16 %v3833, %v3831
  %v5574 = vpack.c.b16 %v3836, %v3834
  %v5575 = vpack.c.b16 %v3837, %v3835
  %v5576 = vpack.c.b16 %v3840, %v3838
  %v5577 = vpack.c.b16 %v3841, %v3839
  %v5578 = vpack.c.b16 %v3844, %v3842
  %v5579 = vpack.c.b16 %v3845, %v3843
  %v5580 = vpack.c.b16 %v3848, %v3846
  %v5581 = vpack.c.b16 %v3849, %v3847
  %v5582 = vpack.c.b16 %v3852, %v3850
  %v5583 = vpack.c.b16 %v3853, %v3851
  %v5584 = vpack.c.b16 %v3856, %v3854
  %v5585 = vpack.c.b16 %v3857, %v3855
  %v5586 = vpack.c.b16 %v3860, %v3858
  %v5587 = vpack.c.b16 %v3861, %v3859
  %v5588 = vpack.c.b16 %v3864, %v3862
  %v5589 = vpack.c.b16 %v3865, %v3863
  %v5590 = vpack.c.b16 %v3868, %v3866
  %v5591 = vpack.c.b16 %v3869, %v3867
  %v5592 = vpack.c.b16 %v3872, %v3870
  %v5593 = vpack.c.b16 %v3873, %v3871
  %v5594 = vpack.c.b16 %v3876, %v3874
  %v5595 = vpack.c.b16 %v3877, %v3875
  %v5596 = vpack.c.b16 %v3880, %v3878
  %v5597 = vpack.c.b16 %v3881, %v3879
  %v5598 = vpack.c.b16 %v3884, %v3882
  %v5599 = vpack.c.b16 %v3885, %v3883
  %v5600 = vpack.c.b16 %v3888, %v3886
  %v5601 = vpack.c.b16 %v3889, %v3887
  %v5602 = vpack.c.b16 %v3892, %v3890
  %v5603 = vpack.c.b16 %v3893, %v3891
  %v5604 = vpack.c.b16 %v3896, %v3894
  %v5605 = vpack.c.b16 %v3897, %v3895
  %v5606 = vpack.c.b16 %v3900, %v3898
  %v5607 = vpack.c.b16 %v3901, %v3899
  %v5608 = vpack.c.b16 %v3904, %v3902
  %v5609 = vpack.c.b16 %v3905, %v3903
  %v5610 = vpack.c.b16 %v3908, %v3906
  %v5611 = vpack.c.b16 %v3909, %v3907
  %v5612 = vpack.c.b16 %v3912, %v3910
  %v5613 = vpack.c.b16 %v3913, %v3911
  %v5614 = vpack.c.b16 %v3916, %v3914
  %v5615 = vpack.c.b16 %v3917, %v3915
  %v5616 = vpack.c.b16 %v3920, %v3918
  %v5617 = vpack.c.b16 %v3921, %v3919
  %v5618 = vpack.c.b16 %v3924, %v3922
  %v5619 = vpack.c.b16 %v3925, %v3923
  %v5620 = vpack.c.b16 %v3928, %v3926
  %v5621 = vpack.c.b16 %v3929, %v3927
  %v5622 = vpack.c.b16 %v3932, %v3930
  %v5623 = vpack.c.b16 %v3933, %v3931
  %v5624 = vpack.c.b16 %v3936, %v3934
  %v5625 = vpack.c.b16 %v3937, %v3935
  %v5626 = vpack.c.b16 %v3940, %v3938
  %v5627 = vpack.c.b16 %v3941, %v3939
  %v5628 = vpack.c.b16 %v3944, %v3942
  %v5629 = vpack.c.b16 %v3945, %v3943
  %v5630 = vpack.c.b16 %v3948, %v3946
  %v5631 = vpack.c.b16 %v3949, %v3947
  %v5632 = vpack.c.b16 %v3952, %v3950
  %v5633 = vpack.c.b16 %v3953, %v3951
  %v5634 = vpack.c.b16 %v3956, %v3954
  %v5635 = vpack.c.b16 %v3957, %v3955
  %v5636 = vpack.c.b16 %v3960, %v3958
  %v5637 = vpack.c.b16 %v3961, %v3959
  %v5638 = vpack.c.b16 %v3964, %v3962
  %v5639 = vpack.c.b16 %v3965, %v3963
  %v5640 = vpack.c.b16 %v3968, %v3966
  %v5641 = vpack.c.b16 %v3969, %v3967
  %v5642 = vpack.c.b16 %v3972, %v3970
  %v5643 = vpack.c.b16 %v3973, %v3971
  %v5644 = vpack.c.b16 %v3976, %v3974
  %v5645 = vpack.c.b16 %v3977, %v3975
  %v5646 = vpack.c.b16 %v3980, %v3978
  %v5647 = vpack.c.b16 %v3981, %v3979
  %v5648 = vpack.c.b16 %v3984, %v3982
  %v5649 = vpack.c.b16 %v3985, %v3983
  %v5650 = vpack.c.b16 %v3988, %v3986
  %v5651 = vpack.c.b16 %v3989, %v3987
  %v5652 = vpack.c.b16 %v3992, %v3990
  %v5653 = vpack.c.b16 %v3993, %v3991
  %v5654 = vpack.c.b16 %v3996, %v3994
  %v5655 = vpack.c.b16 %v3997, %v3995
  %v5656 = vpack.c.b16 %v4000, %v3998
  %v5657 = vpack.c.b16 %v4001, %v3999
  %v5658 = vpack.c.b16 %v4004, %v4002
  %v5659 = vpack.c.b16 %v4005, %v4003
  %v5660 = vpack.c.b16 %v4008, %v4006
  %v5661 = vpack.c.b16 %v4009, %v4007
  %v5662 = vpack.c.b16 %v4012, %v4010
  %v5663 = vpack.c.b16 %v4013, %v4011
  %v5664 = vpack.c.b16 %v4016, %v4014
  %v5665 = vpack.c.b16 %v4017, %v4015
  %v5666 = vpack.c.b16 %v4020, %v4018
  %v5667 = vpack.c.b16 %v4021, %v4019
  %v5668 = vpack.c.b16 %v4024, %v4022
  %v5669 = vpack.c.b16 %v4025, %v4023
  %v5670 = vpack.c.b16 %v4028, %v4026
  %v5671 = vpack.c.b16 %v4029, %v4027
  %v5672 = vpack.c.b16 %v4032, %v4030
  %v5673 = vpack.c.b16 %v4033, %v4031
  %v5674 = vpack.c.b16 %v4036, %v4034
  %v5675 = vpack.c.b16 %v4037, %v4035
  %v5676 = vpack.c.b16 %v4040, %v4038
  %v5677 = vpack.c.b16 %v4041, %v4039
  %v5678 = vpack.c.b16 %v4044, %v4042
  %v5679 = vpack.c.b16 %v4045, %v4043
  %v5680 = vpack.c.b16 %v4048, %v4046
  %v5681 = vpack.c.b16 %v4049, %v4047
  %v5682 = vpack.c.b16 %v4052, %v4050
  %v5683 = vpack.c.b16 %v4053, %v4051
  %v5684 = vpack.c.b16 %v4056, %v4054
  %v5685 = vpack.c.b16 %v4057, %v4055
  %v5686 = vpack.c.b16 %v4060, %v4058
  %v5687 = vpack.c.b16 %v4061, %v4059
  %v5688 = vpack.c.b16 %v4064, %v4062
  %v5689 = vpack.c.b16 %v4065, %v4063
  %v5690 = vpack.c.b16 %v4068, %v4066
  %v5691 = vpack.c.b16 %v4069, %v4067
  %v5692 = vpack.c.b16 %v4072, %v4070
  %v5693 = vpack.c.b16 %v4073, %v4071
  %v5694 = vpack.c.b16 %v4076, %v4074
  %v5695 = vpack.c.b16 %v4077, %v4075
  %v5696 = vpack.c.b16 %v4080, %v4078
  %v5697 = vpack.c.b16 %v4081, %v4079
  %v5698 = vpack.c.b16 %v4084, %v4082
  %v5699 = vpack.c.b16 %v4085, %v4083
  %v5700 = vpack.c.b16 %v4088, %v4086
  %v5701 = vpack.c.b16 %v4089, %v4087
  %v5702 = vpack.c.b16 %v4092, %v4090
  %v5703 = vpack.c.b16 %v4093, %v4091
  %v5704 = vpack.c.b16 %v4096, %v4094
  %v5705 = vpack.c.b16 %v4097, %v4095
  %v5706 = vpack.c.b16 %v4100, %v4098
  %v5707 = vpack.c.b16 %v4101, %v4099
  %v5708 = vpack.c.b16 %v4104, %v4102
  %v5709 = vpack.c.b16 %v4105, %v4103
  %v5710 = vpack.c.b16 %v4108, %v4106
  %v5711 = vpack.c.b16 %v4109, %v4107
  %v5712 = vpack.c.b16 %v4112, %v4110
  %v5713 = vpack.c.b16 %v4113, %v4111
  %v5714 = vpack.c.b16 %v4116, %v4114
  %v5715 = vpack.c.b16 %v4117, %v4115
  %v5716 = vpack.c.b16 %v4120, %v4118
  %v5717 = vpack.c.b16 %v4121, %v4119
  %v5718 = vpack.c.b16 %v4124, %v4122
  %v5719 = vpack.c.b16 %v4125, %v4123
  %v5720 = vpack.c.b16 %v4128, %v4126
  %v5721 = vpack.c.b16 %v4129, %v4127
  %v5722 = vpack.c.b16 %v4132, %v4130
  %v5723 = vpack.c.b16 %v4133, %v4131
  %v5724 = vpack.c.b16 %v4136, %v4134
  %v5725 = vpack.c.b16 %v4137, %v4135
  %v5726 = vpack.c.b16 %v4140, %v4138
  %v5727 = vpack.c.b16 %v4141, %v4139
  %v5728 = vpack.c.b16 %v4144, %v4142
  %v5729 = vpack.c.b16 %v4145, %v4143
  %v5730 = vpack.c.b16 %v4148, %v4146
  %v5731 = vpack.c.b16 %v4149, %v4147
  %v5732 = vpack.c.b16 %v4152, %v4150
  %v5733 = vpack.c.b16 %v4153, %v4151
  %v5734 = vpack.c.b16 %v4156, %v4154
  %v5735 = vpack.c.b16 %v4157, %v4155
  %v5736 = vpack.c.b16 %v4160, %v4158
  %v5737 = vpack.c.b16 %v4161, %v4159
  %v5738 = vpack.c.b16 %v4164, %v4162
  %v5739 = vpack.c.b16 %v4165, %v4163
  %v5740 = vpack.c.b16 %v4168, %v4166
  %v5741 = vpack.c.b16 %v4169, %v4167
  %v5742 = vpack.c.b16 %v4172, %v4170
  %v5743 = vpack.c.b16 %v4173, %v4171
  %v5744 = vpack.c.b16 %v4176, %v4174
  %v5745 = vpack.c.b16 %v4177, %v4175
  %v5746 = vpack.c.b16 %v4180, %v4178
  %v5747 = vpack.c.b16 %v4181, %v4179
  %v5748 = vpack.c.b16 %v4184, %v4182
  %v5749 = vpack.c.b16 %v4185, %v4183
  %v5750 = vpack.c.b16 %v4188, %v4186
  %v5751 = vpack.c.b16 %v4189, %v4187
  %v5752 = vpack.c.b16 %v4192, %v4190
  %v5753 = vpack.c.b16 %v4193, %v4191
  %v5754 = vpack.c.b16 %v4196, %v4194
  %v5755 = vpack.c.b16 %v4197, %v4195
  %v5756 = vpack.c.b16 %v4200, %v4198
  %v5757 = vpack.c.b16 %v4201, %v4199
  %v5758 = vpack.c.b16 %v4204, %v4202
  %v5759 = vpack.c.b16 %v4205, %v4203
  %v5760 = vpack.c.b16 %v4208, %v4206
  %v5761 = vpack.c.b16 %v4209, %v4207
  %v5762 = vpack.c.b16 %v4212, %v4210
  %v5763 = vpack.c.b16 %v4213, %v4211
  %v5764 = vpack.c.b16 %v4216, %v4214
  %v5765 = vpack.c.b16 %v4217, %v4215
  %v5766 = vpack.c.b16 %v4220, %v4218
  %v5767 = vpack.c.b16 %v4221, %v4219
  %v5768 = vpack.c.b16 %v4224, %v4222
  %v5769 = vpack.c.b16 %v4225, %v4223
  %v5770 = vpack.c.b16 %v4228, %v4226
  %v5771 = vpack.c.b16 %v4229, %v4227
  %v5772 = vpack.c.b16 %v4232, %v4230
  %v5773 = vpack.c.b16 %v4233, %v4231
  %v5774 = vpack.c.b16 %v4236, %v4234
  %v5775 = vpack.c.b16 %v4237, %v4235
  %v5776 = vpack.c.b16 %v4240, %v4238
  %v5777 = vpack.c.b16 %v4241, %v4239
  %v5778 = vpack.c.b16 %v4244, %v4242
  %v5779 = vpack.c.b16 %v4245, %v4243
  %v5780 = vpack.c.b16 %v4248, %v4246
  %v5781 = vpack.c.b16 %v4249, %v4247
  %v5782 = vpack.c.b16 %v4252, %v4250
  %v5783 = vpack.c.b16 %v4253, %v4251
  %v5784 = vpack.c.b16 %v4256, %v4254
  %v5785 = vpack.c.b16 %v4257, %v4255
  %v5786 = vpack.c.b16 %v4260, %v4258
  %v5787 = vpack.c.b16 %v4261, %v4259
  %v5788 = vpack.c.b16 %v4264, %v4262
  %v5789 = vpack.c.b16 %v4265, %v4263
  %v5790 = vpack.c.b16 %v4268, %v4266
  %v5791 = vpack.c.b16 %v4269, %v4267
  %v5792 = vpack.c.b16 %v4272, %v4270
  %v5793 = vpack.c.b16 %v4273, %v4271
  %v5794 = vpack.c.b16 %v4276, %v4274
  %v5795 = vpack.c.b16 %v4277, %v4275
  %v5796 = vpack.c.b16 %v4280, %v4278
  %v5797 = vpack.c.b16 %v4281, %v4279
  %v5798 = vpack.c.b16 %v4284, %v4282
  %v5799 = vpack.c.b16 %v4285, %v4283
  %v5800 = vpack.c.b16 %v4288, %v4286
  %v5801 = vpack.c.b16 %v4289, %v4287
  %v5802 = vpack.c.b16 %v4292, %v4290
  %v5803 = vpack.c.b16 %v4293, %v4291
  %v5804 = vpack.c.b16 %v4296, %v4294
  %v5805 = vpack.c.b16 %v4297, %v4295
  %v5806 = vpack.c.b16 %v4300, %v4298
  %v5807 = vpack.c.b16 %v4301, %v4299
  %v5808 = vpack.c.b16 %v4304, %v4302
  %v5809 = vpack.c.b16 %v4305, %v4303
  %v5810 = vpack.c.b16 %v4308, %v4306
  %v5811 = vpack.c.b16 %v4309, %v4307
  %v5812 = vpack.c.b16 %v4312, %v4310
  %v5813 = vpack.c.b16 %v4313, %v4311
  %v5814 = vpack.c.b16 %v4316, %v4314
  %v5815 = vpack.c.b16 %v4317, %v4315
  %v5816 = vpack.c.b16 %v4320, %v4318
  %v5817 = vpack.c.b16 %v4321, %v4319
  %v5818 = vpack.c.b16 %v4324, %v4322
  %v5819 = vpack.c.b16 %v4325, %v4323
  %v5820 = vpack.c.b16 %v4328, %v4326
  %v5821 = vpack.c.b16 %v4329, %v4327
  %v5822 = vpack.c.b16 %v4332, %v4330
  %v5823 = vpack.c.b16 %v4333, %v4331
  %v5824 = vpack.c.b16 %v4336, %v4334
  %v5825 = vpack.c.b16 %v4337, %v4335
  %v5826 = vpack.c.b16 %v4340, %v4338
  %v5827 = vpack.c.b16 %v4341, %v4339
  %v5828 = vpack.c.b16 %v4344, %v4342
  %v5829 = vpack.c.b16 %v4345, %v4343
  %v5830 = vpack.c.b16 %v4348, %v4346
  %v5831 = vpack.c.b16 %v4349, %v4347
  %v5832 = vpack.c.b16 %v4352, %v4350
  %v5833 = vpack.c.b16 %v4353, %v4351
  %v5834 = vpack.c.b16 %v4356, %v4354
  %v5835 = vpack.c.b16 %v4357, %v4355
  %v5836 = vpack.c.b16 %v4360, %v4358
  %v5837 = vpack.c.b16 %v4361, %v4359
  %v5838 = vpack.c.b16 %v4364, %v4362
  %v5839 = vpack.c.b16 %v4365, %v4363
  %v5840 = vpack.c.b16 %v4368, %v4366
  %v5841 = vpack.c.b16 %v4369, %v4367
  %v5842 = vpack.c.b16 %v4372, %v4370
  %v5843 = vpack.c.b16 %v4373, %v4371
  %v5844 = vpack.c.b16 %v4376, %v4374
  %v5845 = vpack.c.b16 %v4377, %v4375
  %v5846 = vpack.c.b16 %v4380, %v4378
  %v5847 = vpack.c.b16 %v4381, %v4379
  %v5848 = vpack.c.b16 %v4384, %v4382
  %v5849 = vpack.c.b16 %v4385, %v4383
  %v5850 = vpack.c.b16 %v4388, %v4386
  %v5851 = vpack.c.b16 %v4389, %v4387
  %v5852 = vpack.c.b16 %v4392, %v4390
  %v5853 = vpack.c.b16 %v4393, %v4391
  %v5854 = vpack.c.b16 %v4396, %v4394
  %v5855 = vpack.c.b16 %v4397, %v4395
  %v5856 = vpack.c.b16 %v4400, %v4398
  %v5857 = vpack.c.b16 %v4401, %v4399
  %v5858 = vpack.c.b16 %v4404, %v4402
  %v5859 = vpack.c.b16 %v4405, %v4403
  %v5860 = vpack.c.b16 %v4408, %v4406
  %v5861 = vpack.c.b16 %v4409, %v4407
  %v5862 = vpack.c.b16 %v4412, %v4410
  %v5863 = vpack.c.b16 %v4413, %v4411
  %v5864 = vpack.c.b16 %v4416, %v4414
  %v5865 = vpack.c.b16 %v4417, %v4415
  %v5866 = vpack.c.b16 %v4420, %v4418
  %v5867 = vpack.c.b16 %v4421, %v4419
  %v5868 = vpack.c.b16 %v4424, %v4422
  %v5869 = vpack.c.b16 %v4425, %v4423
  %v5870 = vpack.c.b16 %v4428, %v4426
  %v5871 = vpack.c.b16 %v4429, %v4427
  %v5872 = vpack.c.b16 %v4432, %v4430
  %v5873 = vpack.c.b16 %v4433, %v4431
  %v5874 = vpack.c.b16 %v4436, %v4434
  %v5875 = vpack.c.b16 %v4437, %v4435
  %v5876 = vpack.c.b16 %v4440, %v4438
  %v5877 = vpack.c.b16 %v4441, %v4439
  %v5878 = vpack.c.b16 %v4444, %v4442
  %v5879 = vpack.c.b16 %v4445, %v4443
  %v5880 = vpack.c.b16 %v4448, %v4446
  %v5881 = vpack.c.b16 %v4449, %v4447
  %v5882 = vpack.c.b16 %v4452, %v4450
  %v5883 = vpack.c.b16 %v4453, %v4451
  %v5884 = vpack.c.b16 %v4456, %v4454
  %v5885 = vpack.c.b16 %v4457, %v4455
  %v5886 = vpack.c.b16 %v4460, %v4458
  %v5887 = vpack.c.b16 %v4461, %v4459
  %v5888 = vpack.c.b16 %v4464, %v4462
  %v5889 = vpack.c.b16 %v4465, %v4463
  %v5890 = vpack.c.b16 %v4468, %v4466
  %v5891 = vpack.c.b16 %v4469, %v4467
  %v5892 = vpack.c.b16 %v4472, %v4470
  %v5893 = vpack.c.b16 %v4473, %v4471
  %v5894 = vpack.c.b16 %v4476, %v4474
  %v5895 = vpack.c.b16 %v4477, %v4475
  %v5896 = vpack.c.b16 %v4480, %v4478
  %v5897 = vpack.c.b16 %v4481, %v4479
  %v5898 = vpack.c.b16 %v4484, %v4482
  %v5899 = vpack.c.b16 %v4485, %v4483
  %v5900 = vpack.c.b16 %v4488, %v4486
  %v5901 = vpack.c.b16 %v4489, %v4487
  %v5902 = vpack.c.b16 %v4492, %v4490
  %v5903 = vpack.c.b16 %v4493, %v4491
  %v5904 = vpack.c.b16 %v4496, %v4494
  %v5905 = vpack.c.b16 %v4497, %v4495
  %v5906 = vpack.c.b16 %v4500, %v4498
  %v5907 = vpack.c.b16 %v4501, %v4499
  %v5908 = vpack.c.b16 %v4504, %v4502
  %v5909 = vpack.c.b16 %v4505, %v4503
  %v5910 = vpack.c.b16 %v4508, %v4506
  %v5911 = vpack.c.b16 %v4509, %v4507
  %v5912 = vpack.c.b16 %v4512, %v4510
  %v5913 = vpack.c.b16 %v4513, %v4511
  %v5914 = vpack.c.b16 %v4516, %v4514
  %v5915 = vpack.c.b16 %v4517, %v4515
  %v5916 = vpack.c.b16 %v4520, %v4518
  %v5917 = vpack.c.b16 %v4521, %v4519
  %v5918 = vpack.c.b16 %v4524, %v4522
  %v5919 = vpack.c.b16 %v4525, %v4523
  %v5920 = vpack.c.b16 %v4528, %v4526
  %v5921 = vpack.c.b16 %v4529, %v4527
  %v5922 = vpack.c.b16 %v4532, %v4530
  %v5923 = vpack.c.b16 %v4533, %v4531
  %v5924 = vpack.c.b16 %v4536, %v4534
  %v5925 = vpack.c.b16 %v4537, %v4535
  %v5926 = vpack.c.b16 %v4540, %v4538
  %v5927 = vpack.c.b16 %v4541, %v4539
  %v5928 = vpack.c.b16 %v4544, %v4542
  %v5929 = vpack.c.b16 %v4545, %v4543
  %v5930 = vpack.c.b16 %v4548, %v4546
  %v5931 = vpack.c.b16 %v4549, %v4547
  %v5932 = vpack.c.b16 %v4552, %v4550
  %v5933 = vpack.c.b16 %v4553, %v4551
  %v5934 = vpack.c.b16 %v4556, %v4554
  %v5935 = vpack.c.b16 %v4557, %v4555
  %v5936 = vpack.c.b16 %v4560, %v4558
  %v5937 = vpack.c.b16 %v4561, %v4559
  %v5938 = vpack.c.b16 %v4564, %v4562
  %v5939 = vpack.c.b16 %v4565, %v4563
  %v5940 = vpack.c.b16 %v4568, %v4566
  %v5941 = vpack.c.b16 %v4569, %v4567
  %v5942 = vpack.c.b16 %v4572, %v4570
  %v5943 = vpack.c.b16 %v4573, %v4571
  %v5944 = vpack.c.b16 %v4576, %v4574
  %v5945 = vpack.c.b16 %v4577, %v4575
  %v5946 = vpack.c.b16 %v4580, %v4578
  %v5947 = vpack.c.b16 %v4581, %v4579
  %v5948 = vpack.c.b16 %v4584, %v4582
  %v5949 = vpack.c.b16 %v4585, %v4583
  %v5950 = vpack.c.b16 %v4588, %v4586
  %v5951 = vpack.c.b16 %v4589, %v4587
  %v5952 = vpack.c.b16 %v4592, %v4590
  %v5953 = vpack.c.b16 %v4593, %v4591
  %v5954 = vpack.c.b16 %v4596, %v4594
  %v5955 = vpack.c.b16 %v4597, %v4595
  %v5956 = vpack.c.b16 %v4600, %v4598
  %v5957 = vpack.c.b16 %v4601, %v4599
  %v5958 = vpack.c.b16 %v4604, %v4602
  %v5959 = vpack.c.b16 %v4605, %v4603
  %v5960 = vpack.c.b16 %v4608, %v4606
  %v5961 = vpack.c.b16 %v4609, %v4607
  %v5962 = vpack.c.b16 %v4612, %v4610
  %v5963 = vpack.c.b16 %v4613, %v4611
  %v5964 = vpack.c.b16 %v4616, %v4614
  %v5965 = vpack.c.b16 %v4617, %v4615
  %v5966 = vpack.c.b16 %v4620, %v4618
  %v5967 = vpack.c.b16 %v4621, %v4619
  %v5968 = vpack.c.b16 %v4624, %v4622
  %v5969 = vpack.c.b16 %v4625, %v4623
  %v5970 = vpack.c.b16 %v4628, %v4626
  %v5971 = vpack.c.b16 %v4629, %v4627
  %v5972 = vpack.c.b16 %v4632, %v4630
  %v5973 = vpack.c.b16 %v4633, %v4631
  %v5974 = vpack.c.b16 %v4636, %v4634
  %v5975 = vpack.c.b16 %v4637, %v4635
  %v5976 = vpack.c.b16 %v4640, %v4638
  %v5977 = vpack.c.b16 %v4641, %v4639
  %v5978 = vpack.c.b16 %v4644, %v4642
  %v5979 = vpack.c.b16 %v4645, %v4643
  %v5980 = vpack.c.b16 %v4648, %v4646
  %v5981 = vpack.c.b16 %v4649, %v4647
  %v5982 = vpack.c.b16 %v4652, %v4650
  %v5983 = vpack.c.b16 %v4653, %v4651
  %v5984 = vpack.c.b16 %v4656, %v4654
  %v5985 = vpack.c.b16 %v4657, %v4655
  %v5986 = vpack.c.b16 %v4660, %v4658
  %v5987 = vpack.c.b16 %v4661, %v4659
  %v5988 = vpack.c.b16 %v4664, %v4662
  %v5989 = vpack.c.b16 %v4665, %v4663
  %v5990 = vpack.c.b16 %v4668, %v4666
  %v5991 = vpack.c.b16 %v4669, %v4667
  %v5992 = vpack.c.b16 %v4672, %v4670
  %v5993 = vpack.c.b16 %v4673, %v4671
  %v5994 = vpack.c.b16 %v4676, %v4674
  %v5995 = vpack.c.b16 %v4677, %v4675
  %v5996 = vpack.c.b16 %v4680, %v4678
  %v5997 = vpack.c.b16 %v4681, %v4679
  %v5998 = vpack.c.b16 %v4684, %v4682
  %v5999 = vpack.c.b16 %v4685, %v4683
  %v6000 = vpack.c.b16 %v4688, %v4686
  %v6001 = vpack.c.b16 %v4689, %v4687
  %v6002 = vpack.c.b16 %v4692, %v4690
  %v6003 = vpack.c.b16 %v4693, %v4691
  %v6004 = vpack.c.b16 %v4696, %v4694
  %v6005 = vpack.c.b16 %v4697, %v4695
  %v6006 = vpack.c.b16 %v4700, %v4698
  %v6007 = vpack.c.b16 %v4701, %v4699
  %v6008 = vpack.c.b16 %v4704, %v4702
  %v6009 = vpack.c.b16 %v4705, %v4703
  %v6010 = vpack.c.b16 %v4708, %v4706
  %v6011 = vpack.c.b16 %v4709, %v4707
  %v6012 = vpack.c.b16 %v4712, %v4710
  %v6013 = vpack.c.b16 %v4713, %v4711
  %v6014 = vpack.c.b16 %v4716, %v4714
  %v6015 = vpack.c.b16 %v4717, %v4715
  %v6016 = vpack.c.b16 %v4720, %v4718
  %v6017 = vpack.c.b16 %v4721, %v4719
  %v6018 = vpack.c.b16 %v4724, %v4722
  %v6019 = vpack.c.b16 %v4725, %v4723
  %v6020 = vpack.c.b16 %v4728, %v4726
  %v6021 = vpack.c.b16 %v4729, %v4727
  %v6022 = vpack.c.b16 %v4732, %v4730
  %v6023 = vpack.c.b16 %v4733, %v4731
  %v6024 = vpack.c.b16 %v4736, %v4734
  %v6025 = vpack.c.b16 %v4737, %v4735
  %v6026 = vpack.c.b16 %v4740, %v4738
  %v6027 = vpack.c.b16 %v4741, %v4739
  %v6028 = vpack.c.b16 %v4744, %v4742
  %v6029 = vpack.c.b16 %v4745, %v4743
  %v6030 = vpack.c.b16 %v4748, %v4746
  %v6031 = vpack.c.b16 %v4749, %v4747
  %v6032 = vpack.c.b16 %v4752, %v4750
  %v6033 = vpack.c.b16 %v4753, %v4751
  %v6034 = vpack.c.b16 %v4756, %v4754
  %v6035 = vpack.c.b16 %v4757, %v4755
  %v6036 = vpack.c.b16 %v4760, %v4758
  %v6037 = vpack.c.b16 %v4761, %v4759
  %v6038 = vpack.c.b16 %v4764, %v4762
  %v6039 = vpack.c.b16 %v4765, %v4763
  %v6040 = vpack.c.b16 %v4768, %v4766
  %v6041 = vpack.c.b16 %v4769, %v4767
  %v6042 = vpack.c.b16 %v4772, %v4770
  %v6043 = vpack.c.b16 %v4773, %v4771
  %v6044 = vpack.c.b16 %v4776, %v4774
  %v6045 = vpack.c.b16 %v4777, %v4775
  %v6046 = vpack.c.b16 %v4780, %v4778
  %v6047 = vpack.c.b16 %v4781, %v4779
  %v6048 = vpack.c.b16 %v4784, %v4782
  %v6049 = vpack.c.b16 %v4785, %v4783
  %v6050 = vpack.c.b16 %v4788, %v4786
  %v6051 = vpack.c.b16 %v4789, %v4787
  %v6052 = vpack.c.b16 %v4792, %v4790
  %v6053 = vpack.c.b16 %v4793, %v4791
  %v6054 = vpack.c.b16 %v4796, %v4794
  %v6055 = vpack.c.b16 %v4797, %v4795
  %v6056 = vpack.c.b16 %v4800, %v4798
  %v6057 = vpack.c.b16 %v4801, %v4799
  %v6058 = vpack.c.b16 %v4804, %v4802
  %v6059 = vpack.c.b16 %v4805, %v4803
  %v6060 = vpack.c.b16 %v4808, %v4806
  %v6061 = vpack.c.b16 %v4809, %v4807
  %v6062 = vpack.c.b16 %v4812, %v4810
  %v6063 = vpack.c.b16 %v4813, %v4811
  %v6064 = vpack.c.b16 %v4816, %v4814
  %v6065 = vpack.c.b16 %v4817, %v4815
  %v6066 = vpack.c.b16 %v4820, %v4818
  %v6067 = vpack.c.b16 %v4821, %v4819
  %v6068 = vpack.c.b16 %v4824, %v4822
  %v6069 = vpack.c.b16 %v4825, %v4823
  %v6070 = vpack.c.b16 %v4828, %v4826
  %v6071 = vpack.c.b16 %v4829, %v4827
  %v6072 = vpack.c.b16 %v4832, %v4830
  %v6073 = vpack.c.b16 %v4833, %v4831
  %v6074 = vpack.c.b16 %v4836, %v4834
  %v6075 = vpack.c.b16 %v4837, %v4835
  %v6076 = vpack.c.b16 %v4840, %v4838
  %v6077 = vpack.c.b16 %v4841, %v4839
  %v6078 = vpack.c.b16 %v4844, %v4842
  %v6079 = vpack.c.b16 %v4845, %v4843
  %v6080 = vpack.c.b16 %v4848, %v4846
  %v6081 = vpack.c.b16 %v4849, %v4847
  %v6082 = vpack.c.b16 %v4852, %v4850
  %v6083 = vpack.c.b16 %v4853, %v4851
  %v6084 = vpack.c.b16 %v4856, %v4854
  %v6085 = vpack.c.b16 %v4857, %v4855
  %v6086 = vpack.c.b16 %v4860, %v4858
  %v6087 = vpack.c.b16 %v4861, %v4859
  %v6088 = vpack.c.b16 %v4864, %v4862
  %v6089 = vpack.c.b16 %v4865, %v4863
  %v6090 = vpack.c.b16 %v4868, %v4866
  %v6091 = vpack.c.b16 %v4869, %v4867
  %v6092 = vpack.c.b16 %v4872, %v4870
  %v6093 = vpack.c.b16 %v4873, %v4871
  %v6094 = vpack.c.b16 %v4876, %v4874
  %v6095 = vpack.c.b16 %v4877, %v4875
  %v6096 = vpack.c.b16 %v4880, %v4878
  %v6097 = vpack.c.b16 %v4881, %v4879
  %v6098 = vpack.c.b16 %v4884, %v4882
  %v6099 = vpack.c.b16 %v4885, %v4883
  %v6100 = vpack.c.b16 %v4888, %v4886
  %v6101 = vpack.c.b16 %v4889, %v4887
  %v6102 = vpack.c.b16 %v4892, %v4890
  %v6103 = vpack.c.b16 %v4893, %v4891
  %v6104 = vpack.c.b16 %v4896, %v4894
  %v6105 = vpack.c.b16 %v4897, %v4895
  %v6106 = vpack.c.b16 %v4900, %v4898
  %v6107 = vpack.c.b16 %v4901, %v4899
  %v6108 = vpack.c.b16 %v4904, %v4902
  %v6109 = vpack.c.b16 %v4905, %v4903
  %v6110 = vpack.c.b16 %v4908, %v4906
  %v6111 = vpack.c.b16 %v4909, %v4907
  %v6112 = vpack.c.b16 %v4912, %v4910
  %v6113 = vpack.c.b16 %v4913, %v4911
  %v6114 = vpack.c.b16 %v4916, %v4914
  %v6115 = vpack.c.b16 %v4917, %v4915
  %v6116 = vpack.c.b16 %v4920, %v4918
  %v6117 = vpack.c.b16 %v4921, %v4919
  %v6118 = vpack.c.b16 %v4924, %v4922
  %v6119 = vpack.c.b16 %v4925, %v4923
  %v6120 = vpack.c.b16 %v4928, %v4926
  %v6121 = vpack.c.b16 %v4929, %v4927
  %v6122 = vpack.c.b16 %v4932, %v4930
  %v6123 = vpack.c.b16 %v4933, %v4931
  %v6124 = vpack.c.b16 %v4936, %v4934
  %v6125 = vpack.c.b16 %v4937, %v4935
  %v6126 = vpack.c.b16 %v4940, %v4938
  %v6127 = vpack.c.b16 %v4941, %v4939
  %v6128 = vpack.c.b16 %v4944, %v4942
  %v6129 = vpack.c.b16 %v4945, %v4943
  %v6130 = vpack.c.b16 %v4948, %v4946
  %v6131 = vpack.c.b16 %v4949, %v4947
  %v6132 = vpack.c.b16 %v4952, %v4950
  %v6133 = vpack.c.b16 %v4953, %v4951
  %v6134 = vpack.c.b16 %v4956, %v4954
  %v6135 = vpack.c.b16 %v4957, %v4955
  %v6136 = vpack.c.b16 %v4960, %v4958
  %v6137 = vpack.c.b16 %v4961, %v4959
  %v6138 = vpack.c.b16 %v4964, %v4962
  %v6139 = vpack.c.b16 %v4965, %v4963
  %v6140 = vpack.c.b16 %v4968, %v4966
  %v6141 = vpack.c.b16 %v4969, %v4967
  %v6142 = vpack.c.b16 %v4972, %v4970
  %v6143 = vpack.c.b16 %v4973, %v4971
  %v6144 = vpack.c.b16 %v4976, %v4974
  %v6145 = vpack.c.b16 %v4977, %v4975
  %v6146 = vpack.c.b16 %v4980, %v4978
  %v6147 = vpack.c.b16 %v4981, %v4979
  %v6148 = vpack.c.b16 %v4984, %v4982
  %v6149 = vpack.c.b16 %v4985, %v4983
  %v6150 = vpack.c.b16 %v4988, %v4986
  %v6151 = vpack.c.b16 %v4989, %v4987
  %v6152 = vpack.c.b16 %v4992, %v4990
  %v6153 = vpack.c.b16 %v4993, %v4991
  %v6154 = vpack.c.b16 %v4996, %v4994
  %v6155 = vpack.c.b16 %v4997, %v4995
  %v6156 = vpack.c.b16 %v5000, %v4998
  %v6157 = vpack.c.b16 %v5001, %v4999
  %v6158 = vpack.c.b16 %v5004, %v5002
  %v6159 = vpack.c.b16 %v5005, %v5003
  %v6160 = vpack.c.b16 %v5008, %v5006
  %v6161 = vpack.c.b16 %v5009, %v5007
  %v6162 = vpack.c.b16 %v5012, %v5010
  %v6163 = vpack.c.b16 %v5013, %v5011
  %v6164 = vpack.c.b16 %v5016, %v5014
  %v6165 = vpack.c.b16 %v5017, %v5015
  %v6166 = vpack.c.b16 %v5020, %v5018
  %v6167 = vpack.c.b16 %v5021, %v5019
  %v6168 = vpack.c.b16 %v5024, %v5022
  %v6169 = vpack.c.b16 %v5025, %v5023
  %v6170 = vpack.c.b16 %v5028, %v5026
  %v6171 = vpack.c.b16 %v5029, %v5027
  %v6172 = vpack.c.b16 %v5032, %v5030
  %v6173 = vpack.c.b16 %v5033, %v5031
  %v6174 = vpack.c.b16 %v5036, %v5034
  %v6175 = vpack.c.b16 %v5037, %v5035
  %v6176 = vpack.c.b16 %v5040, %v5038
  %v6177 = vpack.c.b16 %v5041, %v5039
  %v6178 = vpack.c.b16 %v5044, %v5042
  %v6179 = vpack.c.b16 %v5045, %v5043
  %v6180 = vpack.c.b16 %v5048, %v5046
  %v6181 = vpack.c.b16 %v5049, %v5047
  %v6182 = vpack.c.b16 %v5052, %v5050
  %v6183 = vpack.c.b16 %v5053, %v5051
  %v6184 = vpack.c.b16 %v5056, %v5054
  %v6185 = vpack.c.b16 %v5057, %v5055
  %v6186 = vpack.c.b16 %v5060, %v5058
  %v6187 = vpack.c.b16 %v5061, %v5059
  %v6188 = vpack.c.b16 %v5064, %v5062
  %v6189 = vpack.c.b16 %v5065, %v5063
  %v6190 = vpack.c.b16 %v5068, %v5066
  %v6191 = vpack.c.b16 %v5069, %v5067
  %v6192 = vpack.c.b16 %v5072, %v5070
  %v6193 = vpack.c.b16 %v5073, %v5071
  %v6194 = vpack.c.b16 %v5076, %v5074
  %v6195 = vpack.c.b16 %v5077, %v5075
  %v6196 = vpack.c.b16 %v5080, %v5078
  %v6197 = vpack.c.b16 %v5081, %v5079
  %v6198 = vpack.c.b16 %v5084, %v5082
  %v6199 = vpack.c.b16 %v5085, %v5083
  %v6200 = vpack.c.b16 %v5088, %v5086
  %v6201 = vpack.c.b16 %v5089, %v5087
  %v6202 = vpack.c.b16 %v5092, %v5090
  %v6203 = vpack.c.b16 %v5093, %v5091
  %v6204 = vpack.c.b16 %v5096, %v5094
  %v6205 = vpack.c.b16 %v5097, %v5095
  %v6206 = vpack.c.b16 %v5100, %v5098
  %v6207 = vpack.c.b16 %v5101, %v5099
  %v6208 = vpack.c.b16 %v5104, %v5102
  %v6209 = vpack.c.b16 %v5105, %v5103
  %v6210 = vpack.c.b16 %v5108, %v5106
  %v6211 = vpack.c.b16 %v5109, %v5107
  %v6212 = vpack.c.b16 %v5112, %v5110
  %v6213 = vpack.c.b16 %v5113, %v5111
  %v6214 = vpack.c.b16 %v5116, %v5114
  %v6215 = vpack.c.b16 %v5117, %v5115
  %v6216 = vpack.c.b16 %v5120, %v5118
  %v6217 = vpack.c.b16 %v5121, %v5119
  %v6218 = vpack.c.b16 %v5124, %v5122
  %v6219 = vpack.c.b16 %v5125, %v5123
  %v6220 = vpack.c.b16 %v5128, %v5126
  %v6221 = vpack.c.b16 %v5129, %v5127
  %v6222 = vpack.c.b16 %v5132, %v5130
  %v6223 = vpack.c.b16 %v5133, %v5131
  %v6224 = vpack.c.b16 %v5136, %v5134
  %v6225 = vpack.c.b16 %v5137, %v5135
  %v6226 = vpack.c.b16 %v5140, %v5138
  %v6227 = vpack.c.b16 %v5141, %v5139
  %v6228 = vpack.c.b16 %v5144, %v5142
  %v6229 = vpack.c.b16 %v5145, %v5143
  %v6230 = vpack.c.b16 %v5148, %v5146
  %v6231 = vpack.c.b16 %v5149, %v5147
  %v6232 = vpack.c.b16 %v5152, %v5150
  %v6233 = vpack.c.b16 %v5153, %v5151
  %v6234 = vpack.c.b16 %v5156, %v5154
  %v6235 = vpack.c.b16 %v5157, %v5155
  %v6236 = vpack.c.b16 %v5160, %v5158
  %v6237 = vpack.c.b16 %v5161, %v5159
  %v6238 = vpack.c.b16 %v5164, %v5162
  %v6239 = vpack.c.b16 %v5165, %v5163
  %v6240 = vpack.c.b16 %v5168, %v5166
  %v6241 = vpack.c.b16 %v5169, %v5167
  %v6242 = vpack.c.b16 %v5172, %v5170
  %v6243 = vpack.c.b16 %v5173, %v5171
  %v6244 = vpack.c.b16 %v5176, %v5174
  %v6245 = vpack.c.b16 %v5177, %v5175
  %v6246 = vpack.c.b16 %v5180, %v5178
  %v6247 = vpack.c.b16 %v5181, %v5179
  %v6248 = vpack.c.b16 %v5184, %v5182
  %v6249 = vpack.c.b16 %v5185, %v5183
  %v6250 = vpack.c.b16 %v5188, %v5186
  %v6251 = vpack.c.b16 %v5189, %v5187
  %v6252 = vpack.c.b16 %v5192, %v5190
  %v6253 = vpack.c.b16 %v5193, %v5191
  %v6254 = vpack.c.b16 %v5196, %v5194
  %v6255 = vpack.c.b16 %v5197, %v5195
  %v6256 = vpack.c.b16 %v5200, %v5198
  %v6257 = vpack.c.b16 %v5201, %v5199
  %v6258 = vpack.c.b16 %v5204, %v5202
  %v6259 = vpack.c.b16 %v5205, %v5203
  %v6260 = vpack.c.b16 %v5208, %v5206
  %v6261 = vpack.c.b16 %v5209, %v5207
  %v6262 = vpack.c.b16 %v5212, %v5210
  %v6263 = vpack.c.b16 %v5213, %v5211
  %v6264 = vpack.c.b16 %v5216, %v5214
  %v6265 = vpack.c.b16 %v5217, %v5215
  %v6266 = vpack.c.b16 %v5220, %v5218
  %v6267 = vpack.c.b16 %v5221, %v5219
  %v6268 = vpack.c.b16 %v5224, %v5222
  %v6269 = vpack.c.b16 %v5225, %v5223
  %v6270 = vpack.c.b16 %v5228, %v5226
  %v6271 = vpack.c.b16 %v5229, %v5227
  %v6272 = vpack.c.b16 %v5232, %v5230
  %v6273 = vpack.c.b16 %v5233, %v5231
  %v6274 = vpack.c.b16 %v5236, %v5234
  %v6275 = vpack.c.b16 %v5237, %v5235
  %v6276 = vpack.c.b16 %v5240, %v5238
  %v6277 = vpack.c.b16 %v5241, %v5239
  %v6278 = vpack.c.b16 %v5244, %v5242
  %v6279 = vpack.c.b16 %v5245, %v5243
  %v6280 = vpack.c.b16 %v5248, %v5246
  %v6281 = vpack.c.b16 %v5249, %v5247
  %v6282 = vpack.c.b16 %v5252, %v5250
  %v6283 = vpack.c.b16 %v5253, %v5251
  %v6284 = vpack.c.b16 %v5256, %v5254
  %v6285 = vpack.c.b16 %v5257, %v5255
  %v6286 = vpack.c.b16 %v5260, %v5258
  %v6287 = vpack.c.b16 %v5261, %v5259
  %v6288 = vpack.c.b16 %v5264, %v5262
  %v6289 = vpack.c.b16 %v5265, %v5263
  %7314 = vmatprep.subr.bf16.mxu0 %v5267
  %7315 = vmatpush1.bf16.msra.mxu0 %v5266
  %7316 = vmatprep.subr.bf16.mxu0 %v5269
  %7317 = vmatpush1.bf16.msra.mxu0 %v5268
  %7318 = vmatprep.subr.bf16.mxu0 %v5271
  %7319 = vmatpush1.bf16.msra.mxu0 %v5270
  %7320 = vmatprep.subr.bf16.mxu0 %v5273
  %7321 = vmatpush1.bf16.msra.mxu0 %v5272
  %7322 = vmatprep.subr.bf16.mxu0 %v5275
  %7323 = vmatpush1.bf16.msra.mxu0 %v5274
  %7324 = vmatprep.subr.bf16.mxu0 %v5277
  %7325 = vmatpush1.bf16.msra.mxu0 %v5276
  %7326 = vmatprep.subr.bf16.mxu0 %v5279
  %7327 = vmatpush1.bf16.msra.mxu0 %v5278
  %7328 = vmatprep.subr.bf16.mxu0 %v5281
  %7329 = vmatpush1.bf16.msra.mxu0 %v5280
  %7330 = vmatprep.subr.bf16.mxu0 %v5283
  %7331 = vmatpush1.bf16.msra.mxu0 %v5282
  %7332 = vmatprep.subr.bf16.mxu0 %v5285
  %7333 = vmatpush1.bf16.msra.mxu0 %v5284
  %7334 = vmatprep.subr.bf16.mxu0 %v5287
  %7335 = vmatpush1.bf16.msra.mxu0 %v5286
  %7336 = vmatprep.subr.bf16.mxu0 %v5289
  %7337 = vmatpush1.bf16.msra.mxu0 %v5288
  %7338 = vmatprep.subr.bf16.mxu0 %v5291
  %7339 = vmatpush1.bf16.msra.mxu0 %v5290
  %7340 = vmatprep.subr.bf16.mxu0 %v5293
  %7341 = vmatpush1.bf16.msra.mxu0 %v5292
  %7342 = vmatprep.subr.bf16.mxu0 %v5295
  %7343 = vmatpush1.bf16.msra.mxu0 %v5294
  %7344 = vmatprep.subr.bf16.mxu0 %v5297
  %7345 = vmatpush1.bf16.msra.mxu0 %v5296
  %7346 = vmatprep.mubr.bf16.mxu0 %v2067
  %7347 = vmatmul.mubr.bf16.gmra.mrb[0].mxu0 %v2066
  %v7348 = vpop.f32.mrb[0].mxu0
  %v7349 = vadd.f32 %v1963, %v7348
  %v7350 = vpop.f32.mrb[0].mxu0
  %v7351 = vadd.f32 %v1967, %v7350
  %v7352 = vpop.f32.mrb[0].mxu0
  %v7353 = vpop.f32.mrb[0].mxu0
  %7354 = vdwg.mxu0
  %7355 = vmatprep.subr.bf16.mxu0 %v5299
  %7356 = vmatpush1.bf16.msra.mxu0 %v5298
  %7357 = vmatprep.subr.bf16.mxu0 %v5301
  %7358 = vmatpush1.bf16.msra.mxu0 %v5300
  %7359 = vmatprep.subr.bf16.mxu0 %v5303
  %7360 = vmatpush1.bf16.msra.mxu0 %v5302
  %7361 = vmatprep.subr.bf16.mxu0 %v5305
  %7362 = vmatpush1.bf16.msra.mxu0 %v5304
  %7363 = vmatprep.subr.bf16.mxu0 %v5307
  %7364 = vmatpush1.bf16.msra.mxu0 %v5306
  %7365 = vmatprep.subr.bf16.mxu0 %v5309
  %7366 = vmatpush1.bf16.msra.mxu0 %v5308
  %7367 = vmatprep.subr.bf16.mxu0 %v5311
  %7368 = vmatpush1.bf16.msra.mxu0 %v5310
  %7369 = vmatprep.subr.bf16.mxu0 %v5313
  %7370 = vmatpush1.bf16.msra.mxu0 %v5312
  %7371 = vmatprep.subr.bf16.mxu0 %v5315
  %7372 = vmatpush1.bf16.msra.mxu0 %v5314
  %7373 = vmatprep.subr.bf16.mxu0 %v5317
  %7374 = vmatpush1.bf16.msra.mxu0 %v5316
  %7375 = vmatprep.subr.bf16.mxu0 %v5319
  %7376 = vmatpush1.bf16.msra.mxu0 %v5318
  %7377 = vmatprep.subr.bf16.mxu0 %v5321
  %7378 = vmatpush1.bf16.msra.mxu0 %v5320
  %7379 = vmatprep.subr.bf16.mxu0 %v5323
  %7380 = vmatpush1.bf16.msra.mxu0 %v5322
  %7381 = vmatprep.subr.bf16.mxu0 %v5325
  %7382 = vmatpush1.bf16.msra.mxu0 %v5324
  %7383 = vmatprep.subr.bf16.mxu0 %v5327
  %7384 = vmatpush1.bf16.msra.mxu0 %v5326
  %7385 = vmatprep.subr.bf16.mxu0 %v5329
  %7386 = vmatpush1.bf16.msra.mxu0 %v5328
  %7387 = vmatprep.mubr.bf16.mxu0 %v2069
  %7388 = vmatmul.mubr.bf16.gmra.mrb[0].mxu0 %v2068
  %v7389 = vpop.f32.mrb[0].mxu0
  %v7390 = vadd.f32 %v7349, %v7389
  %v7391 = vpop.f32.mrb[0].mxu0
  %v7392 = vadd.f32 %v7351, %v7391
  %v7393 = vpop.f32.mrb[0].mxu0
  %v7394 = vpop.f32.mrb[0].mxu0
  %7395 = vdwg.mxu0
  %7396 = vmatprep.subr.bf16.mxu0 %v5331
  %7397 = vmatpush1.bf16.msra.mxu0 %v5330
  %7398 = vmatprep.subr.bf16.mxu0 %v5333
  %7399 = vmatpush1.bf16.msra.mxu0 %v5332
  %7400 = vmatprep.subr.bf16.mxu0 %v5335
  %7401 = vmatpush1.bf16.msra.mxu0 %v5334
  %7402 = vmatprep.subr.bf16.mxu0 %v5337
  %7403 = vmatpush1.bf16.msra.mxu0 %v5336
  %7404 = vmatprep.subr.bf16.mxu0 %v5339
  %7405 = vmatpush1.bf16.msra.mxu0 %v5338
  %7406 = vmatprep.subr.bf16.mxu0 %v5341
  %7407 = vmatpush1.bf16.msra.mxu0 %v5340
  %7408 = vmatprep.subr.bf16.mxu0 %v5343
  %7409 = vmatpush1.bf16.msra.mxu0 %v5342
  %7410 = vmatprep.subr.bf16.mxu0 %v5345
  %7411 = vmatpush1.bf16.msra.mxu0 %v5344
  %7412 = vmatprep.subr.bf16.mxu0 %v5347
  %7413 = vmatpush1.bf16.msra.mxu0 %v5346
  %7414 = vmatprep.subr.bf16.mxu0 %v5349
  %7415 = vmatpush1.bf16.msra.mxu0 %v5348
  %7416 = vmatprep.subr.bf16.mxu0 %v5351
  %7417 = vmatpush1.bf16.msra.mxu0 %v5350
  %7418 = vmatprep.subr.bf16.mxu0 %v5353
  %7419 = vmatpush1.bf16.msra.mxu0 %v5352
  %7420 = vmatprep.subr.bf16.mxu0 %v5355
  %7421 = vmatpush1.bf16.msra.mxu0 %v5354
  %7422 = vmatprep.subr.bf16.mxu0 %v5357
  %7423 = vmatpush1.bf16.msra.mxu0 %v5356
  %7424 = vmatprep.subr.bf16.mxu0 %v5359
  %7425 = vmatpush1.bf16.msra.mxu0 %v5358
  %7426 = vmatprep.subr.bf16.mxu0 %v5361
  %7427 = vmatpush1.bf16.msra.mxu0 %v5360
  %7428 = vmatprep.mubr.bf16.mxu0 %v2071
  %7429 = vmatmul.mubr.bf16.gmra.mrb[0].mxu0 %v2070
  %v7430 = vpop.f32.mrb[0].mxu0
  %v7431 = vadd.f32 %v7390, %v7430
  %v7432 = vpop.f32.mrb[0].mxu0
  %v7433 = vadd.f32 %v7392, %v7432
  %v7434 = vpop.f32.mrb[0].mxu0
  %v7435 = vpop.f32.mrb[0].mxu0
  %7436 = vdwg.mxu0
  %7437 = vmatprep.subr.bf16.mxu0 %v5363
  %7438 = vmatpush1.bf16.msra.mxu0 %v5362
  %7439 = vmatprep.subr.bf16.mxu0 %v5365
  %7440 = vmatpush1.bf16.msra.mxu0 %v5364
  %7441 = vmatprep.subr.bf16.mxu0 %v5367
  %7442 = vmatpush1.bf16.msra.mxu0 %v5366
  %7443 = vmatprep.subr.bf16.mxu0 %v5369
  %7444 = vmatpush1.bf16.msra.mxu0 %v5368
  %7445 = vmatprep.subr.bf16.mxu0 %v5371
  %7446 = vmatpush1.bf16.msra.mxu0 %v5370
  %7447 = vmatprep.subr.bf16.mxu0 %v5373
  %7448 = vmatpush1.bf16.msra.mxu0 %v5372
  %7449 = vmatprep.subr.bf16.mxu0 %v5375
  %7450 = vmatpush1.bf16.msra.mxu0 %v5374
  %7451 = vmatprep.subr.bf16.mxu0 %v5377
  %7452 = vmatpush1.bf16.msra.mxu0 %v5376
  %7453 = vmatprep.subr.bf16.mxu0 %v5379
  %7454 = vmatpush1.bf16.msra.mxu0 %v5378
  %7455 = vmatprep.subr.bf16.mxu0 %v5381
  %7456 = vmatpush1.bf16.msra.mxu0 %v5380
  %7457 = vmatprep.subr.bf16.mxu0 %v5383
  %7458 = vmatpush1.bf16.msra.mxu0 %v5382
  %7459 = vmatprep.subr.bf16.mxu0 %v5385
  %7460 = vmatpush1.bf16.msra.mxu0 %v5384
  %7461 = vmatprep.subr.bf16.mxu0 %v5387
  %7462 = vmatpush1.bf16.msra.mxu0 %v5386
  %7463 = vmatprep.subr.bf16.mxu0 %v5389
  %7464 = vmatpush1.bf16.msra.mxu0 %v5388
  %7465 = vmatprep.subr.bf16.mxu0 %v5391
  %7466 = vmatpush1.bf16.msra.mxu0 %v5390
  %7467 = vmatprep.subr.bf16.mxu0 %v5393
  %7468 = vmatpush1.bf16.msra.mxu0 %v5392
  %7469 = vmatprep.mubr.bf16.mxu0 %v2073
  %7470 = vmatmul.mubr.bf16.gmra.mrb[0].mxu0 %v2072
  %v7471 = vpop.f32.mrb[0].mxu0
  %v7472 = vadd.f32 %v7431, %v7471
  %v7473 = vpop.f32.mrb[0].mxu0
  %v7474 = vadd.f32 %v7433, %v7473
  %v7475 = vpop.f32.mrb[0].mxu0
  %v7476 = vpop.f32.mrb[0].mxu0
  %7477 = vdwg.mxu0
  %7478 = vmatprep.subr.bf16.mxu0 %v5395
  %7479 = vmatpush1.bf16.msra.mxu0 %v5394
  %7480 = vmatprep.subr.bf16.mxu0 %v5397
  %7481 = vmatpush1.bf16.msra.mxu0 %v5396
  %7482 = vmatprep.subr.bf16.mxu0 %v5399
  %7483 = vmatpush1.bf16.msra.mxu0 %v5398
  %7484 = vmatprep.subr.bf16.mxu0 %v5401
  %7485 = vmatpush1.bf16.msra.mxu0 %v5400
  %7486 = vmatprep.subr.bf16.mxu0 %v5403
  %7487 = vmatpush1.bf16.msra.mxu0 %v5402
  %7488 = vmatprep.subr.bf16.mxu0 %v5405
  %7489 = vmatpush1.bf16.msra.mxu0 %v5404
  %7490 = vmatprep.subr.bf16.mxu0 %v5407
  %7491 = vmatpush1.bf16.msra.mxu0 %v5406
  %7492 = vmatprep.subr.bf16.mxu0 %v5409
  %7493 = vmatpush1.bf16.msra.mxu0 %v5408
  %7494 = vmatprep.subr.bf16.mxu0 %v5411
  %7495 = vmatpush1.bf16.msra.mxu0 %v5410
  %7496 = vmatprep.subr.bf16.mxu0 %v5413
  %7497 = vmatpush1.bf16.msra.mxu0 %v5412
  %7498 = vmatprep.subr.bf16.mxu0 %v5415
  %7499 = vmatpush1.bf16.msra.mxu0 %v5414
  %7500 = vmatprep.subr.bf16.mxu0 %v5417
  %7501 = vmatpush1.bf16.msra.mxu0 %v5416
  %7502 = vmatprep.subr.bf16.mxu0 %v5419
  %7503 = vmatpush1.bf16.msra.mxu0 %v5418
  %7504 = vmatprep.subr.bf16.mxu0 %v5421
  %7505 = vmatpush1.bf16.msra.mxu0 %v5420
  %7506 = vmatprep.subr.bf16.mxu0 %v5423
  %7507 = vmatpush1.bf16.msra.mxu0 %v5422
  %7508 = vmatprep.subr.bf16.mxu0 %v5425
  %7509 = vmatpush1.bf16.msra.mxu0 %v5424
  %7510 = vmatprep.mubr.bf16.mxu0 %v2075
  %7511 = vmatmul.mubr.bf16.gmra.mrb[0].mxu0 %v2074
  %v7512 = vpop.f32.mrb[0].mxu0
  %v7513 = vadd.f32 %v7472, %v7512
  %v7514 = vpop.f32.mrb[0].mxu0
  %v7515 = vadd.f32 %v7474, %v7514
  %v7516 = vpop.f32.mrb[0].mxu0
  %v7517 = vpop.f32.mrb[0].mxu0
  %7518 = vdwg.mxu0
  %7519 = vmatprep.subr.bf16.mxu0 %v5427
  %7520 = vmatpush1.bf16.msra.mxu0 %v5426
  %7521 = vmatprep.subr.bf16.mxu0 %v5429
  %7522 = vmatpush1.bf16.msra.mxu0 %v5428
  %7523 = vmatprep.subr.bf16.mxu0 %v5431
  %7524 = vmatpush1.bf16.msra.mxu0 %v5430
  %7525 = vmatprep.subr.bf16.mxu0 %v5433
  %7526 = vmatpush1.bf16.msra.mxu0 %v5432
  %7527 = vmatprep.subr.bf16.mxu0 %v5435
  %7528 = vmatpush1.bf16.msra.mxu0 %v5434
  %7529 = vmatprep.subr.bf16.mxu0 %v5437
  %7530 = vmatpush1.bf16.msra.mxu0 %v5436
  %7531 = vmatprep.subr.bf16.mxu0 %v5439
  %7532 = vmatpush1.bf16.msra.mxu0 %v5438
  %7533 = vmatprep.subr.bf16.mxu0 %v5441
  %7534 = vmatpush1.bf16.msra.mxu0 %v5440
  %7535 = vmatprep.subr.bf16.mxu0 %v5443
  %7536 = vmatpush1.bf16.msra.mxu0 %v5442
  %7537 = vmatprep.subr.bf16.mxu0 %v5445
  %7538 = vmatpush1.bf16.msra.mxu0 %v5444
  %7539 = vmatprep.subr.bf16.mxu0 %v5447
  %7540 = vmatpush1.bf16.msra.mxu0 %v5446
  %7541 = vmatprep.subr.bf16.mxu0 %v5449
  %7542 = vmatpush1.bf16.msra.mxu0 %v5448
  %7543 = vmatprep.subr.bf16.mxu0 %v5451
  %7544 = vmatpush1.bf16.msra.mxu0 %v5450
  %7545 = vmatprep.subr.bf16.mxu0 %v5453
  %7546 = vmatpush1.bf16.msra.mxu0 %v5452
  %7547 = vmatprep.subr.bf16.mxu0 %v5455
  %7548 = vmatpush1.bf16.msra.mxu0 %v5454
  %7549 = vmatprep.subr.bf16.mxu0 %v5457
  %7550 = vmatpush1.bf16.msra.mxu0 %v5456
  %7551 = vmatprep.mubr.bf16.mxu0 %v2077
  %7552 = vmatmul.mubr.bf16.gmra.mrb[0].mxu0 %v2076
  %v7553 = vpop.f32.mrb[0].mxu0
  %v7554 = vadd.f32 %v7513, %v7553
  %v7555 = vpop.f32.mrb[0].mxu0
  %v7556 = vadd.f32 %v7515, %v7555
  %v7557 = vpop.f32.mrb[0].mxu0
  %v7558 = vpop.f32.mrb[0].mxu0
  %7559 = vdwg.mxu0
  %7560 = vmatprep.subr.bf16.mxu0 %v5459
  %7561 = vmatpush1.bf16.msra.mxu0 %v5458
  %7562 = vmatprep.subr.bf16.mxu0 %v5461
  %7563 = vmatpush1.bf16.msra.mxu0 %v5460
  %7564 = vmatprep.subr.bf16.mxu0 %v5463
  %7565 = vmatpush1.bf16.msra.mxu0 %v5462
  %7566 = vmatprep.subr.bf16.mxu0 %v5465
  %7567 = vmatpush1.bf16.msra.mxu0 %v5464
  %7568 = vmatprep.subr.bf16.mxu0 %v5467
  %7569 = vmatpush1.bf16.msra.mxu0 %v5466
  %7570 = vmatprep.subr.bf16.mxu0 %v5469
  %7571 = vmatpush1.bf16.msra.mxu0 %v5468
  %7572 = vmatprep.subr.bf16.mxu0 %v5471
  %7573 = vmatpush1.bf16.msra.mxu0 %v5470
  %7574 = vmatprep.subr.bf16.mxu0 %v5473
  %7575 = vmatpush1.bf16.msra.mxu0 %v5472
  %7576 = vmatprep.subr.bf16.mxu0 %v5475
  %7577 = vmatpush1.bf16.msra.mxu0 %v5474
  %7578 = vmatprep.subr.bf16.mxu0 %v5477
  %7579 = vmatpush1.bf16.msra.mxu0 %v5476
  %7580 = vmatprep.subr.bf16.mxu0 %v5479
  %7581 = vmatpush1.bf16.msra.mxu0 %v5478
  %7582 = vmatprep.subr.bf16.mxu0 %v5481
  %7583 = vmatpush1.bf16.msra.mxu0 %v5480
  %7584 = vmatprep.subr.bf16.mxu0 %v5483
  %7585 = vmatpush1.bf16.msra.mxu0 %v5482
  %7586 = vmatprep.subr.bf16.mxu0 %v5485
  %7587 = vmatpush1.bf16.msra.mxu0 %v5484
  %7588 = vmatprep.subr.bf16.mxu0 %v5487
  %7589 = vmatpush1.bf16.msra.mxu0 %v5486
  %7590 = vmatprep.subr.bf16.mxu0 %v5489
  %7591 = vmatpush1.bf16.msra.mxu0 %v5488
  %7592 = vmatprep.mubr.bf16.mxu0 %v2079
  %7593 = vmatmul.mubr.bf16.gmra.mrb[0].mxu0 %v2078
  %v7594 = vpop.f32.mrb[0].mxu0
  %v7595 = vadd.f32 %v7554, %v7594
  %v7596 = vpop.f32.mrb[0].mxu0
  %v7597 = vadd.f32 %v7556, %v7596
  %v7598 = vpop.f32.mrb[0].mxu0
  %v7599 = vpop.f32.mrb[0].mxu0
  %7600 = vdwg.mxu0
  %7601 = vmatprep.subr.bf16.mxu0 %v5491
  %7602 = vmatpush1.bf16.msra.mxu0 %v5490
  %7603 = vmatprep.subr.bf16.mxu0 %v5493
  %7604 = vmatpush1.bf16.msra.mxu0 %v5492
  %7605 = vmatprep.subr.bf16.mxu0 %v5495
  %7606 = vmatpush1.bf16.msra.mxu0 %v5494
  %7607 = vmatprep.subr.bf16.mxu0 %v5497
  %7608 = vmatpush1.bf16.msra.mxu0 %v5496
  %7609 = vmatprep.subr.bf16.mxu0 %v5499
  %7610 = vmatpush1.bf16.msra.mxu0 %v5498
  %7611 = vmatprep.subr.bf16.mxu0 %v5501
  %7612 = vmatpush1.bf16.msra.mxu0 %v5500
  %7613 = vmatprep.subr.bf16.mxu0 %v5503
  %7614 = vmatpush1.bf16.msra.mxu0 %v5502
  %7615 = vmatprep.subr.bf16.mxu0 %v5505
  %7616 = vmatpush1.bf16.msra.mxu0 %v5504
  %7617 = vmatprep.subr.bf16.mxu0 %v5507
  %7618 = vmatpush1.bf16.msra.mxu0 %v5506
  %7619 = vmatprep.subr.bf16.mxu0 %v5509
  %7620 = vmatpush1.bf16.msra.mxu0 %v5508
  %7621 = vmatprep.subr.bf16.mxu0 %v5511
  %7622 = vmatpush1.bf16.msra.mxu0 %v5510
  %7623 = vmatprep.subr.bf16.mxu0 %v5513
  %7624 = vmatpush1.bf16.msra.mxu0 %v5512
  %7625 = vmatprep.subr.bf16.mxu0 %v5515
  %7626 = vmatpush1.bf16.msra.mxu0 %v5514
  %7627 = vmatprep.subr.bf16.mxu0 %v5517
  %7628 = vmatpush1.bf16.msra.mxu0 %v5516
  %7629 = vmatprep.subr.bf16.mxu0 %v5519
  %7630 = vmatpush1.bf16.msra.mxu0 %v5518
  %7631 = vmatprep.subr.bf16.mxu0 %v5521
  %7632 = vmatpush1.bf16.msra.mxu0 %v5520
  %7633 = vmatprep.mubr.bf16.mxu0 %v2081
  %7634 = vmatmul.mubr.bf16.gmra.mrb[0].mxu0 %v2080
  %v7635 = vpop.f32.mrb[0].mxu0
  %v7636 = vadd.f32 %v7595, %v7635
  %v7637 = vpop.f32.mrb[0].mxu0
  %v7638 = vadd.f32 %v7597, %v7637
  %v7639 = vpop.f32.mrb[0].mxu0
  %v7640 = vpop.f32.mrb[0].mxu0
  %7641 = vdwg.mxu0
  %7642 = vmatprep.subr.bf16.mxu0 %v5523
  %7643 = vmatpush1.bf16.msra.mxu0 %v5522
  %7644 = vmatprep.subr.bf16.mxu0 %v5525
  %7645 = vmatpush1.bf16.msra.mxu0 %v5524
  %7646 = vmatprep.subr.bf16.mxu0 %v5527
  %7647 = vmatpush1.bf16.msra.mxu0 %v5526
  %7648 = vmatprep.subr.bf16.mxu0 %v5529
  %7649 = vmatpush1.bf16.msra.mxu0 %v5528
  %7650 = vmatprep.subr.bf16.mxu0 %v5531
  %7651 = vmatpush1.bf16.msra.mxu0 %v5530
  %7652 = vmatprep.subr.bf16.mxu0 %v5533
  %7653 = vmatpush1.bf16.msra.mxu0 %v5532
  %7654 = vmatprep.subr.bf16.mxu0 %v5535
  %7655 = vmatpush1.bf16.msra.mxu0 %v5534
  %7656 = vmatprep.subr.bf16.mxu0 %v5537
  %7657 = vmatpush1.bf16.msra.mxu0 %v5536
  %7658 = vmatprep.subr.bf16.mxu0 %v5539
  %7659 = vmatpush1.bf16.msra.mxu0 %v5538
  %7660 = vmatprep.subr.bf16.mxu0 %v5541
  %7661 = vmatpush1.bf16.msra.mxu0 %v5540
  %7662 = vmatprep.subr.bf16.mxu0 %v5543
  %7663 = vmatpush1.bf16.msra.mxu0 %v5542
  %7664 = vmatprep.subr.bf16.mxu0 %v5545
  %7665 = vmatpush1.bf16.msra.mxu0 %v5544
  %7666 = vmatprep.subr.bf16.mxu0 %v5547
  %7667 = vmatpush1.bf16.msra.mxu0 %v5546
  %7668 = vmatprep.subr.bf16.mxu0 %v5549
  %7669 = vmatpush1.bf16.msra.mxu0 %v5548
  %7670 = vmatprep.subr.bf16.mxu0 %v5551
  %7671 = vmatpush1.bf16.msra.mxu0 %v5550
  %7672 = vmatprep.subr.bf16.mxu0 %v5553
  %7673 = vmatpush1.bf16.msra.mxu0 %v5552
  %7674 = vmatprep.mubr.bf16.mxu0 %v2083
  %7675 = vmatmul.mubr.bf16.gmra.mrb[0].mxu0 %v2082
  %v7676 = vpop.f32.mrb[0].mxu0
  %v7677 = vadd.f32 %v7636, %v7676
  %v7678 = vpop.f32.mrb[0].mxu0
  %v7679 = vadd.f32 %v7638, %v7678
  %v7680 = vpop.f32.mrb[0].mxu0
  %v7681 = vpop.f32.mrb[0].mxu0
  %7682 = vdwg.mxu0
  %7683 = vmatprep.subr.bf16.mxu0 %v5555
  %7684 = vmatpush1.bf16.msra.mxu0 %v5554
  %7685 = vmatprep.subr.bf16.mxu0 %v5557
  %7686 = vmatpush1.bf16.msra.mxu0 %v5556
  %7687 = vmatprep.subr.bf16.mxu0 %v5559
  %7688 = vmatpush1.bf16.msra.mxu0 %v5558
  %7689 = vmatprep.subr.bf16.mxu0 %v5561
  %7690 = vmatpush1.bf16.msra.mxu0 %v5560
  %7691 = vmatprep.subr.bf16.mxu0 %v5563
  %7692 = vmatpush1.bf16.msra.mxu0 %v5562
  %7693 = vmatprep.subr.bf16.mxu0 %v5565
  %7694 = vmatpush1.bf16.msra.mxu0 %v5564
  %7695 = vmatprep.subr.bf16.mxu0 %v5567
  %7696 = vmatpush1.bf16.msra.mxu0 %v5566
  %7697 = vmatprep.subr.bf16.mxu0 %v5569
  %7698 = vmatpush1.bf16.msra.mxu0 %v5568
  %7699 = vmatprep.subr.bf16.mxu0 %v5571
  %7700 = vmatpush1.bf16.msra.mxu0 %v5570
  %7701 = vmatprep.subr.bf16.mxu0 %v5573
  %7702 = vmatpush1.bf16.msra.mxu0 %v5572
  %7703 = vmatprep.subr.bf16.mxu0 %v5575
  %7704 = vmatpush1.bf16.msra.mxu0 %v5574
  %7705 = vmatprep.subr.bf16.mxu0 %v5577
  %7706 = vmatpush1.bf16.msra.mxu0 %v5576
  %7707 = vmatprep.subr.bf16.mxu0 %v5579
  %7708 = vmatpush1.bf16.msra.mxu0 %v5578
  %7709 = vmatprep.subr.bf16.mxu0 %v5581
  %7710 = vmatpush1.bf16.msra.mxu0 %v5580
  %7711 = vmatprep.subr.bf16.mxu0 %v5583
  %7712 = vmatpush1.bf16.msra.mxu0 %v5582
  %7713 = vmatprep.subr.bf16.mxu0 %v5585
  %7714 = vmatpush1.bf16.msra.mxu0 %v5584
  %7715 = vmatprep.mubr.bf16.mxu0 %v2085
  %7716 = vmatmul.mubr.bf16.gmra.mrb[0].mxu0 %v2084
  %v7717 = vpop.f32.mrb[0].mxu0
  %v7718 = vadd.f32 %v7677, %v7717
  %v7719 = vpop.f32.mrb[0].mxu0
  %v7720 = vadd.f32 %v7679, %v7719
  %v7721 = vpop.f32.mrb[0].mxu0
  %v7722 = vpop.f32.mrb[0].mxu0
  %7723 = vdwg.mxu0
  %7724 = vmatprep.subr.bf16.mxu0 %v5587
  %7725 = vmatpush1.bf16.msra.mxu0 %v5586
  %7726 = vmatprep.subr.bf16.mxu0 %v5589
  %7727 = vmatpush1.bf16.msra.mxu0 %v5588
  %7728 = vmatprep.subr.bf16.mxu0 %v5591
  %7729 = vmatpush1.bf16.msra.mxu0 %v5590
  %7730 = vmatprep.subr.bf16.mxu0 %v5593
  %7731 = vmatpush1.bf16.msra.mxu0 %v5592
  %7732 = vmatprep.subr.bf16.mxu0 %v5595
  %7733 = vmatpush1.bf16.msra.mxu0 %v5594
  %7734 = vmatprep.subr.bf16.mxu0 %v5597
  %7735 = vmatpush1.bf16.msra.mxu0 %v5596
  %7736 = vmatprep.subr.bf16.mxu0 %v5599
  %7737 = vmatpush1.bf16.msra.mxu0 %v5598
  %7738 = vmatprep.subr.bf16.mxu0 %v5601
  %7739 = vmatpush1.bf16.msra.mxu0 %v5600
  %7740 = vmatprep.subr.bf16.mxu0 %v5603
  %7741 = vmatpush1.bf16.msra.mxu0 %v5602
  %7742 = vmatprep.subr.bf16.mxu0 %v5605
  %7743 = vmatpush1.bf16.msra.mxu0 %v5604
  %7744 = vmatprep.subr.bf16.mxu0 %v5607
  %7745 = vmatpush1.bf16.msra.mxu0 %v5606
  %7746 = vmatprep.subr.bf16.mxu0 %v5609
  %7747 = vmatpush1.bf16.msra.mxu0 %v5608
  %7748 = vmatprep.subr.bf16.mxu0 %v5611
  %7749 = vmatpush1.bf16.msra.mxu0 %v5610
  %7750 = vmatprep.subr.bf16.mxu0 %v5613
  %7751 = vmatpush1.bf16.msra.mxu0 %v5612
  %7752 = vmatprep.subr.bf16.mxu0 %v5615
  %7753 = vmatpush1.bf16.msra.mxu0 %v5614
  %7754 = vmatprep.subr.bf16.mxu0 %v5617
  %7755 = vmatpush1.bf16.msra.mxu0 %v5616
  %7756 = vmatprep.mubr.bf16.mxu0 %v2087
  %7757 = vmatmul.mubr.bf16.gmra.mrb[0].mxu0 %v2086
  %v7758 = vpop.f32.mrb[0].mxu0
  %v7759 = vadd.f32 %v7718, %v7758
  %v7760 = vpop.f32.mrb[0].mxu0
  %v7761 = vadd.f32 %v7720, %v7760
  %v7762 = vpop.f32.mrb[0].mxu0
  %v7763 = vpop.f32.mrb[0].mxu0
  %7764 = vdwg.mxu0
  %7765 = vmatprep.subr.bf16.mxu0 %v5619
  %7766 = vmatpush1.bf16.msra.mxu0 %v5618
  %7767 = vmatprep.subr.bf16.mxu0 %v5621
  %7768 = vmatpush1.bf16.msra.mxu0 %v5620
  %7769 = vmatprep.subr.bf16.mxu0 %v5623
  %7770 = vmatpush1.bf16.msra.mxu0 %v5622
  %7771 = vmatprep.subr.bf16.mxu0 %v5625
  %7772 = vmatpush1.bf16.msra.mxu0 %v5624
  %7773 = vmatprep.subr.bf16.mxu0 %v5627
  %7774 = vmatpush1.bf16.msra.mxu0 %v5626
  %7775 = vmatprep.subr.bf16.mxu0 %v5629
  %7776 = vmatpush1.bf16.msra.mxu0 %v5628
  %7777 = vmatprep.subr.bf16.mxu0 %v5631
  %7778 = vmatpush1.bf16.msra.mxu0 %v5630
  %7779 = vmatprep.subr.bf16.mxu0 %v5633
  %7780 = vmatpush1.bf16.msra.mxu0 %v5632
  %7781 = vmatprep.subr.bf16.mxu0 %v5635
  %7782 = vmatpush1.bf16.msra.mxu0 %v5634
  %7783 = vmatprep.subr.bf16.mxu0 %v5637
  %7784 = vmatpush1.bf16.msra.mxu0 %v5636
  %7785 = vmatprep.subr.bf16.mxu0 %v5639
  %7786 = vmatpush1.bf16.msra.mxu0 %v5638
  %7787 = vmatprep.subr.bf16.mxu0 %v5641
  %7788 = vmatpush1.bf16.msra.mxu0 %v5640
  %7789 = vmatprep.subr.bf16.mxu0 %v5643
  %7790 = vmatpush1.bf16.msra.mxu0 %v5642
  %7791 = vmatprep.subr.bf16.mxu0 %v5645
  %7792 = vmatpush1.bf16.msra.mxu0 %v5644
  %7793 = vmatprep.subr.bf16.mxu0 %v5647
  %7794 = vmatpush1.bf16.msra.mxu0 %v5646
  %7795 = vmatprep.subr.bf16.mxu0 %v5649
  %7796 = vmatpush1.bf16.msra.mxu0 %v5648
  %7797 = vmatprep.mubr.bf16.mxu0 %v2089
  %7798 = vmatmul.mubr.bf16.gmra.mrb[0].mxu0 %v2088
  %v7799 = vpop.f32.mrb[0].mxu0
  %v7800 = vadd.f32 %v7759, %v7799
  %v7801 = vpop.f32.mrb[0].mxu0
  %v7802 = vadd.f32 %v7761, %v7801
  %v7803 = vpop.f32.mrb[0].mxu0
  %v7804 = vpop.f32.mrb[0].mxu0
  %7805 = vdwg.mxu0
  %7806 = vmatprep.subr.bf16.mxu0 %v5651
  %7807 = vmatpush1.bf16.msra.mxu0 %v5650
  %7808 = vmatprep.subr.bf16.mxu0 %v5653
  %7809 = vmatpush1.bf16.msra.mxu0 %v5652
  %7810 = vmatprep.subr.bf16.mxu0 %v5655
  %7811 = vmatpush1.bf16.msra.mxu0 %v5654
  %7812 = vmatprep.subr.bf16.mxu0 %v5657
  %7813 = vmatpush1.bf16.msra.mxu0 %v5656
  %7814 = vmatprep.subr.bf16.mxu0 %v5659
  %7815 = vmatpush1.bf16.msra.mxu0 %v5658
  %7816 = vmatprep.subr.bf16.mxu0 %v5661
  %7817 = vmatpush1.bf16.msra.mxu0 %v5660
  %7818 = vmatprep.subr.bf16.mxu0 %v5663
  %7819 = vmatpush1.bf16.msra.mxu0 %v5662
  %7820 = vmatprep.subr.bf16.mxu0 %v5665
  %7821 = vmatpush1.bf16.msra.mxu0 %v5664
  %7822 = vmatprep.subr.bf16.mxu0 %v5667
  %7823 = vmatpush1.bf16.msra.mxu0 %v5666
  %7824 = vmatprep.subr.bf16.mxu0 %v5669
  %7825 = vmatpush1.bf16.msra.mxu0 %v5668
  %7826 = vmatprep.subr.bf16.mxu0 %v5671
  %7827 = vmatpush1.bf16.msra.mxu0 %v5670
  %7828 = vmatprep.subr.bf16.mxu0 %v5673
  %7829 = vmatpush1.bf16.msra.mxu0 %v5672
  %7830 = vmatprep.subr.bf16.mxu0 %v5675
  %7831 = vmatpush1.bf16.msra.mxu0 %v5674
  %7832 = vmatprep.subr.bf16.mxu0 %v5677
  %7833 = vmatpush1.bf16.msra.mxu0 %v5676
  %7834 = vmatprep.subr.bf16.mxu0 %v5679
  %7835 = vmatpush1.bf16.msra.mxu0 %v5678
  %7836 = vmatprep.subr.bf16.mxu0 %v5681
  %7837 = vmatpush1.bf16.msra.mxu0 %v5680
  %7838 = vmatprep.mubr.bf16.mxu0 %v2091
  %7839 = vmatmul.mubr.bf16.gmra.mrb[0].mxu0 %v2090
  %v7840 = vpop.f32.mrb[0].mxu0
  %v7841 = vadd.f32 %v7800, %v7840
  %v7842 = vpop.f32.mrb[0].mxu0
  %v7843 = vadd.f32 %v7802, %v7842
  %v7844 = vpop.f32.mrb[0].mxu0
  %v7845 = vpop.f32.mrb[0].mxu0
  %7846 = vdwg.mxu0
  %7847 = vmatprep.subr.bf16.mxu0 %v5683
  %7848 = vmatpush1.bf16.msra.mxu0 %v5682
  %7849 = vmatprep.subr.bf16.mxu0 %v5685
  %7850 = vmatpush1.bf16.msra.mxu0 %v5684
  %7851 = vmatprep.subr.bf16.mxu0 %v5687
  %7852 = vmatpush1.bf16.msra.mxu0 %v5686
  %7853 = vmatprep.subr.bf16.mxu0 %v5689
  %7854 = vmatpush1.bf16.msra.mxu0 %v5688
  %7855 = vmatprep.subr.bf16.mxu0 %v5691
  %7856 = vmatpush1.bf16.msra.mxu0 %v5690
  %7857 = vmatprep.subr.bf16.mxu0 %v5693
  %7858 = vmatpush1.bf16.msra.mxu0 %v5692
  %7859 = vmatprep.subr.bf16.mxu0 %v5695
  %7860 = vmatpush1.bf16.msra.mxu0 %v5694
  %7861 = vmatprep.subr.bf16.mxu0 %v5697
  %7862 = vmatpush1.bf16.msra.mxu0 %v5696
  %7863 = vmatprep.subr.bf16.mxu0 %v5699
  %7864 = vmatpush1.bf16.msra.mxu0 %v5698
  %7865 = vmatprep.subr.bf16.mxu0 %v5701
  %7866 = vmatpush1.bf16.msra.mxu0 %v5700
  %7867 = vmatprep.subr.bf16.mxu0 %v5703
  %7868 = vmatpush1.bf16.msra.mxu0 %v5702
  %7869 = vmatprep.subr.bf16.mxu0 %v5705
  %7870 = vmatpush1.bf16.msra.mxu0 %v5704
  %7871 = vmatprep.subr.bf16.mxu0 %v5707
  %7872 = vmatpush1.bf16.msra.mxu0 %v5706
  %7873 = vmatprep.subr.bf16.mxu0 %v5709
  %7874 = vmatpush1.bf16.msra.mxu0 %v5708
  %7875 = vmatprep.subr.bf16.mxu0 %v5711
  %7876 = vmatpush1.bf16.msra.mxu0 %v5710
  %7877 = vmatprep.subr.bf16.mxu0 %v5713
  %7878 = vmatpush1.bf16.msra.mxu0 %v5712
  %7879 = vmatprep.mubr.bf16.mxu0 %v2093
  %7880 = vmatmul.mubr.bf16.gmra.mrb[0].mxu0 %v2092
  %v7881 = vpop.f32.mrb[0].mxu0
  %v7882 = vadd.f32 %v7841, %v7881
  %v7883 = vpop.f32.mrb[0].mxu0
  %v7884 = vadd.f32 %v7843, %v7883
  %v7885 = vpop.f32.mrb[0].mxu0
  %v7886 = vpop.f32.mrb[0].mxu0
  %7887 = vdwg.mxu0
  %7888 = vmatprep.subr.bf16.mxu0 %v5715
  %7889 = vmatpush1.bf16.msra.mxu0 %v5714
  %7890 = vmatprep.subr.bf16.mxu0 %v5717
  %7891 = vmatpush1.bf16.msra.mxu0 %v5716
  %7892 = vmatprep.subr.bf16.mxu0 %v5719
  %7893 = vmatpush1.bf16.msra.mxu0 %v5718
  %7894 = vmatprep.subr.bf16.mxu0 %v5721
  %7895 = vmatpush1.bf16.msra.mxu0 %v5720
  %7896 = vmatprep.subr.bf16.mxu0 %v5723
  %7897 = vmatpush1.bf16.msra.mxu0 %v5722
  %7898 = vmatprep.subr.bf16.mxu0 %v5725
  %7899 = vmatpush1.bf16.msra.mxu0 %v5724
  %7900 = vmatprep.subr.bf16.mxu0 %v5727
  %7901 = vmatpush1.bf16.msra.mxu0 %v5726
  %7902 = vmatprep.subr.bf16.mxu0 %v5729
  %7903 = vmatpush1.bf16.msra.mxu0 %v5728
  %7904 = vmatprep.subr.bf16.mxu0 %v5731
  %7905 = vmatpush1.bf16.msra.mxu0 %v5730
  %7906 = vmatprep.subr.bf16.mxu0 %v5733
  %7907 = vmatpush1.bf16.msra.mxu0 %v5732
  %7908 = vmatprep.subr.bf16.mxu0 %v5735
  %7909 = vmatpush1.bf16.msra.mxu0 %v5734
  %7910 = vmatprep.subr.bf16.mxu0 %v5737
  %7911 = vmatpush1.bf16.msra.mxu0 %v5736
  %7912 = vmatprep.subr.bf16.mxu0 %v5739
  %7913 = vmatpush1.bf16.msra.mxu0 %v5738
  %7914 = vmatprep.subr.bf16.mxu0 %v5741
  %7915 = vmatpush1.bf16.msra.mxu0 %v5740
  %7916 = vmatprep.subr.bf16.mxu0 %v5743
  %7917 = vmatpush1.bf16.msra.mxu0 %v5742
  %7918 = vmatprep.subr.bf16.mxu0 %v5745
  %7919 = vmatpush1.bf16.msra.mxu0 %v5744
  %7920 = vmatprep.mubr.bf16.mxu0 %v2095
  %7921 = vmatmul.mubr.bf16.gmra.mrb[0].mxu0 %v2094
  %v7922 = vpop.f32.mrb[0].mxu0
  %v7923 = vadd.f32 %v7882, %v7922
  %v7924 = vpop.f32.mrb[0].mxu0
  %v7925 = vadd.f32 %v7884, %v7924
  %v7926 = vpop.f32.mrb[0].mxu0
  %v7927 = vpop.f32.mrb[0].mxu0
  %7928 = vdwg.mxu0
  %7929 = vmatprep.subr.bf16.mxu0 %v5747
  %7930 = vmatpush1.bf16.msra.mxu0 %v5746
  %7931 = vmatprep.subr.bf16.mxu0 %v5749
  %7932 = vmatpush1.bf16.msra.mxu0 %v5748
  %7933 = vmatprep.subr.bf16.mxu0 %v5751
  %7934 = vmatpush1.bf16.msra.mxu0 %v5750
  %7935 = vmatprep.subr.bf16.mxu0 %v5753
  %7936 = vmatpush1.bf16.msra.mxu0 %v5752
  %7937 = vmatprep.subr.bf16.mxu0 %v5755
  %7938 = vmatpush1.bf16.msra.mxu0 %v5754
  %7939 = vmatprep.subr.bf16.mxu0 %v5757
  %7940 = vmatpush1.bf16.msra.mxu0 %v5756
  %7941 = vmatprep.subr.bf16.mxu0 %v5759
  %7942 = vmatpush1.bf16.msra.mxu0 %v5758
  %7943 = vmatprep.subr.bf16.mxu0 %v5761
  %7944 = vmatpush1.bf16.msra.mxu0 %v5760
  %7945 = vmatprep.subr.bf16.mxu0 %v5763
  %7946 = vmatpush1.bf16.msra.mxu0 %v5762
  %7947 = vmatprep.subr.bf16.mxu0 %v5765
  %7948 = vmatpush1.bf16.msra.mxu0 %v5764
  %7949 = vmatprep.subr.bf16.mxu0 %v5767
  %7950 = vmatpush1.bf16.msra.mxu0 %v5766
  %7951 = vmatprep.subr.bf16.mxu0 %v5769
  %7952 = vmatpush1.bf16.msra.mxu0 %v5768
  %7953 = vmatprep.subr.bf16.mxu0 %v5771
  %7954 = vmatpush1.bf16.msra.mxu0 %v5770
  %7955 = vmatprep.subr.bf16.mxu0 %v5773
  %7956 = vmatpush1.bf16.msra.mxu0 %v5772
  %7957 = vmatprep.subr.bf16.mxu0 %v5775
  %7958 = vmatpush1.bf16.msra.mxu0 %v5774
  %7959 = vmatprep.subr.bf16.mxu0 %v5777
  %7960 = vmatpush1.bf16.msra.mxu0 %v5776
  %7961 = vmatprep.mubr.bf16.mxu0 %v2097
  %7962 = vmatmul.mubr.bf16.gmra.mrb[0].mxu0 %v2096
  %v7963 = vpop.f32.mrb[0].mxu0
  %v7964 = vadd.f32 %v7923, %v7963
  %v7965 = vpop.f32.mrb[0].mxu0
  %v7966 = vadd.f32 %v7925, %v7965
  %v7967 = vpop.f32.mrb[0].mxu0
  %v7968 = vpop.f32.mrb[0].mxu0
  %7969 = vdwg.mxu0
  %7970 = vmatprep.subr.bf16.mxu0 %v5779
  %7971 = vmatpush1.bf16.msra.mxu0 %v5778
  %7972 = vmatprep.subr.bf16.mxu0 %v5781
  %7973 = vmatpush1.bf16.msra.mxu0 %v5780
  %7974 = vmatprep.subr.bf16.mxu0 %v5783
  %7975 = vmatpush1.bf16.msra.mxu0 %v5782
  %7976 = vmatprep.subr.bf16.mxu0 %v5785
  %7977 = vmatpush1.bf16.msra.mxu0 %v5784
  %7978 = vmatprep.subr.bf16.mxu0 %v5787
  %7979 = vmatpush1.bf16.msra.mxu0 %v5786
  %7980 = vmatprep.subr.bf16.mxu0 %v5789
  %7981 = vmatpush1.bf16.msra.mxu0 %v5788
  %7982 = vmatprep.subr.bf16.mxu0 %v5791
  %7983 = vmatpush1.bf16.msra.mxu0 %v5790
  %7984 = vmatprep.subr.bf16.mxu0 %v5793
  %7985 = vmatpush1.bf16.msra.mxu0 %v5792
  %7986 = vmatprep.subr.bf16.mxu0 %v5795
  %7987 = vmatpush1.bf16.msra.mxu0 %v5794
  %7988 = vmatprep.subr.bf16.mxu0 %v5797
  %7989 = vmatpush1.bf16.msra.mxu0 %v5796
  %7990 = vmatprep.subr.bf16.mxu0 %v5799
  %7991 = vmatpush1.bf16.msra.mxu0 %v5798
  %7992 = vmatprep.subr.bf16.mxu0 %v5801
  %7993 = vmatpush1.bf16.msra.mxu0 %v5800
  %7994 = vmatprep.subr.bf16.mxu0 %v5803
  %7995 = vmatpush1.bf16.msra.mxu0 %v5802
  %7996 = vmatprep.subr.bf16.mxu0 %v5805
  %7997 = vmatpush1.bf16.msra.mxu0 %v5804
  %7998 = vmatprep.subr.bf16.mxu0 %v5807
  %7999 = vmatpush1.bf16.msra.mxu0 %v5806
  %8000 = vmatprep.subr.bf16.mxu0 %v5809
  %8001 = vmatpush1.bf16.msra.mxu0 %v5808
  %8002 = vmatprep.mubr.bf16.mxu0 %v2099
  %8003 = vmatmul.mubr.bf16.gmra.mrb[0].mxu0 %v2098
  %v8004 = vpop.f32.mrb[0].mxu0
  %v8005 = vadd.f32 %v7964, %v8004
  %v8006 = vpop.f32.mrb[0].mxu0
  %v8007 = vadd.f32 %v7966, %v8006
  %v8008 = vpop.f32.mrb[0].mxu0
  %v8009 = vpop.f32.mrb[0].mxu0
  %8010 = vdwg.mxu0
  %8011 = vmatprep.subr.bf16.mxu0 %v5811
  %8012 = vmatpush1.bf16.msra.mxu0 %v5810
  %8013 = vmatprep.subr.bf16.mxu0 %v5813
  %8014 = vmatpush1.bf16.msra.mxu0 %v5812
  %8015 = vmatprep.subr.bf16.mxu0 %v5815
  %8016 = vmatpush1.bf16.msra.mxu0 %v5814
  %8017 = vmatprep.subr.bf16.mxu0 %v5817
  %8018 = vmatpush1.bf16.msra.mxu0 %v5816
  %8019 = vmatprep.subr.bf16.mxu0 %v5819
  %8020 = vmatpush1.bf16.msra.mxu0 %v5818
  %8021 = vmatprep.subr.bf16.mxu0 %v5821
  %8022 = vmatpush1.bf16.msra.mxu0 %v5820
  %8023 = vmatprep.subr.bf16.mxu0 %v5823
  %8024 = vmatpush1.bf16.msra.mxu0 %v5822
  %8025 = vmatprep.subr.bf16.mxu0 %v5825
  %8026 = vmatpush1.bf16.msra.mxu0 %v5824
  %8027 = vmatprep.subr.bf16.mxu0 %v5827
  %8028 = vmatpush1.bf16.msra.mxu0 %v5826
  %8029 = vmatprep.subr.bf16.mxu0 %v5829
  %8030 = vmatpush1.bf16.msra.mxu0 %v5828
  %8031 = vmatprep.subr.bf16.mxu0 %v5831
  %8032 = vmatpush1.bf16.msra.mxu0 %v5830
  %8033 = vmatprep.subr.bf16.mxu0 %v5833
  %8034 = vmatpush1.bf16.msra.mxu0 %v5832
  %8035 = vmatprep.subr.bf16.mxu0 %v5835
  %8036 = vmatpush1.bf16.msra.mxu0 %v5834
  %8037 = vmatprep.subr.bf16.mxu0 %v5837
  %8038 = vmatpush1.bf16.msra.mxu0 %v5836
  %8039 = vmatprep.subr.bf16.mxu0 %v5839
  %8040 = vmatpush1.bf16.msra.mxu0 %v5838
  %8041 = vmatprep.subr.bf16.mxu0 %v5841
  %8042 = vmatpush1.bf16.msra.mxu0 %v5840
  %8043 = vmatprep.mubr.bf16.mxu0 %v2101
  %8044 = vmatmul.mubr.bf16.gmra.mrb[0].mxu0 %v2100
  %v8045 = vpop.f32.mrb[0].mxu0
  %v8046 = vadd.f32 %v8005, %v8045
  %v8047 = vpop.f32.mrb[0].mxu0
  %v8048 = vadd.f32 %v8007, %v8047
  %v8049 = vpop.f32.mrb[0].mxu0
  %v8050 = vpop.f32.mrb[0].mxu0
  %8051 = vdwg.mxu0
  %8052 = vmatprep.subr.bf16.mxu0 %v5843
  %8053 = vmatpush1.bf16.msra.mxu0 %v5842
  %8054 = vmatprep.subr.bf16.mxu0 %v5845
  %8055 = vmatpush1.bf16.msra.mxu0 %v5844
  %8056 = vmatprep.subr.bf16.mxu0 %v5847
  %8057 = vmatpush1.bf16.msra.mxu0 %v5846
  %8058 = vmatprep.subr.bf16.mxu0 %v5849
  %8059 = vmatpush1.bf16.msra.mxu0 %v5848
  %8060 = vmatprep.subr.bf16.mxu0 %v5851
  %8061 = vmatpush1.bf16.msra.mxu0 %v5850
  %8062 = vmatprep.subr.bf16.mxu0 %v5853
  %8063 = vmatpush1.bf16.msra.mxu0 %v5852
  %8064 = vmatprep.subr.bf16.mxu0 %v5855
  %8065 = vmatpush1.bf16.msra.mxu0 %v5854
  %8066 = vmatprep.subr.bf16.mxu0 %v5857
  %8067 = vmatpush1.bf16.msra.mxu0 %v5856
  %8068 = vmatprep.subr.bf16.mxu0 %v5859
  %8069 = vmatpush1.bf16.msra.mxu0 %v5858
  %8070 = vmatprep.subr.bf16.mxu0 %v5861
  %8071 = vmatpush1.bf16.msra.mxu0 %v5860
  %8072 = vmatprep.subr.bf16.mxu0 %v5863
  %8073 = vmatpush1.bf16.msra.mxu0 %v5862
  %8074 = vmatprep.subr.bf16.mxu0 %v5865
  %8075 = vmatpush1.bf16.msra.mxu0 %v5864
  %8076 = vmatprep.subr.bf16.mxu0 %v5867
  %8077 = vmatpush1.bf16.msra.mxu0 %v5866
  %8078 = vmatprep.subr.bf16.mxu0 %v5869
  %8079 = vmatpush1.bf16.msra.mxu0 %v5868
  %8080 = vmatprep.subr.bf16.mxu0 %v5871
  %8081 = vmatpush1.bf16.msra.mxu0 %v5870
  %8082 = vmatprep.subr.bf16.mxu0 %v5873
  %8083 = vmatpush1.bf16.msra.mxu0 %v5872
  %8084 = vmatprep.mubr.bf16.mxu0 %v2103
  %8085 = vmatmul.mubr.bf16.gmra.mrb[0].mxu0 %v2102
  %v8086 = vpop.f32.mrb[0].mxu0
  %v8087 = vadd.f32 %v8046, %v8086
  %v8088 = vpop.f32.mrb[0].mxu0
  %v8089 = vadd.f32 %v8048, %v8088
  %v8090 = vpop.f32.mrb[0].mxu0
  %v8091 = vpop.f32.mrb[0].mxu0
  %8092 = vdwg.mxu0
  %8093 = vmatprep.subr.bf16.mxu0 %v5875
  %8094 = vmatpush1.bf16.msra.mxu0 %v5874
  %8095 = vmatprep.subr.bf16.mxu0 %v5877
  %8096 = vmatpush1.bf16.msra.mxu0 %v5876
  %8097 = vmatprep.subr.bf16.mxu0 %v5879
  %8098 = vmatpush1.bf16.msra.mxu0 %v5878
  %8099 = vmatprep.subr.bf16.mxu0 %v5881
  %8100 = vmatpush1.bf16.msra.mxu0 %v5880
  %8101 = vmatprep.subr.bf16.mxu0 %v5883
  %8102 = vmatpush1.bf16.msra.mxu0 %v5882
  %8103 = vmatprep.subr.bf16.mxu0 %v5885
  %8104 = vmatpush1.bf16.msra.mxu0 %v5884
  %8105 = vmatprep.subr.bf16.mxu0 %v5887
  %8106 = vmatpush1.bf16.msra.mxu0 %v5886
  %8107 = vmatprep.subr.bf16.mxu0 %v5889
  %8108 = vmatpush1.bf16.msra.mxu0 %v5888
  %8109 = vmatprep.subr.bf16.mxu0 %v5891
  %8110 = vmatpush1.bf16.msra.mxu0 %v5890
  %8111 = vmatprep.subr.bf16.mxu0 %v5893
  %8112 = vmatpush1.bf16.msra.mxu0 %v5892
  %8113 = vmatprep.subr.bf16.mxu0 %v5895
  %8114 = vmatpush1.bf16.msra.mxu0 %v5894
  %8115 = vmatprep.subr.bf16.mxu0 %v5897
  %8116 = vmatpush1.bf16.msra.mxu0 %v5896
  %8117 = vmatprep.subr.bf16.mxu0 %v5899
  %8118 = vmatpush1.bf16.msra.mxu0 %v5898
  %8119 = vmatprep.subr.bf16.mxu0 %v5901
  %8120 = vmatpush1.bf16.msra.mxu0 %v5900
  %8121 = vmatprep.subr.bf16.mxu0 %v5903
  %8122 = vmatpush1.bf16.msra.mxu0 %v5902
  %8123 = vmatprep.subr.bf16.mxu0 %v5905
  %8124 = vmatpush1.bf16.msra.mxu0 %v5904
  %8125 = vmatprep.mubr.bf16.mxu0 %v2105
  %8126 = vmatmul.mubr.bf16.gmra.mrb[0].mxu0 %v2104
  %v8127 = vpop.f32.mrb[0].mxu0
  %v8128 = vadd.f32 %v8087, %v8127
  %v8129 = vpop.f32.mrb[0].mxu0
  %v8130 = vadd.f32 %v8089, %v8129
  %v8131 = vpop.f32.mrb[0].mxu0
  %v8132 = vpop.f32.mrb[0].mxu0
  %8133 = vdwg.mxu0
  %8134 = vmatprep.subr.bf16.mxu0 %v5907
  %8135 = vmatpush1.bf16.msra.mxu0 %v5906
  %8136 = vmatprep.subr.bf16.mxu0 %v5909
  %8137 = vmatpush1.bf16.msra.mxu0 %v5908
  %8138 = vmatprep.subr.bf16.mxu0 %v5911
  %8139 = vmatpush1.bf16.msra.mxu0 %v5910
  %8140 = vmatprep.subr.bf16.mxu0 %v5913
  %8141 = vmatpush1.bf16.msra.mxu0 %v5912
  %8142 = vmatprep.subr.bf16.mxu0 %v5915
  %8143 = vmatpush1.bf16.msra.mxu0 %v5914
  %8144 = vmatprep.subr.bf16.mxu0 %v5917
  %8145 = vmatpush1.bf16.msra.mxu0 %v5916
  %8146 = vmatprep.subr.bf16.mxu0 %v5919
  %8147 = vmatpush1.bf16.msra.mxu0 %v5918
  %8148 = vmatprep.subr.bf16.mxu0 %v5921
  %8149 = vmatpush1.bf16.msra.mxu0 %v5920
  %8150 = vmatprep.subr.bf16.mxu0 %v5923
  %8151 = vmatpush1.bf16.msra.mxu0 %v5922
  %8152 = vmatprep.subr.bf16.mxu0 %v5925
  %8153 = vmatpush1.bf16.msra.mxu0 %v5924
  %8154 = vmatprep.subr.bf16.mxu0 %v5927
  %8155 = vmatpush1.bf16.msra.mxu0 %v5926
  %8156 = vmatprep.subr.bf16.mxu0 %v5929
  %8157 = vmatpush1.bf16.msra.mxu0 %v5928
  %8158 = vmatprep.subr.bf16.mxu0 %v5931
  %8159 = vmatpush1.bf16.msra.mxu0 %v5930
  %8160 = vmatprep.subr.bf16.mxu0 %v5933
  %8161 = vmatpush1.bf16.msra.mxu0 %v5932
  %8162 = vmatprep.subr.bf16.mxu0 %v5935
  %8163 = vmatpush1.bf16.msra.mxu0 %v5934
  %8164 = vmatprep.subr.bf16.mxu0 %v5937
  %8165 = vmatpush1.bf16.msra.mxu0 %v5936
  %8166 = vmatprep.mubr.bf16.mxu0 %v2107
  %8167 = vmatmul.mubr.bf16.gmra.mrb[0].mxu0 %v2106
  %v8168 = vpop.f32.mrb[0].mxu0
  %v8169 = vadd.f32 %v8128, %v8168
  %v8170 = vpop.f32.mrb[0].mxu0
  %v8171 = vadd.f32 %v8130, %v8170
  %v8172 = vpop.f32.mrb[0].mxu0
  %v8173 = vpop.f32.mrb[0].mxu0
  %8174 = vdwg.mxu0
  %8175 = vmatprep.subr.bf16.mxu0 %v5939
  %8176 = vmatpush1.bf16.msra.mxu0 %v5938
  %8177 = vmatprep.subr.bf16.mxu0 %v5941
  %8178 = vmatpush1.bf16.msra.mxu0 %v5940
  %8179 = vmatprep.subr.bf16.mxu0 %v5943
  %8180 = vmatpush1.bf16.msra.mxu0 %v5942
  %8181 = vmatprep.subr.bf16.mxu0 %v5945
  %8182 = vmatpush1.bf16.msra.mxu0 %v5944
  %8183 = vmatprep.subr.bf16.mxu0 %v5947
  %8184 = vmatpush1.bf16.msra.mxu0 %v5946
  %8185 = vmatprep.subr.bf16.mxu0 %v5949
  %8186 = vmatpush1.bf16.msra.mxu0 %v5948
  %8187 = vmatprep.subr.bf16.mxu0 %v5951
  %8188 = vmatpush1.bf16.msra.mxu0 %v5950
  %8189 = vmatprep.subr.bf16.mxu0 %v5953
  %8190 = vmatpush1.bf16.msra.mxu0 %v5952
  %8191 = vmatprep.subr.bf16.mxu0 %v5955
  %8192 = vmatpush1.bf16.msra.mxu0 %v5954
  %8193 = vmatprep.subr.bf16.mxu0 %v5957
  %8194 = vmatpush1.bf16.msra.mxu0 %v5956
  %8195 = vmatprep.subr.bf16.mxu0 %v5959
  %8196 = vmatpush1.bf16.msra.mxu0 %v5958
  %8197 = vmatprep.subr.bf16.mxu0 %v5961
  %8198 = vmatpush1.bf16.msra.mxu0 %v5960
  %8199 = vmatprep.subr.bf16.mxu0 %v5963
  %8200 = vmatpush1.bf16.msra.mxu0 %v5962
  %8201 = vmatprep.subr.bf16.mxu0 %v5965
  %8202 = vmatpush1.bf16.msra.mxu0 %v5964
  %8203 = vmatprep.subr.bf16.mxu0 %v5967
  %8204 = vmatpush1.bf16.msra.mxu0 %v5966
  %8205 = vmatprep.subr.bf16.mxu0 %v5969
  %8206 = vmatpush1.bf16.msra.mxu0 %v5968
  %8207 = vmatprep.mubr.bf16.mxu0 %v2109
  %8208 = vmatmul.mubr.bf16.gmra.mrb[0].mxu0 %v2108
  %v8209 = vpop.f32.mrb[0].mxu0
  %v8210 = vadd.f32 %v8169, %v8209
  %v8211 = vpop.f32.mrb[0].mxu0
  %v8212 = vadd.f32 %v8171, %v8211
  %v8213 = vpop.f32.mrb[0].mxu0
  %v8214 = vpop.f32.mrb[0].mxu0
  %8215 = vdwg.mxu0
  %8216 = vmatprep.subr.bf16.mxu0 %v5971
  %8217 = vmatpush1.bf16.msra.mxu0 %v5970
  %8218 = vmatprep.subr.bf16.mxu0 %v5973
  %8219 = vmatpush1.bf16.msra.mxu0 %v5972
  %8220 = vmatprep.subr.bf16.mxu0 %v5975
  %8221 = vmatpush1.bf16.msra.mxu0 %v5974
  %8222 = vmatprep.subr.bf16.mxu0 %v5977
  %8223 = vmatpush1.bf16.msra.mxu0 %v5976
  %8224 = vmatprep.subr.bf16.mxu0 %v5979
  %8225 = vmatpush1.bf16.msra.mxu0 %v5978
  %8226 = vmatprep.subr.bf16.mxu0 %v5981
  %8227 = vmatpush1.bf16.msra.mxu0 %v5980
  %8228 = vmatprep.subr.bf16.mxu0 %v5983
  %8229 = vmatpush1.bf16.msra.mxu0 %v5982
  %8230 = vmatprep.subr.bf16.mxu0 %v5985
  %8231 = vmatpush1.bf16.msra.mxu0 %v5984
  %8232 = vmatprep.subr.bf16.mxu0 %v5987
  %8233 = vmatpush1.bf16.msra.mxu0 %v5986
  %8234 = vmatprep.subr.bf16.mxu0 %v5989
  %8235 = vmatpush1.bf16.msra.mxu0 %v5988
  %8236 = vmatprep.subr.bf16.mxu0 %v5991
  %8237 = vmatpush1.bf16.msra.mxu0 %v5990
  %8238 = vmatprep.subr.bf16.mxu0 %v5993
  %8239 = vmatpush1.bf16.msra.mxu0 %v5992
  %8240 = vmatprep.subr.bf16.mxu0 %v5995
  %8241 = vmatpush1.bf16.msra.mxu0 %v5994
  %8242 = vmatprep.subr.bf16.mxu0 %v5997
  %8243 = vmatpush1.bf16.msra.mxu0 %v5996
  %8244 = vmatprep.subr.bf16.mxu0 %v5999
  %8245 = vmatpush1.bf16.msra.mxu0 %v5998
  %8246 = vmatprep.subr.bf16.mxu0 %v6001
  %8247 = vmatpush1.bf16.msra.mxu0 %v6000
  %8248 = vmatprep.mubr.bf16.mxu0 %v2111
  %8249 = vmatmul.mubr.bf16.gmra.mrb[0].mxu0 %v2110
  %v8250 = vpop.f32.mrb[0].mxu0
  %v8251 = vadd.f32 %v8210, %v8250
  %v8252 = vpop.f32.mrb[0].mxu0
  %v8253 = vadd.f32 %v8212, %v8252
  %v8254 = vpop.f32.mrb[0].mxu0
  %v8255 = vpop.f32.mrb[0].mxu0
  %8256 = vdwg.mxu0
  %8257 = vmatprep.subr.bf16.mxu0 %v6003
  %8258 = vmatpush1.bf16.msra.mxu0 %v6002
  %8259 = vmatprep.subr.bf16.mxu0 %v6005
  %8260 = vmatpush1.bf16.msra.mxu0 %v6004
  %8261 = vmatprep.subr.bf16.mxu0 %v6007
  %8262 = vmatpush1.bf16.msra.mxu0 %v6006
  %8263 = vmatprep.subr.bf16.mxu0 %v6009
  %8264 = vmatpush1.bf16.msra.mxu0 %v6008
  %8265 = vmatprep.subr.bf16.mxu0 %v6011
  %8266 = vmatpush1.bf16.msra.mxu0 %v6010
  %8267 = vmatprep.subr.bf16.mxu0 %v6013
  %8268 = vmatpush1.bf16.msra.mxu0 %v6012
  %8269 = vmatprep.subr.bf16.mxu0 %v6015
  %8270 = vmatpush1.bf16.msra.mxu0 %v6014
  %8271 = vmatprep.subr.bf16.mxu0 %v6017
  %8272 = vmatpush1.bf16.msra.mxu0 %v6016
  %8273 = vmatprep.subr.bf16.mxu0 %v6019
  %8274 = vmatpush1.bf16.msra.mxu0 %v6018
  %8275 = vmatprep.subr.bf16.mxu0 %v6021
  %8276 = vmatpush1.bf16.msra.mxu0 %v6020
  %8277 = vmatprep.subr.bf16.mxu0 %v6023
  %8278 = vmatpush1.bf16.msra.mxu0 %v6022
  %8279 = vmatprep.subr.bf16.mxu0 %v6025
  %8280 = vmatpush1.bf16.msra.mxu0 %v6024
  %8281 = vmatprep.subr.bf16.mxu0 %v6027
  %8282 = vmatpush1.bf16.msra.mxu0 %v6026
  %8283 = vmatprep.subr.bf16.mxu0 %v6029
  %8284 = vmatpush1.bf16.msra.mxu0 %v6028
  %8285 = vmatprep.subr.bf16.mxu0 %v6031
  %8286 = vmatpush1.bf16.msra.mxu0 %v6030
  %8287 = vmatprep.subr.bf16.mxu0 %v6033
  %8288 = vmatpush1.bf16.msra.mxu0 %v6032
  %8289 = vmatprep.mubr.bf16.mxu0 %v2113
  %8290 = vmatmul.mubr.bf16.gmra.mrb[0].mxu0 %v2112
  %v8291 = vpop.f32.mrb[0].mxu0
  %v8292 = vadd.f32 %v8251, %v8291
  %v8293 = vpop.f32.mrb[0].mxu0
  %v8294 = vadd.f32 %v8253, %v8293
  %v8295 = vpop.f32.mrb[0].mxu0
  %v8296 = vpop.f32.mrb[0].mxu0
  %8297 = vdwg.mxu0
  %8298 = vmatprep.subr.bf16.mxu0 %v6035
  %8299 = vmatpush1.bf16.msra.mxu0 %v6034
  %8300 = vmatprep.subr.bf16.mxu0 %v6037
  %8301 = vmatpush1.bf16.msra.mxu0 %v6036
  %8302 = vmatprep.subr.bf16.mxu0 %v6039
  %8303 = vmatpush1.bf16.msra.mxu0 %v6038
  %8304 = vmatprep.subr.bf16.mxu0 %v6041
  %8305 = vmatpush1.bf16.msra.mxu0 %v6040
  %8306 = vmatprep.subr.bf16.mxu0 %v6043
  %8307 = vmatpush1.bf16.msra.mxu0 %v6042
  %8308 = vmatprep.subr.bf16.mxu0 %v6045
  %8309 = vmatpush1.bf16.msra.mxu0 %v6044
  %8310 = vmatprep.subr.bf16.mxu0 %v6047
  %8311 = vmatpush1.bf16.msra.mxu0 %v6046
  %8312 = vmatprep.subr.bf16.mxu0 %v6049
  %8313 = vmatpush1.bf16.msra.mxu0 %v6048
  %8314 = vmatprep.subr.bf16.mxu0 %v6051
  %8315 = vmatpush1.bf16.msra.mxu0 %v6050
  %8316 = vmatprep.subr.bf16.mxu0 %v6053
  %8317 = vmatpush1.bf16.msra.mxu0 %v6052
  %8318 = vmatprep.subr.bf16.mxu0 %v6055
  %8319 = vmatpush1.bf16.msra.mxu0 %v6054
  %8320 = vmatprep.subr.bf16.mxu0 %v6057
  %8321 = vmatpush1.bf16.msra.mxu0 %v6056
  %8322 = vmatprep.subr.bf16.mxu0 %v6059
  %8323 = vmatpush1.bf16.msra.mxu0 %v6058
  %8324 = vmatprep.subr.bf16.mxu0 %v6061
  %8325 = vmatpush1.bf16.msra.mxu0 %v6060
  %8326 = vmatprep.subr.bf16.mxu0 %v6063
  %8327 = vmatpush1.bf16.msra.mxu0 %v6062
  %8328 = vmatprep.subr.bf16.mxu0 %v6065
  %8329 = vmatpush1.bf16.msra.mxu0 %v6064
  %8330 = vmatprep.mubr.bf16.mxu0 %v2115
  %8331 = vmatmul.mubr.bf16.gmra.mrb[0].mxu0 %v2114
  %v8332 = vpop.f32.mrb[0].mxu0
  %v8333 = vadd.f32 %v8292, %v8332
  %v8334 = vpop.f32.mrb[0].mxu0
  %v8335 = vadd.f32 %v8294, %v8334
  %v8336 = vpop.f32.mrb[0].mxu0
  %v8337 = vpop.f32.mrb[0].mxu0
  %8338 = vdwg.mxu0
  %8339 = vmatprep.subr.bf16.mxu0 %v6067
  %8340 = vmatpush1.bf16.msra.mxu0 %v6066
  %8341 = vmatprep.subr.bf16.mxu0 %v6069
  %8342 = vmatpush1.bf16.msra.mxu0 %v6068
  %8343 = vmatprep.subr.bf16.mxu0 %v6071
  %8344 = vmatpush1.bf16.msra.mxu0 %v6070
  %8345 = vmatprep.subr.bf16.mxu0 %v6073
  %8346 = vmatpush1.bf16.msra.mxu0 %v6072
  %8347 = vmatprep.subr.bf16.mxu0 %v6075
  %8348 = vmatpush1.bf16.msra.mxu0 %v6074
  %8349 = vmatprep.subr.bf16.mxu0 %v6077
  %8350 = vmatpush1.bf16.msra.mxu0 %v6076
  %8351 = vmatprep.subr.bf16.mxu0 %v6079
  %8352 = vmatpush1.bf16.msra.mxu0 %v6078
  %8353 = vmatprep.subr.bf16.mxu0 %v6081
  %8354 = vmatpush1.bf16.msra.mxu0 %v6080
  %8355 = vmatprep.subr.bf16.mxu0 %v6083
  %8356 = vmatpush1.bf16.msra.mxu0 %v6082
  %8357 = vmatprep.subr.bf16.mxu0 %v6085
  %8358 = vmatpush1.bf16.msra.mxu0 %v6084
  %8359 = vmatprep.subr.bf16.mxu0 %v6087
  %8360 = vmatpush1.bf16.msra.mxu0 %v6086
  %8361 = vmatprep.subr.bf16.mxu0 %v6089
  %8362 = vmatpush1.bf16.msra.mxu0 %v6088
  %8363 = vmatprep.subr.bf16.mxu0 %v6091
  %8364 = vmatpush1.bf16.msra.mxu0 %v6090
  %8365 = vmatprep.subr.bf16.mxu0 %v6093
  %8366 = vmatpush1.bf16.msra.mxu0 %v6092
  %8367 = vmatprep.subr.bf16.mxu0 %v6095
  %8368 = vmatpush1.bf16.msra.mxu0 %v6094
  %8369 = vmatprep.subr.bf16.mxu0 %v6097
  %8370 = vmatpush1.bf16.msra.mxu0 %v6096
  %8371 = vmatprep.mubr.bf16.mxu0 %v2117
  %8372 = vmatmul.mubr.bf16.gmra.mrb[0].mxu0 %v2116
  %v8373 = vpop.f32.mrb[0].mxu0
  %v8374 = vadd.f32 %v8333, %v8373
  %v8375 = vpop.f32.mrb[0].mxu0
  %v8376 = vadd.f32 %v8335, %v8375
  %v8377 = vpop.f32.mrb[0].mxu0
  %v8378 = vpop.f32.mrb[0].mxu0
  %8379 = vdwg.mxu0
  %8380 = vmatprep.subr.bf16.mxu0 %v6099
  %8381 = vmatpush1.bf16.msra.mxu0 %v6098
  %8382 = vmatprep.subr.bf16.mxu0 %v6101
  %8383 = vmatpush1.bf16.msra.mxu0 %v6100
  %8384 = vmatprep.subr.bf16.mxu0 %v6103
  %8385 = vmatpush1.bf16.msra.mxu0 %v6102
  %8386 = vmatprep.subr.bf16.mxu0 %v6105
  %8387 = vmatpush1.bf16.msra.mxu0 %v6104
  %8388 = vmatprep.subr.bf16.mxu0 %v6107
  %8389 = vmatpush1.bf16.msra.mxu0 %v6106
  %8390 = vmatprep.subr.bf16.mxu0 %v6109
  %8391 = vmatpush1.bf16.msra.mxu0 %v6108
  %8392 = vmatprep.subr.bf16.mxu0 %v6111
  %8393 = vmatpush1.bf16.msra.mxu0 %v6110
  %8394 = vmatprep.subr.bf16.mxu0 %v6113
  %8395 = vmatpush1.bf16.msra.mxu0 %v6112
  %8396 = vmatprep.subr.bf16.mxu0 %v6115
  %8397 = vmatpush1.bf16.msra.mxu0 %v6114
  %8398 = vmatprep.subr.bf16.mxu0 %v6117
  %8399 = vmatpush1.bf16.msra.mxu0 %v6116
  %8400 = vmatprep.subr.bf16.mxu0 %v6119
  %8401 = vmatpush1.bf16.msra.mxu0 %v6118
  %8402 = vmatprep.subr.bf16.mxu0 %v6121
  %8403 = vmatpush1.bf16.msra.mxu0 %v6120
  %8404 = vmatprep.subr.bf16.mxu0 %v6123
  %8405 = vmatpush1.bf16.msra.mxu0 %v6122
  %8406 = vmatprep.subr.bf16.mxu0 %v6125
  %8407 = vmatpush1.bf16.msra.mxu0 %v6124
  %8408 = vmatprep.subr.bf16.mxu0 %v6127
  %8409 = vmatpush1.bf16.msra.mxu0 %v6126
  %8410 = vmatprep.subr.bf16.mxu0 %v6129
  %8411 = vmatpush1.bf16.msra.mxu0 %v6128
  %8412 = vmatprep.mubr.bf16.mxu0 %v2119
  %8413 = vmatmul.mubr.bf16.gmra.mrb[0].mxu0 %v2118
  %v8414 = vpop.f32.mrb[0].mxu0
  %v8415 = vadd.f32 %v8374, %v8414
  %v8416 = vpop.f32.mrb[0].mxu0
  %v8417 = vadd.f32 %v8376, %v8416
  %v8418 = vpop.f32.mrb[0].mxu0
  %v8419 = vpop.f32.mrb[0].mxu0
  %8420 = vdwg.mxu0
  %8421 = vmatprep.subr.bf16.mxu0 %v6131
  %8422 = vmatpush1.bf16.msra.mxu0 %v6130
  %8423 = vmatprep.subr.bf16.mxu0 %v6133
  %8424 = vmatpush1.bf16.msra.mxu0 %v6132
  %8425 = vmatprep.subr.bf16.mxu0 %v6135
  %8426 = vmatpush1.bf16.msra.mxu0 %v6134
  %8427 = vmatprep.subr.bf16.mxu0 %v6137
  %8428 = vmatpush1.bf16.msra.mxu0 %v6136
  %8429 = vmatprep.subr.bf16.mxu0 %v6139
  %8430 = vmatpush1.bf16.msra.mxu0 %v6138
  %8431 = vmatprep.subr.bf16.mxu0 %v6141
  %8432 = vmatpush1.bf16.msra.mxu0 %v6140
  %8433 = vmatprep.subr.bf16.mxu0 %v6143
  %8434 = vmatpush1.bf16.msra.mxu0 %v6142
  %8435 = vmatprep.subr.bf16.mxu0 %v6145
  %8436 = vmatpush1.bf16.msra.mxu0 %v6144
  %8437 = vmatprep.subr.bf16.mxu0 %v6147
  %8438 = vmatpush1.bf16.msra.mxu0 %v6146
  %8439 = vmatprep.subr.bf16.mxu0 %v6149
  %8440 = vmatpush1.bf16.msra.mxu0 %v6148
  %8441 = vmatprep.subr.bf16.mxu0 %v6151
  %8442 = vmatpush1.bf16.msra.mxu0 %v6150
  %8443 = vmatprep.subr.bf16.mxu0 %v6153
  %8444 = vmatpush1.bf16.msra.mxu0 %v6152
  %8445 = vmatprep.subr.bf16.mxu0 %v6155
  %8446 = vmatpush1.bf16.msra.mxu0 %v6154
  %8447 = vmatprep.subr.bf16.mxu0 %v6157
  %8448 = vmatpush1.bf16.msra.mxu0 %v6156
  %8449 = vmatprep.subr.bf16.mxu0 %v6159
  %8450 = vmatpush1.bf16.msra.mxu0 %v6158
  %8451 = vmatprep.subr.bf16.mxu0 %v6161
  %8452 = vmatpush1.bf16.msra.mxu0 %v6160
  %8453 = vmatprep.mubr.bf16.mxu0 %v2121
  %8454 = vmatmul.mubr.bf16.gmra.mrb[0].mxu0 %v2120
  %v8455 = vpop.f32.mrb[0].mxu0
  %v8456 = vadd.f32 %v8415, %v8455
  %v8457 = vpop.f32.mrb[0].mxu0
  %v8458 = vadd.f32 %v8417, %v8457
  %v8459 = vpop.f32.mrb[0].mxu0
  %v8460 = vpop.f32.mrb[0].mxu0
  %8461 = vdwg.mxu0
  %8462 = vmatprep.subr.bf16.mxu0 %v6163
  %8463 = vmatpush1.bf16.msra.mxu0 %v6162
  %8464 = vmatprep.subr.bf16.mxu0 %v6165
  %8465 = vmatpush1.bf16.msra.mxu0 %v6164
  %8466 = vmatprep.subr.bf16.mxu0 %v6167
  %8467 = vmatpush1.bf16.msra.mxu0 %v6166
  %8468 = vmatprep.subr.bf16.mxu0 %v6169
  %8469 = vmatpush1.bf16.msra.mxu0 %v6168
  %8470 = vmatprep.subr.bf16.mxu0 %v6171
  %8471 = vmatpush1.bf16.msra.mxu0 %v6170
  %8472 = vmatprep.subr.bf16.mxu0 %v6173
  %8473 = vmatpush1.bf16.msra.mxu0 %v6172
  %8474 = vmatprep.subr.bf16.mxu0 %v6175
  %8475 = vmatpush1.bf16.msra.mxu0 %v6174
  %8476 = vmatprep.subr.bf16.mxu0 %v6177
  %8477 = vmatpush1.bf16.msra.mxu0 %v6176
  %8478 = vmatprep.subr.bf16.mxu0 %v6179
  %8479 = vmatpush1.bf16.msra.mxu0 %v6178
  %8480 = vmatprep.subr.bf16.mxu0 %v6181
  %8481 = vmatpush1.bf16.msra.mxu0 %v6180
  %8482 = vmatprep.subr.bf16.mxu0 %v6183
  %8483 = vmatpush1.bf16.msra.mxu0 %v6182
  %8484 = vmatprep.subr.bf16.mxu0 %v6185
  %8485 = vmatpush1.bf16.msra.mxu0 %v6184
  %8486 = vmatprep.subr.bf16.mxu0 %v6187
  %8487 = vmatpush1.bf16.msra.mxu0 %v6186
  %8488 = vmatprep.subr.bf16.mxu0 %v6189
  %8489 = vmatpush1.bf16.msra.mxu0 %v6188
  %8490 = vmatprep.subr.bf16.mxu0 %v6191
  %8491 = vmatpush1.bf16.msra.mxu0 %v6190
  %8492 = vmatprep.subr.bf16.mxu0 %v6193
  %8493 = vmatpush1.bf16.msra.mxu0 %v6192
  %8494 = vmatprep.mubr.bf16.mxu0 %v2123
  %8495 = vmatmul.mubr.bf16.gmra.mrb[0].mxu0 %v2122
  %v8496 = vpop.f32.mrb[0].mxu0
  %v8497 = vadd.f32 %v8456, %v8496
  %v8498 = vpop.f32.mrb[0].mxu0
  %v8499 = vadd.f32 %v8458, %v8498
  %v8500 = vpop.f32.mrb[0].mxu0
  %v8501 = vpop.f32.mrb[0].mxu0
  %8502 = vdwg.mxu0
  %8503 = vmatprep.subr.bf16.mxu0 %v6195
  %8504 = vmatpush1.bf16.msra.mxu0 %v6194
  %8505 = vmatprep.subr.bf16.mxu0 %v6197
  %8506 = vmatpush1.bf16.msra.mxu0 %v6196
  %8507 = vmatprep.subr.bf16.mxu0 %v6199
  %8508 = vmatpush1.bf16.msra.mxu0 %v6198
  %8509 = vmatprep.subr.bf16.mxu0 %v6201
  %8510 = vmatpush1.bf16.msra.mxu0 %v6200
  %8511 = vmatprep.subr.bf16.mxu0 %v6203
  %8512 = vmatpush1.bf16.msra.mxu0 %v6202
  %8513 = vmatprep.subr.bf16.mxu0 %v6205
  %8514 = vmatpush1.bf16.msra.mxu0 %v6204
  %8515 = vmatprep.subr.bf16.mxu0 %v6207
  %8516 = vmatpush1.bf16.msra.mxu0 %v6206
  %8517 = vmatprep.subr.bf16.mxu0 %v6209
  %8518 = vmatpush1.bf16.msra.mxu0 %v6208
  %8519 = vmatprep.subr.bf16.mxu0 %v6211
  %8520 = vmatpush1.bf16.msra.mxu0 %v6210
  %8521 = vmatprep.subr.bf16.mxu0 %v6213
  %8522 = vmatpush1.bf16.msra.mxu0 %v6212
  %8523 = vmatprep.subr.bf16.mxu0 %v6215
  %8524 = vmatpush1.bf16.msra.mxu0 %v6214
  %8525 = vmatprep.subr.bf16.mxu0 %v6217
  %8526 = vmatpush1.bf16.msra.mxu0 %v6216
  %8527 = vmatprep.subr.bf16.mxu0 %v6219
  %8528 = vmatpush1.bf16.msra.mxu0 %v6218
  %8529 = vmatprep.subr.bf16.mxu0 %v6221
  %8530 = vmatpush1.bf16.msra.mxu0 %v6220
  %8531 = vmatprep.subr.bf16.mxu0 %v6223
  %8532 = vmatpush1.bf16.msra.mxu0 %v6222
  %8533 = vmatprep.subr.bf16.mxu0 %v6225
  %8534 = vmatpush1.bf16.msra.mxu0 %v6224
  %8535 = vmatprep.mubr.bf16.mxu0 %v2125
  %8536 = vmatmul.mubr.bf16.gmra.mrb[0].mxu0 %v2124
  %v8537 = vpop.f32.mrb[0].mxu0
  %v8538 = vadd.f32 %v8497, %v8537
  %v8539 = vpop.f32.mrb[0].mxu0
  %v8540 = vadd.f32 %v8499, %v8539
  %v8541 = vpop.f32.mrb[0].mxu0
  %v8542 = vpop.f32.mrb[0].mxu0
  %8543 = vdwg.mxu0
  %8544 = vmatprep.subr.bf16.mxu0 %v6227
  %8545 = vmatpush1.bf16.msra.mxu0 %v6226
  %8546 = vmatprep.subr.bf16.mxu0 %v6229
  %8547 = vmatpush1.bf16.msra.mxu0 %v6228
  %8548 = vmatprep.subr.bf16.mxu0 %v6231
  %8549 = vmatpush1.bf16.msra.mxu0 %v6230
  %8550 = vmatprep.subr.bf16.mxu0 %v6233
  %8551 = vmatpush1.bf16.msra.mxu0 %v6232
  %8552 = vmatprep.subr.bf16.mxu0 %v6235
  %8553 = vmatpush1.bf16.msra.mxu0 %v6234
  %8554 = vmatprep.subr.bf16.mxu0 %v6237
  %8555 = vmatpush1.bf16.msra.mxu0 %v6236
  %8556 = vmatprep.subr.bf16.mxu0 %v6239
  %8557 = vmatpush1.bf16.msra.mxu0 %v6238
  %8558 = vmatprep.subr.bf16.mxu0 %v6241
  %8559 = vmatpush1.bf16.msra.mxu0 %v6240
  %8560 = vmatprep.subr.bf16.mxu0 %v6243
  %8561 = vmatpush1.bf16.msra.mxu0 %v6242
  %8562 = vmatprep.subr.bf16.mxu0 %v6245
  %8563 = vmatpush1.bf16.msra.mxu0 %v6244
  %8564 = vmatprep.subr.bf16.mxu0 %v6247
  %8565 = vmatpush1.bf16.msra.mxu0 %v6246
  %8566 = vmatprep.subr.bf16.mxu0 %v6249
  %8567 = vmatpush1.bf16.msra.mxu0 %v6248
  %8568 = vmatprep.subr.bf16.mxu0 %v6251
  %8569 = vmatpush1.bf16.msra.mxu0 %v6250
  %8570 = vmatprep.subr.bf16.mxu0 %v6253
  %8571 = vmatpush1.bf16.msra.mxu0 %v6252
  %8572 = vmatprep.subr.bf16.mxu0 %v6255
  %8573 = vmatpush1.bf16.msra.mxu0 %v6254
  %8574 = vmatprep.subr.bf16.mxu0 %v6257
  %8575 = vmatpush1.bf16.msra.mxu0 %v6256
  %8576 = vmatprep.mubr.bf16.mxu0 %v2127
  %8577 = vmatmul.mubr.bf16.gmra.mrb[0].mxu0 %v2126
  %v8578 = vpop.f32.mrb[0].mxu0
  %v8579 = vadd.f32 %v8538, %v8578
  %v8580 = vpop.f32.mrb[0].mxu0
  %v8581 = vadd.f32 %v8540, %v8580
  %v8582 = vpop.f32.mrb[0].mxu0
  %v8583 = vpop.f32.mrb[0].mxu0
  %8584 = vdwg.mxu0
  %8585 = vmatprep.subr.bf16.mxu0 %v6259
  %8586 = vmatpush1.bf16.msra.mxu0 %v6258
  %8587 = vmatprep.subr.bf16.mxu0 %v6261
  %8588 = vmatpush1.bf16.msra.mxu0 %v6260
  %8589 = vmatprep.subr.bf16.mxu0 %v6263
  %8590 = vmatpush1.bf16.msra.mxu0 %v6262
  %8591 = vmatprep.subr.bf16.mxu0 %v6265
  %8592 = vmatpush1.bf16.msra.mxu0 %v6264
  %8593 = vmatprep.subr.bf16.mxu0 %v6267
  %8594 = vmatpush1.bf16.msra.mxu0 %v6266
  %8595 = vmatprep.subr.bf16.mxu0 %v6269
  %8596 = vmatpush1.bf16.msra.mxu0 %v6268
  %8597 = vmatprep.subr.bf16.mxu0 %v6271
  %8598 = vmatpush1.bf16.msra.mxu0 %v6270
  %8599 = vmatprep.subr.bf16.mxu0 %v6273
  %8600 = vmatpush1.bf16.msra.mxu0 %v6272
  %8601 = vmatprep.subr.bf16.mxu0 %v6275
  %8602 = vmatpush1.bf16.msra.mxu0 %v6274
  %8603 = vmatprep.subr.bf16.mxu0 %v6277
  %8604 = vmatpush1.bf16.msra.mxu0 %v6276
  %8605 = vmatprep.subr.bf16.mxu0 %v6279
  %8606 = vmatpush1.bf16.msra.mxu0 %v6278
  %8607 = vmatprep.subr.bf16.mxu0 %v6281
  %8608 = vmatpush1.bf16.msra.mxu0 %v6280
  %8609 = vmatprep.subr.bf16.mxu0 %v6283
  %8610 = vmatpush1.bf16.msra.mxu0 %v6282
  %8611 = vmatprep.subr.bf16.mxu0 %v6285
  %8612 = vmatpush1.bf16.msra.mxu0 %v6284
  %8613 = vmatprep.subr.bf16.mxu0 %v6287
  %8614 = vmatpush1.bf16.msra.mxu0 %v6286
  %8615 = vmatprep.subr.bf16.mxu0 %v6289
  %8616 = vmatpush1.bf16.msra.mxu0 %v6288
  %8617 = vmatprep.mubr.bf16.mxu0 %v2129
  %8618 = vmatmul.mubr.bf16.gmra.mrb[0].mxu0 %v2128
  %v8619 = vpop.f32.mrb[0].mxu0
  %v8620 = vadd.f32 %v8579, %v8619
  %v8621 = vpop.f32.mrb[0].mxu0
  %v8622 = vadd.f32 %v8581, %v8621
  %v8623 = vpop.f32.mrb[0].mxu0
  %v8624 = vpop.f32.mrb[0].mxu0
  %8625 = vdwg.mxu0
  %v8626 = vmax.f32 %v8620, 0.0
  %v8627 = vmax.f32 %v8622, 0.0
  %v8628 = vld [vmem:[%s1] sm:$0xff]
  %v8629 = vld [vmem:[%s1 + $0x8] sm:$0xff]
  %v8630 = vld [vmem:[%s1 + $0x10] sm:$0xff]
  %v8631 = vld [vmem:[%s1 + $0x18] sm:$0xff]
  %v8632 = vld [vmem:[%s1 + $0x20] sm:$0xff]
  %v8633 = vld [vmem:[%s1 + $0x28] sm:$0xff]
  %v8634 = vld [vmem:[%s1 + $0x30] sm:$0xff]
  %v8635 = vld [vmem:[%s1 + $0x38] sm:$0xff]
  %v8636 = vld [vmem:[%s1 + $0x40] sm:$0xff]
  %v8637 = vld [vmem:[%s1 + $0x48] sm:$0xff]
  %v8638 = vld [vmem:[%s1 + $0x50] sm:$0xff]
  %v8639 = vld [vmem:[%s1 + $0x58] sm:$0xff]
  %v8640 = vld [vmem:[%s5] sm:$0xff]
  %v8641 = vld [vmem:[%s5 + $0x8] sm:$0xff]
  %v8642 = vld [vmem:[%s5 + $0x10] sm:$0xff]
  %v8643 = vld [vmem:[%s5 + $0x18] sm:$0xff]
  %v8644 = vld [vmem:[%s5 + $0x20] sm:$0xff]
  %v8645 = vld [vmem:[%s5 + $0x28] sm:$0xff]
  %v8646 = vld [vmem:[%s5 + $0x30] sm:$0xff]
  %v8647 = vld [vmem:[%s5 + $0x38] sm:$0xff]
  %v8648 = vld [vmem:[%s5 + $0x40] sm:$0xff]
  %v8649 = vld [vmem:[%s5 + $0x48] sm:$0xff]
  %v8650 = vld [vmem:[%s5 + $0x50] sm:$0xff]
  %v8651 = vld [vmem:[%s5 + $0x58] sm:$0xff]
  %v8652 = vld [vmem:[%s5 + $0x60] sm:$0xff]
  %v8653 = vld [vmem:[%s5 + $0x68] sm:$0xff]
  %v8654 = vld [vmem:[%s5 + $0x70] sm:$0xff]
  %v8655 = vld [vmem:[%s5 + $0x78] sm:$0xff]
  %v8656 = vld [vmem:[%s5 + $0x80] sm:$0xff]
  %v8657 = vld [vmem:[%s5 + $0x88] sm:$0xff]
  %v8658 = vld [vmem:[%s5 + $0x90] sm:$0xff]
  %v8659 = vld [vmem:[%s5 + $0x98] sm:$0xff]
  %v8660 = vld [vmem:[%s5 + $0xa0] sm:$0xff]
  %v8661 = vld [vmem:[%s5 + $0xa8] sm:$0xff]
  %v8662 = vld [vmem:[%s5 + $0xb0] sm:$0xff]
  %v8663 = vld [vmem:[%s5 + $0xb8] sm:$0xff]
  %v8664 = vld [vmem:[%s5 + $0xc0] sm:$0xff]
  %v8665 = vld [vmem:[%s5 + $0xc8] sm:$0xff]
  %v8666 = vld [vmem:[%s5 + $0xd0] sm:$0xff]
  %v8667 = vld [vmem:[%s5 + $0xd8] sm:$0xff]
  %v8668 = vld [vmem:[%s5 + $0xe0] sm:$0xff]
  %v8669 = vld [vmem:[%s5 + $0xe8] sm:$0xff]
  %v8670 = vld [vmem:[%s5 + $0xf0] sm:$0xff]
  %v8671 = vld [vmem:[%s5 + $0xf8] sm:$0xff]
  %v8672 = vld [vmem:[%s5 + $0x100] sm:$0xff]
  %v8673 = vld [vmem:[%s5 + $0x108] sm:$0xff]
  %v8674 = vld [vmem:[%s5 + $0x110] sm:$0xff]
  %v8675 = vld [vmem:[%s5 + $0x118] sm:$0xff]
  %v8676 = vld [vmem:[%s5 + $0x120] sm:$0xff]
  %v8677 = vld [vmem:[%s5 + $0x128] sm:$0xff]
  %v8678 = vld [vmem:[%s5 + $0x130] sm:$0xff]
  %v8679 = vld [vmem:[%s5 + $0x138] sm:$0xff]
  %v8680 = vld [vmem:[%s5 + $0x140] sm:$0xff]
  %v8681 = vld [vmem:[%s5 + $0x148] sm:$0xff]
  %v8682 = vld [vmem:[%s5 + $0x150] sm:$0xff]
  %v8683 = vld [vmem:[%s5 + $0x158] sm:$0xff]
  %v8684 = vld [vmem:[%s5 + $0x160] sm:$0xff]
  %v8685 = vld [vmem:[%s5 + $0x168] sm:$0xff]
  %v8686 = vld [vmem:[%s5 + $0x170] sm:$0xff]
  %v8687 = vld [vmem:[%s5 + $0x178] sm:$0xff]
  %v8688 = vld [vmem:[%s5 + $0x180] sm:$0xff]
  %v8689 = vld [vmem:[%s5 + $0x188] sm:$0xff]
  %v8690 = vld [vmem:[%s5 + $0x190] sm:$0xff]
  %v8691 = vld [vmem:[%s5 + $0x198] sm:$0xff]
  %v8692 = vld [vmem:[%s5 + $0x1a0] sm:$0xff]
  %v8693 = vld [vmem:[%s5 + $0x1a8] sm:$0xff]
  %v8694 = vld [vmem:[%s5 + $0x1b0] sm:$0xff]
  %v8695 = vld [vmem:[%s5 + $0x1b8] sm:$0xff]
  %v8696 = vld [vmem:[%s5 + $0x1c0] sm:$0xff]
  %v8697 = vld [vmem:[%s5 + $0x1c8] sm:$0xff]
  %v8698 = vld [vmem:[%s5 + $0x1d0] sm:$0xff]
  %v8699 = vld [vmem:[%s5 + $0x1d8] sm:$0xff]
  %v8700 = vld [vmem:[%s5 + $0x1e0] sm:$0xff]
  %v8701 = vld [vmem:[%s5 + $0x1e8] sm:$0xff]
  %v8702 = vld [vmem:[%s5 + $0x1f0] sm:$0xff]
  %v8703 = vld [vmem:[%s5 + $0x1f8] sm:$0xff]
  %v8704 = vld [vmem:[%s5 + $0x200] sm:$0xff]
  %v8705 = vld [vmem:[%s5 + $0x208] sm:$0xff]
  %v8706 = vld [vmem:[%s5 + $0x210] sm:$0xff]
  %v8707 = vld [vmem:[%s5 + $0x218] sm:$0xff]
  %v8708 = vld [vmem:[%s5 + $0x220] sm:$0xff]
  %v8709 = vld [vmem:[%s5 + $0x228] sm:$0xff]
  %v8710 = vld [vmem:[%s5 + $0x230] sm:$0xff]
  %v8711 = vld [vmem:[%s5 + $0x238] sm:$0xff]
  %v8712 = vld [vmem:[%s5 + $0x240] sm:$0xff]
  %v8713 = vld [vmem:[%s5 + $0x248] sm:$0xff]
  %v8714 = vld [vmem:[%s5 + $0x250] sm:$0xff]
  %v8715 = vld [vmem:[%s5 + $0x258] sm:$0xff]
  %v8716 = vld [vmem:[%s5 + $0x260] sm:$0xff]
  %v8717 = vld [vmem:[%s5 + $0x268] sm:$0xff]
  %v8718 = vld [vmem:[%s5 + $0x270] sm:$0xff]
  %v8719 = vld [vmem:[%s5 + $0x278] sm:$0xff]
  %v8720 = vld [vmem:[%s5 + $0x280] sm:$0xff]
  %v8721 = vld [vmem:[%s5 + $0x288] sm:$0xff]
  %v8722 = vld [vmem:[%s5 + $0x290] sm:$0xff]
  %v8723 = vld [vmem:[%s5 + $0x298] sm:$0xff]
  %v8724 = vld [vmem:[%s5 + $0x2a0] sm:$0xff]
  %v8725 = vld [vmem:[%s5 + $0x2a8] sm:$0xff]
  %v8726 = vld [vmem:[%s5 + $0x2b0] sm:$0xff]
  %v8727 = vld [vmem:[%s5 + $0x2b8] sm:$0xff]
  %v8728 = vld [vmem:[%s5 + $0x2c0] sm:$0xff]
  %v8729 = vld [vmem:[%s5 + $0x2c8] sm:$0xff]
  %v8730 = vld [vmem:[%s5 + $0x2d0] sm:$0xff]
  %v8731 = vld [vmem:[%s5 + $0x2d8] sm:$0xff]
  %v8732 = vld [vmem:[%s5 + $0x2e0] sm:$0xff]
  %v8733 = vld [vmem:[%s5 + $0x2e8] sm:$0xff]
  %v8734 = vld [vmem:[%s5 + $0x2f0] sm:$0xff]
  %v8735 = vld [vmem:[%s5 + $0x2f8] sm:$0xff]
  %v8736 = vld [vmem:[%s5 + $0x300] sm:$0xff]
  %v8737 = vld [vmem:[%s5 + $0x308] sm:$0xff]
  %v8738 = vld [vmem:[%s5 + $0x310] sm:$0xff]
  %v8739 = vld [vmem:[%s5 + $0x318] sm:$0xff]
  %v8740 = vld [vmem:[%s5 + $0x320] sm:$0xff]
  %v8741 = vld [vmem:[%s5 + $0x328] sm:$0xff]
  %v8742 = vld [vmem:[%s5 + $0x330] sm:$0xff]
  %v8743 = vld [vmem:[%s5 + $0x338] sm:$0xff]
  %v8744 = vld [vmem:[%s5 + $0x340] sm:$0xff]
  %v8745 = vld [vmem:[%s5 + $0x348] sm:$0xff]
  %v8746 = vld [vmem:[%s5 + $0x350] sm:$0xff]
  %v8747 = vld [vmem:[%s5 + $0x358] sm:$0xff]
  %v8748 = vld [vmem:[%s5 + $0x360] sm:$0xff]
  %v8749 = vld [vmem:[%s5 + $0x368] sm:$0xff]
  %v8750 = vld [vmem:[%s5 + $0x370] sm:$0xff]
  %v8751 = vld [vmem:[%s5 + $0x378] sm:$0xff]
  %v8752 = vld [vmem:[%s5 + $0x380] sm:$0xff]
  %v8753 = vld [vmem:[%s5 + $0x388] sm:$0xff]
  %v8754 = vld [vmem:[%s5 + $0x390] sm:$0xff]
  %v8755 = vld [vmem:[%s5 + $0x398] sm:$0xff]
  %v8756 = vld [vmem:[%s5 + $0x3a0] sm:$0xff]
  %v8757 = vld [vmem:[%s5 + $0x3a8] sm:$0xff]
  %v8758 = vld [vmem:[%s5 + $0x3b0] sm:$0xff]
  %v8759 = vld [vmem:[%s5 + $0x3b8] sm:$0xff]
  %v8760 = vld [vmem:[%s5 + $0x3c0] sm:$0xff]
  %v8761 = vld [vmem:[%s5 + $0x3c8] sm:$0xff]
  %v8762 = vld [vmem:[%s5 + $0x3d0] sm:$0xff]
  %v8763 = vld [vmem:[%s5 + $0x3d8] sm:$0xff]
  %v8764 = vld [vmem:[%s5 + $0x3e0] sm:$0xff]
  %v8765 = vld [vmem:[%s5 + $0x3e8] sm:$0xff]
  %v8766 = vld [vmem:[%s5 + $0x3f0] sm:$0xff]
  %v8767 = vld [vmem:[%s5 + $0x3f8] sm:$0xff]
  %v8768 = vld [vmem:[%s5 + $0x400] sm:$0xff]
  %v8769 = vld [vmem:[%s5 + $0x408] sm:$0xff]
  %v8770 = vld [vmem:[%s5 + $0x410] sm:$0xff]
  %v8771 = vld [vmem:[%s5 + $0x418] sm:$0xff]
  %v8772 = vld [vmem:[%s5 + $0x420] sm:$0xff]
  %v8773 = vld [vmem:[%s5 + $0x428] sm:$0xff]
  %v8774 = vld [vmem:[%s5 + $0x430] sm:$0xff]
  %v8775 = vld [vmem:[%s5 + $0x438] sm:$0xff]
  %v8776 = vld [vmem:[%s5 + $0x440] sm:$0xff]
  %v8777 = vld [vmem:[%s5 + $0x448] sm:$0xff]
  %v8778 = vld [vmem:[%s5 + $0x450] sm:$0xff]
  %v8779 = vld [vmem:[%s5 + $0x458] sm:$0xff]
  %v8780 = vld [vmem:[%s5 + $0x460] sm:$0xff]
  %v8781 = vld [vmem:[%s5 + $0x468] sm:$0xff]
  %v8782 = vld [vmem:[%s5 + $0x470] sm:$0xff]
  %v8783 = vld [vmem:[%s5 + $0x478] sm:$0xff]
  %v8784 = vld [vmem:[%s5 + $0x480] sm:$0xff]
  %v8785 = vld [vmem:[%s5 + $0x488] sm:$0xff]
  %v8786 = vld [vmem:[%s5 + $0x490] sm:$0xff]
  %v8787 = vld [vmem:[%s5 + $0x498] sm:$0xff]
  %v8788 = vld [vmem:[%s5 + $0x4a0] sm:$0xff]
  %v8789 = vld [vmem:[%s5 + $0x4a8] sm:$0xff]
  %v8790 = vld [vmem:[%s5 + $0x4b0] sm:$0xff]
  %v8791 = vld [vmem:[%s5 + $0x4b8] sm:$0xff]
  %v8792 = vld [vmem:[%s5 + $0x4c0] sm:$0xff]
  %v8793 = vld [vmem:[%s5 + $0x4c8] sm:$0xff]
  %v8794 = vld [vmem:[%s5 + $0x4d0] sm:$0xff]
  %v8795 = vld [vmem:[%s5 + $0x4d8] sm:$0xff]
  %v8796 = vld [vmem:[%s5 + $0x4e0] sm:$0xff]
  %v8797 = vld [vmem:[%s5 + $0x4e8] sm:$0xff]
  %v8798 = vld [vmem:[%s5 + $0x4f0] sm:$0xff]
  %v8799 = vld [vmem:[%s5 + $0x4f8] sm:$0xff]
  %v8800 = vld [vmem:[%s5 + $0x500] sm:$0xff]
  %v8801 = vld [vmem:[%s5 + $0x508] sm:$0xff]
  %v8802 = vld [vmem:[%s5 + $0x510] sm:$0xff]
  %v8803 = vld [vmem:[%s5 + $0x518] sm:$0xff]
  %v8804 = vld [vmem:[%s5 + $0x520] sm:$0xff]
  %v8805 = vld [vmem:[%s5 + $0x528] sm:$0xff]
  %v8806 = vld [vmem:[%s5 + $0x530] sm:$0xff]
  %v8807 = vld [vmem:[%s5 + $0x538] sm:$0xff]
  %v8808 = vld [vmem:[%s5 + $0x540] sm:$0xff]
  %v8809 = vld [vmem:[%s5 + $0x548] sm:$0xff]
  %v8810 = vld [vmem:[%s5 + $0x550] sm:$0xff]
  %v8811 = vld [vmem:[%s5 + $0x558] sm:$0xff]
  %v8812 = vld [vmem:[%s5 + $0x560] sm:$0xff]
  %v8813 = vld [vmem:[%s5 + $0x568] sm:$0xff]
  %v8814 = vld [vmem:[%s5 + $0x570] sm:$0xff]
  %v8815 = vld [vmem:[%s5 + $0x578] sm:$0xff]
  %v8816 = vld [vmem:[%s5 + $0x580] sm:$0xff]
  %v8817 = vld [vmem:[%s5 + $0x588] sm:$0xff]
  %v8818 = vld [vmem:[%s5 + $0x590] sm:$0xff]
  %v8819 = vld [vmem:[%s5 + $0x598] sm:$0xff]
  %v8820 = vld [vmem:[%s5 + $0x5a0] sm:$0xff]
  %v8821 = vld [vmem:[%s5 + $0x5a8] sm:$0xff]
  %v8822 = vld [vmem:[%s5 + $0x5b0] sm:$0xff]
  %v8823 = vld [vmem:[%s5 + $0x5b8] sm:$0xff]
  %v8824 = vld [vmem:[%s5 + $0x5c0] sm:$0xff]
  %v8825 = vld [vmem:[%s5 + $0x5c8] sm:$0xff]
  %v8826 = vld [vmem:[%s5 + $0x5d0] sm:$0xff]
  %v8827 = vld [vmem:[%s5 + $0x5d8] sm:$0xff]
  %v8828 = vld [vmem:[%s5 + $0x5e0] sm:$0xff]
  %v8829 = vld [vmem:[%s5 + $0x5e8] sm:$0xff]
  %v8830 = vld [vmem:[%s5 + $0x5f0] sm:$0xff]
  %v8831 = vld [vmem:[%s5 + $0x5f8] sm:$0xff]
  %v8832 = vld [vmem:[%s5 + $0x600] sm:$0xff]
  %v8833 = vld [vmem:[%s5 + $0x608] sm:$0xff]
  %v8834 = vld [vmem:[%s5 + $0x610] sm:$0xff]
  %v8835 = vld [vmem:[%s5 + $0x618] sm:$0xff]
  %v8836 = vld [vmem:[%s5 + $0x620] sm:$0xff]
  %v8837 = vld [vmem:[%s5 + $0x628] sm:$0xff]
  %v8838 = vld [vmem:[%s5 + $0x630] sm:$0xff]
  %v8839 = vld [vmem:[%s5 + $0x638] sm:$0xff]
  %v8840 = vld [vmem:[%s5 + $0x640] sm:$0xff]
  %v8841 = vld [vmem:[%s5 + $0x648] sm:$0xff]
  %v8842 = vld [vmem:[%s5 + $0x650] sm:$0xff]
  %v8843 = vld [vmem:[%s5 + $0x658] sm:$0xff]
  %v8844 = vld [vmem:[%s5 + $0x660] sm:$0xff]
  %v8845 = vld [vmem:[%s5 + $0x668] sm:$0xff]
  %v8846 = vld [vmem:[%s5 + $0x670] sm:$0xff]
  %v8847 = vld [vmem:[%s5 + $0x678] sm:$0xff]
  %v8848 = vld [vmem:[%s5 + $0x680] sm:$0xff]
  %v8849 = vld [vmem:[%s5 + $0x688] sm:$0xff]
  %v8850 = vld [vmem:[%s5 + $0x690] sm:$0xff]
  %v8851 = vld [vmem:[%s5 + $0x698] sm:$0xff]
  %v8852 = vld [vmem:[%s5 + $0x6a0] sm:$0xff]
  %v8853 = vld [vmem:[%s5 + $0x6a8] sm:$0xff]
  %v8854 = vld [vmem:[%s5 + $0x6b0] sm:$0xff]
  %v8855 = vld [vmem:[%s5 + $0x6b8] sm:$0xff]
  %v8856 = vld [vmem:[%s5 + $0x6c0] sm:$0xff]
  %v8857 = vld [vmem:[%s5 + $0x6c8] sm:$0xff]
  %v8858 = vld [vmem:[%s5 + $0x6d0] sm:$0xff]
  %v8859 = vld [vmem:[%s5 + $0x6d8] sm:$0xff]
  %v8860 = vld [vmem:[%s5 + $0x6e0] sm:$0xff]
  %v8861 = vld [vmem:[%s5 + $0x6e8] sm:$0xff]
  %v8862 = vld [vmem:[%s5 + $0x6f0] sm:$0xff]
  %v8863 = vld [vmem:[%s5 + $0x6f8] sm:$0xff]
  %v8864 = vld [vmem:[%s5 + $0x700] sm:$0xff]
  %v8865 = vld [vmem:[%s5 + $0x708] sm:$0xff]
  %v8866 = vld [vmem:[%s5 + $0x710] sm:$0xff]
  %v8867 = vld [vmem:[%s5 + $0x718] sm:$0xff]
  %v8868 = vld [vmem:[%s5 + $0x720] sm:$0xff]
  %v8869 = vld [vmem:[%s5 + $0x728] sm:$0xff]
  %v8870 = vld [vmem:[%s5 + $0x730] sm:$0xff]
  %v8871 = vld [vmem:[%s5 + $0x738] sm:$0xff]
  %v8872 = vld [vmem:[%s5 + $0x740] sm:$0xff]
  %v8873 = vld [vmem:[%s5 + $0x748] sm:$0xff]
  %v8874 = vld [vmem:[%s5 + $0x750] sm:$0xff]
  %v8875 = vld [vmem:[%s5 + $0x758] sm:$0xff]
  %v8876 = vld [vmem:[%s5 + $0x760] sm:$0xff]
  %v8877 = vld [vmem:[%s5 + $0x768] sm:$0xff]
  %v8878 = vld [vmem:[%s5 + $0x770] sm:$0xff]
  %v8879 = vld [vmem:[%s5 + $0x778] sm:$0xff]
  %v8880 = vld [vmem:[%s5 + $0x780] sm:$0xff]
  %v8881 = vld [vmem:[%s5 + $0x788] sm:$0xff]
  %v8882 = vld [vmem:[%s5 + $0x790] sm:$0xff]
  %v8883 = vld [vmem:[%s5 + $0x798] sm:$0xff]
  %v8884 = vld [vmem:[%s5 + $0x7a0] sm:$0xff]
  %v8885 = vld [vmem:[%s5 + $0x7a8] sm:$0xff]
  %v8886 = vld [vmem:[%s5 + $0x7b0] sm:$0xff]
  %v8887 = vld [vmem:[%s5 + $0x7b8] sm:$0xff]
  %v8888 = vld [vmem:[%s5 + $0x7c0] sm:$0xff]
  %v8889 = vld [vmem:[%s5 + $0x7c8] sm:$0xff]
  %v8890 = vld [vmem:[%s5 + $0x7d0] sm:$0xff]
  %v8891 = vld [vmem:[%s5 + $0x7d8] sm:$0xff]
  %v8892 = vld [vmem:[%s5 + $0x7e0] sm:$0xff]
  %v8893 = vld [vmem:[%s5 + $0x7e8] sm:$0xff]
  %v8894 = vld [vmem:[%s5 + $0x7f0] sm:$0xff]
  %v8895 = vld [vmem:[%s5 + $0x7f8] sm:$0xff]
  %v8896 = vld [vmem:[%s5 + $0x800] sm:$0xff]
  %v8897 = vld [vmem:[%s5 + $0x808] sm:$0xff]
  %v8898 = vld [vmem:[%s5 + $0x810] sm:$0xff]
  %v8899 = vld [vmem:[%s5 + $0x818] sm:$0xff]
  %v8900 = vld [vmem:[%s5 + $0x820] sm:$0xff]
  %v8901 = vld [vmem:[%s5 + $0x828] sm:$0xff]
  %v8902 = vld [vmem:[%s5 + $0x830] sm:$0xff]
  %v8903 = vld [vmem:[%s5 + $0x838] sm:$0xff]
  %v8904 = vld [vmem:[%s5 + $0x840] sm:$0xff]
  %v8905 = vld [vmem:[%s5 + $0x848] sm:$0xff]
  %v8906 = vld [vmem:[%s5 + $0x850] sm:$0xff]
  %v8907 = vld [vmem:[%s5 + $0x858] sm:$0xff]
  %v8908 = vld [vmem:[%s5 + $0x860] sm:$0xff]
  %v8909 = vld [vmem:[%s5 + $0x868] sm:$0xff]
  %v8910 = vld [vmem:[%s5 + $0x870] sm:$0xff]
  %v8911 = vld [vmem:[%s5 + $0x878] sm:$0xff]
  %v8912 = vld [vmem:[%s5 + $0x880] sm:$0xff]
  %v8913 = vld [vmem:[%s5 + $0x888] sm:$0xff]
  %v8914 = vld [vmem:[%s5 + $0x890] sm:$0xff]
  %v8915 = vld [vmem:[%s5 + $0x898] sm:$0xff]
  %v8916 = vld [vmem:[%s5 + $0x8a0] sm:$0xff]
  %v8917 = vld [vmem:[%s5 + $0x8a8] sm:$0xff]
  %v8918 = vld [vmem:[%s5 + $0x8b0] sm:$0xff]
  %v8919 = vld [vmem:[%s5 + $0x8b8] sm:$0xff]
  %v8920 = vld [vmem:[%s5 + $0x8c0] sm:$0xff]
  %v8921 = vld [vmem:[%s5 + $0x8c8] sm:$0xff]
  %v8922 = vld [vmem:[%s5 + $0x8d0] sm:$0xff]
  %v8923 = vld [vmem:[%s5 + $0x8d8] sm:$0xff]
  %v8924 = vld [vmem:[%s5 + $0x8e0] sm:$0xff]
  %v8925 = vld [vmem:[%s5 + $0x8e8] sm:$0xff]
  %v8926 = vld [vmem:[%s5 + $0x8f0] sm:$0xff]
  %v8927 = vld [vmem:[%s5 + $0x8f8] sm:$0xff]
  %v8928 = vld [vmem:[%s5 + $0x900] sm:$0xff]
  %v8929 = vld [vmem:[%s5 + $0x908] sm:$0xff]
  %v8930 = vld [vmem:[%s5 + $0x910] sm:$0xff]
  %v8931 = vld [vmem:[%s5 + $0x918] sm:$0xff]
  %v8932 = vld [vmem:[%s5 + $0x920] sm:$0xff]
  %v8933 = vld [vmem:[%s5 + $0x928] sm:$0xff]
  %v8934 = vld [vmem:[%s5 + $0x930] sm:$0xff]
  %v8935 = vld [vmem:[%s5 + $0x938] sm:$0xff]
  %v8936 = vld [vmem:[%s5 + $0x940] sm:$0xff]
  %v8937 = vld [vmem:[%s5 + $0x948] sm:$0xff]
  %v8938 = vld [vmem:[%s5 + $0x950] sm:$0xff]
  %v8939 = vld [vmem:[%s5 + $0x958] sm:$0xff]
  %v8940 = vld [vmem:[%s5 + $0x960] sm:$0xff]
  %v8941 = vld [vmem:[%s5 + $0x968] sm:$0xff]
  %v8942 = vld [vmem:[%s5 + $0x970] sm:$0xff]
  %v8943 = vld [vmem:[%s5 + $0x978] sm:$0xff]
  %v8944 = vld [vmem:[%s5 + $0x980] sm:$0xff]
  %v8945 = vld [vmem:[%s5 + $0x988] sm:$0xff]
  %v8946 = vld [vmem:[%s5 + $0x990] sm:$0xff]
  %v8947 = vld [vmem:[%s5 + $0x998] sm:$0xff]
  %v8948 = vld [vmem:[%s5 + $0x9a0] sm:$0xff]
  %v8949 = vld [vmem:[%s5 + $0x9a8] sm:$0xff]
  %v8950 = vld [vmem:[%s5 + $0x9b0] sm:$0xff]
  %v8951 = vld [vmem:[%s5 + $0x9b8] sm:$0xff]
  %v8952 = vld [vmem:[%s5 + $0x9c0] sm:$0xff]
  %v8953 = vld [vmem:[%s5 + $0x9c8] sm:$0xff]
  %v8954 = vld [vmem:[%s5 + $0x9d0] sm:$0xff]
  %v8955 = vld [vmem:[%s5 + $0x9d8] sm:$0xff]
  %v8956 = vld [vmem:[%s5 + $0x9e0] sm:$0xff]
  %v8957 = vld [vmem:[%s5 + $0x9e8] sm:$0xff]
  %v8958 = vld [vmem:[%s5 + $0x9f0] sm:$0xff]
  %v8959 = vld [vmem:[%s5 + $0x9f8] sm:$0xff]
  %v8960 = vld [vmem:[%s5 + $0xa00] sm:$0xff]
  %v8961 = vld [vmem:[%s5 + $0xa08] sm:$0xff]
  %v8962 = vld [vmem:[%s5 + $0xa10] sm:$0xff]
  %v8963 = vld [vmem:[%s5 + $0xa18] sm:$0xff]
  %v8964 = vld [vmem:[%s5 + $0xa20] sm:$0xff]
  %v8965 = vld [vmem:[%s5 + $0xa28] sm:$0xff]
  %v8966 = vld [vmem:[%s5 + $0xa30] sm:$0xff]
  %v8967 = vld [vmem:[%s5 + $0xa38] sm:$0xff]
  %v8968 = vld [vmem:[%s5 + $0xa40] sm:$0xff]
  %v8969 = vld [vmem:[%s5 + $0xa48] sm:$0xff]
  %v8970 = vld [vmem:[%s5 + $0xa50] sm:$0xff]
  %v8971 = vld [vmem:[%s5 + $0xa58] sm:$0xff]
  %v8972 = vld [vmem:[%s5 + $0xa60] sm:$0xff]
  %v8973 = vld [vmem:[%s5 + $0xa68] sm:$0xff]
  %v8974 = vld [vmem:[%s5 + $0xa70] sm:$0xff]
  %v8975 = vld [vmem:[%s5 + $0xa78] sm:$0xff]
  %v8976 = vld [vmem:[%s5 + $0xa80] sm:$0xff]
  %v8977 = vld [vmem:[%s5 + $0xa88] sm:$0xff]
  %v8978 = vld [vmem:[%s5 + $0xa90] sm:$0xff]
  %v8979 = vld [vmem:[%s5 + $0xa98] sm:$0xff]
  %v8980 = vld [vmem:[%s5 + $0xaa0] sm:$0xff]
  %v8981 = vld [vmem:[%s5 + $0xaa8] sm:$0xff]
  %v8982 = vld [vmem:[%s5 + $0xab0] sm:$0xff]
  %v8983 = vld [vmem:[%s5 + $0xab8] sm:$0xff]
  %v8984 = vld [vmem:[%s5 + $0xac0] sm:$0xff]
  %v8985 = vld [vmem:[%s5 + $0xac8] sm:$0xff]
  %v8986 = vld [vmem:[%s5 + $0xad0] sm:$0xff]
  %v8987 = vld [vmem:[%s5 + $0xad8] sm:$0xff]
  %v8988 = vld [vmem:[%s5 + $0xae0] sm:$0xff]
  %v8989 = vld [vmem:[%s5 + $0xae8] sm:$0xff]
  %v8990 = vld [vmem:[%s5 + $0xaf0] sm:$0xff]
  %v8991 = vld [vmem:[%s5 + $0xaf8] sm:$0xff]
  %v8992 = vld [vmem:[%s5 + $0xb00] sm:$0xff]
  %v8993 = vld [vmem:[%s5 + $0xb08] sm:$0xff]
  %v8994 = vld [vmem:[%s5 + $0xb10] sm:$0xff]
  %v8995 = vld [vmem:[%s5 + $0xb18] sm:$0xff]
  %v8996 = vld [vmem:[%s5 + $0xb20] sm:$0xff]
  %v8997 = vld [vmem:[%s5 + $0xb28] sm:$0xff]
  %v8998 = vld [vmem:[%s5 + $0xb30] sm:$0xff]
  %v8999 = vld [vmem:[%s5 + $0xb38] sm:$0xff]
  %v9000 = vld [vmem:[%s5 + $0xb40] sm:$0xff]
  %v9001 = vld [vmem:[%s5 + $0xb48] sm:$0xff]
  %v9002 = vld [vmem:[%s5 + $0xb50] sm:$0xff]
  %v9003 = vld [vmem:[%s5 + $0xb58] sm:$0xff]
  %v9004 = vld [vmem:[%s5 + $0xb60] sm:$0xff]
  %v9005 = vld [vmem:[%s5 + $0xb68] sm:$0xff]
  %v9006 = vld [vmem:[%s5 + $0xb70] sm:$0xff]
  %v9007 = vld [vmem:[%s5 + $0xb78] sm:$0xff]
  %v9008 = vld [vmem:[%s5 + $0xb80] sm:$0xff]
  %v9009 = vld [vmem:[%s5 + $0xb88] sm:$0xff]
  %v9010 = vld [vmem:[%s5 + $0xb90] sm:$0xff]
  %v9011 = vld [vmem:[%s5 + $0xb98] sm:$0xff]
  %v9012 = vld [vmem:[%s5 + $0xba0] sm:$0xff]
  %v9013 = vld [vmem:[%s5 + $0xba8] sm:$0xff]
  %v9014 = vld [vmem:[%s5 + $0xbb0] sm:$0xff]
  %v9015 = vld [vmem:[%s5 + $0xbb8] sm:$0xff]
  %v9016 = vld [vmem:[%s5 + $0xbc0] sm:$0xff]
  %v9017 = vld [vmem:[%s5 + $0xbc8] sm:$0xff]
  %v9018 = vld [vmem:[%s5 + $0xbd0] sm:$0xff]
  %v9019 = vld [vmem:[%s5 + $0xbd8] sm:$0xff]
  %v9020 = vld [vmem:[%s5 + $0xbe0] sm:$0xff]
  %v9021 = vld [vmem:[%s5 + $0xbe8] sm:$0xff]
  %v9022 = vld [vmem:[%s5 + $0xbf0] sm:$0xff]
  %v9023 = vld [vmem:[%s5 + $0xbf8] sm:$0xff]
  %v9024 = vld [vmem:[%s5 + $0xc00] sm:$0xff]
  %v9025 = vld [vmem:[%s5 + $0xc08] sm:$0xff]
  %v9026 = vld [vmem:[%s5 + $0xc10] sm:$0xff]
  %v9027 = vld [vmem:[%s5 + $0xc18] sm:$0xff]
  %v9028 = vld [vmem:[%s5 + $0xc20] sm:$0xff]
  %v9029 = vld [vmem:[%s5 + $0xc28] sm:$0xff]
  %v9030 = vld [vmem:[%s5 + $0xc30] sm:$0xff]
  %v9031 = vld [vmem:[%s5 + $0xc38] sm:$0xff]
  %v9032 = vld [vmem:[%s5 + $0xc40] sm:$0xff]
  %v9033 = vld [vmem:[%s5 + $0xc48] sm:$0xff]
  %v9034 = vld [vmem:[%s5 + $0xc50] sm:$0xff]
  %v9035 = vld [vmem:[%s5 + $0xc58] sm:$0xff]
  %v9036 = vld [vmem:[%s5 + $0xc60] sm:$0xff]
  %v9037 = vld [vmem:[%s5 + $0xc68] sm:$0xff]
  %v9038 = vld [vmem:[%s5 + $0xc70] sm:$0xff]
  %v9039 = vld [vmem:[%s5 + $0xc78] sm:$0xff]
  %v9040 = vld [vmem:[%s5 + $0xc80] sm:$0xff]
  %v9041 = vld [vmem:[%s5 + $0xc88] sm:$0xff]
  %v9042 = vld [vmem:[%s5 + $0xc90] sm:$0xff]
  %v9043 = vld [vmem:[%s5 + $0xc98] sm:$0xff]
  %v9044 = vld [vmem:[%s5 + $0xca0] sm:$0xff]
  %v9045 = vld [vmem:[%s5 + $0xca8] sm:$0xff]
  %v9046 = vld [vmem:[%s5 + $0xcb0] sm:$0xff]
  %v9047 = vld [vmem:[%s5 + $0xcb8] sm:$0xff]
  %v9048 = vld [vmem:[%s5 + $0xcc0] sm:$0xff]
  %v9049 = vld [vmem:[%s5 + $0xcc8] sm:$0xff]
  %v9050 = vld [vmem:[%s5 + $0xcd0] sm:$0xff]
  %v9051 = vld [vmem:[%s5 + $0xcd8] sm:$0xff]
  %v9052 = vld [vmem:[%s5 + $0xce0] sm:$0xff]
  %v9053 = vld [vmem:[%s5 + $0xce8] sm:$0xff]
  %v9054 = vld [vmem:[%s5 + $0xcf0] sm:$0xff]
  %v9055 = vld [vmem:[%s5 + $0xcf8] sm:$0xff]
  %v9056 = vld [vmem:[%s5 + $0xd00] sm:$0xff]
  %v9057 = vld [vmem:[%s5 + $0xd08] sm:$0xff]
  %v9058 = vld [vmem:[%s5 + $0xd10] sm:$0xff]
  %v9059 = vld [vmem:[%s5 + $0xd18] sm:$0xff]
  %v9060 = vld [vmem:[%s5 + $0xd20] sm:$0xff]
  %v9061 = vld [vmem:[%s5 + $0xd28] sm:$0xff]
  %v9062 = vld [vmem:[%s5 + $0xd30] sm:$0xff]
  %v9063 = vld [vmem:[%s5 + $0xd38] sm:$0xff]
  %v9064 = vld [vmem:[%s5 + $0xd40] sm:$0xff]
  %v9065 = vld [vmem:[%s5 + $0xd48] sm:$0xff]
  %v9066 = vld [vmem:[%s5 + $0xd50] sm:$0xff]
  %v9067 = vld [vmem:[%s5 + $0xd58] sm:$0xff]
  %v9068 = vld [vmem:[%s5 + $0xd60] sm:$0xff]
  %v9069 = vld [vmem:[%s5 + $0xd68] sm:$0xff]
  %v9070 = vld [vmem:[%s5 + $0xd70] sm:$0xff]
  %v9071 = vld [vmem:[%s5 + $0xd78] sm:$0xff]
  %v9072 = vld [vmem:[%s5 + $0xd80] sm:$0xff]
  %v9073 = vld [vmem:[%s5 + $0xd88] sm:$0xff]
  %v9074 = vld [vmem:[%s5 + $0xd90] sm:$0xff]
  %v9075 = vld [vmem:[%s5 + $0xd98] sm:$0xff]
  %v9076 = vld [vmem:[%s5 + $0xda0] sm:$0xff]
  %v9077 = vld [vmem:[%s5 + $0xda8] sm:$0xff]
  %v9078 = vld [vmem:[%s5 + $0xdb0] sm:$0xff]
  %v9079 = vld [vmem:[%s5 + $0xdb8] sm:$0xff]
  %v9080 = vld [vmem:[%s5 + $0xdc0] sm:$0xff]
  %v9081 = vld [vmem:[%s5 + $0xdc8] sm:$0xff]
  %v9082 = vld [vmem:[%s5 + $0xdd0] sm:$0xff]
  %v9083 = vld [vmem:[%s5 + $0xdd8] sm:$0xff]
  %v9084 = vld [vmem:[%s5 + $0xde0] sm:$0xff]
  %v9085 = vld [vmem:[%s5 + $0xde8] sm:$0xff]
  %v9086 = vld [vmem:[%s5 + $0xdf0] sm:$0xff]
  %v9087 = vld [vmem:[%s5 + $0xdf8] sm:$0xff]
  %v9088 = vld [vmem:[%s5 + $0xe00] sm:$0xff]
  %v9089 = vld [vmem:[%s5 + $0xe08] sm:$0xff]
  %v9090 = vld [vmem:[%s5 + $0xe10] sm:$0xff]
  %v9091 = vld [vmem:[%s5 + $0xe18] sm:$0xff]
  %v9092 = vld [vmem:[%s5 + $0xe20] sm:$0xff]
  %v9093 = vld [vmem:[%s5 + $0xe28] sm:$0xff]
  %v9094 = vld [vmem:[%s5 + $0xe30] sm:$0xff]
  %v9095 = vld [vmem:[%s5 + $0xe38] sm:$0xff]
  %v9096 = vld [vmem:[%s5 + $0xe40] sm:$0xff]
  %v9097 = vld [vmem:[%s5 + $0xe48] sm:$0xff]
  %v9098 = vld [vmem:[%s5 + $0xe50] sm:$0xff]
  %v9099 = vld [vmem:[%s5 + $0xe58] sm:$0xff]
  %v9100 = vld [vmem:[%s5 + $0xe60] sm:$0xff]
  %v9101 = vld [vmem:[%s5 + $0xe68] sm:$0xff]
  %v9102 = vld [vmem:[%s5 + $0xe70] sm:$0xff]
  %v9103 = vld [vmem:[%s5 + $0xe78] sm:$0xff]
  %v9104 = vld [vmem:[%s5 + $0xe80] sm:$0xff]
  %v9105 = vld [vmem:[%s5 + $0xe88] sm:$0xff]
  %v9106 = vld [vmem:[%s5 + $0xe90] sm:$0xff]
  %v9107 = vld [vmem:[%s5 + $0xe98] sm:$0xff]
  %v9108 = vld [vmem:[%s5 + $0xea0] sm:$0xff]
  %v9109 = vld [vmem:[%s5 + $0xea8] sm:$0xff]
  %v9110 = vld [vmem:[%s5 + $0xeb0] sm:$0xff]
  %v9111 = vld [vmem:[%s5 + $0xeb8] sm:$0xff]
  %v9112 = vld [vmem:[%s5 + $0xec0] sm:$0xff]
  %v9113 = vld [vmem:[%s5 + $0xec8] sm:$0xff]
  %v9114 = vld [vmem:[%s5 + $0xed0] sm:$0xff]
  %v9115 = vld [vmem:[%s5 + $0xed8] sm:$0xff]
  %v9116 = vld [vmem:[%s5 + $0xee0] sm:$0xff]
  %v9117 = vld [vmem:[%s5 + $0xee8] sm:$0xff]
  %v9118 = vld [vmem:[%s5 + $0xef0] sm:$0xff]
  %v9119 = vld [vmem:[%s5 + $0xef8] sm:$0xff]
  %v9120 = vld [vmem:[%s5 + $0xf00] sm:$0xff]
  %v9121 = vld [vmem:[%s5 + $0xf08] sm:$0xff]
  %v9122 = vld [vmem:[%s5 + $0xf10] sm:$0xff]
  %v9123 = vld [vmem:[%s5 + $0xf18] sm:$0xff]
  %v9124 = vld [vmem:[%s5 + $0xf20] sm:$0xff]
  %v9125 = vld [vmem:[%s5 + $0xf28] sm:$0xff]
  %v9126 = vld [vmem:[%s5 + $0xf30] sm:$0xff]
  %v9127 = vld [vmem:[%s5 + $0xf38] sm:$0xff]
  %v9128 = vld [vmem:[%s5 + $0xf40] sm:$0xff]
  %v9129 = vld [vmem:[%s5 + $0xf48] sm:$0xff]
  %v9130 = vld [vmem:[%s5 + $0xf50] sm:$0xff]
  %v9131 = vld [vmem:[%s5 + $0xf58] sm:$0xff]
  %v9132 = vld [vmem:[%s5 + $0xf60] sm:$0xff]
  %v9133 = vld [vmem:[%s5 + $0xf68] sm:$0xff]
  %v9134 = vld [vmem:[%s5 + $0xf70] sm:$0xff]
  %v9135 = vld [vmem:[%s5 + $0xf78] sm:$0xff]
  %v9136 = vld [vmem:[%s5 + $0xf80] sm:$0xff]
  %v9137 = vld [vmem:[%s5 + $0xf88] sm:$0xff]
  %v9138 = vld [vmem:[%s5 + $0xf90] sm:$0xff]
  %v9139 = vld [vmem:[%s5 + $0xf98] sm:$0xff]
  %v9140 = vld [vmem:[%s5 + $0xfa0] sm:$0xff]
  %v9141 = vld [vmem:[%s5 + $0xfa8] sm:$0xff]
  %v9142 = vld [vmem:[%s5 + $0xfb0] sm:$0xff]
  %v9143 = vld [vmem:[%s5 + $0xfb8] sm:$0xff]
  %v9144 = vld [vmem:[%s5 + $0xfc0] sm:$0xff]
  %v9145 = vld [vmem:[%s5 + $0xfc8] sm:$0xff]
  %v9146 = vld [vmem:[%s5 + $0xfd0] sm:$0xff]
  %v9147 = vld [vmem:[%s5 + $0xfd8] sm:$0xff]
  %v9148 = vld [vmem:[%s5 + $0xfe0] sm:$0xff]
  %v9149 = vld [vmem:[%s5 + $0xfe8] sm:$0xff]
  %v9150 = vld [vmem:[%s5 + $0xff0] sm:$0xff]
  %v9151 = vld [vmem:[%s5 + $0xff8] sm:$0xff]
  %v9152 = vld [vmem:[%s5 + $0x1000] sm:$0xff]
  %v9153 = vld [vmem:[%s5 + $0x1008] sm:$0xff]
  %v9154 = vld [vmem:[%s5 + $0x1010] sm:$0xff]
  %v9155 = vld [vmem:[%s5 + $0x1018] sm:$0xff]
  %v9156 = vld [vmem:[%s5 + $0x1020] sm:$0xff]
  %v9157 = vld [vmem:[%s5 + $0x1028] sm:$0xff]
  %v9158 = vld [vmem:[%s5 + $0x1030] sm:$0xff]
  %v9159 = vld [vmem:[%s5 + $0x1038] sm:$0xff]
  %v9160 = vld [vmem:[%s5 + $0x1040] sm:$0xff]
  %v9161 = vld [vmem:[%s5 + $0x1048] sm:$0xff]
  %v9162 = vld [vmem:[%s5 + $0x1050] sm:$0xff]
  %v9163 = vld [vmem:[%s5 + $0x1058] sm:$0xff]
  %v9164 = vld [vmem:[%s5 + $0x1060] sm:$0xff]
  %v9165 = vld [vmem:[%s5 + $0x1068] sm:$0xff]
  %v9166 = vld [vmem:[%s5 + $0x1070] sm:$0xff]
  %v9167 = vld [vmem:[%s5 + $0x1078] sm:$0xff]
  %v9168 = vld [vmem:[%s5 + $0x1080] sm:$0xff]
  %v9169 = vld [vmem:[%s5 + $0x1088] sm:$0xff]
  %v9170 = vld [vmem:[%s5 + $0x1090] sm:$0xff]
  %v9171 = vld [vmem:[%s5 + $0x1098] sm:$0xff]
  %v9172 = vld [vmem:[%s5 + $0x10a0] sm:$0xff]
  %v9173 = vld [vmem:[%s5 + $0x10a8] sm:$0xff]
  %v9174 = vld [vmem:[%s5 + $0x10b0] sm:$0xff]
  %v9175 = vld [vmem:[%s5 + $0x10b8] sm:$0xff]
  %v9176 = vld [vmem:[%s5 + $0x10c0] sm:$0xff]
  %v9177 = vld [vmem:[%s5 + $0x10c8] sm:$0xff]
  %v9178 = vld [vmem:[%s5 + $0x10d0] sm:$0xff]
  %v9179 = vld [vmem:[%s5 + $0x10d8] sm:$0xff]
  %v9180 = vld [vmem:[%s5 + $0x10e0] sm:$0xff]
  %v9181 = vld [vmem:[%s5 + $0x10e8] sm:$0xff]
  %v9182 = vld [vmem:[%s5 + $0x10f0] sm:$0xff]
  %v9183 = vld [vmem:[%s5 + $0x10f8] sm:$0xff]
  %v9184 = vld [vmem:[%s5 + $0x1100] sm:$0xff]
  %v9185 = vld [vmem:[%s5 + $0x1108] sm:$0xff]
  %v9186 = vld [vmem:[%s5 + $0x1110] sm:$0xff]
  %v9187 = vld [vmem:[%s5 + $0x1118] sm:$0xff]
  %v9188 = vld [vmem:[%s5 + $0x1120] sm:$0xff]
  %v9189 = vld [vmem:[%s5 + $0x1128] sm:$0xff]
  %v9190 = vld [vmem:[%s5 + $0x1130] sm:$0xff]
  %v9191 = vld [vmem:[%s5 + $0x1138] sm:$0xff]
  %v9192 = vld [vmem:[%s5 + $0x1140] sm:$0xff]
  %v9193 = vld [vmem:[%s5 + $0x1148] sm:$0xff]
  %v9194 = vld [vmem:[%s5 + $0x1150] sm:$0xff]
  %v9195 = vld [vmem:[%s5 + $0x1158] sm:$0xff]
  %v9196 = vld [vmem:[%s5 + $0x1160] sm:$0xff]
  %v9197 = vld [vmem:[%s5 + $0x1168] sm:$0xff]
  %v9198 = vld [vmem:[%s5 + $0x1170] sm:$0xff]
  %v9199 = vld [vmem:[%s5 + $0x1178] sm:$0xff]
  %v9200 = vld [vmem:[%s5 + $0x1180] sm:$0xff]
  %v9201 = vld [vmem:[%s5 + $0x1188] sm:$0xff]
  %v9202 = vld [vmem:[%s5 + $0x1190] sm:$0xff]
  %v9203 = vld [vmem:[%s5 + $0x1198] sm:$0xff]
  %v9204 = vld [vmem:[%s5 + $0x11a0] sm:$0xff]
  %v9205 = vld [vmem:[%s5 + $0x11a8] sm:$0xff]
  %v9206 = vld [vmem:[%s5 + $0x11b0] sm:$0xff]
  %v9207 = vld [vmem:[%s5 + $0x11b8] sm:$0xff]
  %v9208 = vld [vmem:[%s5 + $0x11c0] sm:$0xff]
  %v9209 = vld [vmem:[%s5 + $0x11c8] sm:$0xff]
  %v9210 = vld [vmem:[%s5 + $0x11d0] sm:$0xff]
  %v9211 = vld [vmem:[%s5 + $0x11d8] sm:$0xff]
  %v9212 = vld [vmem:[%s5 + $0x11e0] sm:$0xff]
  %v9213 = vld [vmem:[%s5 + $0x11e8] sm:$0xff]
  %v9214 = vld [vmem:[%s5 + $0x11f0] sm:$0xff]
  %v9215 = vld [vmem:[%s5 + $0x11f8] sm:$0xff]
  %v9216 = vld [vmem:[%s5 + $0x1200] sm:$0xff]
  %v9217 = vld [vmem:[%s5 + $0x1208] sm:$0xff]
  %v9218 = vld [vmem:[%s5 + $0x1210] sm:$0xff]
  %v9219 = vld [vmem:[%s5 + $0x1218] sm:$0xff]
  %v9220 = vld [vmem:[%s5 + $0x1220] sm:$0xff]
  %v9221 = vld [vmem:[%s5 + $0x1228] sm:$0xff]
  %v9222 = vld [vmem:[%s5 + $0x1230] sm:$0xff]
  %v9223 = vld [vmem:[%s5 + $0x1238] sm:$0xff]
  %v9224 = vld [vmem:[%s5 + $0x1240] sm:$0xff]
  %v9225 = vld [vmem:[%s5 + $0x1248] sm:$0xff]
  %v9226 = vld [vmem:[%s5 + $0x1250] sm:$0xff]
  %v9227 = vld [vmem:[%s5 + $0x1258] sm:$0xff]
  %v9228 = vld [vmem:[%s5 + $0x1260] sm:$0xff]
  %v9229 = vld [vmem:[%s5 + $0x1268] sm:$0xff]
  %v9230 = vld [vmem:[%s5 + $0x1270] sm:$0xff]
  %v9231 = vld [vmem:[%s5 + $0x1278] sm:$0xff]
  %v9232 = vld [vmem:[%s5 + $0x1280] sm:$0xff]
  %v9233 = vld [vmem:[%s5 + $0x1288] sm:$0xff]
  %v9234 = vld [vmem:[%s5 + $0x1290] sm:$0xff]
  %v9235 = vld [vmem:[%s5 + $0x1298] sm:$0xff]
  %v9236 = vld [vmem:[%s5 + $0x12a0] sm:$0xff]
  %v9237 = vld [vmem:[%s5 + $0x12a8] sm:$0xff]
  %v9238 = vld [vmem:[%s5 + $0x12b0] sm:$0xff]
  %v9239 = vld [vmem:[%s5 + $0x12b8] sm:$0xff]
  %v9240 = vld [vmem:[%s5 + $0x12c0] sm:$0xff]
  %v9241 = vld [vmem:[%s5 + $0x12c8] sm:$0xff]
  %v9242 = vld [vmem:[%s5 + $0x12d0] sm:$0xff]
  %v9243 = vld [vmem:[%s5 + $0x12d8] sm:$0xff]
  %v9244 = vld [vmem:[%s5 + $0x12e0] sm:$0xff]
  %v9245 = vld [vmem:[%s5 + $0x12e8] sm:$0xff]
  %v9246 = vld [vmem:[%s5 + $0x12f0] sm:$0xff]
  %v9247 = vld [vmem:[%s5 + $0x12f8] sm:$0xff]
  %v9248 = vld [vmem:[%s5 + $0x1300] sm:$0xff]
  %v9249 = vld [vmem:[%s5 + $0x1308] sm:$0xff]
  %v9250 = vld [vmem:[%s5 + $0x1310] sm:$0xff]
  %v9251 = vld [vmem:[%s5 + $0x1318] sm:$0xff]
  %v9252 = vld [vmem:[%s5 + $0x1320] sm:$0xff]
  %v9253 = vld [vmem:[%s5 + $0x1328] sm:$0xff]
  %v9254 = vld [vmem:[%s5 + $0x1330] sm:$0xff]
  %v9255 = vld [vmem:[%s5 + $0x1338] sm:$0xff]
  %v9256 = vld [vmem:[%s5 + $0x1340] sm:$0xff]
  %v9257 = vld [vmem:[%s5 + $0x1348] sm:$0xff]
  %v9258 = vld [vmem:[%s5 + $0x1350] sm:$0xff]
  %v9259 = vld [vmem:[%s5 + $0x1358] sm:$0xff]
  %v9260 = vld [vmem:[%s5 + $0x1360] sm:$0xff]
  %v9261 = vld [vmem:[%s5 + $0x1368] sm:$0xff]
  %v9262 = vld [vmem:[%s5 + $0x1370] sm:$0xff]
  %v9263 = vld [vmem:[%s5 + $0x1378] sm:$0xff]
  %v9264 = vld [vmem:[%s5 + $0x1380] sm:$0xff]
  %v9265 = vld [vmem:[%s5 + $0x1388] sm:$0xff]
  %v9266 = vld [vmem:[%s5 + $0x1390] sm:$0xff]
  %v9267 = vld [vmem:[%s5 + $0x1398] sm:$0xff]
  %v9268 = vld [vmem:[%s5 + $0x13a0] sm:$0xff]
  %v9269 = vld [vmem:[%s5 + $0x13a8] sm:$0xff]
  %v9270 = vld [vmem:[%s5 + $0x13b0] sm:$0xff]
  %v9271 = vld [vmem:[%s5 + $0x13b8] sm:$0xff]
  %v9272 = vld [vmem:[%s5 + $0x13c0] sm:$0xff]
  %v9273 = vld [vmem:[%s5 + $0x13c8] sm:$0xff]
  %v9274 = vld [vmem:[%s5 + $0x13d0] sm:$0xff]
  %v9275 = vld [vmem:[%s5 + $0x13d8] sm:$0xff]
  %v9276 = vld [vmem:[%s5 + $0x13e0] sm:$0xff]
  %v9277 = vld [vmem:[%s5 + $0x13e8] sm:$0xff]
  %v9278 = vld [vmem:[%s5 + $0x13f0] sm:$0xff]
  %v9279 = vld [vmem:[%s5 + $0x13f8] sm:$0xff]
  %v9280 = vld [vmem:[%s5 + $0x1400] sm:$0xff]
  %v9281 = vld [vmem:[%s5 + $0x1408] sm:$0xff]
  %v9282 = vld [vmem:[%s5 + $0x1410] sm:$0xff]
  %v9283 = vld [vmem:[%s5 + $0x1418] sm:$0xff]
  %v9284 = vld [vmem:[%s5 + $0x1420] sm:$0xff]
  %v9285 = vld [vmem:[%s5 + $0x1428] sm:$0xff]
  %v9286 = vld [vmem:[%s5 + $0x1430] sm:$0xff]
  %v9287 = vld [vmem:[%s5 + $0x1438] sm:$0xff]
  %v9288 = vld [vmem:[%s5 + $0x1440] sm:$0xff]
  %v9289 = vld [vmem:[%s5 + $0x1448] sm:$0xff]
  %v9290 = vld [vmem:[%s5 + $0x1450] sm:$0xff]
  %v9291 = vld [vmem:[%s5 + $0x1458] sm:$0xff]
  %v9292 = vld [vmem:[%s5 + $0x1460] sm:$0xff]
  %v9293 = vld [vmem:[%s5 + $0x1468] sm:$0xff]
  %v9294 = vld [vmem:[%s5 + $0x1470] sm:$0xff]
  %v9295 = vld [vmem:[%s5 + $0x1478] sm:$0xff]
  %v9296 = vld [vmem:[%s5 + $0x1480] sm:$0xff]
  %v9297 = vld [vmem:[%s5 + $0x1488] sm:$0xff]
  %v9298 = vld [vmem:[%s5 + $0x1490] sm:$0xff]
  %v9299 = vld [vmem:[%s5 + $0x1498] sm:$0xff]
  %v9300 = vld [vmem:[%s5 + $0x14a0] sm:$0xff]
  %v9301 = vld [vmem:[%s5 + $0x14a8] sm:$0xff]
  %v9302 = vld [vmem:[%s5 + $0x14b0] sm:$0xff]
  %v9303 = vld [vmem:[%s5 + $0x14b8] sm:$0xff]
  %v9304 = vld [vmem:[%s5 + $0x14c0] sm:$0xff]
  %v9305 = vld [vmem:[%s5 + $0x14c8] sm:$0xff]
  %v9306 = vld [vmem:[%s5 + $0x14d0] sm:$0xff]
  %v9307 = vld [vmem:[%s5 + $0x14d8] sm:$0xff]
  %v9308 = vld [vmem:[%s5 + $0x14e0] sm:$0xff]
  %v9309 = vld [vmem:[%s5 + $0x14e8] sm:$0xff]
  %v9310 = vld [vmem:[%s5 + $0x14f0] sm:$0xff]
  %v9311 = vld [vmem:[%s5 + $0x14f8] sm:$0xff]
  %v9312 = vld [vmem:[%s5 + $0x1500] sm:$0xff]
  %v9313 = vld [vmem:[%s5 + $0x1508] sm:$0xff]
  %v9314 = vld [vmem:[%s5 + $0x1510] sm:$0xff]
  %v9315 = vld [vmem:[%s5 + $0x1518] sm:$0xff]
  %v9316 = vld [vmem:[%s5 + $0x1520] sm:$0xff]
  %v9317 = vld [vmem:[%s5 + $0x1528] sm:$0xff]
  %v9318 = vld [vmem:[%s5 + $0x1530] sm:$0xff]
  %v9319 = vld [vmem:[%s5 + $0x1538] sm:$0xff]
  %v9320 = vld [vmem:[%s5 + $0x1540] sm:$0xff]
  %v9321 = vld [vmem:[%s5 + $0x1548] sm:$0xff]
  %v9322 = vld [vmem:[%s5 + $0x1550] sm:$0xff]
  %v9323 = vld [vmem:[%s5 + $0x1558] sm:$0xff]
  %v9324 = vld [vmem:[%s5 + $0x1560] sm:$0xff]
  %v9325 = vld [vmem:[%s5 + $0x1568] sm:$0xff]
  %v9326 = vld [vmem:[%s5 + $0x1570] sm:$0xff]
  %v9327 = vld [vmem:[%s5 + $0x1578] sm:$0xff]
  %v9328 = vld [vmem:[%s5 + $0x1580] sm:$0xff]
  %v9329 = vld [vmem:[%s5 + $0x1588] sm:$0xff]
  %v9330 = vld [vmem:[%s5 + $0x1590] sm:$0xff]
  %v9331 = vld [vmem:[%s5 + $0x1598] sm:$0xff]
  %v9332 = vld [vmem:[%s5 + $0x15a0] sm:$0xff]
  %v9333 = vld [vmem:[%s5 + $0x15a8] sm:$0xff]
  %v9334 = vld [vmem:[%s5 + $0x15b0] sm:$0xff]
  %v9335 = vld [vmem:[%s5 + $0x15b8] sm:$0xff]
  %v9336 = vld [vmem:[%s5 + $0x15c0] sm:$0xff]
  %v9337 = vld [vmem:[%s5 + $0x15c8] sm:$0xff]
  %v9338 = vld [vmem:[%s5 + $0x15d0] sm:$0xff]
  %v9339 = vld [vmem:[%s5 + $0x15d8] sm:$0xff]
  %v9340 = vld [vmem:[%s5 + $0x15e0] sm:$0xff]
  %v9341 = vld [vmem:[%s5 + $0x15e8] sm:$0xff]
  %v9342 = vld [vmem:[%s5 + $0x15f0] sm:$0xff]
  %v9343 = vld [vmem:[%s5 + $0x15f8] sm:$0xff]
  %v9344 = vld [vmem:[%s5 + $0x1600] sm:$0xff]
  %v9345 = vld [vmem:[%s5 + $0x1608] sm:$0xff]
  %v9346 = vld [vmem:[%s5 + $0x1610] sm:$0xff]
  %v9347 = vld [vmem:[%s5 + $0x1618] sm:$0xff]
  %v9348 = vld [vmem:[%s5 + $0x1620] sm:$0xff]
  %v9349 = vld [vmem:[%s5 + $0x1628] sm:$0xff]
  %v9350 = vld [vmem:[%s5 + $0x1630] sm:$0xff]
  %v9351 = vld [vmem:[%s5 + $0x1638] sm:$0xff]
  %v9352 = vld [vmem:[%s5 + $0x1640] sm:$0xff]
  %v9353 = vld [vmem:[%s5 + $0x1648] sm:$0xff]
  %v9354 = vld [vmem:[%s5 + $0x1650] sm:$0xff]
  %v9355 = vld [vmem:[%s5 + $0x1658] sm:$0xff]
  %v9356 = vld [vmem:[%s5 + $0x1660] sm:$0xff]
  %v9357 = vld [vmem:[%s5 + $0x1668] sm:$0xff]
  %v9358 = vld [vmem:[%s5 + $0x1670] sm:$0xff]
  %v9359 = vld [vmem:[%s5 + $0x1678] sm:$0xff]
  %v9360 = vld [vmem:[%s5 + $0x1680] sm:$0xff]
  %v9361 = vld [vmem:[%s5 + $0x1688] sm:$0xff]
  %v9362 = vld [vmem:[%s5 + $0x1690] sm:$0xff]
  %v9363 = vld [vmem:[%s5 + $0x1698] sm:$0xff]
  %v9364 = vld [vmem:[%s5 + $0x16a0] sm:$0xff]
  %v9365 = vld [vmem:[%s5 + $0x16a8] sm:$0xff]
  %v9366 = vld [vmem:[%s5 + $0x16b0] sm:$0xff]
  %v9367 = vld [vmem:[%s5 + $0x16b8] sm:$0xff]
  %v9368 = vld [vmem:[%s5 + $0x16c0] sm:$0xff]
  %v9369 = vld [vmem:[%s5 + $0x16c8] sm:$0xff]
  %v9370 = vld [vmem:[%s5 + $0x16d0] sm:$0xff]
  %v9371 = vld [vmem:[%s5 + $0x16d8] sm:$0xff]
  %v9372 = vld [vmem:[%s5 + $0x16e0] sm:$0xff]
  %v9373 = vld [vmem:[%s5 + $0x16e8] sm:$0xff]
  %v9374 = vld [vmem:[%s5 + $0x16f0] sm:$0xff]
  %v9375 = vld [vmem:[%s5 + $0x16f8] sm:$0xff]
  %v9376 = vld [vmem:[%s5 + $0x1700] sm:$0xff]
  %v9377 = vld [vmem:[%s5 + $0x1708] sm:$0xff]
  %v9378 = vld [vmem:[%s5 + $0x1710] sm:$0xff]
  %v9379 = vld [vmem:[%s5 + $0x1718] sm:$0xff]
  %v9380 = vld [vmem:[%s5 + $0x1720] sm:$0xff]
  %v9381 = vld [vmem:[%s5 + $0x1728] sm:$0xff]
  %v9382 = vld [vmem:[%s5 + $0x1730] sm:$0xff]
  %v9383 = vld [vmem:[%s5 + $0x1738] sm:$0xff]
  %v9384 = vld [vmem:[%s5 + $0x1740] sm:$0xff]
  %v9385 = vld [vmem:[%s5 + $0x1748] sm:$0xff]
  %v9386 = vld [vmem:[%s5 + $0x1750] sm:$0xff]
  %v9387 = vld [vmem:[%s5 + $0x1758] sm:$0xff]
  %v9388 = vld [vmem:[%s5 + $0x1760] sm:$0xff]
  %v9389 = vld [vmem:[%s5 + $0x1768] sm:$0xff]
  %v9390 = vld [vmem:[%s5 + $0x1770] sm:$0xff]
  %v9391 = vld [vmem:[%s5 + $0x1778] sm:$0xff]
  %v9392 = vld [vmem:[%s5 + $0x1780] sm:$0xff]
  %v9393 = vld [vmem:[%s5 + $0x1788] sm:$0xff]
  %v9394 = vld [vmem:[%s5 + $0x1790] sm:$0xff]
  %v9395 = vld [vmem:[%s5 + $0x1798] sm:$0xff]
  %v9396 = vld [vmem:[%s5 + $0x17a0] sm:$0xff]
  %v9397 = vld [vmem:[%s5 + $0x17a8] sm:$0xff]
  %v9398 = vld [vmem:[%s5 + $0x17b0] sm:$0xff]
  %v9399 = vld [vmem:[%s5 + $0x17b8] sm:$0xff]
  %v9400 = vld [vmem:[%s5 + $0x17c0] sm:$0xff]
  %v9401 = vld [vmem:[%s5 + $0x17c8] sm:$0xff]
  %v9402 = vld [vmem:[%s5 + $0x17d0] sm:$0xff]
  %v9403 = vld [vmem:[%s5 + $0x17d8] sm:$0xff]
  %v9404 = vld [vmem:[%s5 + $0x17e0] sm:$0xff]
  %v9405 = vld [vmem:[%s5 + $0x17e8] sm:$0xff]
  %v9406 = vld [vmem:[%s5 + $0x17f0] sm:$0xff]
  %v9407 = vld [vmem:[%s5 + $0x17f8] sm:$0xff]
  %v9408 = vld [vmem:[%s6] sm:$0xf]
  %v9410 = vlaneseq
  %v9411 = vshrl.u32 %v9410, 7
  %v9412 = vsub.s32 0, %v9411
  %v9413 = vrot.slane %v9408, %v9412
  %v9414 = vlaneseq
  %v9415 = vshrl.u32 %v9414, 7
  %v9416 = vsub.s32 1, %v9415
  %v9417 = vrot.slane %v9408, %v9416
  %v9418 = vlaneseq
  %v9419 = vshrl.u32 %v9418, 7
  %v9420 = vsub.s32 2, %v9419
  %v9421 = vrot.slane %v9408, %v9420
  %v9422 = vlaneseq
  %v9423 = vshrl.u32 %v9422, 7
  %v9424 = vsub.s32 3, %v9423
  %v9425 = vrot.slane %v9408, %v9424
  %v9442 = vunpack.c.l.b16 %v8628
  %v9443 = vunpack.c.h.b16 %v8628
  %v9444 = vunpack.c.l.b16 %v8629
  %v9445 = vunpack.c.h.b16 %v8629
  %v9446 = vunpack.c.l.b16 %v8630
  %v9447 = vunpack.c.h.b16 %v8630
  %v9448 = vunpack.c.l.b16 %v8631
  %v9449 = vunpack.c.h.b16 %v8631
  %v9450 = vunpack.c.l.b16 %v8632
  %v9451 = vunpack.c.h.b16 %v8632
  %v9452 = vunpack.c.l.b16 %v8633
  %v9453 = vunpack.c.h.b16 %v8633
  %v9454 = vunpack.c.l.b16 %v8634
  %v9455 = vunpack.c.h.b16 %v8634
  %v9456 = vunpack.c.l.b16 %v8635
  %v9457 = vunpack.c.h.b16 %v8635
  %v9458 = vunpack.c.l.b16 %v8636
  %v9459 = vunpack.c.h.b16 %v8636
  %v9460 = vunpack.c.l.b16 %v8637
  %v9461 = vunpack.c.h.b16 %v8637
  %v9462 = vunpack.c.l.b16 %v8638
  %v9463 = vunpack.c.h.b16 %v8638
  %v9464 = vunpack.c.l.b16 %v8639
  %v9465 = vunpack.c.h.b16 %v8639
  %v9466 = vpack.c.b16 %v9442, %v9442
  %v9467 = vpack.c.b16 %v9443, %v9443
  %v9468 = vpack.c.b16 %v9444, %v9444
  %v9469 = vpack.c.b16 %v9445, %v9445
  %v9470 = vpack.c.b16 %v9446, %v9446
  %v9471 = vpack.c.b16 %v9447, %v9447
  %v9472 = vpack.c.b16 %v9448, %v9448
  %v9473 = vpack.c.b16 %v9449, %v9449
  %v9474 = vpack.c.b16 %v9450, %v9450
  %v9475 = vpack.c.b16 %v9451, %v9451
  %v9476 = vpack.c.b16 %v9452, %v9452
  %v9477 = vpack.c.b16 %v9453, %v9453
  %v9478 = vpack.c.b16 %v9454, %v9454
  %v9479 = vpack.c.b16 %v9455, %v9455
  %v9480 = vpack.c.b16 %v9456, %v9456
  %v9481 = vpack.c.b16 %v9457, %v9457
  %v9482 = vpack.c.b16 %v9458, %v9458
  %v9483 = vpack.c.b16 %v9459, %v9459
  %v9484 = vpack.c.b16 %v9460, %v9460
  %v9485 = vpack.c.b16 %v9461, %v9461
  %v9486 = vpack.c.b16 %v9462, %v9462
  %v9487 = vpack.c.b16 %v9463, %v9463
  %v9488 = vpack.c.b16 %v9464, %v9464
  %v9489 = vpack.c.b16 %v9465, %v9465
  %v10282 = vunpack.c.l.b16 %v8640
  %v10283 = vunpack.c.h.b16 %v8640
  %v10284 = vunpack.c.l.b16 %v8641
  %v10285 = vunpack.c.h.b16 %v8641
  %v10286 = vunpack.c.l.b16 %v8642
  %v10287 = vunpack.c.h.b16 %v8642
  %v10288 = vunpack.c.l.b16 %v8643
  %v10289 = vunpack.c.h.b16 %v8643
  %v10290 = vunpack.c.l.b16 %v8644
  %v10291 = vunpack.c.h.b16 %v8644
  %v10292 = vunpack.c.l.b16 %v8645
  %v10293 = vunpack.c.h.b16 %v8645
  %v10294 = vunpack.c.l.b16 %v8646
  %v10295 = vunpack.c.h.b16 %v8646
  %v10296 = vunpack.c.l.b16 %v8647
  %v10297 = vunpack.c.h.b16 %v8647
  %v10298 = vunpack.c.l.b16 %v8648
  %v10299 = vunpack.c.h.b16 %v8648
  %v10300 = vunpack.c.l.b16 %v8649
  %v10301 = vunpack.c.h.b16 %v8649
  %v10302 = vunpack.c.l.b16 %v8650
  %v10303 = vunpack.c.h.b16 %v8650
  %v10304 = vunpack.c.l.b16 %v8651
  %v10305 = vunpack.c.h.b16 %v8651
  %v10306 = vunpack.c.l.b16 %v8652
  %v10307 = vunpack.c.h.b16 %v8652
  %v10308 = vunpack.c.l.b16 %v8653
  %v10309 = vunpack.c.h.b16 %v8653
  %v10310 = vunpack.c.l.b16 %v8654
  %v10311 = vunpack.c.h.b16 %v8654
  %v10312 = vunpack.c.l.b16 %v8655
  %v10313 = vunpack.c.h.b16 %v8655
  %v10314 = vunpack.c.l.b16 %v8656
  %v10315 = vunpack.c.h.b16 %v8656
  %v10316 = vunpack.c.l.b16 %v8657
  %v10317 = vunpack.c.h.b16 %v8657
  %v10318 = vunpack.c.l.b16 %v8658
  %v10319 = vunpack.c.h.b16 %v8658
  %v10320 = vunpack.c.l.b16 %v8659
  %v10321 = vunpack.c.h.b16 %v8659
  %v10322 = vunpack.c.l.b16 %v8660
  %v10323 = vunpack.c.h.b16 %v8660
  %v10324 = vunpack.c.l.b16 %v8661
  %v10325 = vunpack.c.h.b16 %v8661
  %v10326 = vunpack.c.l.b16 %v8662
  %v10327 = vunpack.c.h.b16 %v8662
  %v10328 = vunpack.c.l.b16 %v8663
  %v10329 = vunpack.c.h.b16 %v8663
  %v10330 = vunpack.c.l.b16 %v8664
  %v10331 = vunpack.c.h.b16 %v8664
  %v10332 = vunpack.c.l.b16 %v8665
  %v10333 = vunpack.c.h.b16 %v8665
  %v10334 = vunpack.c.l.b16 %v8666
  %v10335 = vunpack.c.h.b16 %v8666
  %v10336 = vunpack.c.l.b16 %v8667
  %v10337 = vunpack.c.h.b16 %v8667
  %v10338 = vunpack.c.l.b16 %v8668
  %v10339 = vunpack.c.h.b16 %v8668
  %v10340 = vunpack.c.l.b16 %v8669
  %v10341 = vunpack.c.h.b16 %v8669
  %v10342 = vunpack.c.l.b16 %v8670
  %v10343 = vunpack.c.h.b16 %v8670
  %v10344 = vunpack.c.l.b16 %v8671
  %v10345 = vunpack.c.h.b16 %v8671
  %v10346 = vunpack.c.l.b16 %v8672
  %v10347 = vunpack.c.h.b16 %v8672
  %v10348 = vunpack.c.l.b16 %v8673
  %v10349 = vunpack.c.h.b16 %v8673
  %v10350 = vunpack.c.l.b16 %v8674
  %v10351 = vunpack.c.h.b16 %v8674
  %v10352 = vunpack.c.l.b16 %v8675
  %v10353 = vunpack.c.h.b16 %v8675
  %v10354 = vunpack.c.l.b16 %v8676
  %v10355 = vunpack.c.h.b16 %v8676
  %v10356 = vunpack.c.l.b16 %v8677
  %v10357 = vunpack.c.h.b16 %v8677
  %v10358 = vunpack.c.l.b16 %v8678
  %v10359 = vunpack.c.h.b16 %v8678
  %v10360 = vunpack.c.l.b16 %v8679
  %v10361 = vunpack.c.h.b16 %v8679
  %v10362 = vunpack.c.l.b16 %v8680
  %v10363 = vunpack.c.h.b16 %v8680
  %v10364 = vunpack.c.l.b16 %v8681
  %v10365 = vunpack.c.h.b16 %v8681
  %v10366 = vunpack.c.l.b16 %v8682
  %v10367 = vunpack.c.h.b16 %v8682
  %v10368 = vunpack.c.l.b16 %v8683
  %v10369 = vunpack.c.h.b16 %v8683
  %v10370 = vunpack.c.l.b16 %v8684
  %v10371 = vunpack.c.h.b16 %v8684
  %v10372 = vunpack.c.l.b16 %v8685
  %v10373 = vunpack.c.h.b16 %v8685
  %v10374 = vunpack.c.l.b16 %v8686
  %v10375 = vunpack.c.h.b16 %v8686
  %v10376 = vunpack.c.l.b16 %v8687
  %v10377 = vunpack.c.h.b16 %v8687
  %v10378 = vunpack.c.l.b16 %v8688
  %v10379 = vunpack.c.h.b16 %v8688
  %v10380 = vunpack.c.l.b16 %v8689
  %v10381 = vunpack.c.h.b16 %v8689
  %v10382 = vunpack.c.l.b16 %v8690
  %v10383 = vunpack.c.h.b16 %v8690
  %v10384 = vunpack.c.l.b16 %v8691
  %v10385 = vunpack.c.h.b16 %v8691
  %v10386 = vunpack.c.l.b16 %v8692
  %v10387 = vunpack.c.h.b16 %v8692
  %v10388 = vunpack.c.l.b16 %v8693
  %v10389 = vunpack.c.h.b16 %v8693
  %v10390 = vunpack.c.l.b16 %v8694
  %v10391 = vunpack.c.h.b16 %v8694
  %v10392 = vunpack.c.l.b16 %v8695
  %v10393 = vunpack.c.h.b16 %v8695
  %v10394 = vunpack.c.l.b16 %v8696
  %v10395 = vunpack.c.h.b16 %v8696
  %v10396 = vunpack.c.l.b16 %v8697
  %v10397 = vunpack.c.h.b16 %v8697
  %v10398 = vunpack.c.l.b16 %v8698
  %v10399 = vunpack.c.h.b16 %v8698
  %v10400 = vunpack.c.l.b16 %v8699
  %v10401 = vunpack.c.h.b16 %v8699
  %v10402 = vunpack.c.l.b16 %v8700
  %v10403 = vunpack.c.h.b16 %v8700
  %v10404 = vunpack.c.l.b16 %v8701
  %v10405 = vunpack.c.h.b16 %v8701
  %v10406 = vunpack.c.l.b16 %v8702
  %v10407 = vunpack.c.h.b16 %v8702
  %v10408 = vunpack.c.l.b16 %v8703
  %v10409 = vunpack.c.h.b16 %v8703
  %v10410 = vunpack.c.l.b16 %v8704
  %v10411 = vunpack.c.h.b16 %v8704
  %v10412 = vunpack.c.l.b16 %v8705
  %v10413 = vunpack.c.h.b16 %v8705
  %v10414 = vunpack.c.l.b16 %v8706
  %v10415 = vunpack.c.h.b16 %v8706
  %v10416 = vunpack.c.l.b16 %v8707
  %v10417 = vunpack.c.h.b16 %v8707
  %v10418 = vunpack.c.l.b16 %v8708
  %v10419 = vunpack.c.h.b16 %v8708
  %v10420 = vunpack.c.l.b16 %v8709
  %v10421 = vunpack.c.h.b16 %v8709
  %v10422 = vunpack.c.l.b16 %v8710
  %v10423 = vunpack.c.h.b16 %v8710
  %v10424 = vunpack.c.l.b16 %v8711
  %v10425 = vunpack.c.h.b16 %v8711
  %v10426 = vunpack.c.l.b16 %v8712
  %v10427 = vunpack.c.h.b16 %v8712
  %v10428 = vunpack.c.l.b16 %v8713
  %v10429 = vunpack.c.h.b16 %v8713
  %v10430 = vunpack.c.l.b16 %v8714
  %v10431 = vunpack.c.h.b16 %v8714
  %v10432 = vunpack.c.l.b16 %v8715
  %v10433 = vunpack.c.h.b16 %v8715
  %v10434 = vunpack.c.l.b16 %v8716
  %v10435 = vunpack.c.h.b16 %v8716
  %v10436 = vunpack.c.l.b16 %v8717
  %v10437 = vunpack.c.h.b16 %v8717
  %v10438 = vunpack.c.l.b16 %v8718
  %v10439 = vunpack.c.h.b16 %v8718
  %v10440 = vunpack.c.l.b16 %v8719
  %v10441 = vunpack.c.h.b16 %v8719
  %v10442 = vunpack.c.l.b16 %v8720
  %v10443 = vunpack.c.h.b16 %v8720
  %v10444 = vunpack.c.l.b16 %v8721
  %v10445 = vunpack.c.h.b16 %v8721
  %v10446 = vunpack.c.l.b16 %v8722
  %v10447 = vunpack.c.h.b16 %v8722
  %v10448 = vunpack.c.l.b16 %v8723
  %v10449 = vunpack.c.h.b16 %v8723
  %v10450 = vunpack.c.l.b16 %v8724
  %v10451 = vunpack.c.h.b16 %v8724
  %v10452 = vunpack.c.l.b16 %v8725
  %v10453 = vunpack.c.h.b16 %v8725
  %v10454 = vunpack.c.l.b16 %v8726
  %v10455 = vunpack.c.h.b16 %v8726
  %v10456 = vunpack.c.l.b16 %v8727
  %v10457 = vunpack.c.h.b16 %v8727
  %v10458 = vunpack.c.l.b16 %v8728
  %v10459 = vunpack.c.h.b16 %v8728
  %v10460 = vunpack.c.l.b16 %v8729
  %v10461 = vunpack.c.h.b16 %v8729
  %v10462 = vunpack.c.l.b16 %v8730
  %v10463 = vunpack.c.h.b16 %v8730
  %v10464 = vunpack.c.l.b16 %v8731
  %v10465 = vunpack.c.h.b16 %v8731
  %v10466 = vunpack.c.l.b16 %v8732
  %v10467 = vunpack.c.h.b16 %v8732
  %v10468 = vunpack.c.l.b16 %v8733
  %v10469 = vunpack.c.h.b16 %v8733
  %v10470 = vunpack.c.l.b16 %v8734
  %v10471 = vunpack.c.h.b16 %v8734
  %v10472 = vunpack.c.l.b16 %v8735
  %v10473 = vunpack.c.h.b16 %v8735
  %v10474 = vunpack.c.l.b16 %v8736
  %v10475 = vunpack.c.h.b16 %v8736
  %v10476 = vunpack.c.l.b16 %v8737
  %v10477 = vunpack.c.h.b16 %v8737
  %v10478 = vunpack.c.l.b16 %v8738
  %v10479 = vunpack.c.h.b16 %v8738
  %v10480 = vunpack.c.l.b16 %v8739
  %v10481 = vunpack.c.h.b16 %v8739
  %v10482 = vunpack.c.l.b16 %v8740
  %v10483 = vunpack.c.h.b16 %v8740
  %v10484 = vunpack.c.l.b16 %v8741
  %v10485 = vunpack.c.h.b16 %v8741
  %v10486 = vunpack.c.l.b16 %v8742
  %v10487 = vunpack.c.h.b16 %v8742
  %v10488 = vunpack.c.l.b16 %v8743
  %v10489 = vunpack.c.h.b16 %v8743
  %v10490 = vunpack.c.l.b16 %v8744
  %v10491 = vunpack.c.h.b16 %v8744
  %v10492 = vunpack.c.l.b16 %v8745
  %v10493 = vunpack.c.h.b16 %v8745
  %v10494 = vunpack.c.l.b16 %v8746
  %v10495 = vunpack.c.h.b16 %v8746
  %v10496 = vunpack.c.l.b16 %v8747
  %v10497 = vunpack.c.h.b16 %v8747
  %v10498 = vunpack.c.l.b16 %v8748
  %v10499 = vunpack.c.h.b16 %v8748
  %v10500 = vunpack.c.l.b16 %v8749
  %v10501 = vunpack.c.h.b16 %v8749
  %v10502 = vunpack.c.l.b16 %v8750
  %v10503 = vunpack.c.h.b16 %v8750
  %v10504 = vunpack.c.l.b16 %v8751
  %v10505 = vunpack.c.h.b16 %v8751
  %v10506 = vunpack.c.l.b16 %v8752
  %v10507 = vunpack.c.h.b16 %v8752
  %v10508 = vunpack.c.l.b16 %v8753
  %v10509 = vunpack.c.h.b16 %v8753
  %v10510 = vunpack.c.l.b16 %v8754
  %v10511 = vunpack.c.h.b16 %v8754
  %v10512 = vunpack.c.l.b16 %v8755
  %v10513 = vunpack.c.h.b16 %v8755
  %v10514 = vunpack.c.l.b16 %v8756
  %v10515 = vunpack.c.h.b16 %v8756
  %v10516 = vunpack.c.l.b16 %v8757
  %v10517 = vunpack.c.h.b16 %v8757
  %v10518 = vunpack.c.l.b16 %v8758
  %v10519 = vunpack.c.h.b16 %v8758
  %v10520 = vunpack.c.l.b16 %v8759
  %v10521 = vunpack.c.h.b16 %v8759
  %v10522 = vunpack.c.l.b16 %v8760
  %v10523 = vunpack.c.h.b16 %v8760
  %v10524 = vunpack.c.l.b16 %v8761
  %v10525 = vunpack.c.h.b16 %v8761
  %v10526 = vunpack.c.l.b16 %v8762
  %v10527 = vunpack.c.h.b16 %v8762
  %v10528 = vunpack.c.l.b16 %v8763
  %v10529 = vunpack.c.h.b16 %v8763
  %v10530 = vunpack.c.l.b16 %v8764
  %v10531 = vunpack.c.h.b16 %v8764
  %v10532 = vunpack.c.l.b16 %v8765
  %v10533 = vunpack.c.h.b16 %v8765
  %v10534 = vunpack.c.l.b16 %v8766
  %v10535 = vunpack.c.h.b16 %v8766
  %v10536 = vunpack.c.l.b16 %v8767
  %v10537 = vunpack.c.h.b16 %v8767
  %v10538 = vunpack.c.l.b16 %v8768
  %v10539 = vunpack.c.h.b16 %v8768
  %v10540 = vunpack.c.l.b16 %v8769
  %v10541 = vunpack.c.h.b16 %v8769
  %v10542 = vunpack.c.l.b16 %v8770
  %v10543 = vunpack.c.h.b16 %v8770
  %v10544 = vunpack.c.l.b16 %v8771
  %v10545 = vunpack.c.h.b16 %v8771
  %v10546 = vunpack.c.l.b16 %v8772
  %v10547 = vunpack.c.h.b16 %v8772
  %v10548 = vunpack.c.l.b16 %v8773
  %v10549 = vunpack.c.h.b16 %v8773
  %v10550 = vunpack.c.l.b16 %v8774
  %v10551 = vunpack.c.h.b16 %v8774
  %v10552 = vunpack.c.l.b16 %v8775
  %v10553 = vunpack.c.h.b16 %v8775
  %v10554 = vunpack.c.l.b16 %v8776
  %v10555 = vunpack.c.h.b16 %v8776
  %v10556 = vunpack.c.l.b16 %v8777
  %v10557 = vunpack.c.h.b16 %v8777
  %v10558 = vunpack.c.l.b16 %v8778
  %v10559 = vunpack.c.h.b16 %v8778
  %v10560 = vunpack.c.l.b16 %v8779
  %v10561 = vunpack.c.h.b16 %v8779
  %v10562 = vunpack.c.l.b16 %v8780
  %v10563 = vunpack.c.h.b16 %v8780
  %v10564 = vunpack.c.l.b16 %v8781
  %v10565 = vunpack.c.h.b16 %v8781
  %v10566 = vunpack.c.l.b16 %v8782
  %v10567 = vunpack.c.h.b16 %v8782
  %v10568 = vunpack.c.l.b16 %v8783
  %v10569 = vunpack.c.h.b16 %v8783
  %v10570 = vunpack.c.l.b16 %v8784
  %v10571 = vunpack.c.h.b16 %v8784
  %v10572 = vunpack.c.l.b16 %v8785
  %v10573 = vunpack.c.h.b16 %v8785
  %v10574 = vunpack.c.l.b16 %v8786
  %v10575 = vunpack.c.h.b16 %v8786
  %v10576 = vunpack.c.l.b16 %v8787
  %v10577 = vunpack.c.h.b16 %v8787
  %v10578 = vunpack.c.l.b16 %v8788
  %v10579 = vunpack.c.h.b16 %v8788
  %v10580 = vunpack.c.l.b16 %v8789
  %v10581 = vunpack.c.h.b16 %v8789
  %v10582 = vunpack.c.l.b16 %v8790
  %v10583 = vunpack.c.h.b16 %v8790
  %v10584 = vunpack.c.l.b16 %v8791
  %v10585 = vunpack.c.h.b16 %v8791
  %v10586 = vunpack.c.l.b16 %v8792
  %v10587 = vunpack.c.h.b16 %v8792
  %v10588 = vunpack.c.l.b16 %v8793
  %v10589 = vunpack.c.h.b16 %v8793
  %v10590 = vunpack.c.l.b16 %v8794
  %v10591 = vunpack.c.h.b16 %v8794
  %v10592 = vunpack.c.l.b16 %v8795
  %v10593 = vunpack.c.h.b16 %v8795
  %v10594 = vunpack.c.l.b16 %v8796
  %v10595 = vunpack.c.h.b16 %v8796
  %v10596 = vunpack.c.l.b16 %v8797
  %v10597 = vunpack.c.h.b16 %v8797
  %v10598 = vunpack.c.l.b16 %v8798
  %v10599 = vunpack.c.h.b16 %v8798
  %v10600 = vunpack.c.l.b16 %v8799
  %v10601 = vunpack.c.h.b16 %v8799
  %v10602 = vunpack.c.l.b16 %v8800
  %v10603 = vunpack.c.h.b16 %v8800
  %v10604 = vunpack.c.l.b16 %v8801
  %v10605 = vunpack.c.h.b16 %v8801
  %v10606 = vunpack.c.l.b16 %v8802
  %v10607 = vunpack.c.h.b16 %v8802
  %v10608 = vunpack.c.l.b16 %v8803
  %v10609 = vunpack.c.h.b16 %v8803
  %v10610 = vunpack.c.l.b16 %v8804
  %v10611 = vunpack.c.h.b16 %v8804
  %v10612 = vunpack.c.l.b16 %v8805
  %v10613 = vunpack.c.h.b16 %v8805
  %v10614 = vunpack.c.l.b16 %v8806
  %v10615 = vunpack.c.h.b16 %v8806
  %v10616 = vunpack.c.l.b16 %v8807
  %v10617 = vunpack.c.h.b16 %v8807
  %v10618 = vunpack.c.l.b16 %v8808
  %v10619 = vunpack.c.h.b16 %v8808
  %v10620 = vunpack.c.l.b16 %v8809
  %v10621 = vunpack.c.h.b16 %v8809
  %v10622 = vunpack.c.l.b16 %v8810
  %v10623 = vunpack.c.h.b16 %v8810
  %v10624 = vunpack.c.l.b16 %v8811
  %v10625 = vunpack.c.h.b16 %v8811
  %v10626 = vunpack.c.l.b16 %v8812
  %v10627 = vunpack.c.h.b16 %v8812
  %v10628 = vunpack.c.l.b16 %v8813
  %v10629 = vunpack.c.h.b16 %v8813
  %v10630 = vunpack.c.l.b16 %v8814
  %v10631 = vunpack.c.h.b16 %v8814
  %v10632 = vunpack.c.l.b16 %v8815
  %v10633 = vunpack.c.h.b16 %v8815
  %v10634 = vunpack.c.l.b16 %v8816
  %v10635 = vunpack.c.h.b16 %v8816
  %v10636 = vunpack.c.l.b16 %v8817
  %v10637 = vunpack.c.h.b16 %v8817
  %v10638 = vunpack.c.l.b16 %v8818
  %v10639 = vunpack.c.h.b16 %v8818
  %v10640 = vunpack.c.l.b16 %v8819
  %v10641 = vunpack.c.h.b16 %v8819
  %v10642 = vunpack.c.l.b16 %v8820
  %v10643 = vunpack.c.h.b16 %v8820
  %v10644 = vunpack.c.l.b16 %v8821
  %v10645 = vunpack.c.h.b16 %v8821
  %v10646 = vunpack.c.l.b16 %v8822
  %v10647 = vunpack.c.h.b16 %v8822
  %v10648 = vunpack.c.l.b16 %v8823
  %v10649 = vunpack.c.h.b16 %v8823
  %v10650 = vunpack.c.l.b16 %v8824
  %v10651 = vunpack.c.h.b16 %v8824
  %v10652 = vunpack.c.l.b16 %v8825
  %v10653 = vunpack.c.h.b16 %v8825
  %v10654 = vunpack.c.l.b16 %v8826
  %v10655 = vunpack.c.h.b16 %v8826
  %v10656 = vunpack.c.l.b16 %v8827
  %v10657 = vunpack.c.h.b16 %v8827
  %v10658 = vunpack.c.l.b16 %v8828
  %v10659 = vunpack.c.h.b16 %v8828
  %v10660 = vunpack.c.l.b16 %v8829
  %v10661 = vunpack.c.h.b16 %v8829
  %v10662 = vunpack.c.l.b16 %v8830
  %v10663 = vunpack.c.h.b16 %v8830
  %v10664 = vunpack.c.l.b16 %v8831
  %v10665 = vunpack.c.h.b16 %v8831
  %v10666 = vunpack.c.l.b16 %v8832
  %v10667 = vunpack.c.h.b16 %v8832
  %v10668 = vunpack.c.l.b16 %v8833
  %v10669 = vunpack.c.h.b16 %v8833
  %v10670 = vunpack.c.l.b16 %v8834
  %v10671 = vunpack.c.h.b16 %v8834
  %v10672 = vunpack.c.l.b16 %v8835
  %v10673 = vunpack.c.h.b16 %v8835
  %v10674 = vunpack.c.l.b16 %v8836
  %v10675 = vunpack.c.h.b16 %v8836
  %v10676 = vunpack.c.l.b16 %v8837
  %v10677 = vunpack.c.h.b16 %v8837
  %v10678 = vunpack.c.l.b16 %v8838
  %v10679 = vunpack.c.h.b16 %v8838
  %v10680 = vunpack.c.l.b16 %v8839
  %v10681 = vunpack.c.h.b16 %v8839
  %v10682 = vunpack.c.l.b16 %v8840
  %v10683 = vunpack.c.h.b16 %v8840
  %v10684 = vunpack.c.l.b16 %v8841
  %v10685 = vunpack.c.h.b16 %v8841
  %v10686 = vunpack.c.l.b16 %v8842
  %v10687 = vunpack.c.h.b16 %v8842
  %v10688 = vunpack.c.l.b16 %v8843
  %v10689 = vunpack.c.h.b16 %v8843
  %v10690 = vunpack.c.l.b16 %v8844
  %v10691 = vunpack.c.h.b16 %v8844
  %v10692 = vunpack.c.l.b16 %v8845
  %v10693 = vunpack.c.h.b16 %v8845
  %v10694 = vunpack.c.l.b16 %v8846
  %v10695 = vunpack.c.h.b16 %v8846
  %v10696 = vunpack.c.l.b16 %v8847
  %v10697 = vunpack.c.h.b16 %v8847
  %v10698 = vunpack.c.l.b16 %v8848
  %v10699 = vunpack.c.h.b16 %v8848
  %v10700 = vunpack.c.l.b16 %v8849
  %v10701 = vunpack.c.h.b16 %v8849
  %v10702 = vunpack.c.l.b16 %v8850
  %v10703 = vunpack.c.h.b16 %v8850
  %v10704 = vunpack.c.l.b16 %v8851
  %v10705 = vunpack.c.h.b16 %v8851
  %v10706 = vunpack.c.l.b16 %v8852
  %v10707 = vunpack.c.h.b16 %v8852
  %v10708 = vunpack.c.l.b16 %v8853
  %v10709 = vunpack.c.h.b16 %v8853
  %v10710 = vunpack.c.l.b16 %v8854
  %v10711 = vunpack.c.h.b16 %v8854
  %v10712 = vunpack.c.l.b16 %v8855
  %v10713 = vunpack.c.h.b16 %v8855
  %v10714 = vunpack.c.l.b16 %v8856
  %v10715 = vunpack.c.h.b16 %v8856
  %v10716 = vunpack.c.l.b16 %v8857
  %v10717 = vunpack.c.h.b16 %v8857
  %v10718 = vunpack.c.l.b16 %v8858
  %v10719 = vunpack.c.h.b16 %v8858
  %v10720 = vunpack.c.l.b16 %v8859
  %v10721 = vunpack.c.h.b16 %v8859
  %v10722 = vunpack.c.l.b16 %v8860
  %v10723 = vunpack.c.h.b16 %v8860
  %v10724 = vunpack.c.l.b16 %v8861
  %v10725 = vunpack.c.h.b16 %v8861
  %v10726 = vunpack.c.l.b16 %v8862
  %v10727 = vunpack.c.h.b16 %v8862
  %v10728 = vunpack.c.l.b16 %v8863
  %v10729 = vunpack.c.h.b16 %v8863
  %v10730 = vunpack.c.l.b16 %v8864
  %v10731 = vunpack.c.h.b16 %v8864
  %v10732 = vunpack.c.l.b16 %v8865
  %v10733 = vunpack.c.h.b16 %v8865
  %v10734 = vunpack.c.l.b16 %v8866
  %v10735 = vunpack.c.h.b16 %v8866
  %v10736 = vunpack.c.l.b16 %v8867
  %v10737 = vunpack.c.h.b16 %v8867
  %v10738 = vunpack.c.l.b16 %v8868
  %v10739 = vunpack.c.h.b16 %v8868
  %v10740 = vunpack.c.l.b16 %v8869
  %v10741 = vunpack.c.h.b16 %v8869
  %v10742 = vunpack.c.l.b16 %v8870
  %v10743 = vunpack.c.h.b16 %v8870
  %v10744 = vunpack.c.l.b16 %v8871
  %v10745 = vunpack.c.h.b16 %v8871
  %v10746 = vunpack.c.l.b16 %v8872
  %v10747 = vunpack.c.h.b16 %v8872
  %v10748 = vunpack.c.l.b16 %v8873
  %v10749 = vunpack.c.h.b16 %v8873
  %v10750 = vunpack.c.l.b16 %v8874
  %v10751 = vunpack.c.h.b16 %v8874
  %v10752 = vunpack.c.l.b16 %v8875
  %v10753 = vunpack.c.h.b16 %v8875
  %v10754 = vunpack.c.l.b16 %v8876
  %v10755 = vunpack.c.h.b16 %v8876
  %v10756 = vunpack.c.l.b16 %v8877
  %v10757 = vunpack.c.h.b16 %v8877
  %v10758 = vunpack.c.l.b16 %v8878
  %v10759 = vunpack.c.h.b16 %v8878
  %v10760 = vunpack.c.l.b16 %v8879
  %v10761 = vunpack.c.h.b16 %v8879
  %v10762 = vunpack.c.l.b16 %v8880
  %v10763 = vunpack.c.h.b16 %v8880
  %v10764 = vunpack.c.l.b16 %v8881
  %v10765 = vunpack.c.h.b16 %v8881
  %v10766 = vunpack.c.l.b16 %v8882
  %v10767 = vunpack.c.h.b16 %v8882
  %v10768 = vunpack.c.l.b16 %v8883
  %v10769 = vunpack.c.h.b16 %v8883
  %v10770 = vunpack.c.l.b16 %v8884
  %v10771 = vunpack.c.h.b16 %v8884
  %v10772 = vunpack.c.l.b16 %v8885
  %v10773 = vunpack.c.h.b16 %v8885
  %v10774 = vunpack.c.l.b16 %v8886
  %v10775 = vunpack.c.h.b16 %v8886
  %v10776 = vunpack.c.l.b16 %v8887
  %v10777 = vunpack.c.h.b16 %v8887
  %v10778 = vunpack.c.l.b16 %v8888
  %v10779 = vunpack.c.h.b16 %v8888
  %v10780 = vunpack.c.l.b16 %v8889
  %v10781 = vunpack.c.h.b16 %v8889
  %v10782 = vunpack.c.l.b16 %v8890
  %v10783 = vunpack.c.h.b16 %v8890
  %v10784 = vunpack.c.l.b16 %v8891
  %v10785 = vunpack.c.h.b16 %v8891
  %v10786 = vunpack.c.l.b16 %v8892
  %v10787 = vunpack.c.h.b16 %v8892
  %v10788 = vunpack.c.l.b16 %v8893
  %v10789 = vunpack.c.h.b16 %v8893
  %v10790 = vunpack.c.l.b16 %v8894
  %v10791 = vunpack.c.h.b16 %v8894
  %v10792 = vunpack.c.l.b16 %v8895
  %v10793 = vunpack.c.h.b16 %v8895
  %v10794 = vunpack.c.l.b16 %v8896
  %v10795 = vunpack.c.h.b16 %v8896
  %v10796 = vunpack.c.l.b16 %v8897
  %v10797 = vunpack.c.h.b16 %v8897
  %v10798 = vunpack.c.l.b16 %v8898
  %v10799 = vunpack.c.h.b16 %v8898
  %v10800 = vunpack.c.l.b16 %v8899
  %v10801 = vunpack.c.h.b16 %v8899
  %v10802 = vunpack.c.l.b16 %v8900
  %v10803 = vunpack.c.h.b16 %v8900
  %v10804 = vunpack.c.l.b16 %v8901
  %v10805 = vunpack.c.h.b16 %v8901
  %v10806 = vunpack.c.l.b16 %v8902
  %v10807 = vunpack.c.h.b16 %v8902
  %v10808 = vunpack.c.l.b16 %v8903
  %v10809 = vunpack.c.h.b16 %v8903
  %v10810 = vunpack.c.l.b16 %v8904
  %v10811 = vunpack.c.h.b16 %v8904
  %v10812 = vunpack.c.l.b16 %v8905
  %v10813 = vunpack.c.h.b16 %v8905
  %v10814 = vunpack.c.l.b16 %v8906
  %v10815 = vunpack.c.h.b16 %v8906
  %v10816 = vunpack.c.l.b16 %v8907
  %v10817 = vunpack.c.h.b16 %v8907
  %v10818 = vunpack.c.l.b16 %v8908
  %v10819 = vunpack.c.h.b16 %v8908
  %v10820 = vunpack.c.l.b16 %v8909
  %v10821 = vunpack.c.h.b16 %v8909
  %v10822 = vunpack.c.l.b16 %v8910
  %v10823 = vunpack.c.h.b16 %v8910
  %v10824 = vunpack.c.l.b16 %v8911
  %v10825 = vunpack.c.h.b16 %v8911
  %v10826 = vunpack.c.l.b16 %v8912
  %v10827 = vunpack.c.h.b16 %v8912
  %v10828 = vunpack.c.l.b16 %v8913
  %v10829 = vunpack.c.h.b16 %v8913
  %v10830 = vunpack.c.l.b16 %v8914
  %v10831 = vunpack.c.h.b16 %v8914
  %v10832 = vunpack.c.l.b16 %v8915
  %v10833 = vunpack.c.h.b16 %v8915
  %v10834 = vunpack.c.l.b16 %v8916
  %v10835 = vunpack.c.h.b16 %v8916
  %v10836 = vunpack.c.l.b16 %v8917
  %v10837 = vunpack.c.h.b16 %v8917
  %v10838 = vunpack.c.l.b16 %v8918
  %v10839 = vunpack.c.h.b16 %v8918
  %v10840 = vunpack.c.l.b16 %v8919
  %v10841 = vunpack.c.h.b16 %v8919
  %v10842 = vunpack.c.l.b16 %v8920
  %v10843 = vunpack.c.h.b16 %v8920
  %v10844 = vunpack.c.l.b16 %v8921
  %v10845 = vunpack.c.h.b16 %v8921
  %v10846 = vunpack.c.l.b16 %v8922
  %v10847 = vunpack.c.h.b16 %v8922
  %v10848 = vunpack.c.l.b16 %v8923
  %v10849 = vunpack.c.h.b16 %v8923
  %v10850 = vunpack.c.l.b16 %v8924
  %v10851 = vunpack.c.h.b16 %v8924
  %v10852 = vunpack.c.l.b16 %v8925
  %v10853 = vunpack.c.h.b16 %v8925
  %v10854 = vunpack.c.l.b16 %v8926
  %v10855 = vunpack.c.h.b16 %v8926
  %v10856 = vunpack.c.l.b16 %v8927
  %v10857 = vunpack.c.h.b16 %v8927
  %v10858 = vunpack.c.l.b16 %v8928
  %v10859 = vunpack.c.h.b16 %v8928
  %v10860 = vunpack.c.l.b16 %v8929
  %v10861 = vunpack.c.h.b16 %v8929
  %v10862 = vunpack.c.l.b16 %v8930
  %v10863 = vunpack.c.h.b16 %v8930
  %v10864 = vunpack.c.l.b16 %v8931
  %v10865 = vunpack.c.h.b16 %v8931
  %v10866 = vunpack.c.l.b16 %v8932
  %v10867 = vunpack.c.h.b16 %v8932
  %v10868 = vunpack.c.l.b16 %v8933
  %v10869 = vunpack.c.h.b16 %v8933
  %v10870 = vunpack.c.l.b16 %v8934
  %v10871 = vunpack.c.h.b16 %v8934
  %v10872 = vunpack.c.l.b16 %v8935
  %v10873 = vunpack.c.h.b16 %v8935
  %v10874 = vunpack.c.l.b16 %v8936
  %v10875 = vunpack.c.h.b16 %v8936
  %v10876 = vunpack.c.l.b16 %v8937
  %v10877 = vunpack.c.h.b16 %v8937
  %v10878 = vunpack.c.l.b16 %v8938
  %v10879 = vunpack.c.h.b16 %v8938
  %v10880 = vunpack.c.l.b16 %v8939
  %v10881 = vunpack.c.h.b16 %v8939
  %v10882 = vunpack.c.l.b16 %v8940
  %v10883 = vunpack.c.h.b16 %v8940
  %v10884 = vunpack.c.l.b16 %v8941
  %v10885 = vunpack.c.h.b16 %v8941
  %v10886 = vunpack.c.l.b16 %v8942
  %v10887 = vunpack.c.h.b16 %v8942
  %v10888 = vunpack.c.l.b16 %v8943
  %v10889 = vunpack.c.h.b16 %v8943
  %v10890 = vunpack.c.l.b16 %v8944
  %v10891 = vunpack.c.h.b16 %v8944
  %v10892 = vunpack.c.l.b16 %v8945
  %v10893 = vunpack.c.h.b16 %v8945
  %v10894 = vunpack.c.l.b16 %v8946
  %v10895 = vunpack.c.h.b16 %v8946
  %v10896 = vunpack.c.l.b16 %v8947
  %v10897 = vunpack.c.h.b16 %v8947
  %v10898 = vunpack.c.l.b16 %v8948
  %v10899 = vunpack.c.h.b16 %v8948
  %v10900 = vunpack.c.l.b16 %v8949
  %v10901 = vunpack.c.h.b16 %v8949
  %v10902 = vunpack.c.l.b16 %v8950
  %v10903 = vunpack.c.h.b16 %v8950
  %v10904 = vunpack.c.l.b16 %v8951
  %v10905 = vunpack.c.h.b16 %v8951
  %v10906 = vunpack.c.l.b16 %v8952
  %v10907 = vunpack.c.h.b16 %v8952
  %v10908 = vunpack.c.l.b16 %v8953
  %v10909 = vunpack.c.h.b16 %v8953
  %v10910 = vunpack.c.l.b16 %v8954
  %v10911 = vunpack.c.h.b16 %v8954
  %v10912 = vunpack.c.l.b16 %v8955
  %v10913 = vunpack.c.h.b16 %v8955
  %v10914 = vunpack.c.l.b16 %v8956
  %v10915 = vunpack.c.h.b16 %v8956
  %v10916 = vunpack.c.l.b16 %v8957
  %v10917 = vunpack.c.h.b16 %v8957
  %v10918 = vunpack.c.l.b16 %v8958
  %v10919 = vunpack.c.h.b16 %v8958
  %v10920 = vunpack.c.l.b16 %v8959
  %v10921 = vunpack.c.h.b16 %v8959
  %v10922 = vunpack.c.l.b16 %v8960
  %v10923 = vunpack.c.h.b16 %v8960
  %v10924 = vunpack.c.l.b16 %v8961
  %v10925 = vunpack.c.h.b16 %v8961
  %v10926 = vunpack.c.l.b16 %v8962
  %v10927 = vunpack.c.h.b16 %v8962
  %v10928 = vunpack.c.l.b16 %v8963
  %v10929 = vunpack.c.h.b16 %v8963
  %v10930 = vunpack.c.l.b16 %v8964
  %v10931 = vunpack.c.h.b16 %v8964
  %v10932 = vunpack.c.l.b16 %v8965
  %v10933 = vunpack.c.h.b16 %v8965
  %v10934 = vunpack.c.l.b16 %v8966
  %v10935 = vunpack.c.h.b16 %v8966
  %v10936 = vunpack.c.l.b16 %v8967
  %v10937 = vunpack.c.h.b16 %v8967
  %v10938 = vunpack.c.l.b16 %v8968
  %v10939 = vunpack.c.h.b16 %v8968
  %v10940 = vunpack.c.l.b16 %v8969
  %v10941 = vunpack.c.h.b16 %v8969
  %v10942 = vunpack.c.l.b16 %v8970
  %v10943 = vunpack.c.h.b16 %v8970
  %v10944 = vunpack.c.l.b16 %v8971
  %v10945 = vunpack.c.h.b16 %v8971
  %v10946 = vunpack.c.l.b16 %v8972
  %v10947 = vunpack.c.h.b16 %v8972
  %v10948 = vunpack.c.l.b16 %v8973
  %v10949 = vunpack.c.h.b16 %v8973
  %v10950 = vunpack.c.l.b16 %v8974
  %v10951 = vunpack.c.h.b16 %v8974
  %v10952 = vunpack.c.l.b16 %v8975
  %v10953 = vunpack.c.h.b16 %v8975
  %v10954 = vunpack.c.l.b16 %v8976
  %v10955 = vunpack.c.h.b16 %v8976
  %v10956 = vunpack.c.l.b16 %v8977
  %v10957 = vunpack.c.h.b16 %v8977
  %v10958 = vunpack.c.l.b16 %v8978
  %v10959 = vunpack.c.h.b16 %v8978
  %v10960 = vunpack.c.l.b16 %v8979
  %v10961 = vunpack.c.h.b16 %v8979
  %v10962 = vunpack.c.l.b16 %v8980
  %v10963 = vunpack.c.h.b16 %v8980
  %v10964 = vunpack.c.l.b16 %v8981
  %v10965 = vunpack.c.h.b16 %v8981
  %v10966 = vunpack.c.l.b16 %v8982
  %v10967 = vunpack.c.h.b16 %v8982
  %v10968 = vunpack.c.l.b16 %v8983
  %v10969 = vunpack.c.h.b16 %v8983
  %v10970 = vunpack.c.l.b16 %v8984
  %v10971 = vunpack.c.h.b16 %v8984
  %v10972 = vunpack.c.l.b16 %v8985
  %v10973 = vunpack.c.h.b16 %v8985
  %v10974 = vunpack.c.l.b16 %v8986
  %v10975 = vunpack.c.h.b16 %v8986
  %v10976 = vunpack.c.l.b16 %v8987
  %v10977 = vunpack.c.h.b16 %v8987
  %v10978 = vunpack.c.l.b16 %v8988
  %v10979 = vunpack.c.h.b16 %v8988
  %v10980 = vunpack.c.l.b16 %v8989
  %v10981 = vunpack.c.h.b16 %v8989
  %v10982 = vunpack.c.l.b16 %v8990
  %v10983 = vunpack.c.h.b16 %v8990
  %v10984 = vunpack.c.l.b16 %v8991
  %v10985 = vunpack.c.h.b16 %v8991
  %v10986 = vunpack.c.l.b16 %v8992
  %v10987 = vunpack.c.h.b16 %v8992
  %v10988 = vunpack.c.l.b16 %v8993
  %v10989 = vunpack.c.h.b16 %v8993
  %v10990 = vunpack.c.l.b16 %v8994
  %v10991 = vunpack.c.h.b16 %v8994
  %v10992 = vunpack.c.l.b16 %v8995
  %v10993 = vunpack.c.h.b16 %v8995
  %v10994 = vunpack.c.l.b16 %v8996
  %v10995 = vunpack.c.h.b16 %v8996
  %v10996 = vunpack.c.l.b16 %v8997
  %v10997 = vunpack.c.h.b16 %v8997
  %v10998 = vunpack.c.l.b16 %v8998
  %v10999 = vunpack.c.h.b16 %v8998
  %v11000 = vunpack.c.l.b16 %v8999
  %v11001 = vunpack.c.h.b16 %v8999
  %v11002 = vunpack.c.l.b16 %v9000
  %v11003 = vunpack.c.h.b16 %v9000
  %v11004 = vunpack.c.l.b16 %v9001
  %v11005 = vunpack.c.h.b16 %v9001
  %v11006 = vunpack.c.l.b16 %v9002
  %v11007 = vunpack.c.h.b16 %v9002
  %v11008 = vunpack.c.l.b16 %v9003
  %v11009 = vunpack.c.h.b16 %v9003
  %v11010 = vunpack.c.l.b16 %v9004
  %v11011 = vunpack.c.h.b16 %v9004
  %v11012 = vunpack.c.l.b16 %v9005
  %v11013 = vunpack.c.h.b16 %v9005
  %v11014 = vunpack.c.l.b16 %v9006
  %v11015 = vunpack.c.h.b16 %v9006
  %v11016 = vunpack.c.l.b16 %v9007
  %v11017 = vunpack.c.h.b16 %v9007
  %v11018 = vunpack.c.l.b16 %v9008
  %v11019 = vunpack.c.h.b16 %v9008
  %v11020 = vunpack.c.l.b16 %v9009
  %v11021 = vunpack.c.h.b16 %v9009
  %v11022 = vunpack.c.l.b16 %v9010
  %v11023 = vunpack.c.h.b16 %v9010
  %v11024 = vunpack.c.l.b16 %v9011
  %v11025 = vunpack.c.h.b16 %v9011
  %v11026 = vunpack.c.l.b16 %v9012
  %v11027 = vunpack.c.h.b16 %v9012
  %v11028 = vunpack.c.l.b16 %v9013
  %v11029 = vunpack.c.h.b16 %v9013
  %v11030 = vunpack.c.l.b16 %v9014
  %v11031 = vunpack.c.h.b16 %v9014
  %v11032 = vunpack.c.l.b16 %v9015
  %v11033 = vunpack.c.h.b16 %v9015
  %v11034 = vunpack.c.l.b16 %v9016
  %v11035 = vunpack.c.h.b16 %v9016
  %v11036 = vunpack.c.l.b16 %v9017
  %v11037 = vunpack.c.h.b16 %v9017
  %v11038 = vunpack.c.l.b16 %v9018
  %v11039 = vunpack.c.h.b16 %v9018
  %v11040 = vunpack.c.l.b16 %v9019
  %v11041 = vunpack.c.h.b16 %v9019
  %v11042 = vunpack.c.l.b16 %v9020
  %v11043 = vunpack.c.h.b16 %v9020
  %v11044 = vunpack.c.l.b16 %v9021
  %v11045 = vunpack.c.h.b16 %v9021
  %v11046 = vunpack.c.l.b16 %v9022
  %v11047 = vunpack.c.h.b16 %v9022
  %v11048 = vunpack.c.l.b16 %v9023
  %v11049 = vunpack.c.h.b16 %v9023
  %v11050 = vunpack.c.l.b16 %v9024
  %v11051 = vunpack.c.h.b16 %v9024
  %v11052 = vunpack.c.l.b16 %v9025
  %v11053 = vunpack.c.h.b16 %v9025
  %v11054 = vunpack.c.l.b16 %v9026
  %v11055 = vunpack.c.h.b16 %v9026
  %v11056 = vunpack.c.l.b16 %v9027
  %v11057 = vunpack.c.h.b16 %v9027
  %v11058 = vunpack.c.l.b16 %v9028
  %v11059 = vunpack.c.h.b16 %v9028
  %v11060 = vunpack.c.l.b16 %v9029
  %v11061 = vunpack.c.h.b16 %v9029
  %v11062 = vunpack.c.l.b16 %v9030
  %v11063 = vunpack.c.h.b16 %v9030
  %v11064 = vunpack.c.l.b16 %v9031
  %v11065 = vunpack.c.h.b16 %v9031
  %v11066 = vunpack.c.l.b16 %v9032
  %v11067 = vunpack.c.h.b16 %v9032
  %v11068 = vunpack.c.l.b16 %v9033
  %v11069 = vunpack.c.h.b16 %v9033
  %v11070 = vunpack.c.l.b16 %v9034
  %v11071 = vunpack.c.h.b16 %v9034
  %v11072 = vunpack.c.l.b16 %v9035
  %v11073 = vunpack.c.h.b16 %v9035
  %v11074 = vunpack.c.l.b16 %v9036
  %v11075 = vunpack.c.h.b16 %v9036
  %v11076 = vunpack.c.l.b16 %v9037
  %v11077 = vunpack.c.h.b16 %v9037
  %v11078 = vunpack.c.l.b16 %v9038
  %v11079 = vunpack.c.h.b16 %v9038
  %v11080 = vunpack.c.l.b16 %v9039
  %v11081 = vunpack.c.h.b16 %v9039
  %v11082 = vunpack.c.l.b16 %v9040
  %v11083 = vunpack.c.h.b16 %v9040
  %v11084 = vunpack.c.l.b16 %v9041
  %v11085 = vunpack.c.h.b16 %v9041
  %v11086 = vunpack.c.l.b16 %v9042
  %v11087 = vunpack.c.h.b16 %v9042
  %v11088 = vunpack.c.l.b16 %v9043
  %v11089 = vunpack.c.h.b16 %v9043
  %v11090 = vunpack.c.l.b16 %v9044
  %v11091 = vunpack.c.h.b16 %v9044
  %v11092 = vunpack.c.l.b16 %v9045
  %v11093 = vunpack.c.h.b16 %v9045
  %v11094 = vunpack.c.l.b16 %v9046
  %v11095 = vunpack.c.h.b16 %v9046
  %v11096 = vunpack.c.l.b16 %v9047
  %v11097 = vunpack.c.h.b16 %v9047
  %v11098 = vunpack.c.l.b16 %v9048
  %v11099 = vunpack.c.h.b16 %v9048
  %v11100 = vunpack.c.l.b16 %v9049
  %v11101 = vunpack.c.h.b16 %v9049
  %v11102 = vunpack.c.l.b16 %v9050
  %v11103 = vunpack.c.h.b16 %v9050
  %v11104 = vunpack.c.l.b16 %v9051
  %v11105 = vunpack.c.h.b16 %v9051
  %v11106 = vunpack.c.l.b16 %v9052
  %v11107 = vunpack.c.h.b16 %v9052
  %v11108 = vunpack.c.l.b16 %v9053
  %v11109 = vunpack.c.h.b16 %v9053
  %v11110 = vunpack.c.l.b16 %v9054
  %v11111 = vunpack.c.h.b16 %v9054
  %v11112 = vunpack.c.l.b16 %v9055
  %v11113 = vunpack.c.h.b16 %v9055
  %v11114 = vunpack.c.l.b16 %v9056
  %v11115 = vunpack.c.h.b16 %v9056
  %v11116 = vunpack.c.l.b16 %v9057
  %v11117 = vunpack.c.h.b16 %v9057
  %v11118 = vunpack.c.l.b16 %v9058
  %v11119 = vunpack.c.h.b16 %v9058
  %v11120 = vunpack.c.l.b16 %v9059
  %v11121 = vunpack.c.h.b16 %v9059
  %v11122 = vunpack.c.l.b16 %v9060
  %v11123 = vunpack.c.h.b16 %v9060
  %v11124 = vunpack.c.l.b16 %v9061
  %v11125 = vunpack.c.h.b16 %v9061
  %v11126 = vunpack.c.l.b16 %v9062
  %v11127 = vunpack.c.h.b16 %v9062
  %v11128 = vunpack.c.l.b16 %v9063
  %v11129 = vunpack.c.h.b16 %v9063
  %v11130 = vunpack.c.l.b16 %v9064
  %v11131 = vunpack.c.h.b16 %v9064
  %v11132 = vunpack.c.l.b16 %v9065
  %v11133 = vunpack.c.h.b16 %v9065
  %v11134 = vunpack.c.l.b16 %v9066
  %v11135 = vunpack.c.h.b16 %v9066
  %v11136 = vunpack.c.l.b16 %v9067
  %v11137 = vunpack.c.h.b16 %v9067
  %v11138 = vunpack.c.l.b16 %v9068
  %v11139 = vunpack.c.h.b16 %v9068
  %v11140 = vunpack.c.l.b16 %v9069
  %v11141 = vunpack.c.h.b16 %v9069
  %v11142 = vunpack.c.l.b16 %v9070
  %v11143 = vunpack.c.h.b16 %v9070
  %v11144 = vunpack.c.l.b16 %v9071
  %v11145 = vunpack.c.h.b16 %v9071
  %v11146 = vunpack.c.l.b16 %v9072
  %v11147 = vunpack.c.h.b16 %v9072
  %v11148 = vunpack.c.l.b16 %v9073
  %v11149 = vunpack.c.h.b16 %v9073
  %v11150 = vunpack.c.l.b16 %v9074
  %v11151 = vunpack.c.h.b16 %v9074
  %v11152 = vunpack.c.l.b16 %v9075
  %v11153 = vunpack.c.h.b16 %v9075
  %v11154 = vunpack.c.l.b16 %v9076
  %v11155 = vunpack.c.h.b16 %v9076
  %v11156 = vunpack.c.l.b16 %v9077
  %v11157 = vunpack.c.h.b16 %v9077
  %v11158 = vunpack.c.l.b16 %v9078
  %v11159 = vunpack.c.h.b16 %v9078
  %v11160 = vunpack.c.l.b16 %v9079
  %v11161 = vunpack.c.h.b16 %v9079
  %v11162 = vunpack.c.l.b16 %v9080
  %v11163 = vunpack.c.h.b16 %v9080
  %v11164 = vunpack.c.l.b16 %v9081
  %v11165 = vunpack.c.h.b16 %v9081
  %v11166 = vunpack.c.l.b16 %v9082
  %v11167 = vunpack.c.h.b16 %v9082
  %v11168 = vunpack.c.l.b16 %v9083
  %v11169 = vunpack.c.h.b16 %v9083
  %v11170 = vunpack.c.l.b16 %v9084
  %v11171 = vunpack.c.h.b16 %v9084
  %v11172 = vunpack.c.l.b16 %v9085
  %v11173 = vunpack.c.h.b16 %v9085
  %v11174 = vunpack.c.l.b16 %v9086
  %v11175 = vunpack.c.h.b16 %v9086
  %v11176 = vunpack.c.l.b16 %v9087
  %v11177 = vunpack.c.h.b16 %v9087
  %v11178 = vunpack.c.l.b16 %v9088
  %v11179 = vunpack.c.h.b16 %v9088
  %v11180 = vunpack.c.l.b16 %v9089
  %v11181 = vunpack.c.h.b16 %v9089
  %v11182 = vunpack.c.l.b16 %v9090
  %v11183 = vunpack.c.h.b16 %v9090
  %v11184 = vunpack.c.l.b16 %v9091
  %v11185 = vunpack.c.h.b16 %v9091
  %v11186 = vunpack.c.l.b16 %v9092
  %v11187 = vunpack.c.h.b16 %v9092
  %v11188 = vunpack.c.l.b16 %v9093
  %v11189 = vunpack.c.h.b16 %v9093
  %v11190 = vunpack.c.l.b16 %v9094
  %v11191 = vunpack.c.h.b16 %v9094
  %v11192 = vunpack.c.l.b16 %v9095
  %v11193 = vunpack.c.h.b16 %v9095
  %v11194 = vunpack.c.l.b16 %v9096
  %v11195 = vunpack.c.h.b16 %v9096
  %v11196 = vunpack.c.l.b16 %v9097
  %v11197 = vunpack.c.h.b16 %v9097
  %v11198 = vunpack.c.l.b16 %v9098
  %v11199 = vunpack.c.h.b16 %v9098
  %v11200 = vunpack.c.l.b16 %v9099
  %v11201 = vunpack.c.h.b16 %v9099
  %v11202 = vunpack.c.l.b16 %v9100
  %v11203 = vunpack.c.h.b16 %v9100
  %v11204 = vunpack.c.l.b16 %v9101
  %v11205 = vunpack.c.h.b16 %v9101
  %v11206 = vunpack.c.l.b16 %v9102
  %v11207 = vunpack.c.h.b16 %v9102
  %v11208 = vunpack.c.l.b16 %v9103
  %v11209 = vunpack.c.h.b16 %v9103
  %v11210 = vunpack.c.l.b16 %v9104
  %v11211 = vunpack.c.h.b16 %v9104
  %v11212 = vunpack.c.l.b16 %v9105
  %v11213 = vunpack.c.h.b16 %v9105
  %v11214 = vunpack.c.l.b16 %v9106
  %v11215 = vunpack.c.h.b16 %v9106
  %v11216 = vunpack.c.l.b16 %v9107
  %v11217 = vunpack.c.h.b16 %v9107
  %v11218 = vunpack.c.l.b16 %v9108
  %v11219 = vunpack.c.h.b16 %v9108
  %v11220 = vunpack.c.l.b16 %v9109
  %v11221 = vunpack.c.h.b16 %v9109
  %v11222 = vunpack.c.l.b16 %v9110
  %v11223 = vunpack.c.h.b16 %v9110
  %v11224 = vunpack.c.l.b16 %v9111
  %v11225 = vunpack.c.h.b16 %v9111
  %v11226 = vunpack.c.l.b16 %v9112
  %v11227 = vunpack.c.h.b16 %v9112
  %v11228 = vunpack.c.l.b16 %v9113
  %v11229 = vunpack.c.h.b16 %v9113
  %v11230 = vunpack.c.l.b16 %v9114
  %v11231 = vunpack.c.h.b16 %v9114
  %v11232 = vunpack.c.l.b16 %v9115
  %v11233 = vunpack.c.h.b16 %v9115
  %v11234 = vunpack.c.l.b16 %v9116
  %v11235 = vunpack.c.h.b16 %v9116
  %v11236 = vunpack.c.l.b16 %v9117
  %v11237 = vunpack.c.h.b16 %v9117
  %v11238 = vunpack.c.l.b16 %v9118
  %v11239 = vunpack.c.h.b16 %v9118
  %v11240 = vunpack.c.l.b16 %v9119
  %v11241 = vunpack.c.h.b16 %v9119
  %v11242 = vunpack.c.l.b16 %v9120
  %v11243 = vunpack.c.h.b16 %v9120
  %v11244 = vunpack.c.l.b16 %v9121
  %v11245 = vunpack.c.h.b16 %v9121
  %v11246 = vunpack.c.l.b16 %v9122
  %v11247 = vunpack.c.h.b16 %v9122
  %v11248 = vunpack.c.l.b16 %v9123
  %v11249 = vunpack.c.h.b16 %v9123
  %v11250 = vunpack.c.l.b16 %v9124
  %v11251 = vunpack.c.h.b16 %v9124
  %v11252 = vunpack.c.l.b16 %v9125
  %v11253 = vunpack.c.h.b16 %v9125
  %v11254 = vunpack.c.l.b16 %v9126
  %v11255 = vunpack.c.h.b16 %v9126
  %v11256 = vunpack.c.l.b16 %v9127
  %v11257 = vunpack.c.h.b16 %v9127
  %v11258 = vunpack.c.l.b16 %v9128
  %v11259 = vunpack.c.h.b16 %v9128
  %v11260 = vunpack.c.l.b16 %v9129
  %v11261 = vunpack.c.h.b16 %v9129
  %v11262 = vunpack.c.l.b16 %v9130
  %v11263 = vunpack.c.h.b16 %v9130
  %v11264 = vunpack.c.l.b16 %v9131
  %v11265 = vunpack.c.h.b16 %v9131
  %v11266 = vunpack.c.l.b16 %v9132
  %v11267 = vunpack.c.h.b16 %v9132
  %v11268 = vunpack.c.l.b16 %v9133
  %v11269 = vunpack.c.h.b16 %v9133
  %v11270 = vunpack.c.l.b16 %v9134
  %v11271 = vunpack.c.h.b16 %v9134
  %v11272 = vunpack.c.l.b16 %v9135
  %v11273 = vunpack.c.h.b16 %v9135
  %v11274 = vunpack.c.l.b16 %v9136
  %v11275 = vunpack.c.h.b16 %v9136
  %v11276 = vunpack.c.l.b16 %v9137
  %v11277 = vunpack.c.h.b16 %v9137
  %v11278 = vunpack.c.l.b16 %v9138
  %v11279 = vunpack.c.h.b16 %v9138
  %v11280 = vunpack.c.l.b16 %v9139
  %v11281 = vunpack.c.h.b16 %v9139
  %v11282 = vunpack.c.l.b16 %v9140
  %v11283 = vunpack.c.h.b16 %v9140
  %v11284 = vunpack.c.l.b16 %v9141
  %v11285 = vunpack.c.h.b16 %v9141
  %v11286 = vunpack.c.l.b16 %v9142
  %v11287 = vunpack.c.h.b16 %v9142
  %v11288 = vunpack.c.l.b16 %v9143
  %v11289 = vunpack.c.h.b16 %v9143
  %v11290 = vunpack.c.l.b16 %v9144
  %v11291 = vunpack.c.h.b16 %v9144
  %v11292 = vunpack.c.l.b16 %v9145
  %v11293 = vunpack.c.h.b16 %v9145
  %v11294 = vunpack.c.l.b16 %v9146
  %v11295 = vunpack.c.h.b16 %v9146
  %v11296 = vunpack.c.l.b16 %v9147
  %v11297 = vunpack.c.h.b16 %v9147
  %v11298 = vunpack.c.l.b16 %v9148
  %v11299 = vunpack.c.h.b16 %v9148
  %v11300 = vunpack.c.l.b16 %v9149
  %v11301 = vunpack.c.h.b16 %v9149
  %v11302 = vunpack.c.l.b16 %v9150
  %v11303 = vunpack.c.h.b16 %v9150
  %v11304 = vunpack.c.l.b16 %v9151
  %v11305 = vunpack.c.h.b16 %v9151
  %v11306 = vunpack.c.l.b16 %v9152
  %v11307 = vunpack.c.h.b16 %v9152
  %v11308 = vunpack.c.l.b16 %v9153
  %v11309 = vunpack.c.h.b16 %v9153
  %v11310 = vunpack.c.l.b16 %v9154
  %v11311 = vunpack.c.h.b16 %v9154
  %v11312 = vunpack.c.l.b16 %v9155
  %v11313 = vunpack.c.h.b16 %v9155
  %v11314 = vunpack.c.l.b16 %v9156
  %v11315 = vunpack.c.h.b16 %v9156
  %v11316 = vunpack.c.l.b16 %v9157
  %v11317 = vunpack.c.h.b16 %v9157
  %v11318 = vunpack.c.l.b16 %v9158
  %v11319 = vunpack.c.h.b16 %v9158
  %v11320 = vunpack.c.l.b16 %v9159
  %v11321 = vunpack.c.h.b16 %v9159
  %v11322 = vunpack.c.l.b16 %v9160
  %v11323 = vunpack.c.h.b16 %v9160
  %v11324 = vunpack.c.l.b16 %v9161
  %v11325 = vunpack.c.h.b16 %v9161
  %v11326 = vunpack.c.l.b16 %v9162
  %v11327 = vunpack.c.h.b16 %v9162
  %v11328 = vunpack.c.l.b16 %v9163
  %v11329 = vunpack.c.h.b16 %v9163
  %v11330 = vunpack.c.l.b16 %v9164
  %v11331 = vunpack.c.h.b16 %v9164
  %v11332 = vunpack.c.l.b16 %v9165
  %v11333 = vunpack.c.h.b16 %v9165
  %v11334 = vunpack.c.l.b16 %v9166
  %v11335 = vunpack.c.h.b16 %v9166
  %v11336 = vunpack.c.l.b16 %v9167
  %v11337 = vunpack.c.h.b16 %v9167
  %v11338 = vunpack.c.l.b16 %v9168
  %v11339 = vunpack.c.h.b16 %v9168
  %v11340 = vunpack.c.l.b16 %v9169
  %v11341 = vunpack.c.h.b16 %v9169
  %v11342 = vunpack.c.l.b16 %v9170
  %v11343 = vunpack.c.h.b16 %v9170
  %v11344 = vunpack.c.l.b16 %v9171
  %v11345 = vunpack.c.h.b16 %v9171
  %v11346 = vunpack.c.l.b16 %v9172
  %v11347 = vunpack.c.h.b16 %v9172
  %v11348 = vunpack.c.l.b16 %v9173
  %v11349 = vunpack.c.h.b16 %v9173
  %v11350 = vunpack.c.l.b16 %v9174
  %v11351 = vunpack.c.h.b16 %v9174
  %v11352 = vunpack.c.l.b16 %v9175
  %v11353 = vunpack.c.h.b16 %v9175
  %v11354 = vunpack.c.l.b16 %v9176
  %v11355 = vunpack.c.h.b16 %v9176
  %v11356 = vunpack.c.l.b16 %v9177
  %v11357 = vunpack.c.h.b16 %v9177
  %v11358 = vunpack.c.l.b16 %v9178
  %v11359 = vunpack.c.h.b16 %v9178
  %v11360 = vunpack.c.l.b16 %v9179
  %v11361 = vunpack.c.h.b16 %v9179
  %v11362 = vunpack.c.l.b16 %v9180
  %v11363 = vunpack.c.h.b16 %v9180
  %v11364 = vunpack.c.l.b16 %v9181
  %v11365 = vunpack.c.h.b16 %v9181
  %v11366 = vunpack.c.l.b16 %v9182
  %v11367 = vunpack.c.h.b16 %v9182
  %v11368 = vunpack.c.l.b16 %v9183
  %v11369 = vunpack.c.h.b16 %v9183
  %v11370 = vunpack.c.l.b16 %v9184
  %v11371 = vunpack.c.h.b16 %v9184
  %v11372 = vunpack.c.l.b16 %v9185
  %v11373 = vunpack.c.h.b16 %v9185
  %v11374 = vunpack.c.l.b16 %v9186
  %v11375 = vunpack.c.h.b16 %v9186
  %v11376 = vunpack.c.l.b16 %v9187
  %v11377 = vunpack.c.h.b16 %v9187
  %v11378 = vunpack.c.l.b16 %v9188
  %v11379 = vunpack.c.h.b16 %v9188
  %v11380 = vunpack.c.l.b16 %v9189
  %v11381 = vunpack.c.h.b16 %v9189
  %v11382 = vunpack.c.l.b16 %v9190
  %v11383 = vunpack.c.h.b16 %v9190
  %v11384 = vunpack.c.l.b16 %v9191
  %v11385 = vunpack.c.h.b16 %v9191
  %v11386 = vunpack.c.l.b16 %v9192
  %v11387 = vunpack.c.h.b16 %v9192
  %v11388 = vunpack.c.l.b16 %v9193
  %v11389 = vunpack.c.h.b16 %v9193
  %v11390 = vunpack.c.l.b16 %v9194
  %v11391 = vunpack.c.h.b16 %v9194
  %v11392 = vunpack.c.l.b16 %v9195
  %v11393 = vunpack.c.h.b16 %v9195
  %v11394 = vunpack.c.l.b16 %v9196
  %v11395 = vunpack.c.h.b16 %v9196
  %v11396 = vunpack.c.l.b16 %v9197
  %v11397 = vunpack.c.h.b16 %v9197
  %v11398 = vunpack.c.l.b16 %v9198
  %v11399 = vunpack.c.h.b16 %v9198
  %v11400 = vunpack.c.l.b16 %v9199
  %v11401 = vunpack.c.h.b16 %v9199
  %v11402 = vunpack.c.l.b16 %v9200
  %v11403 = vunpack.c.h.b16 %v9200
  %v11404 = vunpack.c.l.b16 %v9201
  %v11405 = vunpack.c.h.b16 %v9201
  %v11406 = vunpack.c.l.b16 %v9202
  %v11407 = vunpack.c.h.b16 %v9202
  %v11408 = vunpack.c.l.b16 %v9203
  %v11409 = vunpack.c.h.b16 %v9203
  %v11410 = vunpack.c.l.b16 %v9204
  %v11411 = vunpack.c.h.b16 %v9204
  %v11412 = vunpack.c.l.b16 %v9205
  %v11413 = vunpack.c.h.b16 %v9205
  %v11414 = vunpack.c.l.b16 %v9206
  %v11415 = vunpack.c.h.b16 %v9206
  %v11416 = vunpack.c.l.b16 %v9207
  %v11417 = vunpack.c.h.b16 %v9207
  %v11418 = vunpack.c.l.b16 %v9208
  %v11419 = vunpack.c.h.b16 %v9208
  %v11420 = vunpack.c.l.b16 %v9209
  %v11421 = vunpack.c.h.b16 %v9209
  %v11422 = vunpack.c.l.b16 %v9210
  %v11423 = vunpack.c.h.b16 %v9210
  %v11424 = vunpack.c.l.b16 %v9211
  %v11425 = vunpack.c.h.b16 %v9211
  %v11426 = vunpack.c.l.b16 %v9212
  %v11427 = vunpack.c.h.b16 %v9212
  %v11428 = vunpack.c.l.b16 %v9213
  %v11429 = vunpack.c.h.b16 %v9213
  %v11430 = vunpack.c.l.b16 %v9214
  %v11431 = vunpack.c.h.b16 %v9214
  %v11432 = vunpack.c.l.b16 %v9215
  %v11433 = vunpack.c.h.b16 %v9215
  %v11434 = vunpack.c.l.b16 %v9216
  %v11435 = vunpack.c.h.b16 %v9216
  %v11436 = vunpack.c.l.b16 %v9217
  %v11437 = vunpack.c.h.b16 %v9217
  %v11438 = vunpack.c.l.b16 %v9218
  %v11439 = vunpack.c.h.b16 %v9218
  %v11440 = vunpack.c.l.b16 %v9219
  %v11441 = vunpack.c.h.b16 %v9219
  %v11442 = vunpack.c.l.b16 %v9220
  %v11443 = vunpack.c.h.b16 %v9220
  %v11444 = vunpack.c.l.b16 %v9221
  %v11445 = vunpack.c.h.b16 %v9221
  %v11446 = vunpack.c.l.b16 %v9222
  %v11447 = vunpack.c.h.b16 %v9222
  %v11448 = vunpack.c.l.b16 %v9223
  %v11449 = vunpack.c.h.b16 %v9223
  %v11450 = vunpack.c.l.b16 %v9224
  %v11451 = vunpack.c.h.b16 %v9224
  %v11452 = vunpack.c.l.b16 %v9225
  %v11453 = vunpack.c.h.b16 %v9225
  %v11454 = vunpack.c.l.b16 %v9226
  %v11455 = vunpack.c.h.b16 %v9226
  %v11456 = vunpack.c.l.b16 %v9227
  %v11457 = vunpack.c.h.b16 %v9227
  %v11458 = vunpack.c.l.b16 %v9228
  %v11459 = vunpack.c.h.b16 %v9228
  %v11460 = vunpack.c.l.b16 %v9229
  %v11461 = vunpack.c.h.b16 %v9229
  %v11462 = vunpack.c.l.b16 %v9230
  %v11463 = vunpack.c.h.b16 %v9230
  %v11464 = vunpack.c.l.b16 %v9231
  %v11465 = vunpack.c.h.b16 %v9231
  %v11466 = vunpack.c.l.b16 %v9232
  %v11467 = vunpack.c.h.b16 %v9232
  %v11468 = vunpack.c.l.b16 %v9233
  %v11469 = vunpack.c.h.b16 %v9233
  %v11470 = vunpack.c.l.b16 %v9234
  %v11471 = vunpack.c.h.b16 %v9234
  %v11472 = vunpack.c.l.b16 %v9235
  %v11473 = vunpack.c.h.b16 %v9235
  %v11474 = vunpack.c.l.b16 %v9236
  %v11475 = vunpack.c.h.b16 %v9236
  %v11476 = vunpack.c.l.b16 %v9237
  %v11477 = vunpack.c.h.b16 %v9237
  %v11478 = vunpack.c.l.b16 %v9238
  %v11479 = vunpack.c.h.b16 %v9238
  %v11480 = vunpack.c.l.b16 %v9239
  %v11481 = vunpack.c.h.b16 %v9239
  %v11482 = vunpack.c.l.b16 %v9240
  %v11483 = vunpack.c.h.b16 %v9240
  %v11484 = vunpack.c.l.b16 %v9241
  %v11485 = vunpack.c.h.b16 %v9241
  %v11486 = vunpack.c.l.b16 %v9242
  %v11487 = vunpack.c.h.b16 %v9242
  %v11488 = vunpack.c.l.b16 %v9243
  %v11489 = vunpack.c.h.b16 %v9243
  %v11490 = vunpack.c.l.b16 %v9244
  %v11491 = vunpack.c.h.b16 %v9244
  %v11492 = vunpack.c.l.b16 %v9245
  %v11493 = vunpack.c.h.b16 %v9245
  %v11494 = vunpack.c.l.b16 %v9246
  %v11495 = vunpack.c.h.b16 %v9246
  %v11496 = vunpack.c.l.b16 %v9247
  %v11497 = vunpack.c.h.b16 %v9247
  %v11498 = vunpack.c.l.b16 %v9248
  %v11499 = vunpack.c.h.b16 %v9248
  %v11500 = vunpack.c.l.b16 %v9249
  %v11501 = vunpack.c.h.b16 %v9249
  %v11502 = vunpack.c.l.b16 %v9250
  %v11503 = vunpack.c.h.b16 %v9250
  %v11504 = vunpack.c.l.b16 %v9251
  %v11505 = vunpack.c.h.b16 %v9251
  %v11506 = vunpack.c.l.b16 %v9252
  %v11507 = vunpack.c.h.b16 %v9252
  %v11508 = vunpack.c.l.b16 %v9253
  %v11509 = vunpack.c.h.b16 %v9253
  %v11510 = vunpack.c.l.b16 %v9254
  %v11511 = vunpack.c.h.b16 %v9254
  %v11512 = vunpack.c.l.b16 %v9255
  %v11513 = vunpack.c.h.b16 %v9255
  %v11514 = vunpack.c.l.b16 %v9256
  %v11515 = vunpack.c.h.b16 %v9256
  %v11516 = vunpack.c.l.b16 %v9257
  %v11517 = vunpack.c.h.b16 %v9257
  %v11518 = vunpack.c.l.b16 %v9258
  %v11519 = vunpack.c.h.b16 %v9258
  %v11520 = vunpack.c.l.b16 %v9259
  %v11521 = vunpack.c.h.b16 %v9259
  %v11522 = vunpack.c.l.b16 %v9260
  %v11523 = vunpack.c.h.b16 %v9260
  %v11524 = vunpack.c.l.b16 %v9261
  %v11525 = vunpack.c.h.b16 %v9261
  %v11526 = vunpack.c.l.b16 %v9262
  %v11527 = vunpack.c.h.b16 %v9262
  %v11528 = vunpack.c.l.b16 %v9263
  %v11529 = vunpack.c.h.b16 %v9263
  %v11530 = vunpack.c.l.b16 %v9264
  %v11531 = vunpack.c.h.b16 %v9264
  %v11532 = vunpack.c.l.b16 %v9265
  %v11533 = vunpack.c.h.b16 %v9265
  %v11534 = vunpack.c.l.b16 %v9266
  %v11535 = vunpack.c.h.b16 %v9266
  %v11536 = vunpack.c.l.b16 %v9267
  %v11537 = vunpack.c.h.b16 %v9267
  %v11538 = vunpack.c.l.b16 %v9268
  %v11539 = vunpack.c.h.b16 %v9268
  %v11540 = vunpack.c.l.b16 %v9269
  %v11541 = vunpack.c.h.b16 %v9269
  %v11542 = vunpack.c.l.b16 %v9270
  %v11543 = vunpack.c.h.b16 %v9270
  %v11544 = vunpack.c.l.b16 %v9271
  %v11545 = vunpack.c.h.b16 %v9271
  %v11546 = vunpack.c.l.b16 %v9272
  %v11547 = vunpack.c.h.b16 %v9272
  %v11548 = vunpack.c.l.b16 %v9273
  %v11549 = vunpack.c.h.b16 %v9273
  %v11550 = vunpack.c.l.b16 %v9274
  %v11551 = vunpack.c.h.b16 %v9274
  %v11552 = vunpack.c.l.b16 %v9275
  %v11553 = vunpack.c.h.b16 %v9275
  %v11554 = vunpack.c.l.b16 %v9276
  %v11555 = vunpack.c.h.b16 %v9276
  %v11556 = vunpack.c.l.b16 %v9277
  %v11557 = vunpack.c.h.b16 %v9277
  %v11558 = vunpack.c.l.b16 %v9278
  %v11559 = vunpack.c.h.b16 %v9278
  %v11560 = vunpack.c.l.b16 %v9279
  %v11561 = vunpack.c.h.b16 %v9279
  %v11562 = vunpack.c.l.b16 %v9280
  %v11563 = vunpack.c.h.b16 %v9280
  %v11564 = vunpack.c.l.b16 %v9281
  %v11565 = vunpack.c.h.b16 %v9281
  %v11566 = vunpack.c.l.b16 %v9282
  %v11567 = vunpack.c.h.b16 %v9282
  %v11568 = vunpack.c.l.b16 %v9283
  %v11569 = vunpack.c.h.b16 %v9283
  %v11570 = vunpack.c.l.b16 %v9284
  %v11571 = vunpack.c.h.b16 %v9284
  %v11572 = vunpack.c.l.b16 %v9285
  %v11573 = vunpack.c.h.b16 %v9285
  %v11574 = vunpack.c.l.b16 %v9286
  %v11575 = vunpack.c.h.b16 %v9286
  %v11576 = vunpack.c.l.b16 %v9287
  %v11577 = vunpack.c.h.b16 %v9287
  %v11578 = vunpack.c.l.b16 %v9288
  %v11579 = vunpack.c.h.b16 %v9288
  %v11580 = vunpack.c.l.b16 %v9289
  %v11581 = vunpack.c.h.b16 %v9289
  %v11582 = vunpack.c.l.b16 %v9290
  %v11583 = vunpack.c.h.b16 %v9290
  %v11584 = vunpack.c.l.b16 %v9291
  %v11585 = vunpack.c.h.b16 %v9291
  %v11586 = vunpack.c.l.b16 %v9292
  %v11587 = vunpack.c.h.b16 %v9292
  %v11588 = vunpack.c.l.b16 %v9293
  %v11589 = vunpack.c.h.b16 %v9293
  %v11590 = vunpack.c.l.b16 %v9294
  %v11591 = vunpack.c.h.b16 %v9294
  %v11592 = vunpack.c.l.b16 %v9295
  %v11593 = vunpack.c.h.b16 %v9295
  %v11594 = vunpack.c.l.b16 %v9296
  %v11595 = vunpack.c.h.b16 %v9296
  %v11596 = vunpack.c.l.b16 %v9297
  %v11597 = vunpack.c.h.b16 %v9297
  %v11598 = vunpack.c.l.b16 %v9298
  %v11599 = vunpack.c.h.b16 %v9298
  %v11600 = vunpack.c.l.b16 %v9299
  %v11601 = vunpack.c.h.b16 %v9299
  %v11602 = vunpack.c.l.b16 %v9300
  %v11603 = vunpack.c.h.b16 %v9300
  %v11604 = vunpack.c.l.b16 %v9301
  %v11605 = vunpack.c.h.b16 %v9301
  %v11606 = vunpack.c.l.b16 %v9302
  %v11607 = vunpack.c.h.b16 %v9302
  %v11608 = vunpack.c.l.b16 %v9303
  %v11609 = vunpack.c.h.b16 %v9303
  %v11610 = vunpack.c.l.b16 %v9304
  %v11611 = vunpack.c.h.b16 %v9304
  %v11612 = vunpack.c.l.b16 %v9305
  %v11613 = vunpack.c.h.b16 %v9305
  %v11614 = vunpack.c.l.b16 %v9306
  %v11615 = vunpack.c.h.b16 %v9306
  %v11616 = vunpack.c.l.b16 %v9307
  %v11617 = vunpack.c.h.b16 %v9307
  %v11618 = vunpack.c.l.b16 %v9308
  %v11619 = vunpack.c.h.b16 %v9308
  %v11620 = vunpack.c.l.b16 %v9309
  %v11621 = vunpack.c.h.b16 %v9309
  %v11622 = vunpack.c.l.b16 %v9310
  %v11623 = vunpack.c.h.b16 %v9310
  %v11624 = vunpack.c.l.b16 %v9311
  %v11625 = vunpack.c.h.b16 %v9311
  %v11626 = vunpack.c.l.b16 %v9312
  %v11627 = vunpack.c.h.b16 %v9312
  %v11628 = vunpack.c.l.b16 %v9313
  %v11629 = vunpack.c.h.b16 %v9313
  %v11630 = vunpack.c.l.b16 %v9314
  %v11631 = vunpack.c.h.b16 %v9314
  %v11632 = vunpack.c.l.b16 %v9315
  %v11633 = vunpack.c.h.b16 %v9315
  %v11634 = vunpack.c.l.b16 %v9316
  %v11635 = vunpack.c.h.b16 %v9316
  %v11636 = vunpack.c.l.b16 %v9317
  %v11637 = vunpack.c.h.b16 %v9317
  %v11638 = vunpack.c.l.b16 %v9318
  %v11639 = vunpack.c.h.b16 %v9318
  %v11640 = vunpack.c.l.b16 %v9319
  %v11641 = vunpack.c.h.b16 %v9319
  %v11642 = vunpack.c.l.b16 %v9320
  %v11643 = vunpack.c.h.b16 %v9320
  %v11644 = vunpack.c.l.b16 %v9321
  %v11645 = vunpack.c.h.b16 %v9321
  %v11646 = vunpack.c.l.b16 %v9322
  %v11647 = vunpack.c.h.b16 %v9322
  %v11648 = vunpack.c.l.b16 %v9323
  %v11649 = vunpack.c.h.b16 %v9323
  %v11650 = vunpack.c.l.b16 %v9324
  %v11651 = vunpack.c.h.b16 %v9324
  %v11652 = vunpack.c.l.b16 %v9325
  %v11653 = vunpack.c.h.b16 %v9325
  %v11654 = vunpack.c.l.b16 %v9326
  %v11655 = vunpack.c.h.b16 %v9326
  %v11656 = vunpack.c.l.b16 %v9327
  %v11657 = vunpack.c.h.b16 %v9327
  %v11658 = vunpack.c.l.b16 %v9328
  %v11659 = vunpack.c.h.b16 %v9328
  %v11660 = vunpack.c.l.b16 %v9329
  %v11661 = vunpack.c.h.b16 %v9329
  %v11662 = vunpack.c.l.b16 %v9330
  %v11663 = vunpack.c.h.b16 %v9330
  %v11664 = vunpack.c.l.b16 %v9331
  %v11665 = vunpack.c.h.b16 %v9331
  %v11666 = vunpack.c.l.b16 %v9332
  %v11667 = vunpack.c.h.b16 %v9332
  %v11668 = vunpack.c.l.b16 %v9333
  %v11669 = vunpack.c.h.b16 %v9333
  %v11670 = vunpack.c.l.b16 %v9334
  %v11671 = vunpack.c.h.b16 %v9334
  %v11672 = vunpack.c.l.b16 %v9335
  %v11673 = vunpack.c.h.b16 %v9335
  %v11674 = vunpack.c.l.b16 %v9336
  %v11675 = vunpack.c.h.b16 %v9336
  %v11676 = vunpack.c.l.b16 %v9337
  %v11677 = vunpack.c.h.b16 %v9337
  %v11678 = vunpack.c.l.b16 %v9338
  %v11679 = vunpack.c.h.b16 %v9338
  %v11680 = vunpack.c.l.b16 %v9339
  %v11681 = vunpack.c.h.b16 %v9339
  %v11682 = vunpack.c.l.b16 %v9340
  %v11683 = vunpack.c.h.b16 %v9340
  %v11684 = vunpack.c.l.b16 %v9341
  %v11685 = vunpack.c.h.b16 %v9341
  %v11686 = vunpack.c.l.b16 %v9342
  %v11687 = vunpack.c.h.b16 %v9342
  %v11688 = vunpack.c.l.b16 %v9343
  %v11689 = vunpack.c.h.b16 %v9343
  %v11690 = vunpack.c.l.b16 %v9344
  %v11691 = vunpack.c.h.b16 %v9344
  %v11692 = vunpack.c.l.b16 %v9345
  %v11693 = vunpack.c.h.b16 %v9345
  %v11694 = vunpack.c.l.b16 %v9346
  %v11695 = vunpack.c.h.b16 %v9346
  %v11696 = vunpack.c.l.b16 %v9347
  %v11697 = vunpack.c.h.b16 %v9347
  %v11698 = vunpack.c.l.b16 %v9348
  %v11699 = vunpack.c.h.b16 %v9348
  %v11700 = vunpack.c.l.b16 %v9349
  %v11701 = vunpack.c.h.b16 %v9349
  %v11702 = vunpack.c.l.b16 %v9350
  %v11703 = vunpack.c.h.b16 %v9350
  %v11704 = vunpack.c.l.b16 %v9351
  %v11705 = vunpack.c.h.b16 %v9351
  %v11706 = vunpack.c.l.b16 %v9352
  %v11707 = vunpack.c.h.b16 %v9352
  %v11708 = vunpack.c.l.b16 %v9353
  %v11709 = vunpack.c.h.b16 %v9353
  %v11710 = vunpack.c.l.b16 %v9354
  %v11711 = vunpack.c.h.b16 %v9354
  %v11712 = vunpack.c.l.b16 %v9355
  %v11713 = vunpack.c.h.b16 %v9355
  %v11714 = vunpack.c.l.b16 %v9356
  %v11715 = vunpack.c.h.b16 %v9356
  %v11716 = vunpack.c.l.b16 %v9357
  %v11717 = vunpack.c.h.b16 %v9357
  %v11718 = vunpack.c.l.b16 %v9358
  %v11719 = vunpack.c.h.b16 %v9358
  %v11720 = vunpack.c.l.b16 %v9359
  %v11721 = vunpack.c.h.b16 %v9359
  %v11722 = vunpack.c.l.b16 %v9360
  %v11723 = vunpack.c.h.b16 %v9360
  %v11724 = vunpack.c.l.b16 %v9361
  %v11725 = vunpack.c.h.b16 %v9361
  %v11726 = vunpack.c.l.b16 %v9362
  %v11727 = vunpack.c.h.b16 %v9362
  %v11728 = vunpack.c.l.b16 %v9363
  %v11729 = vunpack.c.h.b16 %v9363
  %v11730 = vunpack.c.l.b16 %v9364
  %v11731 = vunpack.c.h.b16 %v9364
  %v11732 = vunpack.c.l.b16 %v9365
  %v11733 = vunpack.c.h.b16 %v9365
  %v11734 = vunpack.c.l.b16 %v9366
  %v11735 = vunpack.c.h.b16 %v9366
  %v11736 = vunpack.c.l.b16 %v9367
  %v11737 = vunpack.c.h.b16 %v9367
  %v11738 = vunpack.c.l.b16 %v9368
  %v11739 = vunpack.c.h.b16 %v9368
  %v11740 = vunpack.c.l.b16 %v9369
  %v11741 = vunpack.c.h.b16 %v9369
  %v11742 = vunpack.c.l.b16 %v9370
  %v11743 = vunpack.c.h.b16 %v9370
  %v11744 = vunpack.c.l.b16 %v9371
  %v11745 = vunpack.c.h.b16 %v9371
  %v11746 = vunpack.c.l.b16 %v9372
  %v11747 = vunpack.c.h.b16 %v9372
  %v11748 = vunpack.c.l.b16 %v9373
  %v11749 = vunpack.c.h.b16 %v9373
  %v11750 = vunpack.c.l.b16 %v9374
  %v11751 = vunpack.c.h.b16 %v9374
  %v11752 = vunpack.c.l.b16 %v9375
  %v11753 = vunpack.c.h.b16 %v9375
  %v11754 = vunpack.c.l.b16 %v9376
  %v11755 = vunpack.c.h.b16 %v9376
  %v11756 = vunpack.c.l.b16 %v9377
  %v11757 = vunpack.c.h.b16 %v9377
  %v11758 = vunpack.c.l.b16 %v9378
  %v11759 = vunpack.c.h.b16 %v9378
  %v11760 = vunpack.c.l.b16 %v9379
  %v11761 = vunpack.c.h.b16 %v9379
  %v11762 = vunpack.c.l.b16 %v9380
  %v11763 = vunpack.c.h.b16 %v9380
  %v11764 = vunpack.c.l.b16 %v9381
  %v11765 = vunpack.c.h.b16 %v9381
  %v11766 = vunpack.c.l.b16 %v9382
  %v11767 = vunpack.c.h.b16 %v9382
  %v11768 = vunpack.c.l.b16 %v9383
  %v11769 = vunpack.c.h.b16 %v9383
  %v11770 = vunpack.c.l.b16 %v9384
  %v11771 = vunpack.c.h.b16 %v9384
  %v11772 = vunpack.c.l.b16 %v9385
  %v11773 = vunpack.c.h.b16 %v9385
  %v11774 = vunpack.c.l.b16 %v9386
  %v11775 = vunpack.c.h.b16 %v9386
  %v11776 = vunpack.c.l.b16 %v9387
  %v11777 = vunpack.c.h.b16 %v9387
  %v11778 = vunpack.c.l.b16 %v9388
  %v11779 = vunpack.c.h.b16 %v9388
  %v11780 = vunpack.c.l.b16 %v9389
  %v11781 = vunpack.c.h.b16 %v9389
  %v11782 = vunpack.c.l.b16 %v9390
  %v11783 = vunpack.c.h.b16 %v9390
  %v11784 = vunpack.c.l.b16 %v9391
  %v11785 = vunpack.c.h.b16 %v9391
  %v11786 = vunpack.c.l.b16 %v9392
  %v11787 = vunpack.c.h.b16 %v9392
  %v11788 = vunpack.c.l.b16 %v9393
  %v11789 = vunpack.c.h.b16 %v9393
  %v11790 = vunpack.c.l.b16 %v9394
  %v11791 = vunpack.c.h.b16 %v9394
  %v11792 = vunpack.c.l.b16 %v9395
  %v11793 = vunpack.c.h.b16 %v9395
  %v11794 = vunpack.c.l.b16 %v9396
  %v11795 = vunpack.c.h.b16 %v9396
  %v11796 = vunpack.c.l.b16 %v9397
  %v11797 = vunpack.c.h.b16 %v9397
  %v11798 = vunpack.c.l.b16 %v9398
  %v11799 = vunpack.c.h.b16 %v9398
  %v11800 = vunpack.c.l.b16 %v9399
  %v11801 = vunpack.c.h.b16 %v9399
  %v11802 = vunpack.c.l.b16 %v9400
  %v11803 = vunpack.c.h.b16 %v9400
  %v11804 = vunpack.c.l.b16 %v9401
  %v11805 = vunpack.c.h.b16 %v9401
  %v11806 = vunpack.c.l.b16 %v9402
  %v11807 = vunpack.c.h.b16 %v9402
  %v11808 = vunpack.c.l.b16 %v9403
  %v11809 = vunpack.c.h.b16 %v9403
  %v11810 = vunpack.c.l.b16 %v9404
  %v11811 = vunpack.c.h.b16 %v9404
  %v11812 = vunpack.c.l.b16 %v9405
  %v11813 = vunpack.c.h.b16 %v9405
  %v11814 = vunpack.c.l.b16 %v9406
  %v11815 = vunpack.c.h.b16 %v9406
  %v11816 = vunpack.c.l.b16 %v9407
  %v11817 = vunpack.c.h.b16 %v9407
  %v11818 = vpack.c.b16 %v10286, %v10282
  %v11819 = vpack.c.b16 %v10287, %v10283
  %v11820 = vpack.c.b16 %v10288, %v10284
  %v11821 = vpack.c.b16 %v10289, %v10285
  %v11822 = vpack.c.b16 %v10294, %v10290
  %v11823 = vpack.c.b16 %v10295, %v10291
  %v11824 = vpack.c.b16 %v10296, %v10292
  %v11825 = vpack.c.b16 %v10297, %v10293
  %v11826 = vpack.c.b16 %v10302, %v10298
  %v11827 = vpack.c.b16 %v10303, %v10299
  %v11828 = vpack.c.b16 %v10304, %v10300
  %v11829 = vpack.c.b16 %v10305, %v10301
  %v11830 = vpack.c.b16 %v10310, %v10306
  %v11831 = vpack.c.b16 %v10311, %v10307
  %v11832 = vpack.c.b16 %v10312, %v10308
  %v11833 = vpack.c.b16 %v10313, %v10309
  %v11834 = vpack.c.b16 %v10318, %v10314
  %v11835 = vpack.c.b16 %v10319, %v10315
  %v11836 = vpack.c.b16 %v10320, %v10316
  %v11837 = vpack.c.b16 %v10321, %v10317
  %v11838 = vpack.c.b16 %v10326, %v10322
  %v11839 = vpack.c.b16 %v10327, %v10323
  %v11840 = vpack.c.b16 %v10328, %v10324
  %v11841 = vpack.c.b16 %v10329, %v10325
  %v11842 = vpack.c.b16 %v10334, %v10330
  %v11843 = vpack.c.b16 %v10335, %v10331
  %v11844 = vpack.c.b16 %v10336, %v10332
  %v11845 = vpack.c.b16 %v10337, %v10333
  %v11846 = vpack.c.b16 %v10342, %v10338
  %v11847 = vpack.c.b16 %v10343, %v10339
  %v11848 = vpack.c.b16 %v10344, %v10340
  %v11849 = vpack.c.b16 %v10345, %v10341
  %v11850 = vpack.c.b16 %v10350, %v10346
  %v11851 = vpack.c.b16 %v10351, %v10347
  %v11852 = vpack.c.b16 %v10352, %v10348
  %v11853 = vpack.c.b16 %v10353, %v10349
  %v11854 = vpack.c.b16 %v10358, %v10354
  %v11855 = vpack.c.b16 %v10359, %v10355
  %v11856 = vpack.c.b16 %v10360, %v10356
  %v11857 = vpack.c.b16 %v10361, %v10357
  %v11858 = vpack.c.b16 %v10366, %v10362
  %v11859 = vpack.c.b16 %v10367, %v10363
  %v11860 = vpack.c.b16 %v10368, %v10364
  %v11861 = vpack.c.b16 %v10369, %v10365
  %v11862 = vpack.c.b16 %v10374, %v10370
  %v11863 = vpack.c.b16 %v10375, %v10371
  %v11864 = vpack.c.b16 %v10376, %v10372
  %v11865 = vpack.c.b16 %v10377, %v10373
  %v11866 = vpack.c.b16 %v10382, %v10378
  %v11867 = vpack.c.b16 %v10383, %v10379
  %v11868 = vpack.c.b16 %v10384, %v10380
  %v11869 = vpack.c.b16 %v10385, %v10381
  %v11870 = vpack.c.b16 %v10390, %v10386
  %v11871 = vpack.c.b16 %v10391, %v10387
  %v11872 = vpack.c.b16 %v10392, %v10388
  %v11873 = vpack.c.b16 %v10393, %v10389
  %v11874 = vpack.c.b16 %v10398, %v10394
  %v11875 = vpack.c.b16 %v10399, %v10395
  %v11876 = vpack.c.b16 %v10400, %v10396
  %v11877 = vpack.c.b16 %v10401, %v10397
  %v11878 = vpack.c.b16 %v10406, %v10402
  %v11879 = vpack.c.b16 %v10407, %v10403
  %v11880 = vpack.c.b16 %v10408, %v10404
  %v11881 = vpack.c.b16 %v10409, %v10405
  %v11882 = vpack.c.b16 %v10414, %v10410
  %v11883 = vpack.c.b16 %v10415, %v10411
  %v11884 = vpack.c.b16 %v10416, %v10412
  %v11885 = vpack.c.b16 %v10417, %v10413
  %v11886 = vpack.c.b16 %v10422, %v10418
  %v11887 = vpack.c.b16 %v10423, %v10419
  %v11888 = vpack.c.b16 %v10424, %v10420
  %v11889 = vpack.c.b16 %v10425, %v10421
  %v11890 = vpack.c.b16 %v10430, %v10426
  %v11891 = vpack.c.b16 %v10431, %v10427
  %v11892 = vpack.c.b16 %v10432, %v10428
  %v11893 = vpack.c.b16 %v10433, %v10429
  %v11894 = vpack.c.b16 %v10438, %v10434
  %v11895 = vpack.c.b16 %v10439, %v10435
  %v11896 = vpack.c.b16 %v10440, %v10436
  %v11897 = vpack.c.b16 %v10441, %v10437
  %v11898 = vpack.c.b16 %v10446, %v10442
  %v11899 = vpack.c.b16 %v10447, %v10443
  %v11900 = vpack.c.b16 %v10448, %v10444
  %v11901 = vpack.c.b16 %v10449, %v10445
  %v11902 = vpack.c.b16 %v10454, %v10450
  %v11903 = vpack.c.b16 %v10455, %v10451
  %v11904 = vpack.c.b16 %v10456, %v10452
  %v11905 = vpack.c.b16 %v10457, %v10453
  %v11906 = vpack.c.b16 %v10462, %v10458
  %v11907 = vpack.c.b16 %v10463, %v10459
  %v11908 = vpack.c.b16 %v10464, %v10460
  %v11909 = vpack.c.b16 %v10465, %v10461
  %v11910 = vpack.c.b16 %v10470, %v10466
  %v11911 = vpack.c.b16 %v10471, %v10467
  %v11912 = vpack.c.b16 %v10472, %v10468
  %v11913 = vpack.c.b16 %v10473, %v10469
  %v11914 = vpack.c.b16 %v10478, %v10474
  %v11915 = vpack.c.b16 %v10479, %v10475
  %v11916 = vpack.c.b16 %v10480, %v10476
  %v11917 = vpack.c.b16 %v10481, %v10477
  %v11918 = vpack.c.b16 %v10486, %v10482
  %v11919 = vpack.c.b16 %v10487, %v10483
  %v11920 = vpack.c.b16 %v10488, %v10484
  %v11921 = vpack.c.b16 %v10489, %v10485
  %v11922 = vpack.c.b16 %v10494, %v10490
  %v11923 = vpack.c.b16 %v10495, %v10491
  %v11924 = vpack.c.b16 %v10496, %v10492
  %v11925 = vpack.c.b16 %v10497, %v10493
  %v11926 = vpack.c.b16 %v10502, %v10498
  %v11927 = vpack.c.b16 %v10503, %v10499
  %v11928 = vpack.c.b16 %v10504, %v10500
  %v11929 = vpack.c.b16 %v10505, %v10501
  %v11930 = vpack.c.b16 %v10510, %v10506
  %v11931 = vpack.c.b16 %v10511, %v10507
  %v11932 = vpack.c.b16 %v10512, %v10508
  %v11933 = vpack.c.b16 %v10513, %v10509
  %v11934 = vpack.c.b16 %v10518, %v10514
  %v11935 = vpack.c.b16 %v10519, %v10515
  %v11936 = vpack.c.b16 %v10520, %v10516
  %v11937 = vpack.c.b16 %v10521, %v10517
  %v11938 = vpack.c.b16 %v10526, %v10522
  %v11939 = vpack.c.b16 %v10527, %v10523
  %v11940 = vpack.c.b16 %v10528, %v10524
  %v11941 = vpack.c.b16 %v10529, %v10525
  %v11942 = vpack.c.b16 %v10534, %v10530
  %v11943 = vpack.c.b16 %v10535, %v10531
  %v11944 = vpack.c.b16 %v10536, %v10532
  %v11945 = vpack.c.b16 %v10537, %v10533
  %v11946 = vpack.c.b16 %v10542, %v10538
  %v11947 = vpack.c.b16 %v10543, %v10539
  %v11948 = vpack.c.b16 %v10544, %v10540
  %v11949 = vpack.c.b16 %v10545, %v10541
  %v11950 = vpack.c.b16 %v10550, %v10546
  %v11951 = vpack.c.b16 %v10551, %v10547
  %v11952 = vpack.c.b16 %v10552, %v10548
  %v11953 = vpack.c.b16 %v10553, %v10549
  %v11954 = vpack.c.b16 %v10558, %v10554
  %v11955 = vpack.c.b16 %v10559, %v10555
  %v11956 = vpack.c.b16 %v10560, %v10556
  %v11957 = vpack.c.b16 %v10561, %v10557
  %v11958 = vpack.c.b16 %v10566, %v10562
  %v11959 = vpack.c.b16 %v10567, %v10563
  %v11960 = vpack.c.b16 %v10568, %v10564
  %v11961 = vpack.c.b16 %v10569, %v10565
  %v11962 = vpack.c.b16 %v10574, %v10570
  %v11963 = vpack.c.b16 %v10575, %v10571
  %v11964 = vpack.c.b16 %v10576, %v10572
  %v11965 = vpack.c.b16 %v10577, %v10573
  %v11966 = vpack.c.b16 %v10582, %v10578
  %v11967 = vpack.c.b16 %v10583, %v10579
  %v11968 = vpack.c.b16 %v10584, %v10580
  %v11969 = vpack.c.b16 %v10585, %v10581
  %v11970 = vpack.c.b16 %v10590, %v10586
  %v11971 = vpack.c.b16 %v10591, %v10587
  %v11972 = vpack.c.b16 %v10592, %v10588
  %v11973 = vpack.c.b16 %v10593, %v10589
  %v11974 = vpack.c.b16 %v10598, %v10594
  %v11975 = vpack.c.b16 %v10599, %v10595
  %v11976 = vpack.c.b16 %v10600, %v10596
  %v11977 = vpack.c.b16 %v10601, %v10597
  %v11978 = vpack.c.b16 %v10606, %v10602
  %v11979 = vpack.c.b16 %v10607, %v10603
  %v11980 = vpack.c.b16 %v10608, %v10604
  %v11981 = vpack.c.b16 %v10609, %v10605
  %v11982 = vpack.c.b16 %v10614, %v10610
  %v11983 = vpack.c.b16 %v10615, %v10611
  %v11984 = vpack.c.b16 %v10616, %v10612
  %v11985 = vpack.c.b16 %v10617, %v10613
  %v11986 = vpack.c.b16 %v10622, %v10618
  %v11987 = vpack.c.b16 %v10623, %v10619
  %v11988 = vpack.c.b16 %v10624, %v10620
  %v11989 = vpack.c.b16 %v10625, %v10621
  %v11990 = vpack.c.b16 %v10630, %v10626
  %v11991 = vpack.c.b16 %v10631, %v10627
  %v11992 = vpack.c.b16 %v10632, %v10628
  %v11993 = vpack.c.b16 %v10633, %v10629
  %v11994 = vpack.c.b16 %v10638, %v10634
  %v11995 = vpack.c.b16 %v10639, %v10635
  %v11996 = vpack.c.b16 %v10640, %v10636
  %v11997 = vpack.c.b16 %v10641, %v10637
  %v11998 = vpack.c.b16 %v10646, %v10642
  %v11999 = vpack.c.b16 %v10647, %v10643
  %v12000 = vpack.c.b16 %v10648, %v10644
  %v12001 = vpack.c.b16 %v10649, %v10645
  %v12002 = vpack.c.b16 %v10654, %v10650
  %v12003 = vpack.c.b16 %v10655, %v10651
  %v12004 = vpack.c.b16 %v10656, %v10652
  %v12005 = vpack.c.b16 %v10657, %v10653
  %v12006 = vpack.c.b16 %v10662, %v10658
  %v12007 = vpack.c.b16 %v10663, %v10659
  %v12008 = vpack.c.b16 %v10664, %v10660
  %v12009 = vpack.c.b16 %v10665, %v10661
  %v12010 = vpack.c.b16 %v10670, %v10666
  %v12011 = vpack.c.b16 %v10671, %v10667
  %v12012 = vpack.c.b16 %v10672, %v10668
  %v12013 = vpack.c.b16 %v10673, %v10669
  %v12014 = vpack.c.b16 %v10678, %v10674
  %v12015 = vpack.c.b16 %v10679, %v10675
  %v12016 = vpack.c.b16 %v10680, %v10676
  %v12017 = vpack.c.b16 %v10681, %v10677
  %v12018 = vpack.c.b16 %v10686, %v10682
  %v12019 = vpack.c.b16 %v10687, %v10683
  %v12020 = vpack.c.b16 %v10688, %v10684
  %v12021 = vpack.c.b16 %v10689, %v10685
  %v12022 = vpack.c.b16 %v10694, %v10690
  %v12023 = vpack.c.b16 %v10695, %v10691
  %v12024 = vpack.c.b16 %v10696, %v10692
  %v12025 = vpack.c.b16 %v10697, %v10693
  %v12026 = vpack.c.b16 %v10702, %v10698
  %v12027 = vpack.c.b16 %v10703, %v10699
  %v12028 = vpack.c.b16 %v10704, %v10700
  %v12029 = vpack.c.b16 %v10705, %v10701
  %v12030 = vpack.c.b16 %v10710, %v10706
  %v12031 = vpack.c.b16 %v10711, %v10707
  %v12032 = vpack.c.b16 %v10712, %v10708
  %v12033 = vpack.c.b16 %v10713, %v10709
  %v12034 = vpack.c.b16 %v10718, %v10714
  %v12035 = vpack.c.b16 %v10719, %v10715
  %v12036 = vpack.c.b16 %v10720, %v10716
  %v12037 = vpack.c.b16 %v10721, %v10717
  %v12038 = vpack.c.b16 %v10726, %v10722
  %v12039 = vpack.c.b16 %v10727, %v10723
  %v12040 = vpack.c.b16 %v10728, %v10724
  %v12041 = vpack.c.b16 %v10729, %v10725
  %v12042 = vpack.c.b16 %v10734, %v10730
  %v12043 = vpack.c.b16 %v10735, %v10731
  %v12044 = vpack.c.b16 %v10736, %v10732
  %v12045 = vpack.c.b16 %v10737, %v10733
  %v12046 = vpack.c.b16 %v10742, %v10738
  %v12047 = vpack.c.b16 %v10743, %v10739
  %v12048 = vpack.c.b16 %v10744, %v10740
  %v12049 = vpack.c.b16 %v10745, %v10741
  %v12050 = vpack.c.b16 %v10750, %v10746
  %v12051 = vpack.c.b16 %v10751, %v10747
  %v12052 = vpack.c.b16 %v10752, %v10748
  %v12053 = vpack.c.b16 %v10753, %v10749
  %v12054 = vpack.c.b16 %v10758, %v10754
  %v12055 = vpack.c.b16 %v10759, %v10755
  %v12056 = vpack.c.b16 %v10760, %v10756
  %v12057 = vpack.c.b16 %v10761, %v10757
  %v12058 = vpack.c.b16 %v10766, %v10762
  %v12059 = vpack.c.b16 %v10767, %v10763
  %v12060 = vpack.c.b16 %v10768, %v10764
  %v12061 = vpack.c.b16 %v10769, %v10765
  %v12062 = vpack.c.b16 %v10774, %v10770
  %v12063 = vpack.c.b16 %v10775, %v10771
  %v12064 = vpack.c.b16 %v10776, %v10772
  %v12065 = vpack.c.b16 %v10777, %v10773
  %v12066 = vpack.c.b16 %v10782, %v10778
  %v12067 = vpack.c.b16 %v10783, %v10779
  %v12068 = vpack.c.b16 %v10784, %v10780
  %v12069 = vpack.c.b16 %v10785, %v10781
  %v12070 = vpack.c.b16 %v10790, %v10786
  %v12071 = vpack.c.b16 %v10791, %v10787
  %v12072 = vpack.c.b16 %v10792, %v10788
  %v12073 = vpack.c.b16 %v10793, %v10789
  %v12074 = vpack.c.b16 %v10798, %v10794
  %v12075 = vpack.c.b16 %v10799, %v10795
  %v12076 = vpack.c.b16 %v10800, %v10796
  %v12077 = vpack.c.b16 %v10801, %v10797
  %v12078 = vpack.c.b16 %v10806, %v10802
  %v12079 = vpack.c.b16 %v10807, %v10803
  %v12080 = vpack.c.b16 %v10808, %v10804
  %v12081 = vpack.c.b16 %v10809, %v10805
  %v12082 = vpack.c.b16 %v10814, %v10810
  %v12083 = vpack.c.b16 %v10815, %v10811
  %v12084 = vpack.c.b16 %v10816, %v10812
  %v12085 = vpack.c.b16 %v10817, %v10813
  %v12086 = vpack.c.b16 %v10822, %v10818
  %v12087 = vpack.c.b16 %v10823, %v10819
  %v12088 = vpack.c.b16 %v10824, %v10820
  %v12089 = vpack.c.b16 %v10825, %v10821
  %v12090 = vpack.c.b16 %v10830, %v10826
  %v12091 = vpack.c.b16 %v10831, %v10827
  %v12092 = vpack.c.b16 %v10832, %v10828
  %v12093 = vpack.c.b16 %v10833, %v10829
  %v12094 = vpack.c.b16 %v10838, %v10834
  %v12095 = vpack.c.b16 %v10839, %v10835
  %v12096 = vpack.c.b16 %v10840, %v10836
  %v12097 = vpack.c.b16 %v10841, %v10837
  %v12098 = vpack.c.b16 %v10846, %v10842
  %v12099 = vpack.c.b16 %v10847, %v10843
  %v12100 = vpack.c.b16 %v10848, %v10844
  %v12101 = vpack.c.b16 %v10849, %v10845
  %v12102 = vpack.c.b16 %v10854, %v10850
  %v12103 = vpack.c.b16 %v10855, %v10851
  %v12104 = vpack.c.b16 %v10856, %v10852
  %v12105 = vpack.c.b16 %v10857, %v10853
  %v12106 = vpack.c.b16 %v10862, %v10858
  %v12107 = vpack.c.b16 %v10863, %v10859
  %v12108 = vpack.c.b16 %v10864, %v10860
  %v12109 = vpack.c.b16 %v10865, %v10861
  %v12110 = vpack.c.b16 %v10870, %v10866
  %v12111 = vpack.c.b16 %v10871, %v10867
  %v12112 = vpack.c.b16 %v10872, %v10868
  %v12113 = vpack.c.b16 %v10873, %v10869
  %v12114 = vpack.c.b16 %v10878, %v10874
  %v12115 = vpack.c.b16 %v10879, %v10875
  %v12116 = vpack.c.b16 %v10880, %v10876
  %v12117 = vpack.c.b16 %v10881, %v10877
  %v12118 = vpack.c.b16 %v10886, %v10882
  %v12119 = vpack.c.b16 %v10887, %v10883
  %v12120 = vpack.c.b16 %v10888, %v10884
  %v12121 = vpack.c.b16 %v10889, %v10885
  %v12122 = vpack.c.b16 %v10894, %v10890
  %v12123 = vpack.c.b16 %v10895, %v10891
  %v12124 = vpack.c.b16 %v10896, %v10892
  %v12125 = vpack.c.b16 %v10897, %v10893
  %v12126 = vpack.c.b16 %v10902, %v10898
  %v12127 = vpack.c.b16 %v10903, %v10899
  %v12128 = vpack.c.b16 %v10904, %v10900
  %v12129 = vpack.c.b16 %v10905, %v10901
  %v12130 = vpack.c.b16 %v10910, %v10906
  %v12131 = vpack.c.b16 %v10911, %v10907
  %v12132 = vpack.c.b16 %v10912, %v10908
  %v12133 = vpack.c.b16 %v10913, %v10909
  %v12134 = vpack.c.b16 %v10918, %v10914
  %v12135 = vpack.c.b16 %v10919, %v10915
  %v12136 = vpack.c.b16 %v10920, %v10916
  %v12137 = vpack.c.b16 %v10921, %v10917
  %v12138 = vpack.c.b16 %v10926, %v10922
  %v12139 = vpack.c.b16 %v10927, %v10923
  %v12140 = vpack.c.b16 %v10928, %v10924
  %v12141 = vpack.c.b16 %v10929, %v10925
  %v12142 = vpack.c.b16 %v10934, %v10930
  %v12143 = vpack.c.b16 %v10935, %v10931
  %v12144 = vpack.c.b16 %v10936, %v10932
  %v12145 = vpack.c.b16 %v10937, %v10933
  %v12146 = vpack.c.b16 %v10942, %v10938
  %v12147 = vpack.c.b16 %v10943, %v10939
  %v12148 = vpack.c.b16 %v10944, %v10940
  %v12149 = vpack.c.b16 %v10945, %v10941
  %v12150 = vpack.c.b16 %v10950, %v10946
  %v12151 = vpack.c.b16 %v10951, %v10947
  %v12152 = vpack.c.b16 %v10952, %v10948
  %v12153 = vpack.c.b16 %v10953, %v10949
  %v12154 = vpack.c.b16 %v10958, %v10954
  %v12155 = vpack.c.b16 %v10959, %v10955
  %v12156 = vpack.c.b16 %v10960, %v10956
  %v12157 = vpack.c.b16 %v10961, %v10957
  %v12158 = vpack.c.b16 %v10966, %v10962
  %v12159 = vpack.c.b16 %v10967, %v10963
  %v12160 = vpack.c.b16 %v10968, %v10964
  %v12161 = vpack.c.b16 %v10969, %v10965
  %v12162 = vpack.c.b16 %v10974, %v10970
  %v12163 = vpack.c.b16 %v10975, %v10971
  %v12164 = vpack.c.b16 %v10976, %v10972
  %v12165 = vpack.c.b16 %v10977, %v10973
  %v12166 = vpack.c.b16 %v10982, %v10978
  %v12167 = vpack.c.b16 %v10983, %v10979
  %v12168 = vpack.c.b16 %v10984, %v10980
  %v12169 = vpack.c.b16 %v10985, %v10981
  %v12170 = vpack.c.b16 %v10990, %v10986
  %v12171 = vpack.c.b16 %v10991, %v10987
  %v12172 = vpack.c.b16 %v10992, %v10988
  %v12173 = vpack.c.b16 %v10993, %v10989
  %v12174 = vpack.c.b16 %v10998, %v10994
  %v12175 = vpack.c.b16 %v10999, %v10995
  %v12176 = vpack.c.b16 %v11000, %v10996
  %v12177 = vpack.c.b16 %v11001, %v10997
  %v12178 = vpack.c.b16 %v11006, %v11002
  %v12179 = vpack.c.b16 %v11007, %v11003
  %v12180 = vpack.c.b16 %v11008, %v11004
  %v12181 = vpack.c.b16 %v11009, %v11005
  %v12182 = vpack.c.b16 %v11014, %v11010
  %v12183 = vpack.c.b16 %v11015, %v11011
  %v12184 = vpack.c.b16 %v11016, %v11012
  %v12185 = vpack.c.b16 %v11017, %v11013
  %v12186 = vpack.c.b16 %v11022, %v11018
  %v12187 = vpack.c.b16 %v11023, %v11019
  %v12188 = vpack.c.b16 %v11024, %v11020
  %v12189 = vpack.c.b16 %v11025, %v11021
  %v12190 = vpack.c.b16 %v11030, %v11026
  %v12191 = vpack.c.b16 %v11031, %v11027
  %v12192 = vpack.c.b16 %v11032, %v11028
  %v12193 = vpack.c.b16 %v11033, %v11029
  %v12194 = vpack.c.b16 %v11038, %v11034
  %v12195 = vpack.c.b16 %v11039, %v11035
  %v12196 = vpack.c.b16 %v11040, %v11036
  %v12197 = vpack.c.b16 %v11041, %v11037
  %v12198 = vpack.c.b16 %v11046, %v11042
  %v12199 = vpack.c.b16 %v11047, %v11043
  %v12200 = vpack.c.b16 %v11048, %v11044
  %v12201 = vpack.c.b16 %v11049, %v11045
  %v12202 = vpack.c.b16 %v11054, %v11050
  %v12203 = vpack.c.b16 %v11055, %v11051
  %v12204 = vpack.c.b16 %v11056, %v11052
  %v12205 = vpack.c.b16 %v11057, %v11053
  %v12206 = vpack.c.b16 %v11062, %v11058
  %v12207 = vpack.c.b16 %v11063, %v11059
  %v12208 = vpack.c.b16 %v11064, %v11060
  %v12209 = vpack.c.b16 %v11065, %v11061
  %v12210 = vpack.c.b16 %v11070, %v11066
  %v12211 = vpack.c.b16 %v11071, %v11067
  %v12212 = vpack.c.b16 %v11072, %v11068
  %v12213 = vpack.c.b16 %v11073, %v11069
  %v12214 = vpack.c.b16 %v11078, %v11074
  %v12215 = vpack.c.b16 %v11079, %v11075
  %v12216 = vpack.c.b16 %v11080, %v11076
  %v12217 = vpack.c.b16 %v11081, %v11077
  %v12218 = vpack.c.b16 %v11086, %v11082
  %v12219 = vpack.c.b16 %v11087, %v11083
  %v12220 = vpack.c.b16 %v11088, %v11084
  %v12221 = vpack.c.b16 %v11089, %v11085
  %v12222 = vpack.c.b16 %v11094, %v11090
  %v12223 = vpack.c.b16 %v11095, %v11091
  %v12224 = vpack.c.b16 %v11096, %v11092
  %v12225 = vpack.c.b16 %v11097, %v11093
  %v12226 = vpack.c.b16 %v11102, %v11098
  %v12227 = vpack.c.b16 %v11103, %v11099
  %v12228 = vpack.c.b16 %v11104, %v11100
  %v12229 = vpack.c.b16 %v11105, %v11101
  %v12230 = vpack.c.b16 %v11110, %v11106
  %v12231 = vpack.c.b16 %v11111, %v11107
  %v12232 = vpack.c.b16 %v11112, %v11108
  %v12233 = vpack.c.b16 %v11113, %v11109
  %v12234 = vpack.c.b16 %v11118, %v11114
  %v12235 = vpack.c.b16 %v11119, %v11115
  %v12236 = vpack.c.b16 %v11120, %v11116
  %v12237 = vpack.c.b16 %v11121, %v11117
  %v12238 = vpack.c.b16 %v11126, %v11122
  %v12239 = vpack.c.b16 %v11127, %v11123
  %v12240 = vpack.c.b16 %v11128, %v11124
  %v12241 = vpack.c.b16 %v11129, %v11125
  %v12242 = vpack.c.b16 %v11134, %v11130
  %v12243 = vpack.c.b16 %v11135, %v11131
  %v12244 = vpack.c.b16 %v11136, %v11132
  %v12245 = vpack.c.b16 %v11137, %v11133
  %v12246 = vpack.c.b16 %v11142, %v11138
  %v12247 = vpack.c.b16 %v11143, %v11139
  %v12248 = vpack.c.b16 %v11144, %v11140
  %v12249 = vpack.c.b16 %v11145, %v11141
  %v12250 = vpack.c.b16 %v11150, %v11146
  %v12251 = vpack.c.b16 %v11151, %v11147
  %v12252 = vpack.c.b16 %v11152, %v11148
  %v12253 = vpack.c.b16 %v11153, %v11149
  %v12254 = vpack.c.b16 %v11158, %v11154
  %v12255 = vpack.c.b16 %v11159, %v11155
  %v12256 = vpack.c.b16 %v11160, %v11156
  %v12257 = vpack.c.b16 %v11161, %v11157
  %v12258 = vpack.c.b16 %v11166, %v11162
  %v12259 = vpack.c.b16 %v11167, %v11163
  %v12260 = vpack.c.b16 %v11168, %v11164
  %v12261 = vpack.c.b16 %v11169, %v11165
  %v12262 = vpack.c.b16 %v11174, %v11170
  %v12263 = vpack.c.b16 %v11175, %v11171
  %v12264 = vpack.c.b16 %v11176, %v11172
  %v12265 = vpack.c.b16 %v11177, %v11173
  %v12266 = vpack.c.b16 %v11182, %v11178
  %v12267 = vpack.c.b16 %v11183, %v11179
  %v12268 = vpack.c.b16 %v11184, %v11180
  %v12269 = vpack.c.b16 %v11185, %v11181
  %v12270 = vpack.c.b16 %v11190, %v11186
  %v12271 = vpack.c.b16 %v11191, %v11187
  %v12272 = vpack.c.b16 %v11192, %v11188
  %v12273 = vpack.c.b16 %v11193, %v11189
  %v12274 = vpack.c.b16 %v11198, %v11194
  %v12275 = vpack.c.b16 %v11199, %v11195
  %v12276 = vpack.c.b16 %v11200, %v11196
  %v12277 = vpack.c.b16 %v11201, %v11197
  %v12278 = vpack.c.b16 %v11206, %v11202
  %v12279 = vpack.c.b16 %v11207, %v11203
  %v12280 = vpack.c.b16 %v11208, %v11204
  %v12281 = vpack.c.b16 %v11209, %v11205
  %v12282 = vpack.c.b16 %v11214, %v11210
  %v12283 = vpack.c.b16 %v11215, %v11211
  %v12284 = vpack.c.b16 %v11216, %v11212
  %v12285 = vpack.c.b16 %v11217, %v11213
  %v12286 = vpack.c.b16 %v11222, %v11218
  %v12287 = vpack.c.b16 %v11223, %v11219
  %v12288 = vpack.c.b16 %v11224, %v11220
  %v12289 = vpack.c.b16 %v11225, %v11221
  %v12290 = vpack.c.b16 %v11230, %v11226
  %v12291 = vpack.c.b16 %v11231, %v11227
  %v12292 = vpack.c.b16 %v11232, %v11228
  %v12293 = vpack.c.b16 %v11233, %v11229
  %v12294 = vpack.c.b16 %v11238, %v11234
  %v12295 = vpack.c.b16 %v11239, %v11235
  %v12296 = vpack.c.b16 %v11240, %v11236
  %v12297 = vpack.c.b16 %v11241, %v11237
  %v12298 = vpack.c.b16 %v11246, %v11242
  %v12299 = vpack.c.b16 %v11247, %v11243
  %v12300 = vpack.c.b16 %v11248, %v11244
  %v12301 = vpack.c.b16 %v11249, %v11245
  %v12302 = vpack.c.b16 %v11254, %v11250
  %v12303 = vpack.c.b16 %v11255, %v11251
  %v12304 = vpack.c.b16 %v11256, %v11252
  %v12305 = vpack.c.b16 %v11257, %v11253
  %v12306 = vpack.c.b16 %v11262, %v11258
  %v12307 = vpack.c.b16 %v11263, %v11259
  %v12308 = vpack.c.b16 %v11264, %v11260
  %v12309 = vpack.c.b16 %v11265, %v11261
  %v12310 = vpack.c.b16 %v11270, %v11266
  %v12311 = vpack.c.b16 %v11271, %v11267
  %v12312 = vpack.c.b16 %v11272, %v11268
  %v12313 = vpack.c.b16 %v11273, %v11269
  %v12314 = vpack.c.b16 %v11278, %v11274
  %v12315 = vpack.c.b16 %v11279, %v11275
  %v12316 = vpack.c.b16 %v11280, %v11276
  %v12317 = vpack.c.b16 %v11281, %v11277
  %v12318 = vpack.c.b16 %v11286, %v11282
  %v12319 = vpack.c.b16 %v11287, %v11283
  %v12320 = vpack.c.b16 %v11288, %v11284
  %v12321 = vpack.c.b16 %v11289, %v11285
  %v12322 = vpack.c.b16 %v11294, %v11290
  %v12323 = vpack.c.b16 %v11295, %v11291
  %v12324 = vpack.c.b16 %v11296, %v11292
  %v12325 = vpack.c.b16 %v11297, %v11293
  %v12326 = vpack.c.b16 %v11302, %v11298
  %v12327 = vpack.c.b16 %v11303, %v11299
  %v12328 = vpack.c.b16 %v11304, %v11300
  %v12329 = vpack.c.b16 %v11305, %v11301
  %v12330 = vpack.c.b16 %v11310, %v11306
  %v12331 = vpack.c.b16 %v11311, %v11307
  %v12332 = vpack.c.b16 %v11312, %v11308
  %v12333 = vpack.c.b16 %v11313, %v11309
  %v12334 = vpack.c.b16 %v11318, %v11314
  %v12335 = vpack.c.b16 %v11319, %v11315
  %v12336 = vpack.c.b16 %v11320, %v11316
  %v12337 = vpack.c.b16 %v11321, %v11317
  %v12338 = vpack.c.b16 %v11326, %v11322
  %v12339 = vpack.c.b16 %v11327, %v11323
  %v12340 = vpack.c.b16 %v11328, %v11324
  %v12341 = vpack.c.b16 %v11329, %v11325
  %v12342 = vpack.c.b16 %v11334, %v11330
  %v12343 = vpack.c.b16 %v11335, %v11331
  %v12344 = vpack.c.b16 %v11336, %v11332
  %v12345 = vpack.c.b16 %v11337, %v11333
  %v12346 = vpack.c.b16 %v11342, %v11338
  %v12347 = vpack.c.b16 %v11343, %v11339
  %v12348 = vpack.c.b16 %v11344, %v11340
  %v12349 = vpack.c.b16 %v11345, %v11341
  %v12350 = vpack.c.b16 %v11350, %v11346
  %v12351 = vpack.c.b16 %v11351, %v11347
  %v12352 = vpack.c.b16 %v11352, %v11348
  %v12353 = vpack.c.b16 %v11353, %v11349
  %v12354 = vpack.c.b16 %v11358, %v11354
  %v12355 = vpack.c.b16 %v11359, %v11355
  %v12356 = vpack.c.b16 %v11360, %v11356
  %v12357 = vpack.c.b16 %v11361, %v11357
  %v12358 = vpack.c.b16 %v11366, %v11362
  %v12359 = vpack.c.b16 %v11367, %v11363
  %v12360 = vpack.c.b16 %v11368, %v11364
  %v12361 = vpack.c.b16 %v11369, %v11365
  %v12362 = vpack.c.b16 %v11374, %v11370
  %v12363 = vpack.c.b16 %v11375, %v11371
  %v12364 = vpack.c.b16 %v11376, %v11372
  %v12365 = vpack.c.b16 %v11377, %v11373
  %v12366 = vpack.c.b16 %v11382, %v11378
  %v12367 = vpack.c.b16 %v11383, %v11379
  %v12368 = vpack.c.b16 %v11384, %v11380
  %v12369 = vpack.c.b16 %v11385, %v11381
  %v12370 = vpack.c.b16 %v11390, %v11386
  %v12371 = vpack.c.b16 %v11391, %v11387
  %v12372 = vpack.c.b16 %v11392, %v11388
  %v12373 = vpack.c.b16 %v11393, %v11389
  %v12374 = vpack.c.b16 %v11398, %v11394
  %v12375 = vpack.c.b16 %v11399, %v11395
  %v12376 = vpack.c.b16 %v11400, %v11396
  %v12377 = vpack.c.b16 %v11401, %v11397
  %v12378 = vpack.c.b16 %v11406, %v11402
  %v12379 = vpack.c.b16 %v11407, %v11403
  %v12380 = vpack.c.b16 %v11408, %v11404
  %v12381 = vpack.c.b16 %v11409, %v11405
  %v12382 = vpack.c.b16 %v11414, %v11410
  %v12383 = vpack.c.b16 %v11415, %v11411
  %v12384 = vpack.c.b16 %v11416, %v11412
  %v12385 = vpack.c.b16 %v11417, %v11413
  %v12386 = vpack.c.b16 %v11422, %v11418
  %v12387 = vpack.c.b16 %v11423, %v11419
  %v12388 = vpack.c.b16 %v11424, %v11420
  %v12389 = vpack.c.b16 %v11425, %v11421
  %v12390 = vpack.c.b16 %v11430, %v11426
  %v12391 = vpack.c.b16 %v11431, %v11427
  %v12392 = vpack.c.b16 %v11432, %v11428
  %v12393 = vpack.c.b16 %v11433, %v11429
  %v12394 = vpack.c.b16 %v11438, %v11434
  %v12395 = vpack.c.b16 %v11439, %v11435
  %v12396 = vpack.c.b16 %v11440, %v11436
  %v12397 = vpack.c.b16 %v11441, %v11437
  %v12398 = vpack.c.b16 %v11446, %v11442
  %v12399 = vpack.c.b16 %v11447, %v11443
  %v12400 = vpack.c.b16 %v11448, %v11444
  %v12401 = vpack.c.b16 %v11449, %v11445
  %v12402 = vpack.c.b16 %v11454, %v11450
  %v12403 = vpack.c.b16 %v11455, %v11451
  %v12404 = vpack.c.b16 %v11456, %v11452
  %v12405 = vpack.c.b16 %v11457, %v11453
  %v12406 = vpack.c.b16 %v11462, %v11458
  %v12407 = vpack.c.b16 %v11463, %v11459
  %v12408 = vpack.c.b16 %v11464, %v11460
  %v12409 = vpack.c.b16 %v11465, %v11461
  %v12410 = vpack.c.b16 %v11470, %v11466
  %v12411 = vpack.c.b16 %v11471, %v11467
  %v12412 = vpack.c.b16 %v11472, %v11468
  %v12413 = vpack.c.b16 %v11473, %v11469
  %v12414 = vpack.c.b16 %v11478, %v11474
  %v12415 = vpack.c.b16 %v11479, %v11475
  %v12416 = vpack.c.b16 %v11480, %v11476
  %v12417 = vpack.c.b16 %v11481, %v11477
  %v12418 = vpack.c.b16 %v11486, %v11482
  %v12419 = vpack.c.b16 %v11487, %v11483
  %v12420 = vpack.c.b16 %v11488, %v11484
  %v12421 = vpack.c.b16 %v11489, %v11485
  %v12422 = vpack.c.b16 %v11494, %v11490
  %v12423 = vpack.c.b16 %v11495, %v11491
  %v12424 = vpack.c.b16 %v11496, %v11492
  %v12425 = vpack.c.b16 %v11497, %v11493
  %v12426 = vpack.c.b16 %v11502, %v11498
  %v12427 = vpack.c.b16 %v11503, %v11499
  %v12428 = vpack.c.b16 %v11504, %v11500
  %v12429 = vpack.c.b16 %v11505, %v11501
  %v12430 = vpack.c.b16 %v11510, %v11506
  %v12431 = vpack.c.b16 %v11511, %v11507
  %v12432 = vpack.c.b16 %v11512, %v11508
  %v12433 = vpack.c.b16 %v11513, %v11509
  %v12434 = vpack.c.b16 %v11518, %v11514
  %v12435 = vpack.c.b16 %v11519, %v11515
  %v12436 = vpack.c.b16 %v11520, %v11516
  %v12437 = vpack.c.b16 %v11521, %v11517
  %v12438 = vpack.c.b16 %v11526, %v11522
  %v12439 = vpack.c.b16 %v11527, %v11523
  %v12440 = vpack.c.b16 %v11528, %v11524
  %v12441 = vpack.c.b16 %v11529, %v11525
  %v12442 = vpack.c.b16 %v11534, %v11530
  %v12443 = vpack.c.b16 %v11535, %v11531
  %v12444 = vpack.c.b16 %v11536, %v11532
  %v12445 = vpack.c.b16 %v11537, %v11533
  %v12446 = vpack.c.b16 %v11542, %v11538
  %v12447 = vpack.c.b16 %v11543, %v11539
  %v12448 = vpack.c.b16 %v11544, %v11540
  %v12449 = vpack.c.b16 %v11545, %v11541
  %v12450 = vpack.c.b16 %v11550, %v11546
  %v12451 = vpack.c.b16 %v11551, %v11547
  %v12452 = vpack.c.b16 %v11552, %v11548
  %v12453 = vpack.c.b16 %v11553, %v11549
  %v12454 = vpack.c.b16 %v11558, %v11554
  %v12455 = vpack.c.b16 %v11559, %v11555
  %v12456 = vpack.c.b16 %v11560, %v11556
  %v12457 = vpack.c.b16 %v11561, %v11557
  %v12458 = vpack.c.b16 %v11566, %v11562
  %v12459 = vpack.c.b16 %v11567, %v11563
  %v12460 = vpack.c.b16 %v11568, %v11564
  %v12461 = vpack.c.b16 %v11569, %v11565
  %v12462 = vpack.c.b16 %v11574, %v11570
  %v12463 = vpack.c.b16 %v11575, %v11571
  %v12464 = vpack.c.b16 %v11576, %v11572
  %v12465 = vpack.c.b16 %v11577, %v11573
  %v12466 = vpack.c.b16 %v11582, %v11578
  %v12467 = vpack.c.b16 %v11583, %v11579
  %v12468 = vpack.c.b16 %v11584, %v11580
  %v12469 = vpack.c.b16 %v11585, %v11581
  %v12470 = vpack.c.b16 %v11590, %v11586
  %v12471 = vpack.c.b16 %v11591, %v11587
  %v12472 = vpack.c.b16 %v11592, %v11588
  %v12473 = vpack.c.b16 %v11593, %v11589
  %v12474 = vpack.c.b16 %v11598, %v11594
  %v12475 = vpack.c.b16 %v11599, %v11595
  %v12476 = vpack.c.b16 %v11600, %v11596
  %v12477 = vpack.c.b16 %v11601, %v11597
  %v12478 = vpack.c.b16 %v11606, %v11602
  %v12479 = vpack.c.b16 %v11607, %v11603
  %v12480 = vpack.c.b16 %v11608, %v11604
  %v12481 = vpack.c.b16 %v11609, %v11605
  %v12482 = vpack.c.b16 %v11614, %v11610
  %v12483 = vpack.c.b16 %v11615, %v11611
  %v12484 = vpack.c.b16 %v11616, %v11612
  %v12485 = vpack.c.b16 %v11617, %v11613
  %v12486 = vpack.c.b16 %v11622, %v11618
  %v12487 = vpack.c.b16 %v11623, %v11619
  %v12488 = vpack.c.b16 %v11624, %v11620
  %v12489 = vpack.c.b16 %v11625, %v11621
  %v12490 = vpack.c.b16 %v11630, %v11626
  %v12491 = vpack.c.b16 %v11631, %v11627
  %v12492 = vpack.c.b16 %v11632, %v11628
  %v12493 = vpack.c.b16 %v11633, %v11629
  %v12494 = vpack.c.b16 %v11638, %v11634
  %v12495 = vpack.c.b16 %v11639, %v11635
  %v12496 = vpack.c.b16 %v11640, %v11636
  %v12497 = vpack.c.b16 %v11641, %v11637
  %v12498 = vpack.c.b16 %v11646, %v11642
  %v12499 = vpack.c.b16 %v11647, %v11643
  %v12500 = vpack.c.b16 %v11648, %v11644
  %v12501 = vpack.c.b16 %v11649, %v11645
  %v12502 = vpack.c.b16 %v11654, %v11650
  %v12503 = vpack.c.b16 %v11655, %v11651
  %v12504 = vpack.c.b16 %v11656, %v11652
  %v12505 = vpack.c.b16 %v11657, %v11653
  %v12506 = vpack.c.b16 %v11662, %v11658
  %v12507 = vpack.c.b16 %v11663, %v11659
  %v12508 = vpack.c.b16 %v11664, %v11660
  %v12509 = vpack.c.b16 %v11665, %v11661
  %v12510 = vpack.c.b16 %v11670, %v11666
  %v12511 = vpack.c.b16 %v11671, %v11667
  %v12512 = vpack.c.b16 %v11672, %v11668
  %v12513 = vpack.c.b16 %v11673, %v11669
  %v12514 = vpack.c.b16 %v11678, %v11674
  %v12515 = vpack.c.b16 %v11679, %v11675
  %v12516 = vpack.c.b16 %v11680, %v11676
  %v12517 = vpack.c.b16 %v11681, %v11677
  %v12518 = vpack.c.b16 %v11686, %v11682
  %v12519 = vpack.c.b16 %v11687, %v11683
  %v12520 = vpack.c.b16 %v11688, %v11684
  %v12521 = vpack.c.b16 %v11689, %v11685
  %v12522 = vpack.c.b16 %v11694, %v11690
  %v12523 = vpack.c.b16 %v11695, %v11691
  %v12524 = vpack.c.b16 %v11696, %v11692
  %v12525 = vpack.c.b16 %v11697, %v11693
  %v12526 = vpack.c.b16 %v11702, %v11698
  %v12527 = vpack.c.b16 %v11703, %v11699
  %v12528 = vpack.c.b16 %v11704, %v11700
  %v12529 = vpack.c.b16 %v11705, %v11701
  %v12530 = vpack.c.b16 %v11710, %v11706
  %v12531 = vpack.c.b16 %v11711, %v11707
  %v12532 = vpack.c.b16 %v11712, %v11708
  %v12533 = vpack.c.b16 %v11713, %v11709
  %v12534 = vpack.c.b16 %v11718, %v11714
  %v12535 = vpack.c.b16 %v11719, %v11715
  %v12536 = vpack.c.b16 %v11720, %v11716
  %v12537 = vpack.c.b16 %v11721, %v11717
  %v12538 = vpack.c.b16 %v11726, %v11722
  %v12539 = vpack.c.b16 %v11727, %v11723
  %v12540 = vpack.c.b16 %v11728, %v11724
  %v12541 = vpack.c.b16 %v11729, %v11725
  %v12542 = vpack.c.b16 %v11734, %v11730
  %v12543 = vpack.c.b16 %v11735, %v11731
  %v12544 = vpack.c.b16 %v11736, %v11732
  %v12545 = vpack.c.b16 %v11737, %v11733
  %v12546 = vpack.c.b16 %v11742, %v11738
  %v12547 = vpack.c.b16 %v11743, %v11739
  %v12548 = vpack.c.b16 %v11744, %v11740
  %v12549 = vpack.c.b16 %v11745, %v11741
  %v12550 = vpack.c.b16 %v11750, %v11746
  %v12551 = vpack.c.b16 %v11751, %v11747
  %v12552 = vpack.c.b16 %v11752, %v11748
  %v12553 = vpack.c.b16 %v11753, %v11749
  %v12554 = vpack.c.b16 %v11758, %v11754
  %v12555 = vpack.c.b16 %v11759, %v11755
  %v12556 = vpack.c.b16 %v11760, %v11756
  %v12557 = vpack.c.b16 %v11761, %v11757
  %v12558 = vpack.c.b16 %v11766, %v11762
  %v12559 = vpack.c.b16 %v11767, %v11763
  %v12560 = vpack.c.b16 %v11768, %v11764
  %v12561 = vpack.c.b16 %v11769, %v11765
  %v12562 = vpack.c.b16 %v11774, %v11770
  %v12563 = vpack.c.b16 %v11775, %v11771
  %v12564 = vpack.c.b16 %v11776, %v11772
  %v12565 = vpack.c.b16 %v11777, %v11773
  %v12566 = vpack.c.b16 %v11782, %v11778
  %v12567 = vpack.c.b16 %v11783, %v11779
  %v12568 = vpack.c.b16 %v11784, %v11780
  %v12569 = vpack.c.b16 %v11785, %v11781
  %v12570 = vpack.c.b16 %v11790, %v11786
  %v12571 = vpack.c.b16 %v11791, %v11787
  %v12572 = vpack.c.b16 %v11792, %v11788
  %v12573 = vpack.c.b16 %v11793, %v11789
  %v12574 = vpack.c.b16 %v11798, %v11794
  %v12575 = vpack.c.b16 %v11799, %v11795
  %v12576 = vpack.c.b16 %v11800, %v11796
  %v12577 = vpack.c.b16 %v11801, %v11797
  %v12578 = vpack.c.b16 %v11806, %v11802
  %v12579 = vpack.c.b16 %v11807, %v11803
  %v12580 = vpack.c.b16 %v11808, %v11804
  %v12581 = vpack.c.b16 %v11809, %v11805
  %v12582 = vpack.c.b16 %v11814, %v11810
  %v12583 = vpack.c.b16 %v11815, %v11811
  %v12584 = vpack.c.b16 %v11816, %v11812
  %v12585 = vpack.c.b16 %v11817, %v11813
  %13354 = vmatprep.subr.bf16.mxu0 %v11819
  %13355 = vmatpush1.bf16.msra.mxu0 %v11818
  %13356 = vmatprep.subr.bf16.mxu0 %v11823
  %13357 = vmatpush1.bf16.msra.mxu0 %v11822
  %13358 = vmatprep.subr.bf16.mxu0 %v11827
  %13359 = vmatpush1.bf16.msra.mxu0 %v11826
  %13360 = vmatprep.subr.bf16.mxu0 %v11831
  %13361 = vmatpush1.bf16.msra.mxu0 %v11830
  %13362 = vmatprep.subr.bf16.mxu0 %v11835
  %13363 = vmatpush1.bf16.msra.mxu0 %v11834
  %13364 = vmatprep.subr.bf16.mxu0 %v11839
  %13365 = vmatpush1.bf16.msra.mxu0 %v11838
  %13366 = vmatprep.subr.bf16.mxu0 %v11843
  %13367 = vmatpush1.bf16.msra.mxu0 %v11842
  %13368 = vmatprep.subr.bf16.mxu0 %v11847
  %13369 = vmatpush1.bf16.msra.mxu0 %v11846
  %13370 = vmatprep.subr.bf16.mxu0 %v11851
  %13371 = vmatpush1.bf16.msra.mxu0 %v11850
  %13372 = vmatprep.subr.bf16.mxu0 %v11855
  %13373 = vmatpush1.bf16.msra.mxu0 %v11854
  %13374 = vmatprep.subr.bf16.mxu0 %v11859
  %13375 = vmatpush1.bf16.msra.mxu0 %v11858
  %13376 = vmatprep.subr.bf16.mxu0 %v11863
  %13377 = vmatpush1.bf16.msra.mxu0 %v11862
  %13378 = vmatprep.subr.bf16.mxu0 %v11867
  %13379 = vmatpush1.bf16.msra.mxu0 %v11866
  %13380 = vmatprep.subr.bf16.mxu0 %v11871
  %13381 = vmatpush1.bf16.msra.mxu0 %v11870
  %13382 = vmatprep.subr.bf16.mxu0 %v11875
  %13383 = vmatpush1.bf16.msra.mxu0 %v11874
  %13384 = vmatprep.subr.bf16.mxu0 %v11879
  %13385 = vmatpush1.bf16.msra.mxu0 %v11878
  %13386 = vmatprep.mubr.bf16.mxu0 %v9467
  %13387 = vmatmul.mubr.bf16.gmra.mrb[0].mxu0 %v9466
  %v13388 = vpop.f32.mrb[0].mxu0
  %v13389 = vadd.f32 %v9413, %v13388
  %v13390 = vpop.f32.mrb[0].mxu0
  %v13391 = vadd.f32 %v9417, %v13390
  %v13392 = vpop.f32.mrb[0].mxu0
  %v13393 = vpop.f32.mrb[0].mxu0
  %13394 = vdwg.mxu0
  %13395 = vmatprep.subr.bf16.mxu0 %v11883
  %13396 = vmatpush1.bf16.msra.mxu0 %v11882
  %13397 = vmatprep.subr.bf16.mxu0 %v11887
  %13398 = vmatpush1.bf16.msra.mxu0 %v11886
  %13399 = vmatprep.subr.bf16.mxu0 %v11891
  %13400 = vmatpush1.bf16.msra.mxu0 %v11890
  %13401 = vmatprep.subr.bf16.mxu0 %v11895
  %13402 = vmatpush1.bf16.msra.mxu0 %v11894
  %13403 = vmatprep.subr.bf16.mxu0 %v11899
  %13404 = vmatpush1.bf16.msra.mxu0 %v11898
  %13405 = vmatprep.subr.bf16.mxu0 %v11903
  %13406 = vmatpush1.bf16.msra.mxu0 %v11902
  %13407 = vmatprep.subr.bf16.mxu0 %v11907
  %13408 = vmatpush1.bf16.msra.mxu0 %v11906
  %13409 = vmatprep.subr.bf16.mxu0 %v11911
  %13410 = vmatpush1.bf16.msra.mxu0 %v11910
  %13411 = vmatprep.subr.bf16.mxu0 %v11915
  %13412 = vmatpush1.bf16.msra.mxu0 %v11914
  %13413 = vmatprep.subr.bf16.mxu0 %v11919
  %13414 = vmatpush1.bf16.msra.mxu0 %v11918
  %13415 = vmatprep.subr.bf16.mxu0 %v11923
  %13416 = vmatpush1.bf16.msra.mxu0 %v11922
  %13417 = vmatprep.subr.bf16.mxu0 %v11927
  %13418 = vmatpush1.bf16.msra.mxu0 %v11926
  %13419 = vmatprep.subr.bf16.mxu0 %v11931
  %13420 = vmatpush1.bf16.msra.mxu0 %v11930
  %13421 = vmatprep.subr.bf16.mxu0 %v11935
  %13422 = vmatpush1.bf16.msra.mxu0 %v11934
  %13423 = vmatprep.subr.bf16.mxu0 %v11939
  %13424 = vmatpush1.bf16.msra.mxu0 %v11938
  %13425 = vmatprep.subr.bf16.mxu0 %v11943
  %13426 = vmatpush1.bf16.msra.mxu0 %v11942
  %13427 = vmatprep.mubr.bf16.mxu0 %v9469
  %13428 = vmatmul.mubr.bf16.gmra.mrb[0].mxu0 %v9468
  %v13429 = vpop.f32.mrb[0].mxu0
  %v13430 = vadd.f32 %v13389, %v13429
  %v13431 = vpop.f32.mrb[0].mxu0
  %v13432 = vadd.f32 %v13391, %v13431
  %v13433 = vpop.f32.mrb[0].mxu0
  %v13434 = vpop.f32.mrb[0].mxu0
  %13435 = vdwg.mxu0
  %13436 = vmatprep.subr.bf16.mxu0 %v11947
  %13437 = vmatpush1.bf16.msra.mxu0 %v11946
  %13438 = vmatprep.subr.bf16.mxu0 %v11951
  %13439 = vmatpush1.bf16.msra.mxu0 %v11950
  %13440 = vmatprep.subr.bf16.mxu0 %v11955
  %13441 = vmatpush1.bf16.msra.mxu0 %v11954
  %13442 = vmatprep.subr.bf16.mxu0 %v11959
  %13443 = vmatpush1.bf16.msra.mxu0 %v11958
  %13444 = vmatprep.subr.bf16.mxu0 %v11963
  %13445 = vmatpush1.bf16.msra.mxu0 %v11962
  %13446 = vmatprep.subr.bf16.mxu0 %v11967
  %13447 = vmatpush1.bf16.msra.mxu0 %v11966
  %13448 = vmatprep.subr.bf16.mxu0 %v11971
  %13449 = vmatpush1.bf16.msra.mxu0 %v11970
  %13450 = vmatprep.subr.bf16.mxu0 %v11975
  %13451 = vmatpush1.bf16.msra.mxu0 %v11974
  %13452 = vmatprep.subr.bf16.mxu0 %v11979
  %13453 = vmatpush1.bf16.msra.mxu0 %v11978
  %13454 = vmatprep.subr.bf16.mxu0 %v11983
  %13455 = vmatpush1.bf16.msra.mxu0 %v11982
  %13456 = vmatprep.subr.bf16.mxu0 %v11987
  %13457 = vmatpush1.bf16.msra.mxu0 %v11986
  %13458 = vmatprep.subr.bf16.mxu0 %v11991
  %13459 = vmatpush1.bf16.msra.mxu0 %v11990
  %13460 = vmatprep.subr.bf16.mxu0 %v11995
  %13461 = vmatpush1.bf16.msra.mxu0 %v11994
  %13462 = vmatprep.subr.bf16.mxu0 %v11999
  %13463 = vmatpush1.bf16.msra.mxu0 %v11998
  %13464 = vmatprep.subr.bf16.mxu0 %v12003
  %13465 = vmatpush1.bf16.msra.mxu0 %v12002
  %13466 = vmatprep.subr.bf16.mxu0 %v12007
  %13467 = vmatpush1.bf16.msra.mxu0 %v12006
  %13468 = vmatprep.mubr.bf16.mxu0 %v9471
  %13469 = vmatmul.mubr.bf16.gmra.mrb[0].mxu0 %v9470
  %v13470 = vpop.f32.mrb[0].mxu0
  %v13471 = vadd.f32 %v13430, %v13470
  %v13472 = vpop.f32.mrb[0].mxu0
  %v13473 = vadd.f32 %v13432, %v13472
  %v13474 = vpop.f32.mrb[0].mxu0
  %v13475 = vpop.f32.mrb[0].mxu0
  %13476 = vdwg.mxu0
  %13477 = vmatprep.subr.bf16.mxu0 %v12011
  %13478 = vmatpush1.bf16.msra.mxu0 %v12010
  %13479 = vmatprep.subr.bf16.mxu0 %v12015
  %13480 = vmatpush1.bf16.msra.mxu0 %v12014
  %13481 = vmatprep.subr.bf16.mxu0 %v12019
  %13482 = vmatpush1.bf16.msra.mxu0 %v12018
  %13483 = vmatprep.subr.bf16.mxu0 %v12023
  %13484 = vmatpush1.bf16.msra.mxu0 %v12022
  %13485 = vmatprep.subr.bf16.mxu0 %v12027
  %13486 = vmatpush1.bf16.msra.mxu0 %v12026
  %13487 = vmatprep.subr.bf16.mxu0 %v12031
  %13488 = vmatpush1.bf16.msra.mxu0 %v12030
  %13489 = vmatprep.subr.bf16.mxu0 %v12035
  %13490 = vmatpush1.bf16.msra.mxu0 %v12034
  %13491 = vmatprep.subr.bf16.mxu0 %v12039
  %13492 = vmatpush1.bf16.msra.mxu0 %v12038
  %13493 = vmatprep.subr.bf16.mxu0 %v12043
  %13494 = vmatpush1.bf16.msra.mxu0 %v12042
  %13495 = vmatprep.subr.bf16.mxu0 %v12047
  %13496 = vmatpush1.bf16.msra.mxu0 %v12046
  %13497 = vmatprep.subr.bf16.mxu0 %v12051
  %13498 = vmatpush1.bf16.msra.mxu0 %v12050
  %13499 = vmatprep.subr.bf16.mxu0 %v12055
  %13500 = vmatpush1.bf16.msra.mxu0 %v12054
  %13501 = vmatprep.subr.bf16.mxu0 %v12059
  %13502 = vmatpush1.bf16.msra.mxu0 %v12058
  %13503 = vmatprep.subr.bf16.mxu0 %v12063
  %13504 = vmatpush1.bf16.msra.mxu0 %v12062
  %13505 = vmatprep.subr.bf16.mxu0 %v12067
  %13506 = vmatpush1.bf16.msra.mxu0 %v12066
  %13507 = vmatprep.subr.bf16.mxu0 %v12071
  %13508 = vmatpush1.bf16.msra.mxu0 %v12070
  %13509 = vmatprep.mubr.bf16.mxu0 %v9473
  %13510 = vmatmul.mubr.bf16.gmra.mrb[0].mxu0 %v9472
  %v13511 = vpop.f32.mrb[0].mxu0
  %v13512 = vadd.f32 %v13471, %v13511
  %v13513 = vpop.f32.mrb[0].mxu0
  %v13514 = vadd.f32 %v13473, %v13513
  %v13515 = vpop.f32.mrb[0].mxu0
  %v13516 = vpop.f32.mrb[0].mxu0
  %13517 = vdwg.mxu0
  %13518 = vmatprep.subr.bf16.mxu0 %v12075
  %13519 = vmatpush1.bf16.msra.mxu0 %v12074
  %13520 = vmatprep.subr.bf16.mxu0 %v12079
  %13521 = vmatpush1.bf16.msra.mxu0 %v12078
  %13522 = vmatprep.subr.bf16.mxu0 %v12083
  %13523 = vmatpush1.bf16.msra.mxu0 %v12082
  %13524 = vmatprep.subr.bf16.mxu0 %v12087
  %13525 = vmatpush1.bf16.msra.mxu0 %v12086
  %13526 = vmatprep.subr.bf16.mxu0 %v12091
  %13527 = vmatpush1.bf16.msra.mxu0 %v12090
  %13528 = vmatprep.subr.bf16.mxu0 %v12095
  %13529 = vmatpush1.bf16.msra.mxu0 %v12094
  %13530 = vmatprep.subr.bf16.mxu0 %v12099
  %13531 = vmatpush1.bf16.msra.mxu0 %v12098
  %13532 = vmatprep.subr.bf16.mxu0 %v12103
  %13533 = vmatpush1.bf16.msra.mxu0 %v12102
  %13534 = vmatprep.subr.bf16.mxu0 %v12107
  %13535 = vmatpush1.bf16.msra.mxu0 %v12106
  %13536 = vmatprep.subr.bf16.mxu0 %v12111
  %13537 = vmatpush1.bf16.msra.mxu0 %v12110
  %13538 = vmatprep.subr.bf16.mxu0 %v12115
  %13539 = vmatpush1.bf16.msra.mxu0 %v12114
  %13540 = vmatprep.subr.bf16.mxu0 %v12119
  %13541 = vmatpush1.bf16.msra.mxu0 %v12118
  %13542 = vmatprep.subr.bf16.mxu0 %v12123
  %13543 = vmatpush1.bf16.msra.mxu0 %v12122
  %13544 = vmatprep.subr.bf16.mxu0 %v12127
  %13545 = vmatpush1.bf16.msra.mxu0 %v12126
  %13546 = vmatprep.subr.bf16.mxu0 %v12131
  %13547 = vmatpush1.bf16.msra.mxu0 %v12130
  %13548 = vmatprep.subr.bf16.mxu0 %v12135
  %13549 = vmatpush1.bf16.msra.mxu0 %v12134
  %13550 = vmatprep.mubr.bf16.mxu0 %v9475
  %13551 = vmatmul.mubr.bf16.gmra.mrb[0].mxu0 %v9474
  %v13552 = vpop.f32.mrb[0].mxu0
  %v13553 = vadd.f32 %v13512, %v13552
  %v13554 = vpop.f32.mrb[0].mxu0
  %v13555 = vadd.f32 %v13514, %v13554
  %v13556 = vpop.f32.mrb[0].mxu0
  %v13557 = vpop.f32.mrb[0].mxu0
  %13558 = vdwg.mxu0
  %13559 = vmatprep.subr.bf16.mxu0 %v12139
  %13560 = vmatpush1.bf16.msra.mxu0 %v12138
  %13561 = vmatprep.subr.bf16.mxu0 %v12143
  %13562 = vmatpush1.bf16.msra.mxu0 %v12142
  %13563 = vmatprep.subr.bf16.mxu0 %v12147
  %13564 = vmatpush1.bf16.msra.mxu0 %v12146
  %13565 = vmatprep.subr.bf16.mxu0 %v12151
  %13566 = vmatpush1.bf16.msra.mxu0 %v12150
  %13567 = vmatprep.subr.bf16.mxu0 %v12155
  %13568 = vmatpush1.bf16.msra.mxu0 %v12154
  %13569 = vmatprep.subr.bf16.mxu0 %v12159
  %13570 = vmatpush1.bf16.msra.mxu0 %v12158
  %13571 = vmatprep.subr.bf16.mxu0 %v12163
  %13572 = vmatpush1.bf16.msra.mxu0 %v12162
  %13573 = vmatprep.subr.bf16.mxu0 %v12167
  %13574 = vmatpush1.bf16.msra.mxu0 %v12166
  %13575 = vmatprep.subr.bf16.mxu0 %v12171
  %13576 = vmatpush1.bf16.msra.mxu0 %v12170
  %13577 = vmatprep.subr.bf16.mxu0 %v12175
  %13578 = vmatpush1.bf16.msra.mxu0 %v12174
  %13579 = vmatprep.subr.bf16.mxu0 %v12179
  %13580 = vmatpush1.bf16.msra.mxu0 %v12178
  %13581 = vmatprep.subr.bf16.mxu0 %v12183
  %13582 = vmatpush1.bf16.msra.mxu0 %v12182
  %13583 = vmatprep.subr.bf16.mxu0 %v12187
  %13584 = vmatpush1.bf16.msra.mxu0 %v12186
  %13585 = vmatprep.subr.bf16.mxu0 %v12191
  %13586 = vmatpush1.bf16.msra.mxu0 %v12190
  %13587 = vmatprep.subr.bf16.mxu0 %v12195
  %13588 = vmatpush1.bf16.msra.mxu0 %v12194
  %13589 = vmatprep.subr.bf16.mxu0 %v12199
  %13590 = vmatpush1.bf16.msra.mxu0 %v12198
  %13591 = vmatprep.mubr.bf16.mxu0 %v9477
  %13592 = vmatmul.mubr.bf16.gmra.mrb[0].mxu0 %v9476
  %v13593 = vpop.f32.mrb[0].mxu0
  %v13594 = vadd.f32 %v13553, %v13593
  %v13595 = vpop.f32.mrb[0].mxu0
  %v13596 = vadd.f32 %v13555, %v13595
  %v13597 = vpop.f32.mrb[0].mxu0
  %v13598 = vpop.f32.mrb[0].mxu0
  %13599 = vdwg.mxu0
  %13600 = vmatprep.subr.bf16.mxu0 %v12203
  %13601 = vmatpush1.bf16.msra.mxu0 %v12202
  %13602 = vmatprep.subr.bf16.mxu0 %v12207
  %13603 = vmatpush1.bf16.msra.mxu0 %v12206
  %13604 = vmatprep.subr.bf16.mxu0 %v12211
  %13605 = vmatpush1.bf16.msra.mxu0 %v12210
  %13606 = vmatprep.subr.bf16.mxu0 %v12215
  %13607 = vmatpush1.bf16.msra.mxu0 %v12214
  %13608 = vmatprep.subr.bf16.mxu0 %v12219
  %13609 = vmatpush1.bf16.msra.mxu0 %v12218
  %13610 = vmatprep.subr.bf16.mxu0 %v12223
  %13611 = vmatpush1.bf16.msra.mxu0 %v12222
  %13612 = vmatprep.subr.bf16.mxu0 %v12227
  %13613 = vmatpush1.bf16.msra.mxu0 %v12226
  %13614 = vmatprep.subr.bf16.mxu0 %v12231
  %13615 = vmatpush1.bf16.msra.mxu0 %v12230
  %13616 = vmatprep.subr.bf16.mxu0 %v12235
  %13617 = vmatpush1.bf16.msra.mxu0 %v12234
  %13618 = vmatprep.subr.bf16.mxu0 %v12239
  %13619 = vmatpush1.bf16.msra.mxu0 %v12238
  %13620 = vmatprep.subr.bf16.mxu0 %v12243
  %13621 = vmatpush1.bf16.msra.mxu0 %v12242
  %13622 = vmatprep.subr.bf16.mxu0 %v12247
  %13623 = vmatpush1.bf16.msra.mxu0 %v12246
  %13624 = vmatprep.subr.bf16.mxu0 %v12251
  %13625 = vmatpush1.bf16.msra.mxu0 %v12250
  %13626 = vmatprep.subr.bf16.mxu0 %v12255
  %13627 = vmatpush1.bf16.msra.mxu0 %v12254
  %13628 = vmatprep.subr.bf16.mxu0 %v12259
  %13629 = vmatpush1.bf16.msra.mxu0 %v12258
  %13630 = vmatprep.subr.bf16.mxu0 %v12263
  %13631 = vmatpush1.bf16.msra.mxu0 %v12262
  %13632 = vmatprep.mubr.bf16.mxu0 %v9479
  %13633 = vmatmul.mubr.bf16.gmra.mrb[0].mxu0 %v9478
  %v13634 = vpop.f32.mrb[0].mxu0
  %v13635 = vadd.f32 %v13594, %v13634
  %v13636 = vpop.f32.mrb[0].mxu0
  %v13637 = vadd.f32 %v13596, %v13636
  %v13638 = vpop.f32.mrb[0].mxu0
  %v13639 = vpop.f32.mrb[0].mxu0
  %13640 = vdwg.mxu0
  %13641 = vmatprep.subr.bf16.mxu0 %v12267
  %13642 = vmatpush1.bf16.msra.mxu0 %v12266
  %13643 = vmatprep.subr.bf16.mxu0 %v12271
  %13644 = vmatpush1.bf16.msra.mxu0 %v12270
  %13645 = vmatprep.subr.bf16.mxu0 %v12275
  %13646 = vmatpush1.bf16.msra.mxu0 %v12274
  %13647 = vmatprep.subr.bf16.mxu0 %v12279
  %13648 = vmatpush1.bf16.msra.mxu0 %v12278
  %13649 = vmatprep.subr.bf16.mxu0 %v12283
  %13650 = vmatpush1.bf16.msra.mxu0 %v12282
  %13651 = vmatprep.subr.bf16.mxu0 %v12287
  %13652 = vmatpush1.bf16.msra.mxu0 %v12286
  %13653 = vmatprep.subr.bf16.mxu0 %v12291
  %13654 = vmatpush1.bf16.msra.mxu0 %v12290
  %13655 = vmatprep.subr.bf16.mxu0 %v12295
  %13656 = vmatpush1.bf16.msra.mxu0 %v12294
  %13657 = vmatprep.subr.bf16.mxu0 %v12299
  %13658 = vmatpush1.bf16.msra.mxu0 %v12298
  %13659 = vmatprep.subr.bf16.mxu0 %v12303
  %13660 = vmatpush1.bf16.msra.mxu0 %v12302
  %13661 = vmatprep.subr.bf16.mxu0 %v12307
  %13662 = vmatpush1.bf16.msra.mxu0 %v12306
  %13663 = vmatprep.subr.bf16.mxu0 %v12311
  %13664 = vmatpush1.bf16.msra.mxu0 %v12310
  %13665 = vmatprep.subr.bf16.mxu0 %v12315
  %13666 = vmatpush1.bf16.msra.mxu0 %v12314
  %13667 = vmatprep.subr.bf16.mxu0 %v12319
  %13668 = vmatpush1.bf16.msra.mxu0 %v12318
  %13669 = vmatprep.subr.bf16.mxu0 %v12323
  %13670 = vmatpush1.bf16.msra.mxu0 %v12322
  %13671 = vmatprep.subr.bf16.mxu0 %v12327
  %13672 = vmatpush1.bf16.msra.mxu0 %v12326
  %13673 = vmatprep.mubr.bf16.mxu0 %v9481
  %13674 = vmatmul.mubr.bf16.gmra.mrb[0].mxu0 %v9480
  %v13675 = vpop.f32.mrb[0].mxu0
  %v13676 = vadd.f32 %v13635, %v13675
  %v13677 = vpop.f32.mrb[0].mxu0
  %v13678 = vadd.f32 %v13637, %v13677
  %v13679 = vpop.f32.mrb[0].mxu0
  %v13680 = vpop.f32.mrb[0].mxu0
  %13681 = vdwg.mxu0
  %13682 = vmatprep.subr.bf16.mxu0 %v12331
  %13683 = vmatpush1.bf16.msra.mxu0 %v12330
  %13684 = vmatprep.subr.bf16.mxu0 %v12335
  %13685 = vmatpush1.bf16.msra.mxu0 %v12334
  %13686 = vmatprep.subr.bf16.mxu0 %v12339
  %13687 = vmatpush1.bf16.msra.mxu0 %v12338
  %13688 = vmatprep.subr.bf16.mxu0 %v12343
  %13689 = vmatpush1.bf16.msra.mxu0 %v12342
  %13690 = vmatprep.subr.bf16.mxu0 %v12347
  %13691 = vmatpush1.bf16.msra.mxu0 %v12346
  %13692 = vmatprep.subr.bf16.mxu0 %v12351
  %13693 = vmatpush1.bf16.msra.mxu0 %v12350
  %13694 = vmatprep.subr.bf16.mxu0 %v12355
  %13695 = vmatpush1.bf16.msra.mxu0 %v12354
  %13696 = vmatprep.subr.bf16.mxu0 %v12359
  %13697 = vmatpush1.bf16.msra.mxu0 %v12358
  %13698 = vmatprep.subr.bf16.mxu0 %v12363
  %13699 = vmatpush1.bf16.msra.mxu0 %v12362
  %13700 = vmatprep.subr.bf16.mxu0 %v12367
  %13701 = vmatpush1.bf16.msra.mxu0 %v12366
  %13702 = vmatprep.subr.bf16.mxu0 %v12371
  %13703 = vmatpush1.bf16.msra.mxu0 %v12370
  %13704 = vmatprep.subr.bf16.mxu0 %v12375
  %13705 = vmatpush1.bf16.msra.mxu0 %v12374
  %13706 = vmatprep.subr.bf16.mxu0 %v12379
  %13707 = vmatpush1.bf16.msra.mxu0 %v12378
  %13708 = vmatprep.subr.bf16.mxu0 %v12383
  %13709 = vmatpush1.bf16.msra.mxu0 %v12382
  %13710 = vmatprep.subr.bf16.mxu0 %v12387
  %13711 = vmatpush1.bf16.msra.mxu0 %v12386
  %13712 = vmatprep.subr.bf16.mxu0 %v12391
  %13713 = vmatpush1.bf16.msra.mxu0 %v12390
  %13714 = vmatprep.mubr.bf16.mxu0 %v9483
  %13715 = vmatmul.mubr.bf16.gmra.mrb[0].mxu0 %v9482
  %v13716 = vpop.f32.mrb[0].mxu0
  %v13717 = vadd.f32 %v13676, %v13716
  %v13718 = vpop.f32.mrb[0].mxu0
  %v13719 = vadd.f32 %v13678, %v13718
  %v13720 = vpop.f32.mrb[0].mxu0
  %v13721 = vpop.f32.mrb[0].mxu0
  %13722 = vdwg.mxu0
  %13723 = vmatprep.subr.bf16.mxu0 %v12395
  %13724 = vmatpush1.bf16.msra.mxu0 %v12394
  %13725 = vmatprep.subr.bf16.mxu0 %v12399
  %13726 = vmatpush1.bf16.msra.mxu0 %v12398
  %13727 = vmatprep.subr.bf16.mxu0 %v12403
  %13728 = vmatpush1.bf16.msra.mxu0 %v12402
  %13729 = vmatprep.subr.bf16.mxu0 %v12407
  %13730 = vmatpush1.bf16.msra.mxu0 %v12406
  %13731 = vmatprep.subr.bf16.mxu0 %v12411
  %13732 = vmatpush1.bf16.msra.mxu0 %v12410
  %13733 = vmatprep.subr.bf16.mxu0 %v12415
  %13734 = vmatpush1.bf16.msra.mxu0 %v12414
  %13735 = vmatprep.subr.bf16.mxu0 %v12419
  %13736 = vmatpush1.bf16.msra.mxu0 %v12418
  %13737 = vmatprep.subr.bf16.mxu0 %v12423
  %13738 = vmatpush1.bf16.msra.mxu0 %v12422
  %13739 = vmatprep.subr.bf16.mxu0 %v12427
  %13740 = vmatpush1.bf16.msra.mxu0 %v12426
  %13741 = vmatprep.subr.bf16.mxu0 %v12431
  %13742 = vmatpush1.bf16.msra.mxu0 %v12430
  %13743 = vmatprep.subr.bf16.mxu0 %v12435
  %13744 = vmatpush1.bf16.msra.mxu0 %v12434
  %13745 = vmatprep.subr.bf16.mxu0 %v12439
  %13746 = vmatpush1.bf16.msra.mxu0 %v12438
  %13747 = vmatprep.subr.bf16.mxu0 %v12443
  %13748 = vmatpush1.bf16.msra.mxu0 %v12442
  %13749 = vmatprep.subr.bf16.mxu0 %v12447
  %13750 = vmatpush1.bf16.msra.mxu0 %v12446
  %13751 = vmatprep.subr.bf16.mxu0 %v12451
  %13752 = vmatpush1.bf16.msra.mxu0 %v12450
  %13753 = vmatprep.subr.bf16.mxu0 %v12455
  %13754 = vmatpush1.bf16.msra.mxu0 %v12454
  %13755 = vmatprep.mubr.bf16.mxu0 %v9485
  %13756 = vmatmul.mubr.bf16.gmra.mrb[0].mxu0 %v9484
  %v13757 = vpop.f32.mrb[0].mxu0
  %v13758 = vadd.f32 %v13717, %v13757
  %v13759 = vpop.f32.mrb[0].mxu0
  %v13760 = vadd.f32 %v13719, %v13759
  %v13761 = vpop.f32.mrb[0].mxu0
  %v13762 = vpop.f32.mrb[0].mxu0
  %13763 = vdwg.mxu0
  %13764 = vmatprep.subr.bf16.mxu0 %v12459
  %13765 = vmatpush1.bf16.msra.mxu0 %v12458
  %13766 = vmatprep.subr.bf16.mxu0 %v12463
  %13767 = vmatpush1.bf16.msra.mxu0 %v12462
  %13768 = vmatprep.subr.bf16.mxu0 %v12467
  %13769 = vmatpush1.bf16.msra.mxu0 %v12466
  %13770 = vmatprep.subr.bf16.mxu0 %v12471
  %13771 = vmatpush1.bf16.msra.mxu0 %v12470
  %13772 = vmatprep.subr.bf16.mxu0 %v12475
  %13773 = vmatpush1.bf16.msra.mxu0 %v12474
  %13774 = vmatprep.subr.bf16.mxu0 %v12479
  %13775 = vmatpush1.bf16.msra.mxu0 %v12478
  %13776 = vmatprep.subr.bf16.mxu0 %v12483
  %13777 = vmatpush1.bf16.msra.mxu0 %v12482
  %13778 = vmatprep.subr.bf16.mxu0 %v12487
  %13779 = vmatpush1.bf16.msra.mxu0 %v12486
  %13780 = vmatprep.subr.bf16.mxu0 %v12491
  %13781 = vmatpush1.bf16.msra.mxu0 %v12490
  %13782 = vmatprep.subr.bf16.mxu0 %v12495
  %13783 = vmatpush1.bf16.msra.mxu0 %v12494
  %13784 = vmatprep.subr.bf16.mxu0 %v12499
  %13785 = vmatpush1.bf16.msra.mxu0 %v12498
  %13786 = vmatprep.subr.bf16.mxu0 %v12503
  %13787 = vmatpush1.bf16.msra.mxu0 %v12502
  %13788 = vmatprep.subr.bf16.mxu0 %v12507
  %13789 = vmatpush1.bf16.msra.mxu0 %v12506
  %13790 = vmatprep.subr.bf16.mxu0 %v12511
  %13791 = vmatpush1.bf16.msra.mxu0 %v12510
  %13792 = vmatprep.subr.bf16.mxu0 %v12515
  %13793 = vmatpush1.bf16.msra.mxu0 %v12514
  %13794 = vmatprep.subr.bf16.mxu0 %v12519
  %13795 = vmatpush1.bf16.msra.mxu0 %v12518
  %13796 = vmatprep.mubr.bf16.mxu0 %v9487
  %13797 = vmatmul.mubr.bf16.gmra.mrb[0].mxu0 %v9486
  %v13798 = vpop.f32.mrb[0].mxu0
  %v13799 = vadd.f32 %v13758, %v13798
  %v13800 = vpop.f32.mrb[0].mxu0
  %v13801 = vadd.f32 %v13760, %v13800
  %v13802 = vpop.f32.mrb[0].mxu0
  %v13803 = vpop.f32.mrb[0].mxu0
  %13804 = vdwg.mxu0
  %13805 = vmatprep.subr.bf16.mxu0 %v12523
  %13806 = vmatpush1.bf16.msra.mxu0 %v12522
  %13807 = vmatprep.subr.bf16.mxu0 %v12527
  %13808 = vmatpush1.bf16.msra.mxu0 %v12526
  %13809 = vmatprep.subr.bf16.mxu0 %v12531
  %13810 = vmatpush1.bf16.msra.mxu0 %v12530
  %13811 = vmatprep.subr.bf16.mxu0 %v12535
  %13812 = vmatpush1.bf16.msra.mxu0 %v12534
  %13813 = vmatprep.subr.bf16.mxu0 %v12539
  %13814 = vmatpush1.bf16.msra.mxu0 %v12538
  %13815 = vmatprep.subr.bf16.mxu0 %v12543
  %13816 = vmatpush1.bf16.msra.mxu0 %v12542
  %13817 = vmatprep.subr.bf16.mxu0 %v12547
  %13818 = vmatpush1.bf16.msra.mxu0 %v12546
  %13819 = vmatprep.subr.bf16.mxu0 %v12551
  %13820 = vmatpush1.bf16.msra.mxu0 %v12550
  %13821 = vmatprep.subr.bf16.mxu0 %v12555
  %13822 = vmatpush1.bf16.msra.mxu0 %v12554
  %13823 = vmatprep.subr.bf16.mxu0 %v12559
  %13824 = vmatpush1.bf16.msra.mxu0 %v12558
  %13825 = vmatprep.subr.bf16.mxu0 %v12563
  %13826 = vmatpush1.bf16.msra.mxu0 %v12562
  %13827 = vmatprep.subr.bf16.mxu0 %v12567
  %13828 = vmatpush1.bf16.msra.mxu0 %v12566
  %13829 = vmatprep.subr.bf16.mxu0 %v12571
  %13830 = vmatpush1.bf16.msra.mxu0 %v12570
  %13831 = vmatprep.subr.bf16.mxu0 %v12575
  %13832 = vmatpush1.bf16.msra.mxu0 %v12574
  %13833 = vmatprep.subr.bf16.mxu0 %v12579
  %13834 = vmatpush1.bf16.msra.mxu0 %v12578
  %13835 = vmatprep.subr.bf16.mxu0 %v12583
  %13836 = vmatpush1.bf16.msra.mxu0 %v12582
  %13837 = vmatprep.mubr.bf16.mxu0 %v9489
  %13838 = vmatmul.mubr.bf16.gmra.mrb[0].mxu0 %v9488
  %v13839 = vpop.f32.mrb[0].mxu0
  %v13840 = vadd.f32 %v13799, %v13839
  %v13841 = vpop.f32.mrb[0].mxu0
  %v13842 = vadd.f32 %v13801, %v13841
  %v13843 = vpop.f32.mrb[0].mxu0
  %v13844 = vpop.f32.mrb[0].mxu0
  %13845 = vdwg.mxu0
  %13846 = vmatprep.subr.bf16.mxu0 %v11821
  %13847 = vmatpush1.bf16.msra.mxu0 %v11820
  %13848 = vmatprep.subr.bf16.mxu0 %v11825
  %13849 = vmatpush1.bf16.msra.mxu0 %v11824
  %13850 = vmatprep.subr.bf16.mxu0 %v11829
  %13851 = vmatpush1.bf16.msra.mxu0 %v11828
  %13852 = vmatprep.subr.bf16.mxu0 %v11833
  %13853 = vmatpush1.bf16.msra.mxu0 %v11832
  %13854 = vmatprep.subr.bf16.mxu0 %v11837
  %13855 = vmatpush1.bf16.msra.mxu0 %v11836
  %13856 = vmatprep.subr.bf16.mxu0 %v11841
  %13857 = vmatpush1.bf16.msra.mxu0 %v11840
  %13858 = vmatprep.subr.bf16.mxu0 %v11845
  %13859 = vmatpush1.bf16.msra.mxu0 %v11844
  %13860 = vmatprep.subr.bf16.mxu0 %v11849
  %13861 = vmatpush1.bf16.msra.mxu0 %v11848
  %13862 = vmatprep.subr.bf16.mxu0 %v11853
  %13863 = vmatpush1.bf16.msra.mxu0 %v11852
  %13864 = vmatprep.subr.bf16.mxu0 %v11857
  %13865 = vmatpush1.bf16.msra.mxu0 %v11856
  %13866 = vmatprep.subr.bf16.mxu0 %v11861
  %13867 = vmatpush1.bf16.msra.mxu0 %v11860
  %13868 = vmatprep.subr.bf16.mxu0 %v11865
  %13869 = vmatpush1.bf16.msra.mxu0 %v11864
  %13870 = vmatprep.subr.bf16.mxu0 %v11869
  %13871 = vmatpush1.bf16.msra.mxu0 %v11868
  %13872 = vmatprep.subr.bf16.mxu0 %v11873
  %13873 = vmatpush1.bf16.msra.mxu0 %v11872
  %13874 = vmatprep.subr.bf16.mxu0 %v11877
  %13875 = vmatpush1.bf16.msra.mxu0 %v11876
  %13876 = vmatprep.subr.bf16.mxu0 %v11881
  %13877 = vmatpush1.bf16.msra.mxu0 %v11880
  %13878 = vmatprep.mubr.bf16.mxu0 %v9467
  %13879 = vmatmul.mubr.bf16.gmra.mrb[0].mxu0 %v9466
  %v13880 = vpop.f32.mrb[0].mxu0
  %v13881 = vadd.f32 %v9421, %v13880
  %v13882 = vpop.f32.mrb[0].mxu0
  %v13883 = vadd.f32 %v9425, %v13882
  %v13884 = vpop.f32.mrb[0].mxu0
  %v13885 = vpop.f32.mrb[0].mxu0
  %13886 = vdwg.mxu0
  %13887 = vmatprep.subr.bf16.mxu0 %v11885
  %13888 = vmatpush1.bf16.msra.mxu0 %v11884
  %13889 = vmatprep.subr.bf16.mxu0 %v11889
  %13890 = vmatpush1.bf16.msra.mxu0 %v11888
  %13891 = vmatprep.subr.bf16.mxu0 %v11893
  %13892 = vmatpush1.bf16.msra.mxu0 %v11892
  %13893 = vmatprep.subr.bf16.mxu0 %v11897
  %13894 = vmatpush1.bf16.msra.mxu0 %v11896
  %13895 = vmatprep.subr.bf16.mxu0 %v11901
  %13896 = vmatpush1.bf16.msra.mxu0 %v11900
  %13897 = vmatprep.subr.bf16.mxu0 %v11905
  %13898 = vmatpush1.bf16.msra.mxu0 %v11904
  %13899 = vmatprep.subr.bf16.mxu0 %v11909
  %13900 = vmatpush1.bf16.msra.mxu0 %v11908
  %13901 = vmatprep.subr.bf16.mxu0 %v11913
  %13902 = vmatpush1.bf16.msra.mxu0 %v11912
  %13903 = vmatprep.subr.bf16.mxu0 %v11917
  %13904 = vmatpush1.bf16.msra.mxu0 %v11916
  %13905 = vmatprep.subr.bf16.mxu0 %v11921
  %13906 = vmatpush1.bf16.msra.mxu0 %v11920
  %13907 = vmatprep.subr.bf16.mxu0 %v11925
  %13908 = vmatpush1.bf16.msra.mxu0 %v11924
  %13909 = vmatprep.subr.bf16.mxu0 %v11929
  %13910 = vmatpush1.bf16.msra.mxu0 %v11928
  %13911 = vmatprep.subr.bf16.mxu0 %v11933
  %13912 = vmatpush1.bf16.msra.mxu0 %v11932
  %13913 = vmatprep.subr.bf16.mxu0 %v11937
  %13914 = vmatpush1.bf16.msra.mxu0 %v11936
  %13915 = vmatprep.subr.bf16.mxu0 %v11941
  %13916 = vmatpush1.bf16.msra.mxu0 %v11940
  %13917 = vmatprep.subr.bf16.mxu0 %v11945
  %13918 = vmatpush1.bf16.msra.mxu0 %v11944
  %13919 = vmatprep.mubr.bf16.mxu0 %v9469
  %13920 = vmatmul.mubr.bf16.gmra.mrb[0].mxu0 %v9468
  %v13921 = vpop.f32.mrb[0].mxu0
  %v13922 = vadd.f32 %v13881, %v13921
  %v13923 = vpop.f32.mrb[0].mxu0
  %v13924 = vadd.f32 %v13883, %v13923
  %v13925 = vpop.f32.mrb[0].mxu0
  %v13926 = vpop.f32.mrb[0].mxu0
  %13927 = vdwg.mxu0
  %13928 = vmatprep.subr.bf16.mxu0 %v11949
  %13929 = vmatpush1.bf16.msra.mxu0 %v11948
  %13930 = vmatprep.subr.bf16.mxu0 %v11953
  %13931 = vmatpush1.bf16.msra.mxu0 %v11952
  %13932 = vmatprep.subr.bf16.mxu0 %v11957
  %13933 = vmatpush1.bf16.msra.mxu0 %v11956
  %13934 = vmatprep.subr.bf16.mxu0 %v11961
  %13935 = vmatpush1.bf16.msra.mxu0 %v11960
  %13936 = vmatprep.subr.bf16.mxu0 %v11965
  %13937 = vmatpush1.bf16.msra.mxu0 %v11964
  %13938 = vmatprep.subr.bf16.mxu0 %v11969
  %13939 = vmatpush1.bf16.msra.mxu0 %v11968
  %13940 = vmatprep.subr.bf16.mxu0 %v11973
  %13941 = vmatpush1.bf16.msra.mxu0 %v11972
  %13942 = vmatprep.subr.bf16.mxu0 %v11977
  %13943 = vmatpush1.bf16.msra.mxu0 %v11976
  %13944 = vmatprep.subr.bf16.mxu0 %v11981
  %13945 = vmatpush1.bf16.msra.mxu0 %v11980
  %13946 = vmatprep.subr.bf16.mxu0 %v11985
  %13947 = vmatpush1.bf16.msra.mxu0 %v11984
  %13948 = vmatprep.subr.bf16.mxu0 %v11989
  %13949 = vmatpush1.bf16.msra.mxu0 %v11988
  %13950 = vmatprep.subr.bf16.mxu0 %v11993
  %13951 = vmatpush1.bf16.msra.mxu0 %v11992
  %13952 = vmatprep.subr.bf16.mxu0 %v11997
  %13953 = vmatpush1.bf16.msra.mxu0 %v11996
  %13954 = vmatprep.subr.bf16.mxu0 %v12001
  %13955 = vmatpush1.bf16.msra.mxu0 %v12000
  %13956 = vmatprep.subr.bf16.mxu0 %v12005
  %13957 = vmatpush1.bf16.msra.mxu0 %v12004
  %13958 = vmatprep.subr.bf16.mxu0 %v12009
  %13959 = vmatpush1.bf16.msra.mxu0 %v12008
  %13960 = vmatprep.mubr.bf16.mxu0 %v9471
  %13961 = vmatmul.mubr.bf16.gmra.mrb[0].mxu0 %v9470
  %v13962 = vpop.f32.mrb[0].mxu0
  %v13963 = vadd.f32 %v13922, %v13962
  %v13964 = vpop.f32.mrb[0].mxu0
  %v13965 = vadd.f32 %v13924, %v13964
  %v13966 = vpop.f32.mrb[0].mxu0
  %v13967 = vpop.f32.mrb[0].mxu0
  %13968 = vdwg.mxu0
  %13969 = vmatprep.subr.bf16.mxu0 %v12013
  %13970 = vmatpush1.bf16.msra.mxu0 %v12012
  %13971 = vmatprep.subr.bf16.mxu0 %v12017
  %13972 = vmatpush1.bf16.msra.mxu0 %v12016
  %13973 = vmatprep.subr.bf16.mxu0 %v12021
  %13974 = vmatpush1.bf16.msra.mxu0 %v12020
  %13975 = vmatprep.subr.bf16.mxu0 %v12025
  %13976 = vmatpush1.bf16.msra.mxu0 %v12024
  %13977 = vmatprep.subr.bf16.mxu0 %v12029
  %13978 = vmatpush1.bf16.msra.mxu0 %v12028
  %13979 = vmatprep.subr.bf16.mxu0 %v12033
  %13980 = vmatpush1.bf16.msra.mxu0 %v12032
  %13981 = vmatprep.subr.bf16.mxu0 %v12037
  %13982 = vmatpush1.bf16.msra.mxu0 %v12036
  %13983 = vmatprep.subr.bf16.mxu0 %v12041
  %13984 = vmatpush1.bf16.msra.mxu0 %v12040
  %13985 = vmatprep.subr.bf16.mxu0 %v12045
  %13986 = vmatpush1.bf16.msra.mxu0 %v12044
  %13987 = vmatprep.subr.bf16.mxu0 %v12049
  %13988 = vmatpush1.bf16.msra.mxu0 %v12048
  %13989 = vmatprep.subr.bf16.mxu0 %v12053
  %13990 = vmatpush1.bf16.msra.mxu0 %v12052
  %13991 = vmatprep.subr.bf16.mxu0 %v12057
  %13992 = vmatpush1.bf16.msra.mxu0 %v12056
  %13993 = vmatprep.subr.bf16.mxu0 %v12061
  %13994 = vmatpush1.bf16.msra.mxu0 %v12060
  %13995 = vmatprep.subr.bf16.mxu0 %v12065
  %13996 = vmatpush1.bf16.msra.mxu0 %v12064
  %13997 = vmatprep.subr.bf16.mxu0 %v12069
  %13998 = vmatpush1.bf16.msra.mxu0 %v12068
  %13999 = vmatprep.subr.bf16.mxu0 %v12073
  %14000 = vmatpush1.bf16.msra.mxu0 %v12072
  %14001 = vmatprep.mubr.bf16.mxu0 %v9473
  %14002 = vmatmul.mubr.bf16.gmra.mrb[0].mxu0 %v9472
  %v14003 = vpop.f32.mrb[0].mxu0
  %v14004 = vadd.f32 %v13963, %v14003
  %v14005 = vpop.f32.mrb[0].mxu0
  %v14006 = vadd.f32 %v13965, %v14005
  %v14007 = vpop.f32.mrb[0].mxu0
  %v14008 = vpop.f32.mrb[0].mxu0
  %14009 = vdwg.mxu0
  %14010 = vmatprep.subr.bf16.mxu0 %v12077
  %14011 = vmatpush1.bf16.msra.mxu0 %v12076
  %14012 = vmatprep.subr.bf16.mxu0 %v12081
  %14013 = vmatpush1.bf16.msra.mxu0 %v12080
  %14014 = vmatprep.subr.bf16.mxu0 %v12085
  %14015 = vmatpush1.bf16.msra.mxu0 %v12084
  %14016 = vmatprep.subr.bf16.mxu0 %v12089
  %14017 = vmatpush1.bf16.msra.mxu0 %v12088
  %14018 = vmatprep.subr.bf16.mxu0 %v12093
  %14019 = vmatpush1.bf16.msra.mxu0 %v12092
  %14020 = vmatprep.subr.bf16.mxu0 %v12097
  %14021 = vmatpush1.bf16.msra.mxu0 %v12096
  %14022 = vmatprep.subr.bf16.mxu0 %v12101
  %14023 = vmatpush1.bf16.msra.mxu0 %v12100
  %14024 = vmatprep.subr.bf16.mxu0 %v12105
  %14025 = vmatpush1.bf16.msra.mxu0 %v12104
  %14026 = vmatprep.subr.bf16.mxu0 %v12109
  %14027 = vmatpush1.bf16.msra.mxu0 %v12108
  %14028 = vmatprep.subr.bf16.mxu0 %v12113
  %14029 = vmatpush1.bf16.msra.mxu0 %v12112
  %14030 = vmatprep.subr.bf16.mxu0 %v12117
  %14031 = vmatpush1.bf16.msra.mxu0 %v12116
  %14032 = vmatprep.subr.bf16.mxu0 %v12121
  %14033 = vmatpush1.bf16.msra.mxu0 %v12120
  %14034 = vmatprep.subr.bf16.mxu0 %v12125
  %14035 = vmatpush1.bf16.msra.mxu0 %v12124
  %14036 = vmatprep.subr.bf16.mxu0 %v12129
  %14037 = vmatpush1.bf16.msra.mxu0 %v12128
  %14038 = vmatprep.subr.bf16.mxu0 %v12133
  %14039 = vmatpush1.bf16.msra.mxu0 %v12132
  %14040 = vmatprep.subr.bf16.mxu0 %v12137
  %14041 = vmatpush1.bf16.msra.mxu0 %v12136
  %14042 = vmatprep.mubr.bf16.mxu0 %v9475
  %14043 = vmatmul.mubr.bf16.gmra.mrb[0].mxu0 %v9474
  %v14044 = vpop.f32.mrb[0].mxu0
  %v14045 = vadd.f32 %v14004, %v14044
  %v14046 = vpop.f32.mrb[0].mxu0
  %v14047 = vadd.f32 %v14006, %v14046
  %v14048 = vpop.f32.mrb[0].mxu0
  %v14049 = vpop.f32.mrb[0].mxu0
  %14050 = vdwg.mxu0
  %14051 = vmatprep.subr.bf16.mxu0 %v12141
  %14052 = vmatpush1.bf16.msra.mxu0 %v12140
  %14053 = vmatprep.subr.bf16.mxu0 %v12145
  %14054 = vmatpush1.bf16.msra.mxu0 %v12144
  %14055 = vmatprep.subr.bf16.mxu0 %v12149
  %14056 = vmatpush1.bf16.msra.mxu0 %v12148
  %14057 = vmatprep.subr.bf16.mxu0 %v12153
  %14058 = vmatpush1.bf16.msra.mxu0 %v12152
  %14059 = vmatprep.subr.bf16.mxu0 %v12157
  %14060 = vmatpush1.bf16.msra.mxu0 %v12156
  %14061 = vmatprep.subr.bf16.mxu0 %v12161
  %14062 = vmatpush1.bf16.msra.mxu0 %v12160
  %14063 = vmatprep.subr.bf16.mxu0 %v12165
  %14064 = vmatpush1.bf16.msra.mxu0 %v12164
  %14065 = vmatprep.subr.bf16.mxu0 %v12169
  %14066 = vmatpush1.bf16.msra.mxu0 %v12168
  %14067 = vmatprep.subr.bf16.mxu0 %v12173
  %14068 = vmatpush1.bf16.msra.mxu0 %v12172
  %14069 = vmatprep.subr.bf16.mxu0 %v12177
  %14070 = vmatpush1.bf16.msra.mxu0 %v12176
  %14071 = vmatprep.subr.bf16.mxu0 %v12181
  %14072 = vmatpush1.bf16.msra.mxu0 %v12180
  %14073 = vmatprep.subr.bf16.mxu0 %v12185
  %14074 = vmatpush1.bf16.msra.mxu0 %v12184
  %14075 = vmatprep.subr.bf16.mxu0 %v12189
  %14076 = vmatpush1.bf16.msra.mxu0 %v12188
  %14077 = vmatprep.subr.bf16.mxu0 %v12193
  %14078 = vmatpush1.bf16.msra.mxu0 %v12192
  %14079 = vmatprep.subr.bf16.mxu0 %v12197
  %14080 = vmatpush1.bf16.msra.mxu0 %v12196
  %14081 = vmatprep.subr.bf16.mxu0 %v12201
  %14082 = vmatpush1.bf16.msra.mxu0 %v12200
  %14083 = vmatprep.mubr.bf16.mxu0 %v9477
  %14084 = vmatmul.mubr.bf16.gmra.mrb[0].mxu0 %v9476
  %v14085 = vpop.f32.mrb[0].mxu0
  %v14086 = vadd.f32 %v14045, %v14085
  %v14087 = vpop.f32.mrb[0].mxu0
  %v14088 = vadd.f32 %v14047, %v14087
  %v14089 = vpop.f32.mrb[0].mxu0
  %v14090 = vpop.f32.mrb[0].mxu0
  %14091 = vdwg.mxu0
  %14092 = vmatprep.subr.bf16.mxu0 %v12205
  %14093 = vmatpush1.bf16.msra.mxu0 %v12204
  %14094 = vmatprep.subr.bf16.mxu0 %v12209
  %14095 = vmatpush1.bf16.msra.mxu0 %v12208
  %14096 = vmatprep.subr.bf16.mxu0 %v12213
  %14097 = vmatpush1.bf16.msra.mxu0 %v12212
  %14098 = vmatprep.subr.bf16.mxu0 %v12217
  %14099 = vmatpush1.bf16.msra.mxu0 %v12216
  %14100 = vmatprep.subr.bf16.mxu0 %v12221
  %14101 = vmatpush1.bf16.msra.mxu0 %v12220
  %14102 = vmatprep.subr.bf16.mxu0 %v12225
  %14103 = vmatpush1.bf16.msra.mxu0 %v12224
  %14104 = vmatprep.subr.bf16.mxu0 %v12229
  %14105 = vmatpush1.bf16.msra.mxu0 %v12228
  %14106 = vmatprep.subr.bf16.mxu0 %v12233
  %14107 = vmatpush1.bf16.msra.mxu0 %v12232
  %14108 = vmatprep.subr.bf16.mxu0 %v12237
  %14109 = vmatpush1.bf16.msra.mxu0 %v12236
  %14110 = vmatprep.subr.bf16.mxu0 %v12241
  %14111 = vmatpush1.bf16.msra.mxu0 %v12240
  %14112 = vmatprep.subr.bf16.mxu0 %v12245
  %14113 = vmatpush1.bf16.msra.mxu0 %v12244
  %14114 = vmatprep.subr.bf16.mxu0 %v12249
  %14115 = vmatpush1.bf16.msra.mxu0 %v12248
  %14116 = vmatprep.subr.bf16.mxu0 %v12253
  %14117 = vmatpush1.bf16.msra.mxu0 %v12252
  %14118 = vmatprep.subr.bf16.mxu0 %v12257
  %14119 = vmatpush1.bf16.msra.mxu0 %v12256
  %14120 = vmatprep.subr.bf16.mxu0 %v12261
  %14121 = vmatpush1.bf16.msra.mxu0 %v12260
  %14122 = vmatprep.subr.bf16.mxu0 %v12265
  %14123 = vmatpush1.bf16.msra.mxu0 %v12264
  %14124 = vmatprep.mubr.bf16.mxu0 %v9479
  %14125 = vmatmul.mubr.bf16.gmra.mrb[0].mxu0 %v9478
  %v14126 = vpop.f32.mrb[0].mxu0
  %v14127 = vadd.f32 %v14086, %v14126
  %v14128 = vpop.f32.mrb[0].mxu0
  %v14129 = vadd.f32 %v14088, %v14128
  %v14130 = vpop.f32.mrb[0].mxu0
  %v14131 = vpop.f32.mrb[0].mxu0
  %14132 = vdwg.mxu0
  %14133 = vmatprep.subr.bf16.mxu0 %v12269
  %14134 = vmatpush1.bf16.msra.mxu0 %v12268
  %14135 = vmatprep.subr.bf16.mxu0 %v12273
  %14136 = vmatpush1.bf16.msra.mxu0 %v12272
  %14137 = vmatprep.subr.bf16.mxu0 %v12277
  %14138 = vmatpush1.bf16.msra.mxu0 %v12276
  %14139 = vmatprep.subr.bf16.mxu0 %v12281
  %14140 = vmatpush1.bf16.msra.mxu0 %v12280
  %14141 = vmatprep.subr.bf16.mxu0 %v12285
  %14142 = vmatpush1.bf16.msra.mxu0 %v12284
  %14143 = vmatprep.subr.bf16.mxu0 %v12289
  %14144 = vmatpush1.bf16.msra.mxu0 %v12288
  %14145 = vmatprep.subr.bf16.mxu0 %v12293
  %14146 = vmatpush1.bf16.msra.mxu0 %v12292
  %14147 = vmatprep.subr.bf16.mxu0 %v12297
  %14148 = vmatpush1.bf16.msra.mxu0 %v12296
  %14149 = vmatprep.subr.bf16.mxu0 %v12301
  %14150 = vmatpush1.bf16.msra.mxu0 %v12300
  %14151 = vmatprep.subr.bf16.mxu0 %v12305
  %14152 = vmatpush1.bf16.msra.mxu0 %v12304
  %14153 = vmatprep.subr.bf16.mxu0 %v12309
  %14154 = vmatpush1.bf16.msra.mxu0 %v12308
  %14155 = vmatprep.subr.bf16.mxu0 %v12313
  %14156 = vmatpush1.bf16.msra.mxu0 %v12312
  %14157 = vmatprep.subr.bf16.mxu0 %v12317
  %14158 = vmatpush1.bf16.msra.mxu0 %v12316
  %14159 = vmatprep.subr.bf16.mxu0 %v12321
  %14160 = vmatpush1.bf16.msra.mxu0 %v12320
  %14161 = vmatprep.subr.bf16.mxu0 %v12325
  %14162 = vmatpush1.bf16.msra.mxu0 %v12324
  %14163 = vmatprep.subr.bf16.mxu0 %v12329
  %14164 = vmatpush1.bf16.msra.mxu0 %v12328
  %14165 = vmatprep.mubr.bf16.mxu0 %v9481
  %14166 = vmatmul.mubr.bf16.gmra.mrb[0].mxu0 %v9480
  %v14167 = vpop.f32.mrb[0].mxu0
  %v14168 = vadd.f32 %v14127, %v14167
  %v14169 = vpop.f32.mrb[0].mxu0
  %v14170 = vadd.f32 %v14129, %v14169
  %v14171 = vpop.f32.mrb[0].mxu0
  %v14172 = vpop.f32.mrb[0].mxu0
  %14173 = vdwg.mxu0
  %14174 = vmatprep.subr.bf16.mxu0 %v12333
  %14175 = vmatpush1.bf16.msra.mxu0 %v12332
  %14176 = vmatprep.subr.bf16.mxu0 %v12337
  %14177 = vmatpush1.bf16.msra.mxu0 %v12336
  %14178 = vmatprep.subr.bf16.mxu0 %v12341
  %14179 = vmatpush1.bf16.msra.mxu0 %v12340
  %14180 = vmatprep.subr.bf16.mxu0 %v12345
  %14181 = vmatpush1.bf16.msra.mxu0 %v12344
  %14182 = vmatprep.subr.bf16.mxu0 %v12349
  %14183 = vmatpush1.bf16.msra.mxu0 %v12348
  %14184 = vmatprep.subr.bf16.mxu0 %v12353
  %14185 = vmatpush1.bf16.msra.mxu0 %v12352
  %14186 = vmatprep.subr.bf16.mxu0 %v12357
  %14187 = vmatpush1.bf16.msra.mxu0 %v12356
  %14188 = vmatprep.subr.bf16.mxu0 %v12361
  %14189 = vmatpush1.bf16.msra.mxu0 %v12360
  %14190 = vmatprep.subr.bf16.mxu0 %v12365
  %14191 = vmatpush1.bf16.msra.mxu0 %v12364
  %14192 = vmatprep.subr.bf16.mxu0 %v12369
  %14193 = vmatpush1.bf16.msra.mxu0 %v12368
  %14194 = vmatprep.subr.bf16.mxu0 %v12373
  %14195 = vmatpush1.bf16.msra.mxu0 %v12372
  %14196 = vmatprep.subr.bf16.mxu0 %v12377
  %14197 = vmatpush1.bf16.msra.mxu0 %v12376
  %14198 = vmatprep.subr.bf16.mxu0 %v12381
  %14199 = vmatpush1.bf16.msra.mxu0 %v12380
  %14200 = vmatprep.subr.bf16.mxu0 %v12385
  %14201 = vmatpush1.bf16.msra.mxu0 %v12384
  %14202 = vmatprep.subr.bf16.mxu0 %v12389
  %14203 = vmatpush1.bf16.msra.mxu0 %v12388
  %14204 = vmatprep.subr.bf16.mxu0 %v12393
  %14205 = vmatpush1.bf16.msra.mxu0 %v12392
  %14206 = vmatprep.mubr.bf16.mxu0 %v9483
  %14207 = vmatmul.mubr.bf16.gmra.mrb[0].mxu0 %v9482
  %v14208 = vpop.f32.mrb[0].mxu0
  %v14209 = vadd.f32 %v14168, %v14208
  %v14210 = vpop.f32.mrb[0].mxu0
  %v14211 = vadd.f32 %v14170, %v14210
  %v14212 = vpop.f32.mrb[0].mxu0
  %v14213 = vpop.f32.mrb[0].mxu0
  %14214 = vdwg.mxu0
  %14215 = vmatprep.subr.bf16.mxu0 %v12397
  %14216 = vmatpush1.bf16.msra.mxu0 %v12396
  %14217 = vmatprep.subr.bf16.mxu0 %v12401
  %14218 = vmatpush1.bf16.msra.mxu0 %v12400
  %14219 = vmatprep.subr.bf16.mxu0 %v12405
  %14220 = vmatpush1.bf16.msra.mxu0 %v12404
  %14221 = vmatprep.subr.bf16.mxu0 %v12409
  %14222 = vmatpush1.bf16.msra.mxu0 %v12408
  %14223 = vmatprep.subr.bf16.mxu0 %v12413
  %14224 = vmatpush1.bf16.msra.mxu0 %v12412
  %14225 = vmatprep.subr.bf16.mxu0 %v12417
  %14226 = vmatpush1.bf16.msra.mxu0 %v12416
  %14227 = vmatprep.subr.bf16.mxu0 %v12421
  %14228 = vmatpush1.bf16.msra.mxu0 %v12420
  %14229 = vmatprep.subr.bf16.mxu0 %v12425
  %14230 = vmatpush1.bf16.msra.mxu0 %v12424
  %14231 = vmatprep.subr.bf16.mxu0 %v12429
  %14232 = vmatpush1.bf16.msra.mxu0 %v12428
  %14233 = vmatprep.subr.bf16.mxu0 %v12433
  %14234 = vmatpush1.bf16.msra.mxu0 %v12432
  %14235 = vmatprep.subr.bf16.mxu0 %v12437
  %14236 = vmatpush1.bf16.msra.mxu0 %v12436
  %14237 = vmatprep.subr.bf16.mxu0 %v12441
  %14238 = vmatpush1.bf16.msra.mxu0 %v12440
  %14239 = vmatprep.subr.bf16.mxu0 %v12445
  %14240 = vmatpush1.bf16.msra.mxu0 %v12444
  %14241 = vmatprep.subr.bf16.mxu0 %v12449
  %14242 = vmatpush1.bf16.msra.mxu0 %v12448
  %14243 = vmatprep.subr.bf16.mxu0 %v12453
  %14244 = vmatpush1.bf16.msra.mxu0 %v12452
  %14245 = vmatprep.subr.bf16.mxu0 %v12457
  %14246 = vmatpush1.bf16.msra.mxu0 %v12456
  %14247 = vmatprep.mubr.bf16.mxu0 %v9485
  %14248 = vmatmul.mubr.bf16.gmra.mrb[0].mxu0 %v9484
  %v14249 = vpop.f32.mrb[0].mxu0
  %v14250 = vadd.f32 %v14209, %v14249
  %v14251 = vpop.f32.mrb[0].mxu0
  %v14252 = vadd.f32 %v14211, %v14251
  %v14253 = vpop.f32.mrb[0].mxu0
  %v14254 = vpop.f32.mrb[0].mxu0
  %14255 = vdwg.mxu0
  %14256 = vmatprep.subr.bf16.mxu0 %v12461
  %14257 = vmatpush1.bf16.msra.mxu0 %v12460
  %14258 = vmatprep.subr.bf16.mxu0 %v12465
  %14259 = vmatpush1.bf16.msra.mxu0 %v12464
  %14260 = vmatprep.subr.bf16.mxu0 %v12469
  %14261 = vmatpush1.bf16.msra.mxu0 %v12468
  %14262 = vmatprep.subr.bf16.mxu0 %v12473
  %14263 = vmatpush1.bf16.msra.mxu0 %v12472
  %14264 = vmatprep.subr.bf16.mxu0 %v12477
  %14265 = vmatpush1.bf16.msra.mxu0 %v12476
  %14266 = vmatprep.subr.bf16.mxu0 %v12481
  %14267 = vmatpush1.bf16.msra.mxu0 %v12480
  %14268 = vmatprep.subr.bf16.mxu0 %v12485
  %14269 = vmatpush1.bf16.msra.mxu0 %v12484
  %14270 = vmatprep.subr.bf16.mxu0 %v12489
  %14271 = vmatpush1.bf16.msra.mxu0 %v12488
  %14272 = vmatprep.subr.bf16.mxu0 %v12493
  %14273 = vmatpush1.bf16.msra.mxu0 %v12492
  %14274 = vmatprep.subr.bf16.mxu0 %v12497
  %14275 = vmatpush1.bf16.msra.mxu0 %v12496
  %14276 = vmatprep.subr.bf16.mxu0 %v12501
  %14277 = vmatpush1.bf16.msra.mxu0 %v12500
  %14278 = vmatprep.subr.bf16.mxu0 %v12505
  %14279 = vmatpush1.bf16.msra.mxu0 %v12504
  %14280 = vmatprep.subr.bf16.mxu0 %v12509
  %14281 = vmatpush1.bf16.msra.mxu0 %v12508
  %14282 = vmatprep.subr.bf16.mxu0 %v12513
  %14283 = vmatpush1.bf16.msra.mxu0 %v12512
  %14284 = vmatprep.subr.bf16.mxu0 %v12517
  %14285 = vmatpush1.bf16.msra.mxu0 %v12516
  %14286 = vmatprep.subr.bf16.mxu0 %v12521
  %14287 = vmatpush1.bf16.msra.mxu0 %v12520
  %14288 = vmatprep.mubr.bf16.mxu0 %v9487
  %14289 = vmatmul.mubr.bf16.gmra.mrb[0].mxu0 %v9486
  %v14290 = vpop.f32.mrb[0].mxu0
  %v14291 = vadd.f32 %v14250, %v14290
  %v14292 = vpop.f32.mrb[0].mxu0
  %v14293 = vadd.f32 %v14252, %v14292
  %v14294 = vpop.f32.mrb[0].mxu0
  %v14295 = vpop.f32.mrb[0].mxu0
  %14296 = vdwg.mxu0
  %14297 = vmatprep.subr.bf16.mxu0 %v12525
  %14298 = vmatpush1.bf16.msra.mxu0 %v12524
  %14299 = vmatprep.subr.bf16.mxu0 %v12529
  %14300 = vmatpush1.bf16.msra.mxu0 %v12528
  %14301 = vmatprep.subr.bf16.mxu0 %v12533
  %14302 = vmatpush1.bf16.msra.mxu0 %v12532
  %14303 = vmatprep.subr.bf16.mxu0 %v12537
  %14304 = vmatpush1.bf16.msra.mxu0 %v12536
  %14305 = vmatprep.subr.bf16.mxu0 %v12541
  %14306 = vmatpush1.bf16.msra.mxu0 %v12540
  %14307 = vmatprep.subr.bf16.mxu0 %v12545
  %14308 = vmatpush1.bf16.msra.mxu0 %v12544
  %14309 = vmatprep.subr.bf16.mxu0 %v12549
  %14310 = vmatpush1.bf16.msra.mxu0 %v12548
  %14311 = vmatprep.subr.bf16.mxu0 %v12553
  %14312 = vmatpush1.bf16.msra.mxu0 %v12552
  %14313 = vmatprep.subr.bf16.mxu0 %v12557
  %14314 = vmatpush1.bf16.msra.mxu0 %v12556
  %14315 = vmatprep.subr.bf16.mxu0 %v12561
  %14316 = vmatpush1.bf16.msra.mxu0 %v12560
  %14317 = vmatprep.subr.bf16.mxu0 %v12565
  %14318 = vmatpush1.bf16.msra.mxu0 %v12564
  %14319 = vmatprep.subr.bf16.mxu0 %v12569
  %14320 = vmatpush1.bf16.msra.mxu0 %v12568
  %14321 = vmatprep.subr.bf16.mxu0 %v12573
  %14322 = vmatpush1.bf16.msra.mxu0 %v12572
  %14323 = vmatprep.subr.bf16.mxu0 %v12577
  %14324 = vmatpush1.bf16.msra.mxu0 %v12576
  %14325 = vmatprep.subr.bf16.mxu0 %v12581
  %14326 = vmatpush1.bf16.msra.mxu0 %v12580
  %14327 = vmatprep.subr.bf16.mxu0 %v12585
  %14328 = vmatpush1.bf16.msra.mxu0 %v12584
  %14329 = vmatprep.mubr.bf16.mxu0 %v9489
  %14330 = vmatmul.mubr.bf16.gmra.mrb[0].mxu0 %v9488
  %v14331 = vpop.f32.mrb[0].mxu0
  %v14332 = vadd.f32 %v14291, %v14331
  %v14333 = vpop.f32.mrb[0].mxu0
  %v14334 = vadd.f32 %v14293, %v14333
  %v14335 = vpop.f32.mrb[0].mxu0
  %v14336 = vpop.f32.mrb[0].mxu0
  %14337 = vdwg.mxu0
  %v14338 = vpack.c.bf16 %v13840, %v13840
  %v14339 = vpack.c.bf16 %v13842, %v13842
  %v14340 = vpack.c.bf16 %v14332, %v14332
  %v14341 = vpack.c.bf16 %v14334, %v14334
  %v14342 = vld [vmem:[%s7] sm:$0xff]
  %v14343 = vld [vmem:[%s7 + $0x8] sm:$0xff]
  %v14344 = vld [vmem:[%s7 + $0x10] sm:$0xff]
  %v14345 = vld [vmem:[%s7 + $0x18] sm:$0xff]
  %v14346 = vld [vmem:[%s7 + $0x20] sm:$0xff]
  %v14347 = vld [vmem:[%s7 + $0x28] sm:$0xff]
  %v14348 = vld [vmem:[%s7 + $0x30] sm:$0xff]
  %v14349 = vld [vmem:[%s7 + $0x38] sm:$0xff]
  %v14350 = vld [vmem:[%s7 + $0x40] sm:$0xff]
  %v14351 = vld [vmem:[%s7 + $0x48] sm:$0xff]
  %v14352 = vld [vmem:[%s7 + $0x50] sm:$0xff]
  %v14353 = vld [vmem:[%s7 + $0x58] sm:$0xff]
  %v14354 = vld [vmem:[%s7 + $0x60] sm:$0xff]
  %v14355 = vld [vmem:[%s7 + $0x68] sm:$0xff]
  %v14356 = vld [vmem:[%s7 + $0x70] sm:$0xff]
  %v14357 = vld [vmem:[%s7 + $0x78] sm:$0xff]
  %v14358 = vld [vmem:[%s7 + $0x80] sm:$0xff]
  %v14359 = vld [vmem:[%s7 + $0x88] sm:$0xff]
  %v14360 = vld [vmem:[%s7 + $0x90] sm:$0xff]
  %v14361 = vld [vmem:[%s7 + $0x98] sm:$0xff]
  %v14362 = vld [vmem:[%s7 + $0xa0] sm:$0xff]
  %v14363 = vld [vmem:[%s7 + $0xa8] sm:$0xff]
  %v14364 = vld [vmem:[%s7 + $0xb0] sm:$0xff]
  %v14365 = vld [vmem:[%s7 + $0xb8] sm:$0xff]
  %v14366 = vld [vmem:[%s7 + $0xc0] sm:$0xff]
  %v14367 = vld [vmem:[%s7 + $0xc8] sm:$0xff]
  %v14368 = vld [vmem:[%s7 + $0xd0] sm:$0xff]
  %v14369 = vld [vmem:[%s7 + $0xd8] sm:$0xff]
  %v14370 = vld [vmem:[%s7 + $0xe0] sm:$0xff]
  %v14371 = vld [vmem:[%s7 + $0xe8] sm:$0xff]
  %v14372 = vld [vmem:[%s7 + $0xf0] sm:$0xff]
  %v14373 = vld [vmem:[%s7 + $0xf8] sm:$0xff]
  %v14374 = vld [vmem:[%s7 + $0x100] sm:$0xff]
  %v14375 = vld [vmem:[%s7 + $0x108] sm:$0xff]
  %v14376 = vld [vmem:[%s7 + $0x110] sm:$0xff]
  %v14377 = vld [vmem:[%s7 + $0x118] sm:$0xff]
  %v14378 = vld [vmem:[%s7 + $0x120] sm:$0xff]
  %v14379 = vld [vmem:[%s7 + $0x128] sm:$0xff]
  %v14380 = vld [vmem:[%s7 + $0x130] sm:$0xff]
  %v14381 = vld [vmem:[%s7 + $0x138] sm:$0xff]
  %v14382 = vld [vmem:[%s7 + $0x140] sm:$0xff]
  %v14383 = vld [vmem:[%s7 + $0x148] sm:$0xff]
  %v14384 = vld [vmem:[%s7 + $0x150] sm:$0xff]
  %v14385 = vld [vmem:[%s7 + $0x158] sm:$0xff]
  %v14386 = vld [vmem:[%s7 + $0x160] sm:$0xff]
  %v14387 = vld [vmem:[%s7 + $0x168] sm:$0xff]
  %v14388 = vld [vmem:[%s7 + $0x170] sm:$0xff]
  %v14389 = vld [vmem:[%s7 + $0x178] sm:$0xff]
  %v14390 = vld [vmem:[%s7 + $0x180] sm:$0xff]
  %v14391 = vld [vmem:[%s7 + $0x188] sm:$0xff]
  %v14392 = vld [vmem:[%s7 + $0x190] sm:$0xff]
  %v14393 = vld [vmem:[%s7 + $0x198] sm:$0xff]
  %v14394 = vld [vmem:[%s7 + $0x1a0] sm:$0xff]
  %v14395 = vld [vmem:[%s7 + $0x1a8] sm:$0xff]
  %v14396 = vld [vmem:[%s7 + $0x1b0] sm:$0xff]
  %v14397 = vld [vmem:[%s7 + $0x1b8] sm:$0xff]
  %v14398 = vld [vmem:[%s7 + $0x1c0] sm:$0xff]
  %v14399 = vld [vmem:[%s7 + $0x1c8] sm:$0xff]
  %v14400 = vld [vmem:[%s7 + $0x1d0] sm:$0xff]
  %v14401 = vld [vmem:[%s7 + $0x1d8] sm:$0xff]
  %v14402 = vld [vmem:[%s7 + $0x1e0] sm:$0xff]
  %v14403 = vld [vmem:[%s7 + $0x1e8] sm:$0xff]
  %v14404 = vld [vmem:[%s7 + $0x1f0] sm:$0xff]
  %v14405 = vld [vmem:[%s7 + $0x1f8] sm:$0xff]
  %v14406 = vld [vmem:[%s8] sm:$0x3]
  %v14408 = vlaneseq
  %v14409 = vshrl.u32 %v14408, 7
  %v14410 = vsub.s32 0, %v14409
  %v14411 = vrot.slane %v14406, %v14410
  %v14412 = vlaneseq
  %v14413 = vshrl.u32 %v14412, 7
  %v14414 = vsub.s32 1, %v14413
  %v14415 = vrot.slane %v14406, %v14414
  %v14482 = vunpack.c.l.b16 %v14342
  %v14483 = vunpack.c.h.b16 %v14342
  %v14484 = vunpack.c.l.b16 %v14343
  %v14485 = vunpack.c.h.b16 %v14343
  %v14486 = vunpack.c.l.b16 %v14344
  %v14487 = vunpack.c.h.b16 %v14344
  %v14488 = vunpack.c.l.b16 %v14345
  %v14489 = vunpack.c.h.b16 %v14345
  %v14490 = vunpack.c.l.b16 %v14346
  %v14491 = vunpack.c.h.b16 %v14346
  %v14492 = vunpack.c.l.b16 %v14347
  %v14493 = vunpack.c.h.b16 %v14347
  %v14494 = vunpack.c.l.b16 %v14348
  %v14495 = vunpack.c.h.b16 %v14348
  %v14496 = vunpack.c.l.b16 %v14349
  %v14497 = vunpack.c.h.b16 %v14349
  %v14498 = vunpack.c.l.b16 %v14350
  %v14499 = vunpack.c.h.b16 %v14350
  %v14500 = vunpack.c.l.b16 %v14351
  %v14501 = vunpack.c.h.b16 %v14351
  %v14502 = vunpack.c.l.b16 %v14352
  %v14503 = vunpack.c.h.b16 %v14352
  %v14504 = vunpack.c.l.b16 %v14353
  %v14505 = vunpack.c.h.b16 %v14353
  %v14506 = vunpack.c.l.b16 %v14354
  %v14507 = vunpack.c.h.b16 %v14354
  %v14508 = vunpack.c.l.b16 %v14355
  %v14509 = vunpack.c.h.b16 %v14355
  %v14510 = vunpack.c.l.b16 %v14356
  %v14511 = vunpack.c.h.b16 %v14356
  %v14512 = vunpack.c.l.b16 %v14357
  %v14513 = vunpack.c.h.b16 %v14357
  %v14514 = vunpack.c.l.b16 %v14358
  %v14515 = vunpack.c.h.b16 %v14358
  %v14516 = vunpack.c.l.b16 %v14359
  %v14517 = vunpack.c.h.b16 %v14359
  %v14518 = vunpack.c.l.b16 %v14360
  %v14519 = vunpack.c.h.b16 %v14360
  %v14520 = vunpack.c.l.b16 %v14361
  %v14521 = vunpack.c.h.b16 %v14361
  %v14522 = vunpack.c.l.b16 %v14362
  %v14523 = vunpack.c.h.b16 %v14362
  %v14524 = vunpack.c.l.b16 %v14363
  %v14525 = vunpack.c.h.b16 %v14363
  %v14526 = vunpack.c.l.b16 %v14364
  %v14527 = vunpack.c.h.b16 %v14364
  %v14528 = vunpack.c.l.b16 %v14365
  %v14529 = vunpack.c.h.b16 %v14365
  %v14530 = vunpack.c.l.b16 %v14366
  %v14531 = vunpack.c.h.b16 %v14366
  %v14532 = vunpack.c.l.b16 %v14367
  %v14533 = vunpack.c.h.b16 %v14367
  %v14534 = vunpack.c.l.b16 %v14368
  %v14535 = vunpack.c.h.b16 %v14368
  %v14536 = vunpack.c.l.b16 %v14369
  %v14537 = vunpack.c.h.b16 %v14369
  %v14538 = vunpack.c.l.b16 %v14370
  %v14539 = vunpack.c.h.b16 %v14370
  %v14540 = vunpack.c.l.b16 %v14371
  %v14541 = vunpack.c.h.b16 %v14371
  %v14542 = vunpack.c.l.b16 %v14372
  %v14543 = vunpack.c.h.b16 %v14372
  %v14544 = vunpack.c.l.b16 %v14373
  %v14545 = vunpack.c.h.b16 %v14373
  %v14546 = vunpack.c.l.b16 %v14374
  %v14547 = vunpack.c.h.b16 %v14374
  %v14548 = vunpack.c.l.b16 %v14375
  %v14549 = vunpack.c.h.b16 %v14375
  %v14550 = vunpack.c.l.b16 %v14376
  %v14551 = vunpack.c.h.b16 %v14376
  %v14552 = vunpack.c.l.b16 %v14377
  %v14553 = vunpack.c.h.b16 %v14377
  %v14554 = vunpack.c.l.b16 %v14378
  %v14555 = vunpack.c.h.b16 %v14378
  %v14556 = vunpack.c.l.b16 %v14379
  %v14557 = vunpack.c.h.b16 %v14379
  %v14558 = vunpack.c.l.b16 %v14380
  %v14559 = vunpack.c.h.b16 %v14380
  %v14560 = vunpack.c.l.b16 %v14381
  %v14561 = vunpack.c.h.b16 %v14381
  %v14562 = vunpack.c.l.b16 %v14382
  %v14563 = vunpack.c.h.b16 %v14382
  %v14564 = vunpack.c.l.b16 %v14383
  %v14565 = vunpack.c.h.b16 %v14383
  %v14566 = vunpack.c.l.b16 %v14384
  %v14567 = vunpack.c.h.b16 %v14384
  %v14568 = vunpack.c.l.b16 %v14385
  %v14569 = vunpack.c.h.b16 %v14385
  %v14570 = vunpack.c.l.b16 %v14386
  %v14571 = vunpack.c.h.b16 %v14386
  %v14572 = vunpack.c.l.b16 %v14387
  %v14573 = vunpack.c.h.b16 %v14387
  %v14574 = vunpack.c.l.b16 %v14388
  %v14575 = vunpack.c.h.b16 %v14388
  %v14576 = vunpack.c.l.b16 %v14389
  %v14577 = vunpack.c.h.b16 %v14389
  %v14578 = vunpack.c.l.b16 %v14390
  %v14579 = vunpack.c.h.b16 %v14390
  %v14580 = vunpack.c.l.b16 %v14391
  %v14581 = vunpack.c.h.b16 %v14391
  %v14582 = vunpack.c.l.b16 %v14392
  %v14583 = vunpack.c.h.b16 %v14392
  %v14584 = vunpack.c.l.b16 %v14393
  %v14585 = vunpack.c.h.b16 %v14393
  %v14586 = vunpack.c.l.b16 %v14394
  %v14587 = vunpack.c.h.b16 %v14394
  %v14588 = vunpack.c.l.b16 %v14395
  %v14589 = vunpack.c.h.b16 %v14395
  %v14590 = vunpack.c.l.b16 %v14396
  %v14591 = vunpack.c.h.b16 %v14396
  %v14592 = vunpack.c.l.b16 %v14397
  %v14593 = vunpack.c.h.b16 %v14397
  %v14594 = vunpack.c.l.b16 %v14398
  %v14595 = vunpack.c.h.b16 %v14398
  %v14596 = vunpack.c.l.b16 %v14399
  %v14597 = vunpack.c.h.b16 %v14399
  %v14598 = vunpack.c.l.b16 %v14400
  %v14599 = vunpack.c.h.b16 %v14400
  %v14600 = vunpack.c.l.b16 %v14401
  %v14601 = vunpack.c.h.b16 %v14401
  %v14602 = vunpack.c.l.b16 %v14402
  %v14603 = vunpack.c.h.b16 %v14402
  %v14604 = vunpack.c.l.b16 %v14403
  %v14605 = vunpack.c.h.b16 %v14403
  %v14606 = vunpack.c.l.b16 %v14404
  %v14607 = vunpack.c.h.b16 %v14404
  %v14608 = vunpack.c.l.b16 %v14405
  %v14609 = vunpack.c.h.b16 %v14405
  %v14610 = vpack.c.b16 %v14484, %v14482
  %v14611 = vpack.c.b16 %v14485, %v14483
  %v14612 = vpack.c.b16 %v14488, %v14486
  %v14613 = vpack.c.b16 %v14489, %v14487
  %v14614 = vpack.c.b16 %v14492, %v14490
  %v14615 = vpack.c.b16 %v14493, %v14491
  %v14616 = vpack.c.b16 %v14496, %v14494
  %v14617 = vpack.c.b16 %v14497, %v14495
  %v14618 = vpack.c.b16 %v14500, %v14498
  %v14619 = vpack.c.b16 %v14501, %v14499
  %v14620 = vpack.c.b16 %v14504, %v14502
  %v14621 = vpack.c.b16 %v14505, %v14503
  %v14622 = vpack.c.b16 %v14508, %v14506
  %v14623 = vpack.c.b16 %v14509, %v14507
  %v14624 = vpack.c.b16 %v14512, %v14510
  %v14625 = vpack.c.b16 %v14513, %v14511
  %v14626 = vpack.c.b16 %v14516, %v14514
  %v14627 = vpack.c.b16 %v14517, %v14515
  %v14628 = vpack.c.b16 %v14520, %v14518
  %v14629 = vpack.c.b16 %v14521, %v14519
  %v14630 = vpack.c.b16 %v14524, %v14522
  %v14631 = vpack.c.b16 %v14525, %v14523
  %v14632 = vpack.c.b16 %v14528, %v14526
  %v14633 = vpack.c.b16 %v14529, %v14527
  %v14634 = vpack.c.b16 %v14532, %v14530
  %v14635 = vpack.c.b16 %v14533, %v14531
  %v14636 = vpack.c.b16 %v14536, %v14534
  %v14637 = vpack.c.b16 %v14537, %v14535
  %v14638 = vpack.c.b16 %v14540, %v14538
  %v14639 = vpack.c.b16 %v14541, %v14539
  %v14640 = vpack.c.b16 %v14544, %v14542
  %v14641 = vpack.c.b16 %v14545, %v14543
  %v14642 = vpack.c.b16 %v14548, %v14546
  %v14643 = vpack.c.b16 %v14549, %v14547
  %v14644 = vpack.c.b16 %v14552, %v14550
  %v14645 = vpack.c.b16 %v14553, %v14551
  %v14646 = vpack.c.b16 %v14556, %v14554
  %v14647 = vpack.c.b16 %v14557, %v14555
  %v14648 = vpack.c.b16 %v14560, %v14558
  %v14649 = vpack.c.b16 %v14561, %v14559
  %v14650 = vpack.c.b16 %v14564, %v14562
  %v14651 = vpack.c.b16 %v14565, %v14563
  %v14652 = vpack.c.b16 %v14568, %v14566
  %v14653 = vpack.c.b16 %v14569, %v14567
  %v14654 = vpack.c.b16 %v14572, %v14570
  %v14655 = vpack.c.b16 %v14573, %v14571
  %v14656 = vpack.c.b16 %v14576, %v14574
  %v14657 = vpack.c.b16 %v14577, %v14575
  %v14658 = vpack.c.b16 %v14580, %v14578
  %v14659 = vpack.c.b16 %v14581, %v14579
  %v14660 = vpack.c.b16 %v14584, %v14582
  %v14661 = vpack.c.b16 %v14585, %v14583
  %v14662 = vpack.c.b16 %v14588, %v14586
  %v14663 = vpack.c.b16 %v14589, %v14587
  %v14664 = vpack.c.b16 %v14592, %v14590
  %v14665 = vpack.c.b16 %v14593, %v14591
  %v14666 = vpack.c.b16 %v14596, %v14594
  %v14667 = vpack.c.b16 %v14597, %v14595
  %v14668 = vpack.c.b16 %v14600, %v14598
  %v14669 = vpack.c.b16 %v14601, %v14599
  %v14670 = vpack.c.b16 %v14604, %v14602
  %v14671 = vpack.c.b16 %v14605, %v14603
  %v14672 = vpack.c.b16 %v14608, %v14606
  %v14673 = vpack.c.b16 %v14609, %v14607
  %14738 = vmatprep.subr.bf16.mxu0 %v14611
  %14739 = vmatpush1.bf16.msra.mxu0 %v14610
  %14740 = vmatprep.subr.bf16.mxu0 %v14613
  %14741 = vmatpush1.bf16.msra.mxu0 %v14612
  %14742 = vmatprep.subr.bf16.mxu0 %v14615
  %14743 = vmatpush1.bf16.msra.mxu0 %v14614
  %14744 = vmatprep.subr.bf16.mxu0 %v14617
  %14745 = vmatpush1.bf16.msra.mxu0 %v14616
  %14746 = vmatprep.subr.bf16.mxu0 %v14619
  %14747 = vmatpush1.bf16.msra.mxu0 %v14618
  %14748 = vmatprep.subr.bf16.mxu0 %v14621
  %14749 = vmatpush1.bf16.msra.mxu0 %v14620
  %14750 = vmatprep.subr.bf16.mxu0 %v14623
  %14751 = vmatpush1.bf16.msra.mxu0 %v14622
  %14752 = vmatprep.subr.bf16.mxu0 %v14625
  %14753 = vmatpush1.bf16.msra.mxu0 %v14624
  %14754 = vmatprep.subr.bf16.mxu0 %v14627
  %14755 = vmatpush1.bf16.msra.mxu0 %v14626
  %14756 = vmatprep.subr.bf16.mxu0 %v14629
  %14757 = vmatpush1.bf16.msra.mxu0 %v14628
  %14758 = vmatprep.subr.bf16.mxu0 %v14631
  %14759 = vmatpush1.bf16.msra.mxu0 %v14630
  %14760 = vmatprep.subr.bf16.mxu0 %v14633
  %14761 = vmatpush1.bf16.msra.mxu0 %v14632
  %14762 = vmatprep.subr.bf16.mxu0 %v14635
  %14763 = vmatpush1.bf16.msra.mxu0 %v14634
  %14764 = vmatprep.subr.bf16.mxu0 %v14637
  %14765 = vmatpush1.bf16.msra.mxu0 %v14636
  %14766 = vmatprep.subr.bf16.mxu0 %v14639
  %14767 = vmatpush1.bf16.msra.mxu0 %v14638
  %14768 = vmatprep.subr.bf16.mxu0 %v14641
  %14769 = vmatpush1.bf16.msra.mxu0 %v14640
  %14770 = vmatprep.mubr.bf16.mxu0 %v14339
  %14771 = vmatmul.mubr.bf16.gmra.mrb[0].mxu0 %v14338
  %v14772 = vpop.f32.mrb[0].mxu0
  %v14773 = vadd.f32 %v14411, %v14772
  %v14774 = vpop.f32.mrb[0].mxu0
  %v14775 = vadd.f32 %v14415, %v14774
  %v14776 = vpop.f32.mrb[0].mxu0
  %v14777 = vpop.f32.mrb[0].mxu0
  %14778 = vdwg.mxu0
  %14779 = vmatprep.subr.bf16.mxu0 %v14643
  %14780 = vmatpush1.bf16.msra.mxu0 %v14642
  %14781 = vmatprep.subr.bf16.mxu0 %v14645
  %14782 = vmatpush1.bf16.msra.mxu0 %v14644
  %14783 = vmatprep.subr.bf16.mxu0 %v14647
  %14784 = vmatpush1.bf16.msra.mxu0 %v14646
  %14785 = vmatprep.subr.bf16.mxu0 %v14649
  %14786 = vmatpush1.bf16.msra.mxu0 %v14648
  %14787 = vmatprep.subr.bf16.mxu0 %v14651
  %14788 = vmatpush1.bf16.msra.mxu0 %v14650
  %14789 = vmatprep.subr.bf16.mxu0 %v14653
  %14790 = vmatpush1.bf16.msra.mxu0 %v14652
  %14791 = vmatprep.subr.bf16.mxu0 %v14655
  %14792 = vmatpush1.bf16.msra.mxu0 %v14654
  %14793 = vmatprep.subr.bf16.mxu0 %v14657
  %14794 = vmatpush1.bf16.msra.mxu0 %v14656
  %14795 = vmatprep.subr.bf16.mxu0 %v14659
  %14796 = vmatpush1.bf16.msra.mxu0 %v14658
  %14797 = vmatprep.subr.bf16.mxu0 %v14661
  %14798 = vmatpush1.bf16.msra.mxu0 %v14660
  %14799 = vmatprep.subr.bf16.mxu0 %v14663
  %14800 = vmatpush1.bf16.msra.mxu0 %v14662
  %14801 = vmatprep.subr.bf16.mxu0 %v14665
  %14802 = vmatpush1.bf16.msra.mxu0 %v14664
  %14803 = vmatprep.subr.bf16.mxu0 %v14667
  %14804 = vmatpush1.bf16.msra.mxu0 %v14666
  %14805 = vmatprep.subr.bf16.mxu0 %v14669
  %14806 = vmatpush1.bf16.msra.mxu0 %v14668
  %14807 = vmatprep.subr.bf16.mxu0 %v14671
  %14808 = vmatpush1.bf16.msra.mxu0 %v14670
  %14809 = vmatprep.subr.bf16.mxu0 %v14673
  %14810 = vmatpush1.bf16.msra.mxu0 %v14672
  %14811 = vmatprep.mubr.bf16.mxu0 %v14341
  %14812 = vmatmul.mubr.bf16.gmra.mrb[0].mxu0 %v14340
  %v14813 = vpop.f32.mrb[0].mxu0
  %v14814 = vadd.f32 %v14773, %v14813
  %v14815 = vpop.f32.mrb[0].mxu0
  %v14816 = vadd.f32 %v14775, %v14815
  %v14817 = vpop.f32.mrb[0].mxu0
  %v14818 = vpop.f32.mrb[0].mxu0
  %14819 = vdwg.mxu0
  %v14820 = vmax.f32 %v14814, 0.0
  %v14821 = vmax.f32 %v14816, 0.0
  %v14822 = vpack.c.bf16 %v14820, %v14820
  %v14823 = vpack.c.bf16 %v14821, %v14821
  %v14824 = vld [vmem:[%s9] sm:$0xf]
  %v14825 = vld [vmem:[%s9 + $0x4] sm:$0xf]
  %v14826 = vld [vmem:[%s9 + $0x8] sm:$0xf]
  %v14827 = vld [vmem:[%s9 + $0xc] sm:$0xf]
  %v14828 = vld [vmem:[%s9 + $0x10] sm:$0xf]
  %v14829 = vld [vmem:[%s9 + $0x14] sm:$0xf]
  %v14830 = vld [vmem:[%s9 + $0x18] sm:$0xf]
  %v14831 = vld [vmem:[%s9 + $0x1c] sm:$0xf]
  %v14832 = vld [vmem:[%s9 + $0x20] sm:$0xf]
  %v14833 = vld [vmem:[%s9 + $0x24] sm:$0xf]
  %v14834 = vld [vmem:[%s9 + $0x28] sm:$0xf]
  %v14835 = vld [vmem:[%s9 + $0x2c] sm:$0xf]
  %v14836 = vld [vmem:[%s9 + $0x30] sm:$0xf]
  %v14837 = vld [vmem:[%s9 + $0x34] sm:$0xf]
  %v14838 = vld [vmem:[%s9 + $0x38] sm:$0xf]
  %v14839 = vld [vmem:[%s9 + $0x3c] sm:$0xf]
  %v14840 = vld [vmem:[%s9 + $0x40] sm:$0xf]
  %v14841 = vld [vmem:[%s9 + $0x44] sm:$0xf]
  %v14842 = vld [vmem:[%s9 + $0x48] sm:$0xf]
  %v14843 = vld [vmem:[%s9 + $0x4c] sm:$0xf]
  %v14844 = vld [vmem:[%s9 + $0x50] sm:$0xf]
  %v14845 = vld [vmem:[%s9 + $0x54] sm:$0xf]
  %v14846 = vld [vmem:[%s9 + $0x58] sm:$0xf]
  %v14847 = vld [vmem:[%s9 + $0x5c] sm:$0xf]
  %v14848 = vld [vmem:[%s9 + $0x60] sm:$0xf]
  %v14849 = vld [vmem:[%s9 + $0x64] sm:$0xf]
  %v14850 = vld [vmem:[%s9 + $0x68] sm:$0xf]
  %v14851 = vld [vmem:[%s9 + $0x6c] sm:$0xf]
  %v14852 = vld [vmem:[%s9 + $0x70] sm:$0xf]
  %v14853 = vld [vmem:[%s9 + $0x74] sm:$0xf]
  %v14854 = vld [vmem:[%s9 + $0x78] sm:$0xf]
  %v14855 = vld [vmem:[%s9 + $0x7c] sm:$0xf]
  %v14856 = vld [vmem:[%s10] sm:$0x1]
  %v14858 = vlaneseq
  %v14859 = vshrl.u32 %v14858, 7
  %v14860 = vsub.s32 0, %v14859
  %v14861 = vrot.slane %v14856, %v14860
  %v14895 = vunpack.c.l.b16 %v14824
  %v14896 = vunpack.c.l.b16 %v14825
  %v14897 = vunpack.c.l.b16 %v14826
  %v14898 = vunpack.c.l.b16 %v14827
  %v14899 = vunpack.c.l.b16 %v14828
  %v14900 = vunpack.c.l.b16 %v14829
  %v14901 = vunpack.c.l.b16 %v14830
  %v14902 = vunpack.c.l.b16 %v14831
  %v14903 = vunpack.c.l.b16 %v14832
  %v14904 = vunpack.c.l.b16 %v14833
  %v14905 = vunpack.c.l.b16 %v14834
  %v14906 = vunpack.c.l.b16 %v14835
  %v14907 = vunpack.c.l.b16 %v14836
  %v14908 = vunpack.c.l.b16 %v14837
  %v14909 = vunpack.c.l.b16 %v14838
  %v14910 = vunpack.c.l.b16 %v14839
  %v14911 = vunpack.c.l.b16 %v14840
  %v14912 = vunpack.c.l.b16 %v14841
  %v14913 = vunpack.c.l.b16 %v14842
  %v14914 = vunpack.c.l.b16 %v14843
  %v14915 = vunpack.c.l.b16 %v14844
  %v14916 = vunpack.c.l.b16 %v14845
  %v14917 = vunpack.c.l.b16 %v14846
  %v14918 = vunpack.c.l.b16 %v14847
  %v14919 = vunpack.c.l.b16 %v14848
  %v14920 = vunpack.c.l.b16 %v14849
  %v14921 = vunpack.c.l.b16 %v14850
  %v14922 = vunpack.c.l.b16 %v14851
  %v14923 = vunpack.c.l.b16 %v14852
  %v14924 = vunpack.c.l.b16 %v14853
  %v14925 = vunpack.c.l.b16 %v14854
  %v14926 = vunpack.c.l.b16 %v14855
  %v14927 = vpack.c.b16 %v14896, %v14895
  %v14928 = vpack.c.b16 %v14898, %v14897
  %v14929 = vpack.c.b16 %v14900, %v14899
  %v14930 = vpack.c.b16 %v14902, %v14901
  %v14931 = vpack.c.b16 %v14904, %v14903
  %v14932 = vpack.c.b16 %v14906, %v14905
  %v14933 = vpack.c.b16 %v14908, %v14907
  %v14934 = vpack.c.b16 %v14910, %v14909
  %v14935 = vpack.c.b16 %v14912, %v14911
  %v14936 = vpack.c.b16 %v14914, %v14913
  %v14937 = vpack.c.b16 %v14916, %v14915
  %v14938 = vpack.c.b16 %v14918, %v14917
  %v14939 = vpack.c.b16 %v14920, %v14919
  %v14940 = vpack.c.b16 %v14922, %v14921
  %v14941 = vpack.c.b16 %v14924, %v14923
  %v14942 = vpack.c.b16 %v14926, %v14925
  %14959 = vmatprep.subr.bf16.mxu0 0
  %14960 = vmatpush1.bf16.msra.mxu0 %v14927
  %14961 = vmatprep.subr.bf16.mxu0 0
  %14962 = vmatpush1.bf16.msra.mxu0 %v14928
  %14963 = vmatprep.subr.bf16.mxu0 0
  %14964 = vmatpush1.bf16.msra.mxu0 %v14929
  %14965 = vmatprep.subr.bf16.mxu0 0
  %14966 = vmatpush1.bf16.msra.mxu0 %v14930
  %14967 = vmatprep.subr.bf16.mxu0 0
  %14968 = vmatpush1.bf16.msra.mxu0 %v14931
  %14969 = vmatprep.subr.bf16.mxu0 0
  %14970 = vmatpush1.bf16.msra.mxu0 %v14932
  %14971 = vmatprep.subr.bf16.mxu0 0
  %14972 = vmatpush1.bf16.msra.mxu0 %v14933
  %14973 = vmatprep.subr.bf16.mxu0 0
  %14974 = vmatpush1.bf16.msra.mxu0 %v14934
  %14975 = vmatprep.subr.bf16.mxu0 0
  %14976 = vmatpush1.bf16.msra.mxu0 %v14935
  %14977 = vmatprep.subr.bf16.mxu0 0
  %14978 = vmatpush1.bf16.msra.mxu0 %v14936
  %14979 = vmatprep.subr.bf16.mxu0 0
  %14980 = vmatpush1.bf16.msra.mxu0 %v14937
  %14981 = vmatprep.subr.bf16.mxu0 0
  %14982 = vmatpush1.bf16.msra.mxu0 %v14938
  %14983 = vmatprep.subr.bf16.mxu0 0
  %14984 = vmatpush1.bf16.msra.mxu0 %v14939
  %14985 = vmatprep.subr.bf16.mxu0 0
  %14986 = vmatpush1.bf16.msra.mxu0 %v14940
  %14987 = vmatprep.subr.bf16.mxu0 0
  %14988 = vmatpush1.bf16.msra.mxu0 %v14941
  %14989 = vmatprep.subr.bf16.mxu0 0
  %14990 = vmatpush1.bf16.msra.mxu0 %v14942
  %14991 = vmatprep.mubr.bf16.mxu0 %v14823
  %14992 = vmatmul.mubr.bf16.gmra.mrb[0].mxu0 %v14822
  %v14993 = vpop.f32.mrb[0].mxu0
  %v14994 = vadd.f32 %v14861, %v14993
  %v14995 = vpop.f32.mrb[0].mxu0
  %v14996 = vpop.f32.mrb[0].mxu0
  %v14997 = vpop.f32.mrb[0].mxu0
  %14998 = vdwg.mxu0
  %v14999 = vmax.f32 %v14994, 0.0
  %v15000 = vpack.c.bf16 %v8626, %v8626
  %v15001 = vpack.c.bf16 %v8627, %v8627
  %v15002 = vld [vmem:[%s11] sm:$0xf]
  %v15003 = vld [vmem:[%s11 + $0x4] sm:$0xf]
  %v15004 = vld [vmem:[%s11 + $0x8] sm:$0xf]
  %v15005 = vld [vmem:[%s11 + $0xc] sm:$0xf]
  %v15006 = vld [vmem:[%s11 + $0x10] sm:$0xf]
  %v15007 = vld [vmem:[%s11 + $0x14] sm:$0xf]
  %v15008 = vld [vmem:[%s11 + $0x18] sm:$0xf]
  %v15009 = vld [vmem:[%s11 + $0x1c] sm:$0xf]
  %v15010 = vld [vmem:[%s11 + $0x20] sm:$0xf]
  %v15011 = vld [vmem:[%s11 + $0x24] sm:$0xf]
  %v15012 = vld [vmem:[%s11 + $0x28] sm:$0xf]
  %v15013 = vld [vmem:[%s11 + $0x2c] sm:$0xf]
  %v15014 = vld [vmem:[%s11 + $0x30] sm:$0xf]
  %v15015 = vld [vmem:[%s11 + $0x34] sm:$0xf]
  %v15016 = vld [vmem:[%s11 + $0x38] sm:$0xf]
  %v15017 = vld [vmem:[%s11 + $0x3c] sm:$0xf]
  %v15018 = vld [vmem:[%s11 + $0x40] sm:$0xf]
  %v15019 = vld [vmem:[%s11 + $0x44] sm:$0xf]
  %v15020 = vld [vmem:[%s11 + $0x48] sm:$0xf]
  %v15021 = vld [vmem:[%s11 + $0x4c] sm:$0xf]
  %v15022 = vld [vmem:[%s11 + $0x50] sm:$0xf]
  %v15023 = vld [vmem:[%s11 + $0x54] sm:$0xf]
  %v15024 = vld [vmem:[%s11 + $0x58] sm:$0xf]
  %v15025 = vld [vmem:[%s11 + $0x5c] sm:$0xf]
  %v15026 = vld [vmem:[%s11 + $0x60] sm:$0xf]
  %v15027 = vld [vmem:[%s11 + $0x64] sm:$0xf]
  %v15028 = vld [vmem:[%s11 + $0x68] sm:$0xf]
  %v15029 = vld [vmem:[%s11 + $0x6c] sm:$0xf]
  %v15030 = vld [vmem:[%s11 + $0x70] sm:$0xf]
  %v15031 = vld [vmem:[%s11 + $0x74] sm:$0xf]
  %v15032 = vld [vmem:[%s11 + $0x78] sm:$0xf]
  %v15033 = vld [vmem:[%s11 + $0x7c] sm:$0xf]
  %v15034 = vpack.c.bf16 %v14999, %v14999
  %v15035 = vld [vmem:[%s11 + $0x80] sm:$0xf]
  %v15036 = vld [vmem:[%s11 + $0x84] sm:$0xf]
  %v15037 = vld [vmem:[%s11 + $0x88] sm:$0xf]
  %v15038 = vld [vmem:[%s11 + $0x8c] sm:$0xf]
  %v15039 = vld [vmem:[%s11 + $0x90] sm:$0xf]
  %v15040 = vld [vmem:[%s11 + $0x94] sm:$0xf]
  %v15041 = vld [vmem:[%s11 + $0x98] sm:$0xf]
  %v15042 = vld [vmem:[%s11 + $0x9c] sm:$0xf]
  %v15043 = vld [vmem:[%s11 + $0xa0] sm:$0xf]
  %v15044 = vld [vmem:[%s11 + $0xa4] sm:$0xf]
  %v15045 = vld [vmem:[%s11 + $0xa8] sm:$0xf]
  %v15046 = vld [vmem:[%s11 + $0xac] sm:$0xf]
  %v15047 = vld [vmem:[%s11 + $0xb0] sm:$0xf]
  %v15048 = vld [vmem:[%s11 + $0xb4] sm:$0xf]
  %v15049 = vld [vmem:[%s11 + $0xb8] sm:$0xf]
  %v15050 = vld [vmem:[%s11 + $0xbc] sm:$0xf]
  %v15067 = vunpack.c.l.b16 %v15035
  %v15068 = vunpack.c.l.b16 %v15036
  %v15069 = vunpack.c.l.b16 %v15037
  %v15070 = vunpack.c.l.b16 %v15038
  %v15071 = vunpack.c.l.b16 %v15039
  %v15072 = vunpack.c.l.b16 %v15040
  %v15073 = vunpack.c.l.b16 %v15041
  %v15074 = vunpack.c.l.b16 %v15042
  %v15075 = vunpack.c.l.b16 %v15043
  %v15076 = vunpack.c.l.b16 %v15044
  %v15077 = vunpack.c.l.b16 %v15045
  %v15078 = vunpack.c.l.b16 %v15046
  %v15079 = vunpack.c.l.b16 %v15047
  %v15080 = vunpack.c.l.b16 %v15048
  %v15081 = vunpack.c.l.b16 %v15049
  %v15082 = vunpack.c.l.b16 %v15050
  %v15083 = vpack.c.b16 %v15068, %v15067
  %v15084 = vpack.c.b16 %v15070, %v15069
  %v15085 = vpack.c.b16 %v15072, %v15071
  %v15086 = vpack.c.b16 %v15074, %v15073
  %v15087 = vpack.c.b16 %v15076, %v15075
  %v15088 = vpack.c.b16 %v15078, %v15077
  %v15089 = vpack.c.b16 %v15080, %v15079
  %v15090 = vpack.c.b16 %v15082, %v15081
  %15099 = vmatprep.subr.bf16.mxu0 0
  %15100 = vmatpush1.bf16.msra.mxu0 %v15083
  %15101 = vmatprep.subr.bf16.mxu0 0
  %15102 = vmatpush1.bf16.msra.mxu0 %v15084
  %15103 = vmatprep.subr.bf16.mxu0 0
  %15104 = vmatpush1.bf16.msra.mxu0 %v15085
  %15105 = vmatprep.subr.bf16.mxu0 0
  %15106 = vmatpush1.bf16.msra.mxu0 %v15086
  %15107 = vmatprep.subr.bf16.mxu0 0
  %15108 = vmatpush1.bf16.msra.mxu0 %v15087
  %15109 = vmatprep.subr.bf16.mxu0 0
  %15110 = vmatpush1.bf16.msra.mxu0 %v15088
  %15111 = vmatprep.subr.bf16.mxu0 0
  %15112 = vmatpush1.bf16.msra.mxu0 %v15089
  %15113 = vmatprep.subr.bf16.mxu0 0
  %15114 = vmatpush1.bf16.msra.mxu0 %v15090
  %15115 = vmatprep.subr.bf16.mxu0 0
  %15116 = vmatpush1.bf16.msra.mxu0 0
  %15117 = vmatprep.subr.bf16.mxu0 0
  %15118 = vmatpush1.bf16.msra.mxu0 0
  %15119 = vmatprep.subr.bf16.mxu0 0
  %15120 = vmatpush1.bf16.msra.mxu0 0
  %15121 = vmatprep.subr.bf16.mxu0 0
  %15122 = vmatpush1.bf16.msra.mxu0 0
  %15123 = vmatprep.subr.bf16.mxu0 0
  %15124 = vmatpush1.bf16.msra.mxu0 0
  %15125 = vmatprep.subr.bf16.mxu0 0
  %15126 = vmatpush1.bf16.msra.mxu0 0
  %15127 = vmatprep.subr.bf16.mxu0 0
  %15128 = vmatpush1.bf16.msra.mxu0 0
  %15129 = vmatprep.subr.bf16.mxu0 0
  %15130 = vmatpush1.bf16.msra.mxu0 0
  %15131 = vmatprep.mubr.bf16.mxu0 0
  %15132 = vmatmul.mubr.bf16.gmra.mrb[0].mxu0 %v15034
  %v15133 = vpop.f32.mrb[0].mxu0
  %v15134 = vadd.f32 0.0, %v15133
  %v15135 = vpop.f32.mrb[0].mxu0
  %v15136 = vpop.f32.mrb[0].mxu0
  %v15137 = vpop.f32.mrb[0].mxu0
  %15138 = vdwg.mxu0
  %v15171 = vunpack.c.l.b16 %v15002
  %v15172 = vunpack.c.l.b16 %v15003
  %v15173 = vunpack.c.l.b16 %v15004
  %v15174 = vunpack.c.l.b16 %v15005
  %v15175 = vunpack.c.l.b16 %v15006
  %v15176 = vunpack.c.l.b16 %v15007
  %v15177 = vunpack.c.l.b16 %v15008
  %v15178 = vunpack.c.l.b16 %v15009
  %v15179 = vunpack.c.l.b16 %v15010
  %v15180 = vunpack.c.l.b16 %v15011
  %v15181 = vunpack.c.l.b16 %v15012
  %v15182 = vunpack.c.l.b16 %v15013
  %v15183 = vunpack.c.l.b16 %v15014
  %v15184 = vunpack.c.l.b16 %v15015
  %v15185 = vunpack.c.l.b16 %v15016
  %v15186 = vunpack.c.l.b16 %v15017
  %v15187 = vunpack.c.l.b16 %v15018
  %v15188 = vunpack.c.l.b16 %v15019
  %v15189 = vunpack.c.l.b16 %v15020
  %v15190 = vunpack.c.l.b16 %v15021
  %v15191 = vunpack.c.l.b16 %v15022
  %v15192 = vunpack.c.l.b16 %v15023
  %v15193 = vunpack.c.l.b16 %v15024
  %v15194 = vunpack.c.l.b16 %v15025
  %v15195 = vunpack.c.l.b16 %v15026
  %v15196 = vunpack.c.l.b16 %v15027
  %v15197 = vunpack.c.l.b16 %v15028
  %v15198 = vunpack.c.l.b16 %v15029
  %v15199 = vunpack.c.l.b16 %v15030
  %v15200 = vunpack.c.l.b16 %v15031
  %v15201 = vunpack.c.l.b16 %v15032
  %v15202 = vunpack.c.l.b16 %v15033
  %v15203 = vpack.c.b16 %v15172, %v15171
  %v15204 = vpack.c.b16 %v15174, %v15173
  %v15205 = vpack.c.b16 %v15176, %v15175
  %v15206 = vpack.c.b16 %v15178, %v15177
  %v15207 = vpack.c.b16 %v15180, %v15179
  %v15208 = vpack.c.b16 %v15182, %v15181
  %v15209 = vpack.c.b16 %v15184, %v15183
  %v15210 = vpack.c.b16 %v15186, %v15185
  %v15211 = vpack.c.b16 %v15188, %v15187
  %v15212 = vpack.c.b16 %v15190, %v15189
  %v15213 = vpack.c.b16 %v15192, %v15191
  %v15214 = vpack.c.b16 %v15194, %v15193
  %v15215 = vpack.c.b16 %v15196, %v15195
  %v15216 = vpack.c.b16 %v15198, %v15197
  %v15217 = vpack.c.b16 %v15200, %v15199
  %v15218 = vpack.c.b16 %v15202, %v15201
  %15235 = vmatprep.subr.bf16.mxu0 0
  %15236 = vmatpush1.bf16.msra.mxu0 %v15203
  %15237 = vmatprep.subr.bf16.mxu0 0
  %15238 = vmatpush1.bf16.msra.mxu0 %v15204
  %15239 = vmatprep.subr.bf16.mxu0 0
  %15240 = vmatpush1.bf16.msra.mxu0 %v15205
  %15241 = vmatprep.subr.bf16.mxu0 0
  %15242 = vmatpush1.bf16.msra.mxu0 %v15206
  %15243 = vmatprep.subr.bf16.mxu0 0
  %15244 = vmatpush1.bf16.msra.mxu0 %v15207
  %15245 = vmatprep.subr.bf16.mxu0 0
  %15246 = vmatpush1.bf16.msra.mxu0 %v15208
  %15247 = vmatprep.subr.bf16.mxu0 0
  %15248 = vmatpush1.bf16.msra.mxu0 %v15209
  %15249 = vmatprep.subr.bf16.mxu0 0
  %15250 = vmatpush1.bf16.msra.mxu0 %v15210
  %15251 = vmatprep.subr.bf16.mxu0 0
  %15252 = vmatpush1.bf16.msra.mxu0 %v15211
  %15253 = vmatprep.subr.bf16.mxu0 0
  %15254 = vmatpush1.bf16.msra.mxu0 %v15212
  %15255 = vmatprep.subr.bf16.mxu0 0
  %15256 = vmatpush1.bf16.msra.mxu0 %v15213
  %15257 = vmatprep.subr.bf16.mxu0 0
  %15258 = vmatpush1.bf16.msra.mxu0 %v15214
  %15259 = vmatprep.subr.bf16.mxu0 0
  %15260 = vmatpush1.bf16.msra.mxu0 %v15215
  %15261 = vmatprep.subr.bf16.mxu0 0
  %15262 = vmatpush1.bf16.msra.mxu0 %v15216
  %15263 = vmatprep.subr.bf16.mxu0 0
  %15264 = vmatpush1.bf16.msra.mxu0 %v15217
  %15265 = vmatprep.subr.bf16.mxu0 0
  %15266 = vmatpush1.bf16.msra.mxu0 %v15218
  %15267 = vmatprep.mubr.bf16.mxu0 %v15001
  %15268 = vmatmul.mubr.bf16.gmra.mrb[0].mxu0 %v15000
  %v15269 = vpop.f32.mrb[0].mxu0
  %v15270 = vadd.f32 %v15134, %v15269
  %v15271 = vpop.f32.mrb[0].mxu0
  %v15272 = vpop.f32.mrb[0].mxu0
  %v15273 = vpop.f32.mrb[0].mxu0
  %15274 = vdwg.mxu0
  %v15275 = vld [vmem:[%s12] sm:$0x1]
  %v15277 = vlaneseq
  %v15278 = vshrl.u32 %v15277, 7
  %v15279 = vsub.s32 0, %v15278
  %v15280 = vrot.slane %v15275, %v15279
  %v15282 = vadd.f32 %v15270, %v15280
  %v15283 = vmax.f32 %v15282, 0.0
  %v15284 = vpack.c.bf16 %v15283, %v15283
  %v15285 = vld [vmem:[%s13] sm:$0xf]
  %v15286 = vld [vmem:[%s13 + $0x4] sm:$0xf]
  %v15287 = vld [vmem:[%s13 + $0x8] sm:$0xf]
  %v15288 = vld [vmem:[%s13 + $0xc] sm:$0xf]
  %v15289 = vld [vmem:[%s13 + $0x10] sm:$0xf]
  %v15290 = vld [vmem:[%s13 + $0x14] sm:$0xf]
  %v15291 = vld [vmem:[%s13 + $0x18] sm:$0xf]
  %v15292 = vld [vmem:[%s13 + $0x1c] sm:$0xf]
  %v15293 = vld [vmem:[%s14] sm:$0x1]
  %v15295 = vlaneseq
  %v15296 = vshrl.u32 %v15295, 7
  %v15297 = vsub.s32 0, %v15296
  %v15298 = vrot.slane %v15293, %v15297
  %v15308 = vunpack.c.l.b16 %v15285
  %v15309 = vunpack.c.l.b16 %v15286
  %v15310 = vunpack.c.l.b16 %v15287
  %v15311 = vunpack.c.l.b16 %v15288
  %v15312 = vunpack.c.l.b16 %v15289
  %v15313 = vunpack.c.l.b16 %v15290
  %v15314 = vunpack.c.l.b16 %v15291
  %v15315 = vunpack.c.l.b16 %v15292
  %v15316 = vpack.c.b16 %v15309, %v15308
  %v15317 = vpack.c.b16 %v15311, %v15310
  %v15318 = vpack.c.b16 %v15313, %v15312
  %v15319 = vpack.c.b16 %v15315, %v15314
  %v15325 = vsel %vm427, %v15284, 0
  %15327 = vmatprep.subr.bf16.mxu0 0
  %15328 = vmatpush1.bf16.msra.mxu0 %v15316
  %15329 = vmatprep.subr.bf16.mxu0 0
  %15330 = vmatpush1.bf16.msra.mxu0 %v15317
  %15331 = vmatprep.subr.bf16.mxu0 0
  %15332 = vmatpush1.bf16.msra.mxu0 %v15318
  %15333 = vmatprep.subr.bf16.mxu0 0
  %15334 = vmatpush1.bf16.msra.mxu0 %v15319
  %15335 = vmatprep.subr.bf16.mxu0 0
  %15336 = vmatpush1.bf16.msra.mxu0 0
  %15337 = vmatprep.subr.bf16.mxu0 0
  %15338 = vmatpush1.bf16.msra.mxu0 0
  %15339 = vmatprep.subr.bf16.mxu0 0
  %15340 = vmatpush1.bf16.msra.mxu0 0
  %15341 = vmatprep.subr.bf16.mxu0 0
  %15342 = vmatpush1.bf16.msra.mxu0 0
  %15343 = vmatprep.subr.bf16.mxu0 0
  %15344 = vmatpush1.bf16.msra.mxu0 0
  %15345 = vmatprep.subr.bf16.mxu0 0
  %15346 = vmatpush1.bf16.msra.mxu0 0
  %15347 = vmatprep.subr.bf16.mxu0 0
  %15348 = vmatpush1.bf16.msra.mxu0 0
  %15349 = vmatprep.subr.bf16.mxu0 0
  %15350 = vmatpush1.bf16.msra.mxu0 0
  %15351 = vmatprep.subr.bf16.mxu0 0
  %15352 = vmatpush1.bf16.msra.mxu0 0
  %15353 = vmatprep.subr.bf16.mxu0 0
  %15354 = vmatpush1.bf16.msra.mxu0 0
  %15355 = vmatprep.subr.bf16.mxu0 0
  %15356 = vmatpush1.bf16.msra.mxu0 0
  %15357 = vmatprep.subr.bf16.mxu0 0
  %15358 = vmatpush1.bf16.msra.mxu0 0
  %15359 = vmatprep.mubr.bf16.mxu0 0
  %15360 = vmatmul.mubr.bf16.gmra.mrb[0].mxu0 %v15325
  %v15361 = vpop.f32.mrb[0].mxu0
  %v15362 = vadd.f32 %v15298, %v15361
  %v15363 = vpop.f32.mrb[0].mxu0
  %v15364 = vpop.f32.mrb[0].mxu0
  %v15365 = vpop.f32.mrb[0].mxu0
  %15366 = vdwg.mxu0
  %vm15367 = vcmask 15360
  %15368 = vst.msk [vmem:[%s15] sm:$0xff] %vm15367, %v15362
  // Predicated region
  $region62: #{vae_classifier_forward.1} parent=0 // pred_check
    _
  $region63: #{vae_classifier_forward.1} parent=0 // pred_check_branch
    %15370 = sbr.rel (0) target = $region65
  $region64: #{vae_classifier_forward.1} parent=0 // pred_region
    _
  $region65: #{vae_classifier_forward.1} parent=0 // pred_fallthru
    _
  // Predicated region
  $region66: #{vae_classifier_forward.1} parent=0 // pred_check
    _
  $region67: #{vae_classifier_forward.1} parent=0 // pred_check_branch
    %15372 = sbr.rel (0) target = $region69
  $region68: #{vae_classifier_forward.1} parent=0 // pred_region
    _
  $region69: #{vae_classifier_forward.1} parent=0 // pred_fallthru
    _

</llo_original>
